<compile_context>
chip_gen: v6e
topology: v6e:2x2x1
jax: 0.10.0
libtpu: 0.0.40
codegen_flags: <defaults>
</compile_context>

<pallas_src>
import numpy as np
import jax
import jax.numpy as jnp
from jax.experimental import pallas as pl
from jax.experimental.pallas import tpu as pltpu

# ------------------------- model configuration ------------------------------
EDGE_CONV_PARAMS = [          # (K, [(C_in, C_out), ...]) per Edge_Conv block
    (4, [(4, 8), (8, 8)]),
    (4, [(8, 16), (16, 16)]),
]
FC_PARAMS = [(0.1, (16, 32)), (0.1, (32, 32))]   # (drop_rate, (in, out))
NUM_CLASSES = 2
BN_EPS = 1e-5
_MASK_VAL = 1e30              # "+inf" used for self / cross-sample / picked entries


# ------------------- host-precomputed kNN masking constants ------------------
def _knn_mask_constants(P, G):
    """Integer constants used to pack column indices into distance mantissas.

    keep[i,j] : AND-mask applied to the (exponent-bumped) distance bits
                (-2**idx_bits i.e. "clear low index bits" when (i,j) is a valid
                 neighbour pair, 0 when invalid -> distance bits erased).
    orb[i,j]  : OR-mask ( column index j for valid pairs,
                          bits(1e30) | j  for invalid pairs ).
    A pair is invalid when i == j (self) or i, j belong to different samples
    of the super-group (block-diagonal mask at granularity P).
    """
    W = G * P
    idx_bits = max(1, int(np.ceil(np.log2(W))))
    low_mask = (1 << idx_bits) - 1
    ii = np.arange(W)[:, None]
    jj = np.arange(W)[None, :]
    jjb = np.broadcast_to(jj, (W, W))
    invalid = (ii == jj) | ((ii // P) != (jj // P))
    big_bits = int(np.array(_MASK_VAL, np.float32).view(np.int32)) & ~low_mask
    keep = np.where(invalid, 0, ~low_mask).astype(np.int32)
    orb = np.where(invalid, big_bits | jjb, jjb).astype(np.int32)
    return jnp.asarray(keep), jnp.asarray(orb)


# ------------------------- in-kernel building blocks -------------------------
def _edge_conv(x_all, pts_all, keep, orb, K, W, n_groups,
               w0c, w0b, b0, mid, w_sc, b_sc):
    """One EdgeConv block on the whole step batch (R = n_groups * W rows)."""
    f32 = jnp.float32
    R = x_all.shape[0]
    c0 = w0b.shape[1]

    # Folded first edge-MLP layer: center term and neighbour projection.
    xproj = jnp.dot(x_all, w0b, preferred_element_type=f32)          # (R, c0)
    ctr = jnp.dot(x_all, w0c, preferred_element_type=f32) + b0       # (R, c0)

    pts_g = pts_all.reshape(n_groups, W, pts_all.shape[1])
    xproj_g = xproj.reshape(n_groups, W, c0)
    ctr_g = ctr.reshape(n_groups, W, c0)

    # Squared pairwise distances per super-group: r_i - 2<p_i,p_j> + r_j.
    # r_j along lanes via ones @ (p*p) matmul -> no lane->sublane relayout.
    sq = pts_g * pts_g
    dotp = jnp.einsum('gic,gjc->gij', pts_g, pts_g,
                      preferred_element_type=f32)                    # (g, W, W)
    rrow = jnp.einsum('gic,gjc->gij', jnp.ones_like(pts_g), sq,
                      preferred_element_type=f32)                    # (g, W, W)
    rcol = jnp.sum(sq, axis=-1, keepdims=True)                       # (g, W, 1)
    dist = jnp.maximum(rcol - 2.0 * dotp + rrow, 0.0)                # >= 0

    # Pack the column index into the low mantissa bits: one min == argmin.
    # +2^23 bumps the exponent (monotone for non-negative floats) so packed
    # values are always normal; invalid pairs get bits(1e30)|j (all distinct).
    bits = pltpu.bitcast(dist, jnp.int32)
    d = pltpu.bitcast(((bits + jnp.int32(1 << 23)) & keep[None]) | orb[None],
                      f32)                                           # (g, W, W)

    parts = []
    for _ in range(K):                                               # K static, small
        m = jnp.min(d, axis=-1, keepdims=True)                       # one XLU reduce
        hit = d == m                                                 # exact one-hot
        d = jnp.where(hit, _MASK_VAL, d)                             # drop picked nbr
        onehot = jnp.where(hit, jnp.float32(1.0), jnp.float32(0.0))
        nbrp = jnp.einsum('gij,gjc->gic', onehot, xproj_g,
                          preferred_element_type=f32)                # gather+project
        parts.append(jnp.maximum(ctr_g - nbrp, 0.0))                 # layer-0 + ReLU

    # Flatten (k, group, point) rows so mid layers are single big matmuls.
    h = jnp.concatenate(parts, axis=0).reshape(K * R, c0)            # k-major rows
    for (wm, bm) in mid:                                             # Conv+BN+ReLU
        h = jnp.maximum(jnp.dot(h, wm, preferred_element_type=f32) + bm, 0.0)

    acc = h[0:R]                                                     # mean over K
    for k in range(1, K):
        acc = acc + h[k * R:(k + 1) * R]
    h_mean = acc * (1.0 / K)

    sc = jnp.dot(x_all, w_sc, preferred_element_type=f32) + b_sc     # shortcut conv+BN
    return jnp.maximum(h_mean + sc, 0.0)                             # final ReLU


def _make_particle_net_kernel(B, P, G, block_cfgs, n_fc):
    """Fully fused forward: EdgeConv blocks -> global mean -> FC -> logits."""
    W = G * P
    n_groups = B // G
    R = B * P
    f32 = jnp.float32

    def kernel(feat_ref, keep_ref, orb_ref, *refs):
        out_ref = refs[-1]
        w = [r[...] for r in refs[:-1]]        # weights are tiny; load once
        keep = keep_ref[...]
        orb = orb_ref[...]

        feat = feat_ref[...].reshape(R, feat_ref.shape[-1])   # (B*P, 2 + c_fts)
        pts = feat[:, 0:2]                     # raw coordinates drive block-0 kNN
        x = feat[:, 2:]                        # raw features (input BN folded in)

        pos = 0
        for (K, n_layers) in block_cfgs:
            w0c, w0b, b0 = w[pos], w[pos + 1], w[pos + 2]
            pos += 3
            mid = []
            for _ in range(n_layers - 1):
                mid.append((w[pos], w[pos + 1]))
                pos += 2
            w_sc, b_sc = w[pos], w[pos + 1]
            pos += 2
            x = _edge_conv(x, pts, keep, orb, K, W, n_groups,
                           w0c, w0b, b0, mid, w_sc, b_sc)
            pts = x                            # blocks > 0 use features as points

        pooled = jnp.sum(x.reshape(B, P, x.shape[-1]), axis=1) * (1.0 / P)  # (B, C)
        for _ in range(n_fc):                  # Linear+ReLU (Dropout identity in eval)
            pooled = jnp.maximum(
                jnp.dot(pooled, w[pos], preferred_element_type=f32) + w[pos + 1], 0.0)
            pos += 2
        out_ref[...] = (jnp.dot(pooled, w[pos], preferred_element_type=f32)
                        + w[pos + 1])          # (B, NUM_CLASSES)

    return kernel


# ---------------------- parameters (deterministic, synthetic) ---------------
def _fuse_bn(w, b, gamma, beta, mean, var):
    scale = gamma / jnp.sqrt(var + BN_EPS)
    return w * scale[None, :], (b - mean) * scale + beta


def init_params(key):
    keys = iter(jax.random.split(key, 128))

    def nrm(shape, s=0.2):
        return s * jax.random.normal(next(keys), shape, jnp.float32)

    params = {}
    c_fts = EDGE_CONV_PARAMS[0][1][0][0]
    params['input_bn'] = dict(
        gamma=1.0 + nrm((c_fts,), 0.1),
        beta=nrm((c_fts,), 0.1),
        mean=nrm((c_fts,), 0.1),
        var=1.0 + jnp.abs(nrm((c_fts,), 0.1)),
    )

    blocks = []
    for K, ch_list in EDGE_CONV_PARAMS:
        layers = []
        for i, (ci, co) in enumerate(ch_list):
            cin_eff = 2 * ci if i == 0 else ci
            w, b = nrm((cin_eff, co)), nrm((co,), 0.1)
            gamma, beta = 1.0 + nrm((co,), 0.1), nrm((co,), 0.1)
            mean, var = nrm((co,), 0.1), 1.0 + jnp.abs(nrm((co,), 0.1))
            wf, bf = _fuse_bn(w, b, gamma, beta, mean, var)
            layers.append((wf, bf.reshape(1, co)))
        ci0, co_last = ch_list[0][0], ch_list[-1][1]
        w, b = nrm((ci0, co_last)), nrm((co_last,), 0.1)
        gamma, beta = 1.0 + nrm((co_last,), 0.1), nrm((co_last,), 0.1)
        mean, var = nrm((co_last,), 0.1), 1.0 + jnp.abs(nrm((co_last,), 0.1))
        wsc, bsc = _fuse_bn(w, b, gamma, beta, mean, var)
        blocks.append(dict(K=K, layers=layers, sc_w=wsc,
                           sc_b=bsc.reshape(1, co_last)))
    params['edge_conv'] = blocks

    params['fc'] = [(nrm((ci, co)), nrm((co,), 0.1).reshape(1, co))
                    for _drop, (ci, co) in FC_PARAMS]
    params['final'] = (nrm((FC_PARAMS[-1][1][1], NUM_CLASSES)),
                       nrm((NUM_CLASSES,), 0.1).reshape(1, NUM_CLASSES))
    return params


def _flatten_params(params):
    """Fold the eval-mode input BatchNorm into block-0 weights, fold the
    first-layer center/diff split into (w0a + w0b, w0b), and flatten all
    weights into the positional order the fused kernel expects."""
    bn = params['input_bn']
    scale = bn['gamma'] / jnp.sqrt(bn['var'] + BN_EPS)           # (c_fts,)
    shift = (bn['beta'] - bn['mean'] * scale).reshape(1, -1)     # (1, c_fts)

    flat, block_cfgs = [], []
    for bi, blk in enumerate(params['edge_conv']):
        layers = blk['layers']
        c_in = layers[0][0].shape[0] // 2
        w0, b0 = layers[0]
        w0a, w0b = w0[:c_in, :], w0[c_in:, :]    # center half / (fc - f) half
        w_sc, b_sc = blk['sc_w'], blk['sc_b']
        if bi == 0:
            # center & shortcut paths see the full affine BN; the diff path
            # only sees the scale (mean/beta cancel in fc - f).
            b0 = b0 + shift @ w0a
            w0a = scale[:, None] * w0a
            w0b = scale[:, None] * w0b
            b_sc = b_sc + shift @ w_sc
            w_sc = scale[:, None] * w_sc
        flat += [w0a + w0b, w0b, b0]             # folded first layer: (w0c, w0b, b0)
        for (wl, bl) in layers[1:]:
            flat += [wl, bl]
        flat += [w_sc, b_sc]
        block_cfgs.append((blk['K'], len(layers)))

    for (wl, bl) in params['fc']:
        flat += [wl, bl]
    flat += list(params['final'])
    return flat, tuple(block_cfgs), len(params['fc'])


# ------------------------------- forward ------------------------------------
def particle_net_forward(features, params, samples_per_step=128):
    """features: (N, P, 2 + c_fts) channels-last; returns (N, NUM_CLASSES)."""
    N, P, C_total = features.shape
    flat, block_cfgs, n_fc = _flatten_params(params)
    # kNN argmin is guaranteed one-hot only while valid candidates remain.
    assert max(k for k, _ in block_cfgs) <= P - 1, "need K <= P-1"

    G = max(1, 128 // P)                   # samples per lane-dense kNN super-group
    B_cap = max(G, (samples_per_step // G) * G)
    n_pad_min = ((N + G - 1) // G) * G     # N rounded up to a group multiple
    B = min(B_cap, n_pad_min)              # samples per grid step (multiple of G)
    n_pad = ((n_pad_min + B - 1) // B) * B
    if n_pad != N:
        pad = jnp.zeros((n_pad - N, P, C_total), features.dtype)
        features = jnp.concatenate([features, pad], axis=0)

    keep, orb = _knn_mask_constants(P, G)

    in_specs = [pl.BlockSpec((B, P, C_total), lambda n: (n, 0, 0)),
                pl.BlockSpec(keep.shape, lambda n: (0, 0)),
                pl.BlockSpec(orb.shape, lambda n: (0, 0))]
    for a in flat:   # weights: whole-array blocks, shared across grid steps
        in_specs.append(pl.BlockSpec(a.shape, lambda n, nd=a.ndim: (0,) * nd))

    out = pl.pallas_call(
        _make_particle_net_kernel(B, P, G, block_cfgs, n_fc),
        out_shape=jax.ShapeDtypeStruct((n_pad, NUM_CLASSES), jnp.float32),
        grid=(n_pad // B,),
        in_specs=in_specs,
        out_specs=pl.BlockSpec((B, NUM_CLASSES), lambda n: (n, 0)),
        compiler_params=pltpu.CompilerParams(
            dimension_semantics=("parallel",),        # batch steps over v7x's 2 TCs
            vmem_limit_bytes=32 * 1024 * 1024),       # above v5e's 16 MiB default
    )(features, keep, orb, *flat)
    return out[:N]


# --------------------------------- main --------------------------------------
if __name__ == "__main__":
    key = jax.random.PRNGKey(0)
    k_in, k_par = jax.random.split(key)
    N, P = 2, 16
    C_total = 2 + EDGE_CONV_PARAMS[0][1][0][0]     # 2 coords + 4 feature channels
    features = jax.random.normal(k_in, (N, P, C_total), jnp.float32)
    params = init_params(k_par)

    out = particle_net_forward(features, params)
    out = jax.block_until_ready(out)
    assert out.shape == (N, NUM_CLASSES) and out.dtype == jnp.float32
    assert bool(jnp.all(jnp.isfinite(out)))
    print("KERNEL_OK")
</pallas_src>

<mosaic_0001>
module attributes {stable_mosaic.version = 11 : i64} {
  func.func @kernel(%arg0: i32, %arg1: memref<8x16x6xf32, #tpu.memory_space<vmem>>, %arg2: memref<128x128xi32, #tpu.memory_space<vmem>>, %arg3: memref<128x128xi32, #tpu.memory_space<vmem>>, %arg4: memref<4x8xf32, #tpu.memory_space<vmem>>, %arg5: memref<4x8xf32, #tpu.memory_space<vmem>>, %arg6: memref<1x8xf32, #tpu.memory_space<vmem>>, %arg7: memref<8x8xf32, #tpu.memory_space<vmem>>, %arg8: memref<1x8xf32, #tpu.memory_space<vmem>>, %arg9: memref<4x8xf32, #tpu.memory_space<vmem>>, %arg10: memref<1x8xf32, #tpu.memory_space<vmem>>, %arg11: memref<8x16xf32, #tpu.memory_space<vmem>>, %arg12: memref<8x16xf32, #tpu.memory_space<vmem>>, %arg13: memref<1x16xf32, #tpu.memory_space<vmem>>, %arg14: memref<16x16xf32, #tpu.memory_space<vmem>>, %arg15: memref<1x16xf32, #tpu.memory_space<vmem>>, %arg16: memref<8x16xf32, #tpu.memory_space<vmem>>, %arg17: memref<1x16xf32, #tpu.memory_space<vmem>>, %arg18: memref<16x32xf32, #tpu.memory_space<vmem>>, %arg19: memref<1x32xf32, #tpu.memory_space<vmem>>, %arg20: memref<32x32xf32, #tpu.memory_space<vmem>>, %arg21: memref<1x32xf32, #tpu.memory_space<vmem>>, %arg22: memref<32x2xf32, #tpu.memory_space<vmem>>, %arg23: memref<1x2xf32, #tpu.memory_space<vmem>>, %arg24: memref<8x2xf32, #tpu.memory_space<vmem>>) attributes {dimension_semantics = [#tpu.dimension_semantics<parallel>], iteration_bounds = array<i64: 1>, scalar_prefetch = 0 : i64, scratch_operands = 0 : i64, tpu.core_type = #tpu.core_type<tc>, window_params = [{transform_indices = @transform_0, window_bounds = array<i64: 8, 16, 6>}, {pipeline_mode = #tpu.pipeline_mode<synchronous>, transform_indices = @transform_1, window_bounds = array<i64: 128, 128>}, {pipeline_mode = #tpu.pipeline_mode<synchronous>, transform_indices = @transform_2, window_bounds = array<i64: 128, 128>}, {pipeline_mode = #tpu.pipeline_mode<synchronous>, transform_indices = @transform_3, window_bounds = array<i64: 4, 8>}, {pipeline_mode = #tpu.pipeline_mode<synchronous>, transform_indices = @transform_4, window_bounds = array<i64: 4, 8>}, {pipeline_mode = #tpu.pipeline_mode<synchronous>, transform_indices = @transform_5, window_bounds = array<i64: 1, 8>}, {pipeline_mode = #tpu.pipeline_mode<synchronous>, transform_indices = @transform_6, window_bounds = array<i64: 8, 8>}, {pipeline_mode = #tpu.pipeline_mode<synchronous>, transform_indices = @transform_7, window_bounds = array<i64: 1, 8>}, {pipeline_mode = #tpu.pipeline_mode<synchronous>, transform_indices = @transform_8, window_bounds = array<i64: 4, 8>}, {pipeline_mode = #tpu.pipeline_mode<synchronous>, transform_indices = @transform_9, window_bounds = array<i64: 1, 8>}, {pipeline_mode = #tpu.pipeline_mode<synchronous>, transform_indices = @transform_10, window_bounds = array<i64: 8, 16>}, {pipeline_mode = #tpu.pipeline_mode<synchronous>, transform_indices = @transform_11, window_bounds = array<i64: 8, 16>}, {pipeline_mode = #tpu.pipeline_mode<synchronous>, transform_indices = @transform_12, window_bounds = array<i64: 1, 16>}, {pipeline_mode = #tpu.pipeline_mode<synchronous>, transform_indices = @transform_13, window_bounds = array<i64: 16, 16>}, {pipeline_mode = #tpu.pipeline_mode<synchronous>, transform_indices = @transform_14, window_bounds = array<i64: 1, 16>}, {pipeline_mode = #tpu.pipeline_mode<synchronous>, transform_indices = @transform_15, window_bounds = array<i64: 8, 16>}, {pipeline_mode = #tpu.pipeline_mode<synchronous>, transform_indices = @transform_16, window_bounds = array<i64: 1, 16>}, {pipeline_mode = #tpu.pipeline_mode<synchronous>, transform_indices = @transform_17, window_bounds = array<i64: 16, 32>}, {pipeline_mode = #tpu.pipeline_mode<synchronous>, transform_indices = @transform_18, window_bounds = array<i64: 1, 32>}, {pipeline_mode = #tpu.pipeline_mode<synchronous>, transform_indices = @transform_19, window_bounds = array<i64: 32, 32>}, {pipeline_mode = #tpu.pipeline_mode<synchronous>, transform_indices = @transform_20, window_bounds = array<i64: 1, 32>}, {pipeline_mode = #tpu.pipeline_mode<synchronous>, transform_indices = @transform_21, window_bounds = array<i64: 32, 2>}, {pipeline_mode = #tpu.pipeline_mode<synchronous>, transform_indices = @transform_22, window_bounds = array<i64: 1, 2>}, {transform_indices = @transform_23, window_bounds = array<i64: 8, 2>}]} {
    %c0 = arith.constant 0 : index
    %c0_0 = arith.constant 0 : index
    %0 = vector.load %arg4[%c0, %c0_0] : memref<4x8xf32, #tpu.memory_space<vmem>>, vector<4x8xf32>
    %c0_1 = arith.constant 0 : index
    %c0_2 = arith.constant 0 : index
    %1 = vector.load %arg5[%c0_1, %c0_2] : memref<4x8xf32, #tpu.memory_space<vmem>>, vector<4x8xf32>
    %c0_3 = arith.constant 0 : index
    %c0_4 = arith.constant 0 : index
    %2 = vector.load %arg6[%c0_3, %c0_4] : memref<1x8xf32, #tpu.memory_space<vmem>>, vector<1x8xf32>
    %c0_5 = arith.constant 0 : index
    %c0_6 = arith.constant 0 : index
    %3 = vector.load %arg7[%c0_5, %c0_6] : memref<8x8xf32, #tpu.memory_space<vmem>>, vector<8x8xf32>
    %c0_7 = arith.constant 0 : index
    %c0_8 = arith.constant 0 : index
    %4 = vector.load %arg8[%c0_7, %c0_8] : memref<1x8xf32, #tpu.memory_space<vmem>>, vector<1x8xf32>
    %c0_9 = arith.constant 0 : index
    %c0_10 = arith.constant 0 : index
    %5 = vector.load %arg9[%c0_9, %c0_10] : memref<4x8xf32, #tpu.memory_space<vmem>>, vector<4x8xf32>
    %c0_11 = arith.constant 0 : index
    %c0_12 = arith.constant 0 : index
    %6 = vector.load %arg10[%c0_11, %c0_12] : memref<1x8xf32, #tpu.memory_space<vmem>>, vector<1x8xf32>
    %c0_13 = arith.constant 0 : index
    %c0_14 = arith.constant 0 : index
    %7 = vector.load %arg11[%c0_13, %c0_14] : memref<8x16xf32, #tpu.memory_space<vmem>>, vector<8x16xf32>
    %c0_15 = arith.constant 0 : index
    %c0_16 = arith.constant 0 : index
    %8 = vector.load %arg12[%c0_15, %c0_16] : memref<8x16xf32, #tpu.memory_space<vmem>>, vector<8x16xf32>
    %c0_17 = arith.constant 0 : index
    %c0_18 = arith.constant 0 : index
    %9 = vector.load %arg13[%c0_17, %c0_18] : memref<1x16xf32, #tpu.memory_space<vmem>>, vector<1x16xf32>
    %c0_19 = arith.constant 0 : index
    %c0_20 = arith.constant 0 : index
    %10 = vector.load %arg14[%c0_19, %c0_20] : memref<16x16xf32, #tpu.memory_space<vmem>>, vector<16x16xf32>
    %c0_21 = arith.constant 0 : index
    %c0_22 = arith.constant 0 : index
    %11 = vector.load %arg15[%c0_21, %c0_22] : memref<1x16xf32, #tpu.memory_space<vmem>>, vector<1x16xf32>
    %c0_23 = arith.constant 0 : index
    %c0_24 = arith.constant 0 : index
    %12 = vector.load %arg16[%c0_23, %c0_24] : memref<8x16xf32, #tpu.memory_space<vmem>>, vector<8x16xf32>
    %c0_25 = arith.constant 0 : index
    %c0_26 = arith.constant 0 : index
    %13 = vector.load %arg17[%c0_25, %c0_26] : memref<1x16xf32, #tpu.memory_space<vmem>>, vector<1x16xf32>
    %c0_27 = arith.constant 0 : index
    %c0_28 = arith.constant 0 : index
    %14 = vector.load %arg18[%c0_27, %c0_28] : memref<16x32xf32, #tpu.memory_space<vmem>>, vector<16x32xf32>
    %c0_29 = arith.constant 0 : index
    %c0_30 = arith.constant 0 : index
    %15 = vector.load %arg19[%c0_29, %c0_30] : memref<1x32xf32, #tpu.memory_space<vmem>>, vector<1x32xf32>
    %c0_31 = arith.constant 0 : index
    %c0_32 = arith.constant 0 : index
    %16 = vector.load %arg20[%c0_31, %c0_32] : memref<32x32xf32, #tpu.memory_space<vmem>>, vector<32x32xf32>
    %c0_33 = arith.constant 0 : index
    %c0_34 = arith.constant 0 : index
    %17 = vector.load %arg21[%c0_33, %c0_34] : memref<1x32xf32, #tpu.memory_space<vmem>>, vector<1x32xf32>
    %c0_35 = arith.constant 0 : index
    %c0_36 = arith.constant 0 : index
    %18 = vector.load %arg22[%c0_35, %c0_36] : memref<32x2xf32, #tpu.memory_space<vmem>>, vector<32x2xf32>
    %c0_37 = arith.constant 0 : index
    %c0_38 = arith.constant 0 : index
    %19 = vector.load %arg23[%c0_37, %c0_38] : memref<1x2xf32, #tpu.memory_space<vmem>>, vector<1x2xf32>
    %c0_39 = arith.constant 0 : index
    %c0_40 = arith.constant 0 : index
    %20 = vector.load %arg2[%c0_39, %c0_40] : memref<128x128xi32, #tpu.memory_space<vmem>>, vector<128x128xi32>
    %c0_41 = arith.constant 0 : index
    %c0_42 = arith.constant 0 : index
    %21 = vector.load %arg3[%c0_41, %c0_42] : memref<128x128xi32, #tpu.memory_space<vmem>>, vector<128x128xi32>
    %c0_43 = arith.constant 0 : index
    %c0_44 = arith.constant 0 : index
    %c0_45 = arith.constant 0 : index
    %22 = vector.load %arg1[%c0_43, %c0_44, %c0_45] : memref<8x16x6xf32, #tpu.memory_space<vmem>>, vector<8x16x6xf32>
    %23 = vector.shape_cast %22 : vector<8x16x6xf32> to vector<128x6xf32>
    %24 = vector.extract_strided_slice %23 {offsets = [0, 0], sizes = [128, 2], strides = [1, 1]} : vector<128x6xf32> to vector<128x2xf32>
    %25 = vector.extract_strided_slice %23 {offsets = [0, 2], sizes = [128, 4], strides = [1, 1]} : vector<128x6xf32> to vector<128x4xf32>
    %cst = arith.constant dense<0.000000e+00> : vector<128x8xf32>
    %26 = tpu.matmul %25, %1, %cst {dimension_numbers = #tpu.dot_dimension_numbers<[1], [0], [0], [1], [0, 0, 1, 1], [], []>} : vector<128x4xf32>, vector<4x8xf32>, vector<128x8xf32> -> vector<128x8xf32>
    %cst_46 = arith.constant dense<0.000000e+00> : vector<128x8xf32>
    %27 = tpu.matmul %25, %0, %cst_46 {dimension_numbers = #tpu.dot_dimension_numbers<[1], [0], [0], [1], [0, 0, 1, 1], [], []>} : vector<128x4xf32>, vector<4x8xf32>, vector<128x8xf32> -> vector<128x8xf32>
    %28 = vector.broadcast %2 : vector<1x8xf32> to vector<128x8xf32>
    %29 = arith.addf %27, %28 : vector<128x8xf32>
    %30 = vector.shape_cast %24 : vector<128x2xf32> to vector<1x128x2xf32>
    %31 = vector.shape_cast %26 : vector<128x8xf32> to vector<1x128x8xf32>
    %32 = vector.shape_cast %29 : vector<128x8xf32> to vector<1x128x8xf32>
    %33 = arith.mulf %30, %30 : vector<1x128x2xf32>
    "tpu.trace_start"() <{level = 10 : i32, message = "gic,gjc->gij"}> : () -> ()
    %cst_47 = arith.constant dense<0.000000e+00> : vector<1x128x128xf32>
    %34 = tpu.matmul %30, %30, %cst_47 {dimension_numbers = #tpu.dot_dimension_numbers<[2], [2], [1], [1], [0, 0, 0, 1, 1, 1], [0], [0]>} : vector<1x128x2xf32>, vector<1x128x2xf32>, vector<1x128x128xf32> -> vector<1x128x128xf32>
    %cst_48 = arith.constant 1.000000e+00 : f32
    "tpu.trace_stop"() : () -> ()
    %35 = vector.broadcast %cst_48 : f32 to vector<1x128x2xf32>
    "tpu.trace_start"() <{level = 10 : i32, message = "gic,gjc->gij"}> : () -> ()
    %cst_49 = arith.constant dense<0.000000e+00> : vector<1x128x128xf32>
    %36 = tpu.matmul %35, %33, %cst_49 {dimension_numbers = #tpu.dot_dimension_numbers<[2], [2], [1], [1], [0, 0, 0, 1, 1, 1], [0], [0]>} : vector<1x128x2xf32>, vector<1x128x2xf32>, vector<1x128x128xf32> -> vector<1x128x128xf32>
    "tpu.trace_stop"() : () -> ()
    %cst_50 = arith.constant dense<0.000000e+00> : vector<1x128xf32>
    %37 = vector.multi_reduction <add>, %33, %cst_50 [2] : vector<1x128x2xf32> to vector<1x128xf32>
    %38 = vector.shape_cast %37 : vector<1x128xf32> to vector<1x128x1xf32>
    %cst_51 = arith.constant 2.000000e+00 : f32
    %39 = vector.broadcast %cst_51 : f32 to vector<1x128x128xf32>
    %40 = arith.mulf %39, %34 : vector<1x128x128xf32>
    %41 = vector.broadcast %38 : vector<1x128x1xf32> to vector<1x128x128xf32>
    %42 = arith.subf %41, %40 : vector<1x128x128xf32>
    %43 = arith.addf %42, %36 : vector<1x128x128xf32>
    %cst_52 = arith.constant 0.000000e+00 : f32
    %44 = vector.broadcast %cst_52 : f32 to vector<1x128x128xf32>
    %45 = arith.maximumf %43, %44 : vector<1x128x128xf32>
    %46 = tpu.bitcast %45 : vector<1x128x128xf32> -> vector<1x128x128xi32>
    %c8388608_i32 = arith.constant 8388608 : i32
    %47 = vector.broadcast %c8388608_i32 : i32 to vector<1x128x128xi32>
    %48 = arith.addi %46, %47 : vector<1x128x128xi32>
    %49 = vector.shape_cast %20 : vector<128x128xi32> to vector<1x128x128xi32>
    %50 = arith.andi %48, %49 : vector<1x128x128xi32>
    %51 = vector.shape_cast %21 : vector<128x128xi32> to vector<1x128x128xi32>
    %52 = arith.ori %50, %51 : vector<1x128x128xi32>
    %53 = tpu.bitcast %52 : vector<1x128x128xi32> -> vector<1x128x128xf32>
    %cst_53 = arith.constant dense<0x7F800000> : vector<1x128xf32>
    %54 = vector.multi_reduction <minimumf>, %53, %cst_53 [2] : vector<1x128x128xf32> to vector<1x128xf32>
    %55 = vector.shape_cast %54 : vector<1x128xf32> to vector<1x128x1xf32>
    %56 = vector.broadcast %55 : vector<1x128x1xf32> to vector<1x128x128xf32>
    %57 = arith.cmpf oeq, %53, %56 : vector<1x128x128xf32>
    %cst_54 = arith.constant 1.000000e+30 : f32
    %58 = vector.broadcast %cst_54 : f32 to vector<1x128x128xf32>
    %59 = arith.select %57, %58, %53 : vector<1x128x128xi1>, vector<1x128x128xf32>
    %cst_55 = arith.constant 1.000000e+00 : f32
    %cst_56 = arith.constant 0.000000e+00 : f32
    %60 = vector.broadcast %cst_55 : f32 to vector<1x128x128xf32>
    %61 = vector.broadcast %cst_56 : f32 to vector<1x128x128xf32>
    %62 = arith.select %57, %60, %61 : vector<1x128x128xi1>, vector<1x128x128xf32>
    "tpu.trace_start"() <{level = 10 : i32, message = "gij,gjc->gic"}> : () -> ()
    %cst_57 = arith.constant dense<0.000000e+00> : vector<1x128x8xf32>
    %63 = tpu.matmul %62, %31, %cst_57 {dimension_numbers = #tpu.dot_dimension_numbers<[2], [1], [1], [2], [0, 0, 0, 1, 1, 2], [0], [0]>} : vector<1x128x128xf32>, vector<1x128x8xf32>, vector<1x128x8xf32> -> vector<1x128x8xf32>
    "tpu.trace_stop"() : () -> ()
    %64 = arith.subf %32, %63 : vector<1x128x8xf32>
    %cst_58 = arith.constant 0.000000e+00 : f32
    %65 = vector.broadcast %cst_58 : f32 to vector<1x128x8xf32>
    %66 = arith.maximumf %64, %65 : vector<1x128x8xf32>
    %cst_59 = arith.constant dense<0x7F800000> : vector<1x128xf32>
    %67 = vector.multi_reduction <minimumf>, %59, %cst_59 [2] : vector<1x128x128xf32> to vector<1x128xf32>
    %68 = vector.shape_cast %67 : vector<1x128xf32> to vector<1x128x1xf32>
    %69 = vector.broadcast %68 : vector<1x128x1xf32> to vector<1x128x128xf32>
    %70 = arith.cmpf oeq, %59, %69 : vector<1x128x128xf32>
    %cst_60 = arith.constant 1.000000e+30 : f32
    %71 = vector.broadcast %cst_60 : f32 to vector<1x128x128xf32>
    %72 = arith.select %70, %71, %59 : vector<1x128x128xi1>, vector<1x128x128xf32>
    %cst_61 = arith.constant 1.000000e+00 : f32
    %cst_62 = arith.constant 0.000000e+00 : f32
    %73 = vector.broadcast %cst_61 : f32 to vector<1x128x128xf32>
    %74 = vector.broadcast %cst_62 : f32 to vector<1x128x128xf32>
    %75 = arith.select %70, %73, %74 : vector<1x128x128xi1>, vector<1x128x128xf32>
    "tpu.trace_start"() <{level = 10 : i32, message = "gij,gjc->gic"}> : () -> ()
    %cst_63 = arith.constant dense<0.000000e+00> : vector<1x128x8xf32>
    %76 = tpu.matmul %75, %31, %cst_63 {dimension_numbers = #tpu.dot_dimension_numbers<[2], [1], [1], [2], [0, 0, 0, 1, 1, 2], [0], [0]>} : vector<1x128x128xf32>, vector<1x128x8xf32>, vector<1x128x8xf32> -> vector<1x128x8xf32>
    "tpu.trace_stop"() : () -> ()
    %77 = arith.subf %32, %76 : vector<1x128x8xf32>
    %cst_64 = arith.constant 0.000000e+00 : f32
    %78 = vector.broadcast %cst_64 : f32 to vector<1x128x8xf32>
    %79 = arith.maximumf %77, %78 : vector<1x128x8xf32>
    %cst_65 = arith.constant dense<0x7F800000> : vector<1x128xf32>
    %80 = vector.multi_reduction <minimumf>, %72, %cst_65 [2] : vector<1x128x128xf32> to vector<1x128xf32>
    %81 = vector.shape_cast %80 : vector<1x128xf32> to vector<1x128x1xf32>
    %82 = vector.broadcast %81 : vector<1x128x1xf32> to vector<1x128x128xf32>
    %83 = arith.cmpf oeq, %72, %82 : vector<1x128x128xf32>
    %cst_66 = arith.constant 1.000000e+30 : f32
    %84 = vector.broadcast %cst_66 : f32 to vector<1x128x128xf32>
    %85 = arith.select %83, %84, %72 : vector<1x128x128xi1>, vector<1x128x128xf32>
    %cst_67 = arith.constant 1.000000e+00 : f32
    %cst_68 = arith.constant 0.000000e+00 : f32
    %86 = vector.broadcast %cst_67 : f32 to vector<1x128x128xf32>
    %87 = vector.broadcast %cst_68 : f32 to vector<1x128x128xf32>
    %88 = arith.select %83, %86, %87 : vector<1x128x128xi1>, vector<1x128x128xf32>
    "tpu.trace_start"() <{level = 10 : i32, message = "gij,gjc->gic"}> : () -> ()
    %cst_69 = arith.constant dense<0.000000e+00> : vector<1x128x8xf32>
    %89 = tpu.matmul %88, %31, %cst_69 {dimension_numbers = #tpu.dot_dimension_numbers<[2], [1], [1], [2], [0, 0, 0, 1, 1, 2], [0], [0]>} : vector<1x128x128xf32>, vector<1x128x8xf32>, vector<1x128x8xf32> -> vector<1x128x8xf32>
    "tpu.trace_stop"() : () -> ()
    %90 = arith.subf %32, %89 : vector<1x128x8xf32>
    %cst_70 = arith.constant 0.000000e+00 : f32
    %91 = vector.broadcast %cst_70 : f32 to vector<1x128x8xf32>
    %92 = arith.maximumf %90, %91 : vector<1x128x8xf32>
    %cst_71 = arith.constant dense<0x7F800000> : vector<1x128xf32>
    %93 = vector.multi_reduction <minimumf>, %85, %cst_71 [2] : vector<1x128x128xf32> to vector<1x128xf32>
    %94 = vector.shape_cast %93 : vector<1x128xf32> to vector<1x128x1xf32>
    %95 = vector.broadcast %94 : vector<1x128x1xf32> to vector<1x128x128xf32>
    %96 = arith.cmpf oeq, %85, %95 : vector<1x128x128xf32>
    %cst_72 = arith.constant 1.000000e+00 : f32
    %cst_73 = arith.constant 0.000000e+00 : f32
    %97 = vector.broadcast %cst_72 : f32 to vector<1x128x128xf32>
    %98 = vector.broadcast %cst_73 : f32 to vector<1x128x128xf32>
    %99 = arith.select %96, %97, %98 : vector<1x128x128xi1>, vector<1x128x128xf32>
    "tpu.trace_start"() <{level = 10 : i32, message = "gij,gjc->gic"}> : () -> ()
    %cst_74 = arith.constant dense<0.000000e+00> : vector<1x128x8xf32>
    %100 = tpu.matmul %99, %31, %cst_74 {dimension_numbers = #tpu.dot_dimension_numbers<[2], [1], [1], [2], [0, 0, 0, 1, 1, 2], [0], [0]>} : vector<1x128x128xf32>, vector<1x128x8xf32>, vector<1x128x8xf32> -> vector<1x128x8xf32>
    "tpu.trace_stop"() : () -> ()
    %101 = arith.subf %32, %100 : vector<1x128x8xf32>
    %cst_75 = arith.constant 0.000000e+00 : f32
    %102 = vector.broadcast %cst_75 : f32 to vector<1x128x8xf32>
    %103 = arith.maximumf %101, %102 : vector<1x128x8xf32>
    %104 = tpu.concatenate %66, %79, %92, %103 in 0 : vector<1x128x8xf32>, vector<1x128x8xf32>, vector<1x128x8xf32>, vector<1x128x8xf32> -> vector<4x128x8xf32>
    %105 = vector.shape_cast %104 : vector<4x128x8xf32> to vector<512x8xf32>
    %cst_76 = arith.constant dense<0.000000e+00> : vector<512x8xf32>
    %106 = tpu.matmul %105, %3, %cst_76 {dimension_numbers = #tpu.dot_dimension_numbers<[1], [0], [0], [1], [0, 0, 1, 1], [], []>} : vector<512x8xf32>, vector<8x8xf32>, vector<512x8xf32> -> vector<512x8xf32>
    %107 = vector.broadcast %4 : vector<1x8xf32> to vector<512x8xf32>
    %108 = arith.addf %106, %107 : vector<512x8xf32>
    %cst_77 = arith.constant 0.000000e+00 : f32
    %109 = vector.broadcast %cst_77 : f32 to vector<512x8xf32>
    %110 = arith.maximumf %108, %109 : vector<512x8xf32>
    %111 = vector.extract_strided_slice %110 {offsets = [0, 0], sizes = [128, 8], strides = [1, 1]} : vector<512x8xf32> to vector<128x8xf32>
    %112 = vector.extract_strided_slice %110 {offsets = [128, 0], sizes = [128, 8], strides = [1, 1]} : vector<512x8xf32> to vector<128x8xf32>
    %113 = arith.addf %111, %112 : vector<128x8xf32>
    %114 = vector.extract_strided_slice %110 {offsets = [256, 0], sizes = [128, 8], strides = [1, 1]} : vector<512x8xf32> to vector<128x8xf32>
    %115 = arith.addf %113, %114 : vector<128x8xf32>
    %116 = vector.extract_strided_slice %110 {offsets = [384, 0], sizes = [128, 8], strides = [1, 1]} : vector<512x8xf32> to vector<128x8xf32>
    %117 = arith.addf %115, %116 : vector<128x8xf32>
    %cst_78 = arith.constant 2.500000e-01 : f32
    %118 = vector.broadcast %cst_78 : f32 to vector<128x8xf32>
    %119 = arith.mulf %117, %118 : vector<128x8xf32>
    %cst_79 = arith.constant dense<0.000000e+00> : vector<128x8xf32>
    %120 = tpu.matmul %25, %5, %cst_79 {dimension_numbers = #tpu.dot_dimension_numbers<[1], [0], [0], [1], [0, 0, 1, 1], [], []>} : vector<128x4xf32>, vector<4x8xf32>, vector<128x8xf32> -> vector<128x8xf32>
    %121 = vector.broadcast %6 : vector<1x8xf32> to vector<128x8xf32>
    %122 = arith.addf %120, %121 : vector<128x8xf32>
    %123 = arith.addf %119, %122 : vector<128x8xf32>
    %cst_80 = arith.constant 0.000000e+00 : f32
    %124 = vector.broadcast %cst_80 : f32 to vector<128x8xf32>
    %125 = arith.maximumf %123, %124 : vector<128x8xf32>
    %cst_81 = arith.constant dense<0.000000e+00> : vector<128x16xf32>
    %126 = tpu.matmul %125, %8, %cst_81 {dimension_numbers = #tpu.dot_dimension_numbers<[1], [0], [0], [1], [0, 0, 1, 1], [], []>} : vector<128x8xf32>, vector<8x16xf32>, vector<128x16xf32> -> vector<128x16xf32>
    %cst_82 = arith.constant dense<0.000000e+00> : vector<128x16xf32>
    %127 = tpu.matmul %125, %7, %cst_82 {dimension_numbers = #tpu.dot_dimension_numbers<[1], [0], [0], [1], [0, 0, 1, 1], [], []>} : vector<128x8xf32>, vector<8x16xf32>, vector<128x16xf32> -> vector<128x16xf32>
    %128 = vector.broadcast %9 : vector<1x16xf32> to vector<128x16xf32>
    %129 = arith.addf %127, %128 : vector<128x16xf32>
    %130 = vector.shape_cast %125 : vector<128x8xf32> to vector<1x128x8xf32>
    %131 = vector.shape_cast %126 : vector<128x16xf32> to vector<1x128x16xf32>
    %132 = vector.shape_cast %129 : vector<128x16xf32> to vector<1x128x16xf32>
    %133 = arith.mulf %130, %130 : vector<1x128x8xf32>
    "tpu.trace_start"() <{level = 10 : i32, message = "gic,gjc->gij"}> : () -> ()
    %cst_83 = arith.constant dense<0.000000e+00> : vector<1x128x128xf32>
    %134 = tpu.matmul %130, %130, %cst_83 {dimension_numbers = #tpu.dot_dimension_numbers<[2], [2], [1], [1], [0, 0, 0, 1, 1, 1], [0], [0]>} : vector<1x128x8xf32>, vector<1x128x8xf32>, vector<1x128x128xf32> -> vector<1x128x128xf32>
    %cst_84 = arith.constant 1.000000e+00 : f32
    "tpu.trace_stop"() : () -> ()
    %135 = vector.broadcast %cst_84 : f32 to vector<1x128x8xf32>
    "tpu.trace_start"() <{level = 10 : i32, message = "gic,gjc->gij"}> : () -> ()
    %cst_85 = arith.constant dense<0.000000e+00> : vector<1x128x128xf32>
    %136 = tpu.matmul %135, %133, %cst_85 {dimension_numbers = #tpu.dot_dimension_numbers<[2], [2], [1], [1], [0, 0, 0, 1, 1, 1], [0], [0]>} : vector<1x128x8xf32>, vector<1x128x8xf32>, vector<1x128x128xf32> -> vector<1x128x128xf32>
    "tpu.trace_stop"() : () -> ()
    %cst_86 = arith.constant dense<0.000000e+00> : vector<1x128xf32>
    %137 = vector.multi_reduction <add>, %133, %cst_86 [2] : vector<1x128x8xf32> to vector<1x128xf32>
    %138 = vector.shape_cast %137 : vector<1x128xf32> to vector<1x128x1xf32>
    %cst_87 = arith.constant 2.000000e+00 : f32
    %139 = vector.broadcast %cst_87 : f32 to vector<1x128x128xf32>
    %140 = arith.mulf %139, %134 : vector<1x128x128xf32>
    %141 = vector.broadcast %138 : vector<1x128x1xf32> to vector<1x128x128xf32>
    %142 = arith.subf %141, %140 : vector<1x128x128xf32>
    %143 = arith.addf %142, %136 : vector<1x128x128xf32>
    %cst_88 = arith.constant 0.000000e+00 : f32
    %144 = vector.broadcast %cst_88 : f32 to vector<1x128x128xf32>
    %145 = arith.maximumf %143, %144 : vector<1x128x128xf32>
    %146 = tpu.bitcast %145 : vector<1x128x128xf32> -> vector<1x128x128xi32>
    %c8388608_i32_89 = arith.constant 8388608 : i32
    %147 = vector.broadcast %c8388608_i32_89 : i32 to vector<1x128x128xi32>
    %148 = arith.addi %146, %147 : vector<1x128x128xi32>
    %149 = vector.shape_cast %20 : vector<128x128xi32> to vector<1x128x128xi32>
    %150 = arith.andi %148, %149 : vector<1x128x128xi32>
    %151 = vector.shape_cast %21 : vector<128x128xi32> to vector<1x128x128xi32>
    %152 = arith.ori %150, %151 : vector<1x128x128xi32>
    %153 = tpu.bitcast %152 : vector<1x128x128xi32> -> vector<1x128x128xf32>
    %cst_90 = arith.constant dense<0x7F800000> : vector<1x128xf32>
    %154 = vector.multi_reduction <minimumf>, %153, %cst_90 [2] : vector<1x128x128xf32> to vector<1x128xf32>
    %155 = vector.shape_cast %154 : vector<1x128xf32> to vector<1x128x1xf32>
    %156 = vector.broadcast %155 : vector<1x128x1xf32> to vector<1x128x128xf32>
    %157 = arith.cmpf oeq, %153, %156 : vector<1x128x128xf32>
    %cst_91 = arith.constant 1.000000e+30 : f32
    %158 = vector.broadcast %cst_91 : f32 to vector<1x128x128xf32>
    %159 = arith.select %157, %158, %153 : vector<1x128x128xi1>, vector<1x128x128xf32>
    %cst_92 = arith.constant 1.000000e+00 : f32
    %cst_93 = arith.constant 0.000000e+00 : f32
    %160 = vector.broadcast %cst_92 : f32 to vector<1x128x128xf32>
    %161 = vector.broadcast %cst_93 : f32 to vector<1x128x128xf32>
    %162 = arith.select %157, %160, %161 : vector<1x128x128xi1>, vector<1x128x128xf32>
    "tpu.trace_start"() <{level = 10 : i32, message = "gij,gjc->gic"}> : () -> ()
    %cst_94 = arith.constant dense<0.000000e+00> : vector<1x128x16xf32>
    %163 = tpu.matmul %162, %131, %cst_94 {dimension_numbers = #tpu.dot_dimension_numbers<[2], [1], [1], [2], [0, 0, 0, 1, 1, 2], [0], [0]>} : vector<1x128x128xf32>, vector<1x128x16xf32>, vector<1x128x16xf32> -> vector<1x128x16xf32>
    "tpu.trace_stop"() : () -> ()
    %164 = arith.subf %132, %163 : vector<1x128x16xf32>
    %cst_95 = arith.constant 0.000000e+00 : f32
    %165 = vector.broadcast %cst_95 : f32 to vector<1x128x16xf32>
    %166 = arith.maximumf %164, %165 : vector<1x128x16xf32>
    %cst_96 = arith.constant dense<0x7F800000> : vector<1x128xf32>
    %167 = vector.multi_reduction <minimumf>, %159, %cst_96 [2] : vector<1x128x128xf32> to vector<1x128xf32>
    %168 = vector.shape_cast %167 : vector<1x128xf32> to vector<1x128x1xf32>
    %169 = vector.broadcast %168 : vector<1x128x1xf32> to vector<1x128x128xf32>
    %170 = arith.cmpf oeq, %159, %169 : vector<1x128x128xf32>
    %cst_97 = arith.constant 1.000000e+30 : f32
    %171 = vector.broadcast %cst_97 : f32 to vector<1x128x128xf32>
    %172 = arith.select %170, %171, %159 : vector<1x128x128xi1>, vector<1x128x128xf32>
    %cst_98 = arith.constant 1.000000e+00 : f32
    %cst_99 = arith.constant 0.000000e+00 : f32
    %173 = vector.broadcast %cst_98 : f32 to vector<1x128x128xf32>
    %174 = vector.broadcast %cst_99 : f32 to vector<1x128x128xf32>
    %175 = arith.select %170, %173, %174 : vector<1x128x128xi1>, vector<1x128x128xf32>
    "tpu.trace_start"() <{level = 10 : i32, message = "gij,gjc->gic"}> : () -> ()
    %cst_100 = arith.constant dense<0.000000e+00> : vector<1x128x16xf32>
    %176 = tpu.matmul %175, %131, %cst_100 {dimension_numbers = #tpu.dot_dimension_numbers<[2], [1], [1], [2], [0, 0, 0, 1, 1, 2], [0], [0]>} : vector<1x128x128xf32>, vector<1x128x16xf32>, vector<1x128x16xf32> -> vector<1x128x16xf32>
    "tpu.trace_stop"() : () -> ()
    %177 = arith.subf %132, %176 : vector<1x128x16xf32>
    %cst_101 = arith.constant 0.000000e+00 : f32
    %178 = vector.broadcast %cst_101 : f32 to vector<1x128x16xf32>
    %179 = arith.maximumf %177, %178 : vector<1x128x16xf32>
    %cst_102 = arith.constant dense<0x7F800000> : vector<1x128xf32>
    %180 = vector.multi_reduction <minimumf>, %172, %cst_102 [2] : vector<1x128x128xf32> to vector<1x128xf32>
    %181 = vector.shape_cast %180 : vector<1x128xf32> to vector<1x128x1xf32>
    %182 = vector.broadcast %181 : vector<1x128x1xf32> to vector<1x128x128xf32>
    %183 = arith.cmpf oeq, %172, %182 : vector<1x128x128xf32>
    %cst_103 = arith.constant 1.000000e+30 : f32
    %184 = vector.broadcast %cst_103 : f32 to vector<1x128x128xf32>
    %185 = arith.select %183, %184, %172 : vector<1x128x128xi1>, vector<1x128x128xf32>
    %cst_104 = arith.constant 1.000000e+00 : f32
    %cst_105 = arith.constant 0.000000e+00 : f32
    %186 = vector.broadcast %cst_104 : f32 to vector<1x128x128xf32>
    %187 = vector.broadcast %cst_105 : f32 to vector<1x128x128xf32>
    %188 = arith.select %183, %186, %187 : vector<1x128x128xi1>, vector<1x128x128xf32>
    "tpu.trace_start"() <{level = 10 : i32, message = "gij,gjc->gic"}> : () -> ()
    %cst_106 = arith.constant dense<0.000000e+00> : vector<1x128x16xf32>
    %189 = tpu.matmul %188, %131, %cst_106 {dimension_numbers = #tpu.dot_dimension_numbers<[2], [1], [1], [2], [0, 0, 0, 1, 1, 2], [0], [0]>} : vector<1x128x128xf32>, vector<1x128x16xf32>, vector<1x128x16xf32> -> vector<1x128x16xf32>
    "tpu.trace_stop"() : () -> ()
    %190 = arith.subf %132, %189 : vector<1x128x16xf32>
    %cst_107 = arith.constant 0.000000e+00 : f32
    %191 = vector.broadcast %cst_107 : f32 to vector<1x128x16xf32>
    %192 = arith.maximumf %190, %191 : vector<1x128x16xf32>
    %cst_108 = arith.constant dense<0x7F800000> : vector<1x128xf32>
    %193 = vector.multi_reduction <minimumf>, %185, %cst_108 [2] : vector<1x128x128xf32> to vector<1x128xf32>
    %194 = vector.shape_cast %193 : vector<1x128xf32> to vector<1x128x1xf32>
    %195 = vector.broadcast %194 : vector<1x128x1xf32> to vector<1x128x128xf32>
    %196 = arith.cmpf oeq, %185, %195 : vector<1x128x128xf32>
    %cst_109 = arith.constant 1.000000e+00 : f32
    %cst_110 = arith.constant 0.000000e+00 : f32
    %197 = vector.broadcast %cst_109 : f32 to vector<1x128x128xf32>
    %198 = vector.broadcast %cst_110 : f32 to vector<1x128x128xf32>
    %199 = arith.select %196, %197, %198 : vector<1x128x128xi1>, vector<1x128x128xf32>
    "tpu.trace_start"() <{level = 10 : i32, message = "gij,gjc->gic"}> : () -> ()
    %cst_111 = arith.constant dense<0.000000e+00> : vector<1x128x16xf32>
    %200 = tpu.matmul %199, %131, %cst_111 {dimension_numbers = #tpu.dot_dimension_numbers<[2], [1], [1], [2], [0, 0, 0, 1, 1, 2], [0], [0]>} : vector<1x128x128xf32>, vector<1x128x16xf32>, vector<1x128x16xf32> -> vector<1x128x16xf32>
    "tpu.trace_stop"() : () -> ()
    %201 = arith.subf %132, %200 : vector<1x128x16xf32>
    %cst_112 = arith.constant 0.000000e+00 : f32
    %202 = vector.broadcast %cst_112 : f32 to vector<1x128x16xf32>
    %203 = arith.maximumf %201, %202 : vector<1x128x16xf32>
    %204 = tpu.concatenate %166, %179, %192, %203 in 0 : vector<1x128x16xf32>, vector<1x128x16xf32>, vector<1x128x16xf32>, vector<1x128x16xf32> -> vector<4x128x16xf32>
    %205 = vector.shape_cast %204 : vector<4x128x16xf32> to vector<512x16xf32>
    %cst_113 = arith.constant dense<0.000000e+00> : vector<512x16xf32>
    %206 = tpu.matmul %205, %10, %cst_113 {dimension_numbers = #tpu.dot_dimension_numbers<[1], [0], [0], [1], [0, 0, 1, 1], [], []>} : vector<512x16xf32>, vector<16x16xf32>, vector<512x16xf32> -> vector<512x16xf32>
    %207 = vector.broadcast %11 : vector<1x16xf32> to vector<512x16xf32>
    %208 = arith.addf %206, %207 : vector<512x16xf32>
    %cst_114 = arith.constant 0.000000e+00 : f32
    %209 = vector.broadcast %cst_114 : f32 to vector<512x16xf32>
    %210 = arith.maximumf %208, %209 : vector<512x16xf32>
    %211 = vector.extract_strided_slice %210 {offsets = [0, 0], sizes = [128, 16], strides = [1, 1]} : vector<512x16xf32> to vector<128x16xf32>
    %212 = vector.extract_strided_slice %210 {offsets = [128, 0], sizes = [128, 16], strides = [1, 1]} : vector<512x16xf32> to vector<128x16xf32>
    %213 = arith.addf %211, %212 : vector<128x16xf32>
    %214 = vector.extract_strided_slice %210 {offsets = [256, 0], sizes = [128, 16], strides = [1, 1]} : vector<512x16xf32> to vector<128x16xf32>
    %215 = arith.addf %213, %214 : vector<128x16xf32>
    %216 = vector.extract_strided_slice %210 {offsets = [384, 0], sizes = [128, 16], strides = [1, 1]} : vector<512x16xf32> to vector<128x16xf32>
    %217 = arith.addf %215, %216 : vector<128x16xf32>
    %cst_115 = arith.constant 2.500000e-01 : f32
    %218 = vector.broadcast %cst_115 : f32 to vector<128x16xf32>
    %219 = arith.mulf %217, %218 : vector<128x16xf32>
    %cst_116 = arith.constant dense<0.000000e+00> : vector<128x16xf32>
    %220 = tpu.matmul %125, %12, %cst_116 {dimension_numbers = #tpu.dot_dimension_numbers<[1], [0], [0], [1], [0, 0, 1, 1], [], []>} : vector<128x8xf32>, vector<8x16xf32>, vector<128x16xf32> -> vector<128x16xf32>
    %221 = vector.broadcast %13 : vector<1x16xf32> to vector<128x16xf32>
    %222 = arith.addf %220, %221 : vector<128x16xf32>
    %223 = arith.addf %219, %222 : vector<128x16xf32>
    %cst_117 = arith.constant 0.000000e+00 : f32
    %224 = vector.broadcast %cst_117 : f32 to vector<128x16xf32>
    %225 = arith.maximumf %223, %224 : vector<128x16xf32>
    %226 = vector.shape_cast %225 : vector<128x16xf32> to vector<8x16x16xf32>
    %cst_118 = arith.constant dense<0.000000e+00> : vector<8x16xf32>
    %227 = vector.multi_reduction <add>, %226, %cst_118 [1] : vector<8x16x16xf32> to vector<8x16xf32>
    %cst_119 = arith.constant 6.250000e-02 : f32
    %228 = vector.broadcast %cst_119 : f32 to vector<8x16xf32>
    %229 = arith.mulf %227, %228 : vector<8x16xf32>
    %cst_120 = arith.constant dense<0.000000e+00> : vector<8x32xf32>
    %230 = tpu.matmul %229, %14, %cst_120 {dimension_numbers = #tpu.dot_dimension_numbers<[1], [0], [0], [1], [0, 0, 1, 1], [], []>} : vector<8x16xf32>, vector<16x32xf32>, vector<8x32xf32> -> vector<8x32xf32>
    %231 = vector.broadcast %15 : vector<1x32xf32> to vector<8x32xf32>
    %232 = arith.addf %230, %231 : vector<8x32xf32>
    %cst_121 = arith.constant 0.000000e+00 : f32
    %233 = vector.broadcast %cst_121 : f32 to vector<8x32xf32>
    %234 = arith.maximumf %232, %233 : vector<8x32xf32>
    %cst_122 = arith.constant dense<0.000000e+00> : vector<8x32xf32>
    %235 = tpu.matmul %234, %16, %cst_122 {dimension_numbers = #tpu.dot_dimension_numbers<[1], [0], [0], [1], [0, 0, 1, 1], [], []>} : vector<8x32xf32>, vector<32x32xf32>, vector<8x32xf32> -> vector<8x32xf32>
    %236 = vector.broadcast %17 : vector<1x32xf32> to vector<8x32xf32>
    %237 = arith.addf %235, %236 : vector<8x32xf32>
    %cst_123 = arith.constant 0.000000e+00 : f32
    %238 = vector.broadcast %cst_123 : f32 to vector<8x32xf32>
    %239 = arith.maximumf %237, %238 : vector<8x32xf32>
    %cst_124 = arith.constant dense<0.000000e+00> : vector<8x2xf32>
    %240 = tpu.matmul %239, %18, %cst_124 {dimension_numbers = #tpu.dot_dimension_numbers<[1], [0], [0], [1], [0, 0, 1, 1], [], []>} : vector<8x32xf32>, vector<32x2xf32>, vector<8x2xf32> -> vector<8x2xf32>
    %241 = vector.broadcast %19 : vector<1x2xf32> to vector<8x2xf32>
    %242 = arith.addf %240, %241 : vector<8x2xf32>
    %c0_125 = arith.constant 0 : index
    %c0_126 = arith.constant 0 : index
    %243 = vector.load %arg24[%c0_125, %c0_126] : memref<8x2xf32, #tpu.memory_space<vmem>>, vector<8x2xf32>
    tpu.vector_store %arg24[%c0_125, %c0_126], %242 {strides = array<i32>} : memref<8x2xf32, #tpu.memory_space<vmem>>, vector<8x2xf32>,
    return
  }
  func.func @transform_0(%arg0: i32) -> (i32, i32, i32) {
    %c0_i32 = arith.constant 0 : i32
    %c0_i32_0 = arith.constant 0 : i32
    %c0_i32_1 = arith.constant 0 : i32
    return %arg0, %c0_i32, %c0_i32_0 : i32, i32, i32
  }
  func.func @transform_1(%arg0: i32) -> (i32, i32) {
    %c0_i32 = arith.constant 0 : i32
    %c0_i32_0 = arith.constant 0 : i32
    %c0_i32_1 = arith.constant 0 : i32
    return %c0_i32, %c0_i32_0 : i32, i32
  }
  func.func @transform_2(%arg0: i32) -> (i32, i32) {
    %c0_i32 = arith.constant 0 : i32
    %c0_i32_0 = arith.constant 0 : i32
    %c0_i32_1 = arith.constant 0 : i32
    return %c0_i32, %c0_i32_0 : i32, i32
  }
  func.func @transform_3(%arg0: i32) -> (i32, i32) {
    %c0_i32 = arith.constant 0 : i32
    %c0_i32_0 = arith.constant 0 : i32
    %c0_i32_1 = arith.constant 0 : i32
    return %c0_i32, %c0_i32_0 : i32, i32
  }
  func.func @transform_4(%arg0: i32) -> (i32, i32) {
    %c0_i32 = arith.constant 0 : i32
    %c0_i32_0 = arith.constant 0 : i32
    %c0_i32_1 = arith.constant 0 : i32
    return %c0_i32, %c0_i32_0 : i32, i32
  }
  func.func @transform_5(%arg0: i32) -> (i32, i32) {
    %c0_i32 = arith.constant 0 : i32
    %c0_i32_0 = arith.constant 0 : i32
    %c0_i32_1 = arith.constant 0 : i32
    return %c0_i32, %c0_i32_0 : i32, i32
  }
  func.func @transform_6(%arg0: i32) -> (i32, i32) {
    %c0_i32 = arith.constant 0 : i32
    %c0_i32_0 = arith.constant 0 : i32
    %c0_i32_1 = arith.constant 0 : i32
    return %c0_i32, %c0_i32_0 : i32, i32
  }
  func.func @transform_7(%arg0: i32) -> (i32, i32) {
    %c0_i32 = arith.constant 0 : i32
    %c0_i32_0 = arith.constant 0 : i32
    %c0_i32_1 = arith.constant 0 : i32
    return %c0_i32, %c0_i32_0 : i32, i32
  }
  func.func @transform_8(%arg0: i32) -> (i32, i32) {
    %c0_i32 = arith.constant 0 : i32
    %c0_i32_0 = arith.constant 0 : i32
    %c0_i32_1 = arith.constant 0 : i32
    return %c0_i32, %c0_i32_0 : i32, i32
  }
  func.func @transform_9(%arg0: i32) -> (i32, i32) {
    %c0_i32 = arith.constant 0 : i32
    %c0_i32_0 = arith.constant 0 : i32
    %c0_i32_1 = arith.constant 0 : i32
    return %c0_i32, %c0_i32_0 : i32, i32
  }
  func.func @transform_10(%arg0: i32) -> (i32, i32) {
    %c0_i32 = arith.constant 0 : i32
    %c0_i32_0 = arith.constant 0 : i32
    %c0_i32_1 = arith.constant 0 : i32
    return %c0_i32, %c0_i32_0 : i32, i32
  }
  func.func @transform_11(%arg0: i32) -> (i32, i32) {
    %c0_i32 = arith.constant 0 : i32
    %c0_i32_0 = arith.constant 0 : i32
    %c0_i32_1 = arith.constant 0 : i32
    return %c0_i32, %c0_i32_0 : i32, i32
  }
  func.func @transform_12(%arg0: i32) -> (i32, i32) {
    %c0_i32 = arith.constant 0 : i32
    %c0_i32_0 = arith.constant 0 : i32
    %c0_i32_1 = arith.constant 0 : i32
    return %c0_i32, %c0_i32_0 : i32, i32
  }
  func.func @transform_13(%arg0: i32) -> (i32, i32) {
    %c0_i32 = arith.constant 0 : i32
    %c0_i32_0 = arith.constant 0 : i32
    %c0_i32_1 = arith.constant 0 : i32
    return %c0_i32, %c0_i32_0 : i32, i32
  }
  func.func @transform_14(%arg0: i32) -> (i32, i32) {
    %c0_i32 = arith.constant 0 : i32
    %c0_i32_0 = arith.constant 0 : i32
    %c0_i32_1 = arith.constant 0 : i32
    return %c0_i32, %c0_i32_0 : i32, i32
  }
  func.func @transform_15(%arg0: i32) -> (i32, i32) {
    %c0_i32 = arith.constant 0 : i32
    %c0_i32_0 = arith.constant 0 : i32
    %c0_i32_1 = arith.constant 0 : i32
    return %c0_i32, %c0_i32_0 : i32, i32
  }
  func.func @transform_16(%arg0: i32) -> (i32, i32) {
    %c0_i32 = arith.constant 0 : i32
    %c0_i32_0 = arith.constant 0 : i32
    %c0_i32_1 = arith.constant 0 : i32
    return %c0_i32, %c0_i32_0 : i32, i32
  }
  func.func @transform_17(%arg0: i32) -> (i32, i32) {
    %c0_i32 = arith.constant 0 : i32
    %c0_i32_0 = arith.constant 0 : i32
    %c0_i32_1 = arith.constant 0 : i32
    return %c0_i32, %c0_i32_0 : i32, i32
  }
  func.func @transform_18(%arg0: i32) -> (i32, i32) {
    %c0_i32 = arith.constant 0 : i32
    %c0_i32_0 = arith.constant 0 : i32
    %c0_i32_1 = arith.constant 0 : i32
    return %c0_i32, %c0_i32_0 : i32, i32
  }
  func.func @transform_19(%arg0: i32) -> (i32, i32) {
    %c0_i32 = arith.constant 0 : i32
    %c0_i32_0 = arith.constant 0 : i32
    %c0_i32_1 = arith.constant 0 : i32
    return %c0_i32, %c0_i32_0 : i32, i32
  }
  func.func @transform_20(%arg0: i32) -> (i32, i32) {
    %c0_i32 = arith.constant 0 : i32
    %c0_i32_0 = arith.constant 0 : i32
    %c0_i32_1 = arith.constant 0 : i32
    return %c0_i32, %c0_i32_0 : i32, i32
  }
  func.func @transform_21(%arg0: i32) -> (i32, i32) {
    %c0_i32 = arith.constant 0 : i32
    %c0_i32_0 = arith.constant 0 : i32
    %c0_i32_1 = arith.constant 0 : i32
    return %c0_i32, %c0_i32_0 : i32, i32
  }
  func.func @transform_22(%arg0: i32) -> (i32, i32) {
    %c0_i32 = arith.constant 0 : i32
    %c0_i32_0 = arith.constant 0 : i32
    %c0_i32_1 = arith.constant 0 : i32
    return %c0_i32, %c0_i32_0 : i32, i32
  }
  func.func @transform_23(%arg0: i32) -> (i32, i32) {
    %c0_i32 = arith.constant 0 : i32
    %c0_i32_0 = arith.constant 0 : i32
    return %arg0, %c0_i32 : i32, i32
  }
}

</mosaic_0001>

<llo_original>
// kernel: tpu_custom_call.1
$region0: #{tpu_custom_call.1}
  #allocation0 [shape = 'u32[]', space=smem, size = 0x4, offset = 0x4, fixed_abs, tag = 'smem constant byte address 0x4 - core index']
  #allocation1 [shape = 'u32[144,128]{1,0:T(1,128)}', space=vmem, size = 0x12000, scoped, tag = 'internal scratch']
  %s0 = inlined_call_operand.vmem [shape: f32[8,16,6], index: 0, kind: input, shape index: {}]
  %s1 = inlined_call_operand.vmem [shape: s32[128,128], index: 1, kind: input, shape index: {}]
  %s2 = inlined_call_operand.hbm [shape: s32[128,128], index: 2, kind: input, shape index: {}]
  %s3 = inlined_call_operand.hbm [shape: f32[4,8], index: 3, kind: input, shape index: {}]
  %s4 = inlined_call_operand.hbm [shape: f32[4,8], index: 4, kind: input, shape index: {}]
  %s5 = inlined_call_operand.hbm [shape: f32[1,8], index: 5, kind: input, shape index: {}]
  %s6 = inlined_call_operand.vmem [shape: f32[8,8], index: 6, kind: input, shape index: {}]
  %s7 = inlined_call_operand.hbm [shape: f32[1,8], index: 7, kind: input, shape index: {}]
  %s8 = inlined_call_operand.hbm [shape: f32[4,8], index: 8, kind: input, shape index: {}]
  %s9 = inlined_call_operand.hbm [shape: f32[1,8], index: 9, kind: input, shape index: {}]
  %s10 = inlined_call_operand.vmem [shape: f32[8,16], index: 10, kind: input, shape index: {}]
  %s11 = inlined_call_operand.vmem [shape: f32[8,16], index: 11, kind: input, shape index: {}]
  %s12 = inlined_call_operand.vmem [shape: f32[1,16], index: 12, kind: input, shape index: {}]
  %s13 = inlined_call_operand.vmem [shape: f32[16,16], index: 13, kind: input, shape index: {}]
  %s14 = inlined_call_operand.vmem [shape: f32[1,16], index: 14, kind: input, shape index: {}]
  %s15 = inlined_call_operand.vmem [shape: f32[8,16], index: 15, kind: input, shape index: {}]
  %s16 = inlined_call_operand.vmem [shape: f32[1,16], index: 16, kind: input, shape index: {}]
  %s17 = inlined_call_operand.vmem [shape: f32[16,32], index: 17, kind: input, shape index: {}]
  %s18 = inlined_call_operand.vmem [shape: f32[1,32], index: 18, kind: input, shape index: {}]
  %s19 = inlined_call_operand.vmem [shape: f32[32,32], index: 19, kind: input, shape index: {}]
  %s20 = inlined_call_operand.vmem [shape: f32[1,32], index: 20, kind: input, shape index: {}]
  %s21 = inlined_call_operand.vmem [shape: f32[32,2], index: 21, kind: input, shape index: {}]
  %s22 = inlined_call_operand.vmem [shape: f32[1,2], index: 22, kind: input, shape index: {}]
  %s23 = inlined_call_operand.vmem [shape: f32[8,2], index: 23, kind: output, shape index: {}]
  %s24 = sld [smem:[#allocation0]]
  $region130: #{tpu_custom_call.1} parent=0
    _
  %s26 = ssub.s32 1, %s24
  %s27 = scalar_select 0, %s26, %s24
  $region1: #{tpu_custom_call.1} parent=0
    #allocation2 [shape = 'u8[65536]{0}', space=vmem, size = 0x10000, scoped, tag = 'input window, operand 2, single buffered']
    #allocation3 [shape = 's32[1]{0}', space=sflag, size = 0x4, scoped, tag = 'scoped memory for tpu_custom_call.1']
    #allocation4 [shape = 'u8[2048]{0}', space=vmem, size = 0x800, scoped, tag = 'input window, operand 3, single buffered']
    #allocation5 [shape = 's32[1]{0}', space=sflag, size = 0x4, scoped, tag = 'scoped memory for tpu_custom_call.1']
    #allocation6 [shape = 'u8[2048]{0}', space=vmem, size = 0x800, scoped, tag = 'input window, operand 4, single buffered']
    #allocation7 [shape = 'u8[512]{0}', space=vmem, size = 0x400, scoped, tag = 'input window, operand 5, single buffered']
    #allocation8 [shape = 's32[1]{0}', space=sflag, size = 0x4, scoped, tag = 'scoped memory for tpu_custom_call.1']
    #allocation9 [shape = 'u8[512]{0}', space=vmem, size = 0x400, scoped, tag = 'input window, operand 7, single buffered']
    #allocation10 [shape = 'u8[2048]{0}', space=vmem, size = 0x800, scoped, tag = 'input window, operand 8, single buffered']
    #allocation11 [shape = 's32[1]{0}', space=sflag, size = 0x4, scoped, tag = 'scoped memory for tpu_custom_call.1']
    #allocation12 [shape = 'u8[512]{0}', space=vmem, size = 0x400, scoped, tag = 'input window, operand 9, single buffered']
    %28 = vsyncpa [#allocation3], 0
    %29 = vsyncpa [#allocation5], 0
    %30 = vsyncpa [#allocation8], 0
    %31 = vsyncpa [#allocation11], 0
    // Predicated region
    $region2: #{tpu_custom_call.1} parent=1 // pred_check
      _
    $region3: #{tpu_custom_call.1} parent=1 // pred_check_branch
      %33 = sbr.rel (0) target = $region5
    $region4: #{tpu_custom_call.1} parent=1 // pred_region
      _
    $region5: #{tpu_custom_call.1} parent=1 // pred_fallthru
      _
    // Predicated region
    $region6: #{tpu_custom_call.1} parent=1 // pred_check
      _
    $region7: #{tpu_custom_call.1} parent=1 // pred_check_branch
      %35 = sbr.rel (0) target = $region9
    $region8: #{tpu_custom_call.1} parent=1 // pred_region
      _
    $region9: #{tpu_custom_call.1} parent=1 // pred_fallthru
      _
    // Predicated region
    $region10: #{tpu_custom_call.1} parent=1 // pred_check
      _
    $region11: #{tpu_custom_call.1} parent=1 // pred_check_branch
      %37 = sbr.rel (0) target = $region13
    $region12: #{tpu_custom_call.1} parent=1 // pred_region
      %s39 = ssub.s32 2048, 2048
      %40 = vsyncadd [#allocation3], %s39
      %s41 = sshll.u32 [#allocation2], 4
      %s42 = int_to_ptr.vmem [resolvable:$true] %s41
      %47 = dma.hbm_to_vmem [thread:$0]  %s2, 2048, %s42, [#allocation3], 128, 128, 8
    $region13: #{tpu_custom_call.1} parent=1 // pred_fallthru
      _
    // Predicated region
    $region14: #{tpu_custom_call.1} parent=1 // pred_check
      _
    $region15: #{tpu_custom_call.1} parent=1 // pred_check_branch
      %49 = sbr.rel (0) target = $region17
    $region16: #{tpu_custom_call.1} parent=1 // pred_region
      %s51 = ssub.s32 64, 64
      %52 = vsyncadd [#allocation5], %s51
      %s54 = sshll.u32 [#allocation4], 4
      %s55 = int_to_ptr.vmem [resolvable:$true] %s54
      %57 = dma.hbm_to_vmem [thread:$0]  %s3, 64, %s55, [#allocation5]
    $region17: #{tpu_custom_call.1} parent=1 // pred_fallthru
      _
    // Predicated region
    $region18: #{tpu_custom_call.1} parent=1 // pred_check
      _
    $region19: #{tpu_custom_call.1} parent=1 // pred_check_branch
      %59 = sbr.rel (0) target = $region21
    $region20: #{tpu_custom_call.1} parent=1 // pred_region
      %s61 = ssub.s32 64, 64
      %62 = vsyncadd [#allocation5], %s61
      %s64 = sshll.u32 [#allocation6], 4
      %s65 = int_to_ptr.vmem [resolvable:$true] %s64
      %67 = dma.hbm_to_vmem [thread:$0]  %s4, 64, %s65, [#allocation5]
    $region21: #{tpu_custom_call.1} parent=1 // pred_fallthru
      _
    // Predicated region
    $region22: #{tpu_custom_call.1} parent=1 // pred_check
      _
    $region23: #{tpu_custom_call.1} parent=1 // pred_check_branch
      %69 = sbr.rel (0) target = $region25
    $region24: #{tpu_custom_call.1} parent=1 // pred_region
      %s71 = ssub.s32 16, 16
      %72 = vsyncadd [#allocation8], %s71
      %s74 = sshll.u32 [#allocation7], 4
      %s75 = int_to_ptr.vmem [resolvable:$true] %s74
      %77 = dma.hbm_to_vmem [thread:$0]  %s5, 16, %s75, [#allocation8]
    $region25: #{tpu_custom_call.1} parent=1 // pred_fallthru
      _
    // Predicated region
    $region26: #{tpu_custom_call.1} parent=1 // pred_check
      _
    $region27: #{tpu_custom_call.1} parent=1 // pred_check_branch
      %79 = sbr.rel (0) target = $region29
    $region28: #{tpu_custom_call.1} parent=1 // pred_region
      _
    $region29: #{tpu_custom_call.1} parent=1 // pred_fallthru
      _
    // Predicated region
    $region30: #{tpu_custom_call.1} parent=1 // pred_check
      _
    $region31: #{tpu_custom_call.1} parent=1 // pred_check_branch
      %81 = sbr.rel (0) target = $region33
    $region32: #{tpu_custom_call.1} parent=1 // pred_region
      %s83 = ssub.s32 16, 16
      %84 = vsyncadd [#allocation8], %s83
      %s86 = sshll.u32 [#allocation9], 4
      %s87 = int_to_ptr.vmem [resolvable:$true] %s86
      %89 = dma.hbm_to_vmem [thread:$0]  %s7, 16, %s87, [#allocation8]
    $region33: #{tpu_custom_call.1} parent=1 // pred_fallthru
      _
    // Predicated region
    $region34: #{tpu_custom_call.1} parent=1 // pred_check
      _
    $region35: #{tpu_custom_call.1} parent=1 // pred_check_branch
      %91 = sbr.rel (0) target = $region37
    $region36: #{tpu_custom_call.1} parent=1 // pred_region
      %s93 = ssub.s32 64, 64
      %94 = vsyncadd [#allocation11], %s93
      %s96 = sshll.u32 [#allocation10], 4
      %s97 = int_to_ptr.vmem [resolvable:$true] %s96
      %99 = dma.hbm_to_vmem [thread:$0]  %s8, 64, %s97, [#allocation11]
    $region37: #{tpu_custom_call.1} parent=1 // pred_fallthru
      _
    // Predicated region
    $region38: #{tpu_custom_call.1} parent=1 // pred_check
      _
    $region39: #{tpu_custom_call.1} parent=1 // pred_check_branch
      %101 = sbr.rel (0) target = $region41
    $region40: #{tpu_custom_call.1} parent=1 // pred_region
      %s103 = ssub.s32 16, 16
      %104 = vsyncadd [#allocation11], %s103
      %s106 = sshll.u32 [#allocation12], 4
      %s107 = int_to_ptr.vmem [resolvable:$true] %s106
      %109 = dma.hbm_to_vmem [thread:$0]  %s9, 16, %s107, [#allocation11]
    $region41: #{tpu_custom_call.1} parent=1 // pred_fallthru
      _
    // Predicated region
    $region42: #{tpu_custom_call.1} parent=1 // pred_check
      _
    $region43: #{tpu_custom_call.1} parent=1 // pred_check_branch
      %111 = sbr.rel (0) target = $region45
    $region44: #{tpu_custom_call.1} parent=1 // pred_region
      _
    $region45: #{tpu_custom_call.1} parent=1 // pred_fallthru
      _
    // Predicated region
    $region46: #{tpu_custom_call.1} parent=1 // pred_check
      _
    $region47: #{tpu_custom_call.1} parent=1 // pred_check_branch
      %113 = sbr.rel (0) target = $region49
    $region48: #{tpu_custom_call.1} parent=1 // pred_region
      _
    $region49: #{tpu_custom_call.1} parent=1 // pred_fallthru
      _
    // Predicated region
    $region50: #{tpu_custom_call.1} parent=1 // pred_check
      _
    $region51: #{tpu_custom_call.1} parent=1 // pred_check_branch
      %115 = sbr.rel (0) target = $region53
    $region52: #{tpu_custom_call.1} parent=1 // pred_region
      _
    $region53: #{tpu_custom_call.1} parent=1 // pred_fallthru
      _
    // Predicated region
    $region54: #{tpu_custom_call.1} parent=1 // pred_check
      _
    $region55: #{tpu_custom_call.1} parent=1 // pred_check_branch
      %117 = sbr.rel (0) target = $region57
    $region56: #{tpu_custom_call.1} parent=1 // pred_region
      _
    $region57: #{tpu_custom_call.1} parent=1 // pred_fallthru
      _
    // Predicated region
    $region58: #{tpu_custom_call.1} parent=1 // pred_check
      _
    $region59: #{tpu_custom_call.1} parent=1 // pred_check_branch
      %119 = sbr.rel (0) target = $region61
    $region60: #{tpu_custom_call.1} parent=1 // pred_region
      _
    $region61: #{tpu_custom_call.1} parent=1 // pred_fallthru
      _
    // Predicated region
    $region62: #{tpu_custom_call.1} parent=1 // pred_check
      _
    $region63: #{tpu_custom_call.1} parent=1 // pred_check_branch
      %121 = sbr.rel (0) target = $region65
    $region64: #{tpu_custom_call.1} parent=1 // pred_region
      _
    $region65: #{tpu_custom_call.1} parent=1 // pred_fallthru
      _
    // Predicated region
    $region66: #{tpu_custom_call.1} parent=1 // pred_check
      _
    $region67: #{tpu_custom_call.1} parent=1 // pred_check_branch
      %123 = sbr.rel (0) target = $region69
    $region68: #{tpu_custom_call.1} parent=1 // pred_region
      _
    $region69: #{tpu_custom_call.1} parent=1 // pred_fallthru
      _
    // Predicated region
    $region70: #{tpu_custom_call.1} parent=1 // pred_check
      _
    $region71: #{tpu_custom_call.1} parent=1 // pred_check_branch
      %125 = sbr.rel (0) target = $region73
    $region72: #{tpu_custom_call.1} parent=1 // pred_region
      _
    $region73: #{tpu_custom_call.1} parent=1 // pred_fallthru
      _
    // Predicated region
    $region74: #{tpu_custom_call.1} parent=1 // pred_check
      _
    $region75: #{tpu_custom_call.1} parent=1 // pred_check_branch
      %127 = sbr.rel (0) target = $region77
    $region76: #{tpu_custom_call.1} parent=1 // pred_region
      _
    $region77: #{tpu_custom_call.1} parent=1 // pred_fallthru
      _
    // Predicated region
    $region78: #{tpu_custom_call.1} parent=1 // pred_check
      _
    $region79: #{tpu_custom_call.1} parent=1 // pred_check_branch
      %129 = sbr.rel (0) target = $region81
    $region80: #{tpu_custom_call.1} parent=1 // pred_region
      _
    $region81: #{tpu_custom_call.1} parent=1 // pred_fallthru
      _
    // Predicated region
    $region82: #{tpu_custom_call.1} parent=1 // pred_check
      _
    $region83: #{tpu_custom_call.1} parent=1 // pred_check_branch
      %131 = sbr.rel (0) target = $region85
    $region84: #{tpu_custom_call.1} parent=1 // pred_region
      _
    $region85: #{tpu_custom_call.1} parent=1 // pred_fallthru
      _
    // Predicated region
    $region86: #{tpu_custom_call.1} parent=1 // pred_check
      _
    $region87: #{tpu_custom_call.1} parent=1 // pred_check_branch
      %133 = sbr.rel (0) target = $region89
    $region88: #{tpu_custom_call.1} parent=1 // pred_region
      _
    $region89: #{tpu_custom_call.1} parent=1 // pred_fallthru
      _
    // Predicated region
    $region90: #{tpu_custom_call.1} parent=1 // pred_check
      _
    $region91: #{tpu_custom_call.1} parent=1 // pred_check_branch
      %135 = sbr.rel (0) target = $region93
    $region92: #{tpu_custom_call.1} parent=1 // pred_region
      _
    $region93: #{tpu_custom_call.1} parent=1 // pred_fallthru
      _
    // Predicated region
    $region94: #{tpu_custom_call.1} parent=1 // pred_check
      _
    $region95: #{tpu_custom_call.1} parent=1 // pred_check_branch
      %137 = sbr.rel (0) target = $region97
    $region96: #{tpu_custom_call.1} parent=1 // pred_region
      %138 = dma.done [#allocation3], 2048
    $region97: #{tpu_custom_call.1} parent=1 // pred_fallthru
      _
    // Predicated region
    $region98: #{tpu_custom_call.1} parent=1 // pred_check
      _
    $region99: #{tpu_custom_call.1} parent=1 // pred_check_branch
      %140 = sbr.rel (0) target = $region101
    $region100: #{tpu_custom_call.1} parent=1 // pred_region
      %141 = dma.done [#allocation5], 64
    $region101: #{tpu_custom_call.1} parent=1 // pred_fallthru
      _
    // Predicated region
    $region102: #{tpu_custom_call.1} parent=1 // pred_check
      _
    $region103: #{tpu_custom_call.1} parent=1 // pred_check_branch
      %143 = sbr.rel (0) target = $region105
    $region104: #{tpu_custom_call.1} parent=1 // pred_region
      %144 = dma.done [#allocation5], 64
    $region105: #{tpu_custom_call.1} parent=1 // pred_fallthru
      _
    // Predicated region
    $region106: #{tpu_custom_call.1} parent=1 // pred_check
      _
    $region107: #{tpu_custom_call.1} parent=1 // pred_check_branch
      %146 = sbr.rel (0) target = $region109
    $region108: #{tpu_custom_call.1} parent=1 // pred_region
      %147 = dma.done [#allocation8], 16
    $region109: #{tpu_custom_call.1} parent=1 // pred_fallthru
      _
    // Predicated region
    $region110: #{tpu_custom_call.1} parent=1 // pred_check
      _
    $region111: #{tpu_custom_call.1} parent=1 // pred_check_branch
      %149 = sbr.rel (0) target = $region113
    $region112: #{tpu_custom_call.1} parent=1 // pred_region
      %150 = dma.done [#allocation8], 16
    $region113: #{tpu_custom_call.1} parent=1 // pred_fallthru
      _
    // Predicated region
    $region114: #{tpu_custom_call.1} parent=1 // pred_check
      _
    $region115: #{tpu_custom_call.1} parent=1 // pred_check_branch
      %152 = sbr.rel (0) target = $region117
    $region116: #{tpu_custom_call.1} parent=1 // pred_region
      %153 = dma.done [#allocation11], 64
    $region117: #{tpu_custom_call.1} parent=1 // pred_fallthru
      _
    // Predicated region
    $region118: #{tpu_custom_call.1} parent=1 // pred_check
      _
    $region119: #{tpu_custom_call.1} parent=1 // pred_check_branch
      %155 = sbr.rel (0) target = $region121
    $region120: #{tpu_custom_call.1} parent=1 // pred_region
      %156 = dma.done [#allocation11], 16
    $region121: #{tpu_custom_call.1} parent=1 // pred_fallthru
      _
    %v157 = vld [vmem:[#allocation4] sm:$0xf]
    %v158 = vld [vmem:[#allocation6] sm:$0xf]
    %v159 = vld [vmem:[#allocation7] sm:$0x1]
    %v160 = vld [vmem:[%s6] sm:$0xff]
    %v161 = vld [vmem:[#allocation9] sm:$0x1]
    %v162 = vld [vmem:[#allocation10] sm:$0xf]
    %v163 = vld [vmem:[#allocation12] sm:$0x1]
    %v164 = vld [vmem:[%s10] sm:$0xff]
    %v165 = vld [vmem:[%s11] sm:$0xff]
    %v166 = vld [vmem:[%s12] sm:$0x1]
    %v167 = vld [vmem:[%s13] sm:$0xff]
    %v168 = vld [vmem:[%s13 + $0x8] sm:$0xff]
    %v169 = vld [vmem:[%s14] sm:$0x1]
    %v170 = vld [vmem:[%s15] sm:$0xff]
    %v171 = vld [vmem:[%s16] sm:$0x1]
    %v172 = vld [vmem:[%s17] sm:$0xff]
    %v173 = vld [vmem:[%s17 + $0x8] sm:$0xff]
    %v174 = vld [vmem:[%s18] sm:$0x1]
    %v175 = vld [vmem:[%s19] sm:$0xff]
    %v176 = vld [vmem:[%s19 + $0x8] sm:$0xff]
    %v177 = vld [vmem:[%s19 + $0x10] sm:$0xff]
    %v178 = vld [vmem:[%s19 + $0x18] sm:$0xff]
    %v179 = vld [vmem:[%s20] sm:$0x1]
    %v180 = vld [vmem:[%s21] sm:$0xff]
    %v181 = vld [vmem:[%s21 + $0x8] sm:$0xff]
    %v182 = vld [vmem:[%s21 + $0x10] sm:$0xff]
    %v183 = vld [vmem:[%s21 + $0x18] sm:$0xff]
    %v184 = vld [vmem:[%s22] sm:$0x1]
    %v185 = vld [vmem:[%s1] sm:$0xff]
    %v186 = vld [vmem:[%s1 + $0x8] sm:$0xff]
    %v187 = vld [vmem:[%s1 + $0x10] sm:$0xff]
    %v188 = vld [vmem:[%s1 + $0x18] sm:$0xff]
    %v189 = vld [vmem:[%s1 + $0x20] sm:$0xff]
    %v190 = vld [vmem:[%s1 + $0x28] sm:$0xff]
    %v191 = vld [vmem:[%s1 + $0x30] sm:$0xff]
    %v192 = vld [vmem:[%s1 + $0x38] sm:$0xff]
    %v193 = vld [vmem:[%s1 + $0x40] sm:$0xff]
    %v194 = vld [vmem:[%s1 + $0x48] sm:$0xff]
    %v195 = vld [vmem:[%s1 + $0x50] sm:$0xff]
    %v196 = vld [vmem:[%s1 + $0x58] sm:$0xff]
    %v197 = vld [vmem:[%s1 + $0x60] sm:$0xff]
    %v198 = vld [vmem:[%s1 + $0x68] sm:$0xff]
    %v199 = vld [vmem:[%s1 + $0x70] sm:$0xff]
    %v200 = vld [vmem:[%s1 + $0x78] sm:$0xff]
    %v201 = vld [vmem:[#allocation2] sm:$0xff]
    %v202 = vld [vmem:[#allocation2 + $0x8] sm:$0xff]
    %v203 = vld [vmem:[#allocation2 + $0x10] sm:$0xff]
    %v204 = vld [vmem:[#allocation2 + $0x18] sm:$0xff]
    %v205 = vld [vmem:[#allocation2 + $0x20] sm:$0xff]
    %v206 = vld [vmem:[#allocation2 + $0x28] sm:$0xff]
    %v207 = vld [vmem:[#allocation2 + $0x30] sm:$0xff]
    %v208 = vld [vmem:[#allocation2 + $0x38] sm:$0xff]
    %v209 = vld [vmem:[#allocation2 + $0x40] sm:$0xff]
    %v210 = vld [vmem:[#allocation2 + $0x48] sm:$0xff]
    %v211 = vld [vmem:[#allocation2 + $0x50] sm:$0xff]
    %v212 = vld [vmem:[#allocation2 + $0x58] sm:$0xff]
    %v213 = vld [vmem:[#allocation2 + $0x60] sm:$0xff]
    %v214 = vld [vmem:[#allocation2 + $0x68] sm:$0xff]
    %v215 = vld [vmem:[#allocation2 + $0x70] sm:$0xff]
    %v216 = vld [vmem:[#allocation2 + $0x78] sm:$0xff]
    %v217 = vld [vmem:[%s0] sm:$0xff]
    %v218 = vld [vmem:[%s0 + $0x8] sm:$0xff]
    %v219 = vld [vmem:[%s0 + $0x10] sm:$0xff]
    %v220 = vld [vmem:[%s0 + $0x18] sm:$0xff]
    %v221 = vld [vmem:[%s0 + $0x20] sm:$0xff]
    %v222 = vld [vmem:[%s0 + $0x28] sm:$0xff]
    %v223 = vld [vmem:[%s0 + $0x30] sm:$0xff]
    %v224 = vld [vmem:[%s0 + $0x38] sm:$0xff]
    %v225 = vld [vmem:[%s0 + $0x40] sm:$0xff]
    %v226 = vld [vmem:[%s0 + $0x48] sm:$0xff]
    %v227 = vld [vmem:[%s0 + $0x50] sm:$0xff]
    %v228 = vld [vmem:[%s0 + $0x58] sm:$0xff]
    %v229 = vld [vmem:[%s0 + $0x60] sm:$0xff]
    %v230 = vld [vmem:[%s0 + $0x68] sm:$0xff]
    %v231 = vld [vmem:[%s0 + $0x70] sm:$0xff]
    %v232 = vld [vmem:[%s0 + $0x78] sm:$0xff]
    %249 = vrot.lane.b32.xlu0 %v217, 126
    %v250 = vpop.permute.xlu0 %249
    %251 = vrot.lane.b32.xlu0 %v218, 126
    %v252 = vpop.permute.xlu0 %251
    %253 = vrot.lane.b32.xlu0 %v219, 126
    %v254 = vpop.permute.xlu0 %253
    %255 = vrot.lane.b32.xlu0 %v220, 126
    %v256 = vpop.permute.xlu0 %255
    %257 = vrot.lane.b32.xlu0 %v221, 126
    %v258 = vpop.permute.xlu0 %257
    %259 = vrot.lane.b32.xlu0 %v222, 126
    %v260 = vpop.permute.xlu0 %259
    %261 = vrot.lane.b32.xlu0 %v223, 126
    %v262 = vpop.permute.xlu0 %261
    %263 = vrot.lane.b32.xlu0 %v224, 126
    %v264 = vpop.permute.xlu0 %263
    %265 = vrot.lane.b32.xlu0 %v225, 126
    %v266 = vpop.permute.xlu0 %265
    %267 = vrot.lane.b32.xlu0 %v226, 126
    %v268 = vpop.permute.xlu0 %267
    %269 = vrot.lane.b32.xlu0 %v227, 126
    %v270 = vpop.permute.xlu0 %269
    %271 = vrot.lane.b32.xlu0 %v228, 126
    %v272 = vpop.permute.xlu0 %271
    %273 = vrot.lane.b32.xlu0 %v229, 126
    %v274 = vpop.permute.xlu0 %273
    %275 = vrot.lane.b32.xlu0 %v230, 126
    %v276 = vpop.permute.xlu0 %275
    %277 = vrot.lane.b32.xlu0 %v231, 126
    %v278 = vpop.permute.xlu0 %277
    %279 = vrot.lane.b32.xlu0 %v232, 126
    %v280 = vpop.permute.xlu0 %279
    %vm281 = vcmask 31744
    %v282 = vsel %vm281, %v250, 0
    %v284 = vsel %vm281, %v252, 0
    %v286 = vsel %vm281, %v254, 0
    %v288 = vsel %vm281, %v256, 0
    %v290 = vsel %vm281, %v258, 0
    %v292 = vsel %vm281, %v260, 0
    %v294 = vsel %vm281, %v262, 0
    %v296 = vsel %vm281, %v264, 0
    %v298 = vsel %vm281, %v266, 0
    %v300 = vsel %vm281, %v268, 0
    %v302 = vsel %vm281, %v270, 0
    %v304 = vsel %vm281, %v272, 0
    %v306 = vsel %vm281, %v274, 0
    %v308 = vsel %vm281, %v276, 0
    %v310 = vsel %vm281, %v278, 0
    %v312 = vsel %vm281, %v280, 0
    %vm314 = vcmask 1043456
    %v316 = vsel %vm314, %v158, 0
    %318 = vmatprep.subr.mxu0 0.0
    %319 = vmatpush1.msra.mxu0 0.0
    %320 = vmatprep.subr.mxu0 0.0
    %321 = vmatpush1.msra.mxu0 0.0
    %322 = vmatprep.subr.mxu0 0.0
    %323 = vmatpush1.msra.mxu0 0.0
    %324 = vmatprep.subr.mxu0 0.0
    %325 = vmatpush1.msra.mxu0 0.0
    %326 = vmatprep.subr.mxu0 0.0
    %327 = vmatpush1.msra.mxu0 0.0
    %328 = vmatprep.subr.mxu0 0.0
    %329 = vmatpush1.msra.mxu0 0.0
    %330 = vmatprep.subr.mxu0 0.0
    %331 = vmatpush1.msra.mxu0 0.0
    %332 = vmatprep.subr.mxu0 0.0
    %333 = vmatpush1.msra.mxu0 0.0
    %334 = vmatprep.subr.mxu0 0.0
    %335 = vmatpush1.msra.mxu0 0.0
    %336 = vmatprep.subr.mxu0 0.0
    %337 = vmatpush1.msra.mxu0 0.0
    %338 = vmatprep.subr.mxu0 0.0
    %339 = vmatpush1.msra.mxu0 0.0
    %340 = vmatprep.subr.mxu0 0.0
    %341 = vmatpush1.msra.mxu0 0.0
    %342 = vmatprep.subr.mxu0 0.0
    %343 = vmatpush1.msra.mxu0 0.0
    %344 = vmatprep.subr.mxu0 0.0
    %345 = vmatpush1.msra.mxu0 0.0
    %346 = vmatprep.subr.mxu0 0.0
    %347 = vmatpush1.msra.mxu0 0.0
    %348 = vmatprep.subr.mxu0 0.0
    %349 = vmatpush1.msra.mxu0 %v316
    %350 = vmatprep.subr.mxu0 0.0
    %351 = vmatpush2.msra.mxu0 0.0
    %352 = vmatprep.subr.mxu0 0.0
    %353 = vmatpush2.msra.mxu0 0.0
    %354 = vmatprep.subr.mxu0 0.0
    %355 = vmatpush2.msra.mxu0 0.0
    %356 = vmatprep.subr.mxu0 0.0
    %357 = vmatpush2.msra.mxu0 0.0
    %358 = vmatprep.subr.mxu0 0.0
    %359 = vmatpush2.msra.mxu0 0.0
    %360 = vmatprep.subr.mxu0 0.0
    %361 = vmatpush2.msra.mxu0 0.0
    %362 = vmatprep.subr.mxu0 0.0
    %363 = vmatpush2.msra.mxu0 0.0
    %364 = vmatprep.subr.mxu0 0.0
    %365 = vmatpush2.msra.mxu0 0.0
    %366 = vmatprep.subr.mxu0 0.0
    %367 = vmatpush2.msra.mxu0 0.0
    %368 = vmatprep.subr.mxu0 0.0
    %369 = vmatpush2.msra.mxu0 0.0
    %370 = vmatprep.subr.mxu0 0.0
    %371 = vmatpush2.msra.mxu0 0.0
    %372 = vmatprep.subr.mxu0 0.0
    %373 = vmatpush2.msra.mxu0 0.0
    %374 = vmatprep.subr.mxu0 0.0
    %375 = vmatpush2.msra.mxu0 0.0
    %376 = vmatprep.subr.mxu0 0.0
    %377 = vmatpush2.msra.mxu0 0.0
    %378 = vmatprep.subr.mxu0 0.0
    %379 = vmatpush2.msra.mxu0 0.0
    %380 = vmatprep.subr.mxu0 0.0
    %381 = vmatpush2.msra.mxu0 0.0
    %382 = vmatprep.mubr.f32.mxu0 0.0
    %383 = vmatmul.mubr.f32.gmra.mxu0 %v282
    %v384 = vpop.f32.mrf.mxu0
    %v385 = vadd.f32 0.0, %v384
    %v386 = vpop.f32.mrf.mxu0
    %387 = vmatprep.mubr.f32.mxu0 0.0
    %388 = vmatmul.mubr.f32.gmra.mxu0 %v284
    %v389 = vpop.f32.mrf.mxu0
    %v390 = vadd.f32 0.0, %v389
    %v391 = vpop.f32.mrf.mxu0
    %392 = vmatprep.mubr.f32.mxu0 0.0
    %393 = vmatmul.mubr.f32.gmra.mxu0 %v286
    %v394 = vpop.f32.mrf.mxu0
    %v395 = vadd.f32 0.0, %v394
    %v396 = vpop.f32.mrf.mxu0
    %397 = vmatprep.mubr.f32.mxu0 0.0
    %398 = vmatmul.mubr.f32.gmra.mxu0 %v288
    %v399 = vpop.f32.mrf.mxu0
    %v400 = vadd.f32 0.0, %v399
    %v401 = vpop.f32.mrf.mxu0
    %402 = vmatprep.mubr.f32.mxu0 0.0
    %403 = vmatmul.mubr.f32.gmra.mxu0 %v290
    %v404 = vpop.f32.mrf.mxu0
    %v405 = vadd.f32 0.0, %v404
    %v406 = vpop.f32.mrf.mxu0
    %407 = vmatprep.mubr.f32.mxu0 0.0
    %408 = vmatmul.mubr.f32.gmra.mxu0 %v292
    %v409 = vpop.f32.mrf.mxu0
    %v410 = vadd.f32 0.0, %v409
    %v411 = vpop.f32.mrf.mxu0
    %412 = vmatprep.mubr.f32.mxu0 0.0
    %413 = vmatmul.mubr.f32.gmra.mxu0 %v294
    %v414 = vpop.f32.mrf.mxu0
    %v415 = vadd.f32 0.0, %v414
    %v416 = vpop.f32.mrf.mxu0
    %417 = vmatprep.mubr.f32.mxu0 0.0
    %418 = vmatmul.mubr.f32.gmra.mxu0 %v296
    %v419 = vpop.f32.mrf.mxu0
    %v420 = vadd.f32 0.0, %v419
    %v421 = vpop.f32.mrf.mxu0
    %422 = vmatprep.mubr.f32.mxu0 0.0
    %423 = vmatmul.mubr.f32.gmra.mxu0 %v298
    %v424 = vpop.f32.mrf.mxu0
    %v425 = vadd.f32 0.0, %v424
    %v426 = vpop.f32.mrf.mxu0
    %427 = vmatprep.mubr.f32.mxu0 0.0
    %428 = vmatmul.mubr.f32.gmra.mxu0 %v300
    %v429 = vpop.f32.mrf.mxu0
    %v430 = vadd.f32 0.0, %v429
    %v431 = vpop.f32.mrf.mxu0
    %432 = vmatprep.mubr.f32.mxu0 0.0
    %433 = vmatmul.mubr.f32.gmra.mxu0 %v302
    %v434 = vpop.f32.mrf.mxu0
    %v435 = vadd.f32 0.0, %v434
    %v436 = vpop.f32.mrf.mxu0
    %437 = vmatprep.mubr.f32.mxu0 0.0
    %438 = vmatmul.mubr.f32.gmra.mxu0 %v304
    %v439 = vpop.f32.mrf.mxu0
    %v440 = vadd.f32 0.0, %v439
    %v441 = vpop.f32.mrf.mxu0
    %442 = vmatprep.mubr.f32.mxu0 0.0
    %443 = vmatmul.mubr.f32.gmra.mxu0 %v306
    %v444 = vpop.f32.mrf.mxu0
    %v445 = vadd.f32 0.0, %v444
    %v446 = vpop.f32.mrf.mxu0
    %447 = vmatprep.mubr.f32.mxu0 0.0
    %448 = vmatmul.mubr.f32.gmra.mxu0 %v308
    %v449 = vpop.f32.mrf.mxu0
    %v450 = vadd.f32 0.0, %v449
    %v451 = vpop.f32.mrf.mxu0
    %452 = vmatprep.mubr.f32.mxu0 0.0
    %453 = vmatmul.mubr.f32.gmra.mxu0 %v310
    %v454 = vpop.f32.mrf.mxu0
    %v455 = vadd.f32 0.0, %v454
    %v456 = vpop.f32.mrf.mxu0
    %457 = vmatprep.mubr.f32.mxu0 0.0
    %458 = vmatmul.mubr.f32.gmra.mxu0 %v312
    %v459 = vpop.f32.mrf.mxu0
    %v460 = vadd.f32 0.0, %v459
    %v461 = vpop.f32.mrf.mxu0
    %462 = vdwg.mxu0
    %v464 = vlaneseq
    %v465 = vshrl.u32 %v464, 7
    %v466 = vsub.s32 0, %v465
    %v467 = vrot.slane %v159, %v466
    %v470 = vsel %vm314, %v157, 0
    %472 = vmatprep.subr.mxu0 0.0
    %473 = vmatpush1.msra.mxu0 0.0
    %474 = vmatprep.subr.mxu0 0.0
    %475 = vmatpush1.msra.mxu0 0.0
    %476 = vmatprep.subr.mxu0 0.0
    %477 = vmatpush1.msra.mxu0 0.0
    %478 = vmatprep.subr.mxu0 0.0
    %479 = vmatpush1.msra.mxu0 0.0
    %480 = vmatprep.subr.mxu0 0.0
    %481 = vmatpush1.msra.mxu0 0.0
    %482 = vmatprep.subr.mxu0 0.0
    %483 = vmatpush1.msra.mxu0 0.0
    %484 = vmatprep.subr.mxu0 0.0
    %485 = vmatpush1.msra.mxu0 0.0
    %486 = vmatprep.subr.mxu0 0.0
    %487 = vmatpush1.msra.mxu0 0.0
    %488 = vmatprep.subr.mxu0 0.0
    %489 = vmatpush1.msra.mxu0 0.0
    %490 = vmatprep.subr.mxu0 0.0
    %491 = vmatpush1.msra.mxu0 0.0
    %492 = vmatprep.subr.mxu0 0.0
    %493 = vmatpush1.msra.mxu0 0.0
    %494 = vmatprep.subr.mxu0 0.0
    %495 = vmatpush1.msra.mxu0 0.0
    %496 = vmatprep.subr.mxu0 0.0
    %497 = vmatpush1.msra.mxu0 0.0
    %498 = vmatprep.subr.mxu0 0.0
    %499 = vmatpush1.msra.mxu0 0.0
    %500 = vmatprep.subr.mxu0 0.0
    %501 = vmatpush1.msra.mxu0 0.0
    %502 = vmatprep.subr.mxu0 0.0
    %503 = vmatpush1.msra.mxu0 %v470
    %504 = vmatprep.subr.mxu0 0.0
    %505 = vmatpush2.msra.mxu0 0.0
    %506 = vmatprep.subr.mxu0 0.0
    %507 = vmatpush2.msra.mxu0 0.0
    %508 = vmatprep.subr.mxu0 0.0
    %509 = vmatpush2.msra.mxu0 0.0
    %510 = vmatprep.subr.mxu0 0.0
    %511 = vmatpush2.msra.mxu0 0.0
    %512 = vmatprep.subr.mxu0 0.0
    %513 = vmatpush2.msra.mxu0 0.0
    %514 = vmatprep.subr.mxu0 0.0
    %515 = vmatpush2.msra.mxu0 0.0
    %516 = vmatprep.subr.mxu0 0.0
    %517 = vmatpush2.msra.mxu0 0.0
    %518 = vmatprep.subr.mxu0 0.0
    %519 = vmatpush2.msra.mxu0 0.0
    %520 = vmatprep.subr.mxu0 0.0
    %521 = vmatpush2.msra.mxu0 0.0
    %522 = vmatprep.subr.mxu0 0.0
    %523 = vmatpush2.msra.mxu0 0.0
    %524 = vmatprep.subr.mxu0 0.0
    %525 = vmatpush2.msra.mxu0 0.0
    %526 = vmatprep.subr.mxu0 0.0
    %527 = vmatpush2.msra.mxu0 0.0
    %528 = vmatprep.subr.mxu0 0.0
    %529 = vmatpush2.msra.mxu0 0.0
    %530 = vmatprep.subr.mxu0 0.0
    %531 = vmatpush2.msra.mxu0 0.0
    %532 = vmatprep.subr.mxu0 0.0
    %533 = vmatpush2.msra.mxu0 0.0
    %534 = vmatprep.subr.mxu0 0.0
    %535 = vmatpush2.msra.mxu0 0.0
    %536 = vmatprep.mubr.f32.mxu0 0.0
    %537 = vmatmul.mubr.f32.gmra.mxu0 %v282
    %v538 = vpop.f32.mrf.mxu0
    %v539 = vadd.f32 %v467, %v538
    %v540 = vpop.f32.mrf.mxu0
    %541 = vmatprep.mubr.f32.mxu0 0.0
    %542 = vmatmul.mubr.f32.gmra.mxu0 %v284
    %v543 = vpop.f32.mrf.mxu0
    %v544 = vadd.f32 %v467, %v543
    %v545 = vpop.f32.mrf.mxu0
    %546 = vmatprep.mubr.f32.mxu0 0.0
    %547 = vmatmul.mubr.f32.gmra.mxu0 %v286
    %v548 = vpop.f32.mrf.mxu0
    %v549 = vadd.f32 %v467, %v548
    %v550 = vpop.f32.mrf.mxu0
    %551 = vmatprep.mubr.f32.mxu0 0.0
    %552 = vmatmul.mubr.f32.gmra.mxu0 %v288
    %v553 = vpop.f32.mrf.mxu0
    %v554 = vadd.f32 %v467, %v553
    %v555 = vpop.f32.mrf.mxu0
    %556 = vmatprep.mubr.f32.mxu0 0.0
    %557 = vmatmul.mubr.f32.gmra.mxu0 %v290
    %v558 = vpop.f32.mrf.mxu0
    %v559 = vadd.f32 %v467, %v558
    %v560 = vpop.f32.mrf.mxu0
    %561 = vmatprep.mubr.f32.mxu0 0.0
    %562 = vmatmul.mubr.f32.gmra.mxu0 %v292
    %v563 = vpop.f32.mrf.mxu0
    %v564 = vadd.f32 %v467, %v563
    %v565 = vpop.f32.mrf.mxu0
    %566 = vmatprep.mubr.f32.mxu0 0.0
    %567 = vmatmul.mubr.f32.gmra.mxu0 %v294
    %v568 = vpop.f32.mrf.mxu0
    %v569 = vadd.f32 %v467, %v568
    %v570 = vpop.f32.mrf.mxu0
    %571 = vmatprep.mubr.f32.mxu0 0.0
    %572 = vmatmul.mubr.f32.gmra.mxu0 %v296
    %v573 = vpop.f32.mrf.mxu0
    %v574 = vadd.f32 %v467, %v573
    %v575 = vpop.f32.mrf.mxu0
    %576 = vmatprep.mubr.f32.mxu0 0.0
    %577 = vmatmul.mubr.f32.gmra.mxu0 %v298
    %v578 = vpop.f32.mrf.mxu0
    %v579 = vadd.f32 %v467, %v578
    %v580 = vpop.f32.mrf.mxu0
    %581 = vmatprep.mubr.f32.mxu0 0.0
    %582 = vmatmul.mubr.f32.gmra.mxu0 %v300
    %v583 = vpop.f32.mrf.mxu0
    %v584 = vadd.f32 %v467, %v583
    %v585 = vpop.f32.mrf.mxu0
    %586 = vmatprep.mubr.f32.mxu0 0.0
    %587 = vmatmul.mubr.f32.gmra.mxu0 %v302
    %v588 = vpop.f32.mrf.mxu0
    %v589 = vadd.f32 %v467, %v588
    %v590 = vpop.f32.mrf.mxu0
    %591 = vmatprep.mubr.f32.mxu0 0.0
    %592 = vmatmul.mubr.f32.gmra.mxu0 %v304
    %v593 = vpop.f32.mrf.mxu0
    %v594 = vadd.f32 %v467, %v593
    %v595 = vpop.f32.mrf.mxu0
    %596 = vmatprep.mubr.f32.mxu0 0.0
    %597 = vmatmul.mubr.f32.gmra.mxu0 %v306
    %v598 = vpop.f32.mrf.mxu0
    %v599 = vadd.f32 %v467, %v598
    %v600 = vpop.f32.mrf.mxu0
    %601 = vmatprep.mubr.f32.mxu0 0.0
    %602 = vmatmul.mubr.f32.gmra.mxu0 %v308
    %v603 = vpop.f32.mrf.mxu0
    %v604 = vadd.f32 %v467, %v603
    %v605 = vpop.f32.mrf.mxu0
    %606 = vmatprep.mubr.f32.mxu0 0.0
    %607 = vmatmul.mubr.f32.gmra.mxu0 %v310
    %v608 = vpop.f32.mrf.mxu0
    %v609 = vadd.f32 %v467, %v608
    %v610 = vpop.f32.mrf.mxu0
    %611 = vmatprep.mubr.f32.mxu0 0.0
    %612 = vmatmul.mubr.f32.gmra.mxu0 %v312
    %v613 = vpop.f32.mrf.mxu0
    %v614 = vadd.f32 %v467, %v613
    %v615 = vpop.f32.mrf.mxu0
    %616 = vdwg.mxu0
    %v617 = vmul.f32 %v217, %v217
    %v618 = vmul.f32 %v218, %v218
    %v619 = vmul.f32 %v219, %v219
    %v620 = vmul.f32 %v220, %v220
    %v621 = vmul.f32 %v221, %v221
    %v622 = vmul.f32 %v222, %v222
    %v623 = vmul.f32 %v223, %v223
    %v624 = vmul.f32 %v224, %v224
    %v625 = vmul.f32 %v225, %v225
    %v626 = vmul.f32 %v226, %v226
    %v627 = vmul.f32 %v227, %v227
    %v628 = vmul.f32 %v228, %v228
    %v629 = vmul.f32 %v229, %v229
    %v630 = vmul.f32 %v230, %v230
    %v631 = vmul.f32 %v231, %v231
    %v632 = vmul.f32 %v232, %v232
    %vm633 = vcmask 15360
    %v634 = vsel %vm633, %v217, 0
    %v636 = vsel %vm633, %v218, 0
    %v638 = vsel %vm633, %v219, 0
    %v640 = vsel %vm633, %v220, 0
    %v642 = vsel %vm633, %v221, 0
    %v644 = vsel %vm633, %v222, 0
    %v646 = vsel %vm633, %v223, 0
    %v648 = vsel %vm633, %v224, 0
    %v650 = vsel %vm633, %v225, 0
    %v652 = vsel %vm633, %v226, 0
    %v654 = vsel %vm633, %v227, 0
    %v656 = vsel %vm633, %v228, 0
    %v658 = vsel %vm633, %v229, 0
    %v660 = vsel %vm633, %v230, 0
    %v662 = vsel %vm633, %v231, 0
    %v664 = vsel %vm633, %v232, 0
    %666 = vmatprep.subr.mxu0 0.0
    %667 = vmatpush1.xpose.msra.mxu0 %v664
    %668 = vmatprep.subr.mxu0 0.0
    %669 = vmatpush1.xpose.msra.mxu0 %v662
    %670 = vmatprep.subr.mxu0 0.0
    %671 = vmatpush1.xpose.msra.mxu0 %v660
    %672 = vmatprep.subr.mxu0 0.0
    %673 = vmatpush1.xpose.msra.mxu0 %v658
    %674 = vmatprep.subr.mxu0 0.0
    %675 = vmatpush1.xpose.msra.mxu0 %v656
    %676 = vmatprep.subr.mxu0 0.0
    %677 = vmatpush1.xpose.msra.mxu0 %v654
    %678 = vmatprep.subr.mxu0 0.0
    %679 = vmatpush1.xpose.msra.mxu0 %v652
    %680 = vmatprep.subr.mxu0 0.0
    %681 = vmatpush1.xpose.msra.mxu0 %v650
    %682 = vmatprep.subr.mxu0 0.0
    %683 = vmatpush1.xpose.msra.mxu0 %v648
    %684 = vmatprep.subr.mxu0 0.0
    %685 = vmatpush1.xpose.msra.mxu0 %v646
    %686 = vmatprep.subr.mxu0 0.0
    %687 = vmatpush1.xpose.msra.mxu0 %v644
    %688 = vmatprep.subr.mxu0 0.0
    %689 = vmatpush1.xpose.msra.mxu0 %v642
    %690 = vmatprep.subr.mxu0 0.0
    %691 = vmatpush1.xpose.msra.mxu0 %v640
    %692 = vmatprep.subr.mxu0 0.0
    %693 = vmatpush1.xpose.msra.mxu0 %v638
    %694 = vmatprep.subr.mxu0 0.0
    %695 = vmatpush1.xpose.msra.mxu0 %v636
    %696 = vmatprep.subr.mxu0 0.0
    %697 = vmatpush1.xpose.msra.mxu0 %v634
    %698 = vmatprep.subr.mxu0 0.0
    %699 = vmatpush2.xpose.msra.mxu0 0.0
    %700 = vmatprep.subr.mxu0 0.0
    %701 = vmatpush2.xpose.msra.mxu0 0.0
    %702 = vmatprep.subr.mxu0 0.0
    %703 = vmatpush2.xpose.msra.mxu0 0.0
    %704 = vmatprep.subr.mxu0 0.0
    %705 = vmatpush2.xpose.msra.mxu0 0.0
    %706 = vmatprep.subr.mxu0 0.0
    %707 = vmatpush2.xpose.msra.mxu0 0.0
    %708 = vmatprep.subr.mxu0 0.0
    %709 = vmatpush2.xpose.msra.mxu0 0.0
    %710 = vmatprep.subr.mxu0 0.0
    %711 = vmatpush2.xpose.msra.mxu0 0.0
    %712 = vmatprep.subr.mxu0 0.0
    %713 = vmatpush2.xpose.msra.mxu0 0.0
    %714 = vmatprep.subr.mxu0 0.0
    %715 = vmatpush2.xpose.msra.mxu0 0.0
    %716 = vmatprep.subr.mxu0 0.0
    %717 = vmatpush2.xpose.msra.mxu0 0.0
    %718 = vmatprep.subr.mxu0 0.0
    %719 = vmatpush2.xpose.msra.mxu0 0.0
    %720 = vmatprep.subr.mxu0 0.0
    %721 = vmatpush2.xpose.msra.mxu0 0.0
    %722 = vmatprep.subr.mxu0 0.0
    %723 = vmatpush2.xpose.msra.mxu0 0.0
    %724 = vmatprep.subr.mxu0 0.0
    %725 = vmatpush2.xpose.msra.mxu0 0.0
    %726 = vmatprep.subr.mxu0 0.0
    %727 = vmatpush2.xpose.msra.mxu0 0.0
    %728 = vmatprep.subr.mxu0 0.0
    %729 = vmatpush2.xpose.msra.mxu0 0.0
    %730 = vmatprep.mubr.f32.mxu0 0.0
    %731 = vmatmul.mubr.f32.gmra.mxu0 %v634
    %v732 = vpop.f32.mrf.mxu0
    %v733 = vadd.f32 0.0, %v732
    %v734 = vpop.f32.mrf.mxu0
    %735 = vmatprep.mubr.f32.mxu0 0.0
    %736 = vmatmul.mubr.f32.gmra.mxu0 %v636
    %v737 = vpop.f32.mrf.mxu0
    %v738 = vadd.f32 0.0, %v737
    %v739 = vpop.f32.mrf.mxu0
    %740 = vmatprep.mubr.f32.mxu0 0.0
    %741 = vmatmul.mubr.f32.gmra.mxu0 %v638
    %v742 = vpop.f32.mrf.mxu0
    %v743 = vadd.f32 0.0, %v742
    %v744 = vpop.f32.mrf.mxu0
    %745 = vmatprep.mubr.f32.mxu0 0.0
    %746 = vmatmul.mubr.f32.gmra.mxu0 %v640
    %v747 = vpop.f32.mrf.mxu0
    %v748 = vadd.f32 0.0, %v747
    %v749 = vpop.f32.mrf.mxu0
    %750 = vmatprep.mubr.f32.mxu0 0.0
    %751 = vmatmul.mubr.f32.gmra.mxu0 %v642
    %v752 = vpop.f32.mrf.mxu0
    %v753 = vadd.f32 0.0, %v752
    %v754 = vpop.f32.mrf.mxu0
    %755 = vmatprep.mubr.f32.mxu0 0.0
    %756 = vmatmul.mubr.f32.gmra.mxu0 %v644
    %v757 = vpop.f32.mrf.mxu0
    %v758 = vadd.f32 0.0, %v757
    %v759 = vpop.f32.mrf.mxu0
    %760 = vmatprep.mubr.f32.mxu0 0.0
    %761 = vmatmul.mubr.f32.gmra.mxu0 %v646
    %v762 = vpop.f32.mrf.mxu0
    %v763 = vadd.f32 0.0, %v762
    %v764 = vpop.f32.mrf.mxu0
    %765 = vmatprep.mubr.f32.mxu0 0.0
    %766 = vmatmul.mubr.f32.gmra.mxu0 %v648
    %v767 = vpop.f32.mrf.mxu0
    %v768 = vadd.f32 0.0, %v767
    %v769 = vpop.f32.mrf.mxu0
    %770 = vmatprep.mubr.f32.mxu0 0.0
    %771 = vmatmul.mubr.f32.gmra.mxu0 %v650
    %v772 = vpop.f32.mrf.mxu0
    %v773 = vadd.f32 0.0, %v772
    %v774 = vpop.f32.mrf.mxu0
    %775 = vmatprep.mubr.f32.mxu0 0.0
    %776 = vmatmul.mubr.f32.gmra.mxu0 %v652
    %v777 = vpop.f32.mrf.mxu0
    %v778 = vadd.f32 0.0, %v777
    %v779 = vpop.f32.mrf.mxu0
    %780 = vmatprep.mubr.f32.mxu0 0.0
    %781 = vmatmul.mubr.f32.gmra.mxu0 %v654
    %v782 = vpop.f32.mrf.mxu0
    %v783 = vadd.f32 0.0, %v782
    %v784 = vpop.f32.mrf.mxu0
    %785 = vmatprep.mubr.f32.mxu0 0.0
    %786 = vmatmul.mubr.f32.gmra.mxu0 %v656
    %v787 = vpop.f32.mrf.mxu0
    %v788 = vadd.f32 0.0, %v787
    %v789 = vpop.f32.mrf.mxu0
    %790 = vmatprep.mubr.f32.mxu0 0.0
    %791 = vmatmul.mubr.f32.gmra.mxu0 %v658
    %v792 = vpop.f32.mrf.mxu0
    %v793 = vadd.f32 0.0, %v792
    %v794 = vpop.f32.mrf.mxu0
    %795 = vmatprep.mubr.f32.mxu0 0.0
    %796 = vmatmul.mubr.f32.gmra.mxu0 %v660
    %v797 = vpop.f32.mrf.mxu0
    %v798 = vadd.f32 0.0, %v797
    %v799 = vpop.f32.mrf.mxu0
    %800 = vmatprep.mubr.f32.mxu0 0.0
    %801 = vmatmul.mubr.f32.gmra.mxu0 %v662
    %v802 = vpop.f32.mrf.mxu0
    %v803 = vadd.f32 0.0, %v802
    %v804 = vpop.f32.mrf.mxu0
    %805 = vmatprep.mubr.f32.mxu0 0.0
    %806 = vmatmul.mubr.f32.gmra.mxu0 %v664
    %v807 = vpop.f32.mrf.mxu0
    %v808 = vadd.f32 0.0, %v807
    %v809 = vpop.f32.mrf.mxu0
    %810 = vdwg.mxu0
    %v812 = vsel %vm633, 1.0, 0
    %v815 = vsel %vm633, %v617, 0
    %v818 = vsel %vm633, %v618, 0
    %v821 = vsel %vm633, %v619, 0
    %v824 = vsel %vm633, %v620, 0
    %v827 = vsel %vm633, %v621, 0
    %v830 = vsel %vm633, %v622, 0
    %v833 = vsel %vm633, %v623, 0
    %v836 = vsel %vm633, %v624, 0
    %v839 = vsel %vm633, %v625, 0
    %v842 = vsel %vm633, %v626, 0
    %v845 = vsel %vm633, %v627, 0
    %v848 = vsel %vm633, %v628, 0
    %v851 = vsel %vm633, %v629, 0
    %v854 = vsel %vm633, %v630, 0
    %v857 = vsel %vm633, %v631, 0
    %v860 = vsel %vm633, %v632, 0
    %862 = vmatprep.subr.mxu0 0.0
    %863 = vmatpush1.xpose.msra.mxu0 %v860
    %864 = vmatprep.subr.mxu0 0.0
    %865 = vmatpush1.xpose.msra.mxu0 %v857
    %866 = vmatprep.subr.mxu0 0.0
    %867 = vmatpush1.xpose.msra.mxu0 %v854
    %868 = vmatprep.subr.mxu0 0.0
    %869 = vmatpush1.xpose.msra.mxu0 %v851
    %870 = vmatprep.subr.mxu0 0.0
    %871 = vmatpush1.xpose.msra.mxu0 %v848
    %872 = vmatprep.subr.mxu0 0.0
    %873 = vmatpush1.xpose.msra.mxu0 %v845
    %874 = vmatprep.subr.mxu0 0.0
    %875 = vmatpush1.xpose.msra.mxu0 %v842
    %876 = vmatprep.subr.mxu0 0.0
    %877 = vmatpush1.xpose.msra.mxu0 %v839
    %878 = vmatprep.subr.mxu0 0.0
    %879 = vmatpush1.xpose.msra.mxu0 %v836
    %880 = vmatprep.subr.mxu0 0.0
    %881 = vmatpush1.xpose.msra.mxu0 %v833
    %882 = vmatprep.subr.mxu0 0.0
    %883 = vmatpush1.xpose.msra.mxu0 %v830
    %884 = vmatprep.subr.mxu0 0.0
    %885 = vmatpush1.xpose.msra.mxu0 %v827
    %886 = vmatprep.subr.mxu0 0.0
    %887 = vmatpush1.xpose.msra.mxu0 %v824
    %888 = vmatprep.subr.mxu0 0.0
    %889 = vmatpush1.xpose.msra.mxu0 %v821
    %890 = vmatprep.subr.mxu0 0.0
    %891 = vmatpush1.xpose.msra.mxu0 %v818
    %892 = vmatprep.subr.mxu0 0.0
    %893 = vmatpush1.xpose.msra.mxu0 %v815
    %894 = vmatprep.subr.mxu0 0.0
    %895 = vmatpush2.xpose.msra.mxu0 0.0
    %896 = vmatprep.subr.mxu0 0.0
    %897 = vmatpush2.xpose.msra.mxu0 0.0
    %898 = vmatprep.subr.mxu0 0.0
    %899 = vmatpush2.xpose.msra.mxu0 0.0
    %900 = vmatprep.subr.mxu0 0.0
    %901 = vmatpush2.xpose.msra.mxu0 0.0
    %902 = vmatprep.subr.mxu0 0.0
    %903 = vmatpush2.xpose.msra.mxu0 0.0
    %904 = vmatprep.subr.mxu0 0.0
    %905 = vmatpush2.xpose.msra.mxu0 0.0
    %906 = vmatprep.subr.mxu0 0.0
    %907 = vmatpush2.xpose.msra.mxu0 0.0
    %908 = vmatprep.subr.mxu0 0.0
    %909 = vmatpush2.xpose.msra.mxu0 0.0
    %910 = vmatprep.subr.mxu0 0.0
    %911 = vmatpush2.xpose.msra.mxu0 0.0
    %912 = vmatprep.subr.mxu0 0.0
    %913 = vmatpush2.xpose.msra.mxu0 0.0
    %914 = vmatprep.subr.mxu0 0.0
    %915 = vmatpush2.xpose.msra.mxu0 0.0
    %916 = vmatprep.subr.mxu0 0.0
    %917 = vmatpush2.xpose.msra.mxu0 0.0
    %918 = vmatprep.subr.mxu0 0.0
    %919 = vmatpush2.xpose.msra.mxu0 0.0
    %920 = vmatprep.subr.mxu0 0.0
    %921 = vmatpush2.xpose.msra.mxu0 0.0
    %922 = vmatprep.subr.mxu0 0.0
    %923 = vmatpush2.xpose.msra.mxu0 0.0
    %924 = vmatprep.subr.mxu0 0.0
    %925 = vmatpush2.xpose.msra.mxu0 0.0
    %926 = vmatprep.mubr.f32.mxu0 0.0
    %927 = vmatmul.mubr.f32.gmra.mxu0 %v812
    %v928 = vpop.f32.mrf.mxu0
    %v929 = vadd.f32 0.0, %v928
    %v930 = vpop.f32.mrf.mxu0
    %931 = vmatprep.mubr.f32.mxu0 0.0
    %932 = vmatmul.mubr.f32.gmra.mxu0 %v812
    %v933 = vpop.f32.mrf.mxu0
    %v934 = vadd.f32 0.0, %v933
    %v935 = vpop.f32.mrf.mxu0
    %936 = vmatprep.mubr.f32.mxu0 0.0
    %937 = vmatmul.mubr.f32.gmra.mxu0 %v812
    %v938 = vpop.f32.mrf.mxu0
    %v939 = vadd.f32 0.0, %v938
    %v940 = vpop.f32.mrf.mxu0
    %941 = vmatprep.mubr.f32.mxu0 0.0
    %942 = vmatmul.mubr.f32.gmra.mxu0 %v812
    %v943 = vpop.f32.mrf.mxu0
    %v944 = vadd.f32 0.0, %v943
    %v945 = vpop.f32.mrf.mxu0
    %946 = vmatprep.mubr.f32.mxu0 0.0
    %947 = vmatmul.mubr.f32.gmra.mxu0 %v812
    %v948 = vpop.f32.mrf.mxu0
    %v949 = vadd.f32 0.0, %v948
    %v950 = vpop.f32.mrf.mxu0
    %951 = vmatprep.mubr.f32.mxu0 0.0
    %952 = vmatmul.mubr.f32.gmra.mxu0 %v812
    %v953 = vpop.f32.mrf.mxu0
    %v954 = vadd.f32 0.0, %v953
    %v955 = vpop.f32.mrf.mxu0
    %956 = vmatprep.mubr.f32.mxu0 0.0
    %957 = vmatmul.mubr.f32.gmra.mxu0 %v812
    %v958 = vpop.f32.mrf.mxu0
    %v959 = vadd.f32 0.0, %v958
    %v960 = vpop.f32.mrf.mxu0
    %961 = vmatprep.mubr.f32.mxu0 0.0
    %962 = vmatmul.mubr.f32.gmra.mxu0 %v812
    %v963 = vpop.f32.mrf.mxu0
    %v964 = vadd.f32 0.0, %v963
    %v965 = vpop.f32.mrf.mxu0
    %966 = vmatprep.mubr.f32.mxu0 0.0
    %967 = vmatmul.mubr.f32.gmra.mxu0 %v812
    %v968 = vpop.f32.mrf.mxu0
    %v969 = vadd.f32 0.0, %v968
    %v970 = vpop.f32.mrf.mxu0
    %971 = vmatprep.mubr.f32.mxu0 0.0
    %972 = vmatmul.mubr.f32.gmra.mxu0 %v812
    %v973 = vpop.f32.mrf.mxu0
    %v974 = vadd.f32 0.0, %v973
    %v975 = vpop.f32.mrf.mxu0
    %976 = vmatprep.mubr.f32.mxu0 0.0
    %977 = vmatmul.mubr.f32.gmra.mxu0 %v812
    %v978 = vpop.f32.mrf.mxu0
    %v979 = vadd.f32 0.0, %v978
    %v980 = vpop.f32.mrf.mxu0
    %981 = vmatprep.mubr.f32.mxu0 0.0
    %982 = vmatmul.mubr.f32.gmra.mxu0 %v812
    %v983 = vpop.f32.mrf.mxu0
    %v984 = vadd.f32 0.0, %v983
    %v985 = vpop.f32.mrf.mxu0
    %986 = vmatprep.mubr.f32.mxu0 0.0
    %987 = vmatmul.mubr.f32.gmra.mxu0 %v812
    %v988 = vpop.f32.mrf.mxu0
    %v989 = vadd.f32 0.0, %v988
    %v990 = vpop.f32.mrf.mxu0
    %991 = vmatprep.mubr.f32.mxu0 0.0
    %992 = vmatmul.mubr.f32.gmra.mxu0 %v812
    %v993 = vpop.f32.mrf.mxu0
    %v994 = vadd.f32 0.0, %v993
    %v995 = vpop.f32.mrf.mxu0
    %996 = vmatprep.mubr.f32.mxu0 0.0
    %997 = vmatmul.mubr.f32.gmra.mxu0 %v812
    %v998 = vpop.f32.mrf.mxu0
    %v999 = vadd.f32 0.0, %v998
    %v1000 = vpop.f32.mrf.mxu0
    %1001 = vmatprep.mubr.f32.mxu0 0.0
    %1002 = vmatmul.mubr.f32.gmra.mxu0 %v812
    %v1003 = vpop.f32.mrf.mxu0
    %v1004 = vadd.f32 0.0, %v1003
    %v1005 = vpop.f32.mrf.mxu0
    %1006 = vdwg.mxu0
    %v1007 = vsel %vm633, %v617, 0.0
    %1008 = vadd.xlane.f32.xlu0 %v1007
    %v1009 = vpop.xlane.xlu0 %1008
    %v1010 = vsel %vm633, %v618, 0.0
    %1011 = vadd.xlane.f32.xlu0 %v1010
    %v1012 = vpop.xlane.xlu0 %1011
    %v1013 = vsel %vm633, %v619, 0.0
    %1014 = vadd.xlane.f32.xlu0 %v1013
    %v1015 = vpop.xlane.xlu0 %1014
    %v1016 = vsel %vm633, %v620, 0.0
    %1017 = vadd.xlane.f32.xlu0 %v1016
    %v1018 = vpop.xlane.xlu0 %1017
    %v1019 = vsel %vm633, %v621, 0.0
    %1020 = vadd.xlane.f32.xlu0 %v1019
    %v1021 = vpop.xlane.xlu0 %1020
    %v1022 = vsel %vm633, %v622, 0.0
    %1023 = vadd.xlane.f32.xlu0 %v1022
    %v1024 = vpop.xlane.xlu0 %1023
    %v1025 = vsel %vm633, %v623, 0.0
    %1026 = vadd.xlane.f32.xlu0 %v1025
    %v1027 = vpop.xlane.xlu0 %1026
    %v1028 = vsel %vm633, %v624, 0.0
    %1029 = vadd.xlane.f32.xlu0 %v1028
    %v1030 = vpop.xlane.xlu0 %1029
    %v1031 = vsel %vm633, %v625, 0.0
    %1032 = vadd.xlane.f32.xlu0 %v1031
    %v1033 = vpop.xlane.xlu0 %1032
    %v1034 = vsel %vm633, %v626, 0.0
    %1035 = vadd.xlane.f32.xlu0 %v1034
    %v1036 = vpop.xlane.xlu0 %1035
    %v1037 = vsel %vm633, %v627, 0.0
    %1038 = vadd.xlane.f32.xlu0 %v1037
    %v1039 = vpop.xlane.xlu0 %1038
    %v1040 = vsel %vm633, %v628, 0.0
    %1041 = vadd.xlane.f32.xlu0 %v1040
    %v1042 = vpop.xlane.xlu0 %1041
    %v1043 = vsel %vm633, %v629, 0.0
    %1044 = vadd.xlane.f32.xlu0 %v1043
    %v1045 = vpop.xlane.xlu0 %1044
    %v1046 = vsel %vm633, %v630, 0.0
    %1047 = vadd.xlane.f32.xlu0 %v1046
    %v1048 = vpop.xlane.xlu0 %1047
    %v1049 = vsel %vm633, %v631, 0.0
    %1050 = vadd.xlane.f32.xlu0 %v1049
    %v1051 = vpop.xlane.xlu0 %1050
    %v1052 = vsel %vm633, %v632, 0.0
    %1053 = vadd.xlane.f32.xlu0 %v1052
    %v1054 = vpop.xlane.xlu0 %1053
    %v1055 = vmul.f32 %v733, 2.0
    %v1056 = vmul.f32 %v738, 2.0
    %v1057 = vmul.f32 %v743, 2.0
    %v1058 = vmul.f32 %v748, 2.0
    %v1059 = vmul.f32 %v753, 2.0
    %v1060 = vmul.f32 %v758, 2.0
    %v1061 = vmul.f32 %v763, 2.0
    %v1062 = vmul.f32 %v768, 2.0
    %v1063 = vmul.f32 %v773, 2.0
    %v1064 = vmul.f32 %v778, 2.0
    %v1065 = vmul.f32 %v783, 2.0
    %v1066 = vmul.f32 %v788, 2.0
    %v1067 = vmul.f32 %v793, 2.0
    %v1068 = vmul.f32 %v798, 2.0
    %v1069 = vmul.f32 %v803, 2.0
    %v1070 = vmul.f32 %v808, 2.0
    %v1071 = vsub.f32 %v1009, %v1055
    %v1072 = vsub.f32 %v1012, %v1056
    %v1073 = vsub.f32 %v1015, %v1057
    %v1074 = vsub.f32 %v1018, %v1058
    %v1075 = vsub.f32 %v1021, %v1059
    %v1076 = vsub.f32 %v1024, %v1060
    %v1077 = vsub.f32 %v1027, %v1061
    %v1078 = vsub.f32 %v1030, %v1062
    %v1079 = vsub.f32 %v1033, %v1063
    %v1080 = vsub.f32 %v1036, %v1064
    %v1081 = vsub.f32 %v1039, %v1065
    %v1082 = vsub.f32 %v1042, %v1066
    %v1083 = vsub.f32 %v1045, %v1067
    %v1084 = vsub.f32 %v1048, %v1068
    %v1085 = vsub.f32 %v1051, %v1069
    %v1086 = vsub.f32 %v1054, %v1070
    %v1087 = vadd.f32 %v1071, %v929
    %v1088 = vadd.f32 %v1072, %v934
    %v1089 = vadd.f32 %v1073, %v939
    %v1090 = vadd.f32 %v1074, %v944
    %v1091 = vadd.f32 %v1075, %v949
    %v1092 = vadd.f32 %v1076, %v954
    %v1093 = vadd.f32 %v1077, %v959
    %v1094 = vadd.f32 %v1078, %v964
    %v1095 = vadd.f32 %v1079, %v969
    %v1096 = vadd.f32 %v1080, %v974
    %v1097 = vadd.f32 %v1081, %v979
    %v1098 = vadd.f32 %v1082, %v984
    %v1099 = vadd.f32 %v1083, %v989
    %v1100 = vadd.f32 %v1084, %v994
    %v1101 = vadd.f32 %v1085, %v999
    %v1102 = vadd.f32 %v1086, %v1004
    %v1103 = vmax.f32 %v1087, 0.0
    %v1104 = vmax.f32 %v1088, 0.0
    %v1105 = vmax.f32 %v1089, 0.0
    %v1106 = vmax.f32 %v1090, 0.0
    %v1107 = vmax.f32 %v1091, 0.0
    %v1108 = vmax.f32 %v1092, 0.0
    %v1109 = vmax.f32 %v1093, 0.0
    %v1110 = vmax.f32 %v1094, 0.0
    %v1111 = vmax.f32 %v1095, 0.0
    %v1112 = vmax.f32 %v1096, 0.0
    %v1113 = vmax.f32 %v1097, 0.0
    %v1114 = vmax.f32 %v1098, 0.0
    %v1115 = vmax.f32 %v1099, 0.0
    %v1116 = vmax.f32 %v1100, 0.0
    %v1117 = vmax.f32 %v1101, 0.0
    %v1118 = vmax.f32 %v1102, 0.0
    %v1135 = vadd.s32 %v1103, 8388608
    %v1136 = vadd.s32 %v1104, 8388608
    %v1137 = vadd.s32 %v1105, 8388608
    %v1138 = vadd.s32 %v1106, 8388608
    %v1139 = vadd.s32 %v1107, 8388608
    %v1140 = vadd.s32 %v1108, 8388608
    %v1141 = vadd.s32 %v1109, 8388608
    %v1142 = vadd.s32 %v1110, 8388608
    %v1143 = vadd.s32 %v1111, 8388608
    %v1144 = vadd.s32 %v1112, 8388608
    %v1145 = vadd.s32 %v1113, 8388608
    %v1146 = vadd.s32 %v1114, 8388608
    %v1147 = vadd.s32 %v1115, 8388608
    %v1148 = vadd.s32 %v1116, 8388608
    %v1149 = vadd.s32 %v1117, 8388608
    %v1150 = vadd.s32 %v1118, 8388608
    %v1151 = vand.u32 %v1135, %v185
    %v1152 = vand.u32 %v1136, %v186
    %v1153 = vand.u32 %v1137, %v187
    %v1154 = vand.u32 %v1138, %v188
    %v1155 = vand.u32 %v1139, %v189
    %v1156 = vand.u32 %v1140, %v190
    %v1157 = vand.u32 %v1141, %v191
    %v1158 = vand.u32 %v1142, %v192
    %v1159 = vand.u32 %v1143, %v193
    %v1160 = vand.u32 %v1144, %v194
    %v1161 = vand.u32 %v1145, %v195
    %v1162 = vand.u32 %v1146, %v196
    %v1163 = vand.u32 %v1147, %v197
    %v1164 = vand.u32 %v1148, %v198
    %v1165 = vand.u32 %v1149, %v199
    %v1166 = vand.u32 %v1150, %v200
    %v1167 = vor.u32 %v1151, %v201
    %v1168 = vor.u32 %v1152, %v202
    %v1169 = vor.u32 %v1153, %v203
    %v1170 = vor.u32 %v1154, %v204
    %v1171 = vor.u32 %v1155, %v205
    %v1172 = vor.u32 %v1156, %v206
    %v1173 = vor.u32 %v1157, %v207
    %v1174 = vor.u32 %v1158, %v208
    %v1175 = vor.u32 %v1159, %v209
    %v1176 = vor.u32 %v1160, %v210
    %v1177 = vor.u32 %v1161, %v211
    %v1178 = vor.u32 %v1162, %v212
    %v1179 = vor.u32 %v1163, %v213
    %v1180 = vor.u32 %v1164, %v214
    %v1181 = vor.u32 %v1165, %v215
    %v1182 = vor.u32 %v1166, %v216
    %1199 = vmin.xlane.f32.xlu0 %v1167
    %v1200 = vpop.xlane.xlu0 %1199
    %1201 = vmin.xlane.f32.xlu0 %v1168
    %v1202 = vpop.xlane.xlu0 %1201
    %1203 = vmin.xlane.f32.xlu0 %v1169
    %v1204 = vpop.xlane.xlu0 %1203
    %1205 = vmin.xlane.f32.xlu0 %v1170
    %v1206 = vpop.xlane.xlu0 %1205
    %1207 = vmin.xlane.f32.xlu0 %v1171
    %v1208 = vpop.xlane.xlu0 %1207
    %1209 = vmin.xlane.f32.xlu0 %v1172
    %v1210 = vpop.xlane.xlu0 %1209
    %1211 = vmin.xlane.f32.xlu0 %v1173
    %v1212 = vpop.xlane.xlu0 %1211
    %1213 = vmin.xlane.f32.xlu0 %v1174
    %v1214 = vpop.xlane.xlu0 %1213
    %1215 = vmin.xlane.f32.xlu0 %v1175
    %v1216 = vpop.xlane.xlu0 %1215
    %1217 = vmin.xlane.f32.xlu0 %v1176
    %v1218 = vpop.xlane.xlu0 %1217
    %1219 = vmin.xlane.f32.xlu0 %v1177
    %v1220 = vpop.xlane.xlu0 %1219
    %1221 = vmin.xlane.f32.xlu0 %v1178
    %v1222 = vpop.xlane.xlu0 %1221
    %1223 = vmin.xlane.f32.xlu0 %v1179
    %v1224 = vpop.xlane.xlu0 %1223
    %1225 = vmin.xlane.f32.xlu0 %v1180
    %v1226 = vpop.xlane.xlu0 %1225
    %1227 = vmin.xlane.f32.xlu0 %v1181
    %v1228 = vpop.xlane.xlu0 %1227
    %1229 = vmin.xlane.f32.xlu0 %v1182
    %v1230 = vpop.xlane.xlu0 %1229
    %vm1231 = vcmp.eq.f32.partialorder %v1167, %v1200
    %vm1232 = vcmp.eq.f32.partialorder %v1168, %v1202
    %vm1233 = vcmp.eq.f32.partialorder %v1169, %v1204
    %vm1234 = vcmp.eq.f32.partialorder %v1170, %v1206
    %vm1235 = vcmp.eq.f32.partialorder %v1171, %v1208
    %vm1236 = vcmp.eq.f32.partialorder %v1172, %v1210
    %vm1237 = vcmp.eq.f32.partialorder %v1173, %v1212
    %vm1238 = vcmp.eq.f32.partialorder %v1174, %v1214
    %vm1239 = vcmp.eq.f32.partialorder %v1175, %v1216
    %vm1240 = vcmp.eq.f32.partialorder %v1176, %v1218
    %vm1241 = vcmp.eq.f32.partialorder %v1177, %v1220
    %vm1242 = vcmp.eq.f32.partialorder %v1178, %v1222
    %vm1243 = vcmp.eq.f32.partialorder %v1179, %v1224
    %vm1244 = vcmp.eq.f32.partialorder %v1180, %v1226
    %vm1245 = vcmp.eq.f32.partialorder %v1181, %v1228
    %vm1246 = vcmp.eq.f32.partialorder %v1182, %v1230
    %v1247 = vsel %vm1231, 1e+30, %v1167
    %v1248 = vsel %vm1232, 1e+30, %v1168
    %v1249 = vsel %vm1233, 1e+30, %v1169
    %v1250 = vsel %vm1234, 1e+30, %v1170
    %v1251 = vsel %vm1235, 1e+30, %v1171
    %v1252 = vsel %vm1236, 1e+30, %v1172
    %v1253 = vsel %vm1237, 1e+30, %v1173
    %v1254 = vsel %vm1238, 1e+30, %v1174
    %v1255 = vsel %vm1239, 1e+30, %v1175
    %v1256 = vsel %vm1240, 1e+30, %v1176
    %v1257 = vsel %vm1241, 1e+30, %v1177
    %v1258 = vsel %vm1242, 1e+30, %v1178
    %v1259 = vsel %vm1243, 1e+30, %v1179
    %v1260 = vsel %vm1244, 1e+30, %v1180
    %v1261 = vsel %vm1245, 1e+30, %v1181
    %v1262 = vsel %vm1246, 1e+30, %v1182
    %v1263 = vsel %vm1231, 1.0, 0.0
    %v1264 = vsel %vm1232, 1.0, 0.0
    %v1265 = vsel %vm1233, 1.0, 0.0
    %v1266 = vsel %vm1234, 1.0, 0.0
    %v1267 = vsel %vm1235, 1.0, 0.0
    %v1268 = vsel %vm1236, 1.0, 0.0
    %v1269 = vsel %vm1237, 1.0, 0.0
    %v1270 = vsel %vm1238, 1.0, 0.0
    %v1271 = vsel %vm1239, 1.0, 0.0
    %v1272 = vsel %vm1240, 1.0, 0.0
    %v1273 = vsel %vm1241, 1.0, 0.0
    %v1274 = vsel %vm1242, 1.0, 0.0
    %v1275 = vsel %vm1243, 1.0, 0.0
    %v1276 = vsel %vm1244, 1.0, 0.0
    %v1277 = vsel %vm1245, 1.0, 0.0
    %v1278 = vsel %vm1246, 1.0, 0.0
    %1279 = vmatprep.subr.mxu0 0.0
    %1280 = vmatpush1.msra.mxu0 %v460
    %1281 = vmatprep.subr.mxu0 0.0
    %1282 = vmatpush1.msra.mxu0 %v455
    %1283 = vmatprep.subr.mxu0 0.0
    %1284 = vmatpush1.msra.mxu0 %v450
    %1285 = vmatprep.subr.mxu0 0.0
    %1286 = vmatpush1.msra.mxu0 %v445
    %1287 = vmatprep.subr.mxu0 0.0
    %1288 = vmatpush1.msra.mxu0 %v440
    %1289 = vmatprep.subr.mxu0 0.0
    %1290 = vmatpush1.msra.mxu0 %v435
    %1291 = vmatprep.subr.mxu0 0.0
    %1292 = vmatpush1.msra.mxu0 %v430
    %1293 = vmatprep.subr.mxu0 0.0
    %1294 = vmatpush1.msra.mxu0 %v425
    %1295 = vmatprep.subr.mxu0 0.0
    %1296 = vmatpush1.msra.mxu0 %v420
    %1297 = vmatprep.subr.mxu0 0.0
    %1298 = vmatpush1.msra.mxu0 %v415
    %1299 = vmatprep.subr.mxu0 0.0
    %1300 = vmatpush1.msra.mxu0 %v410
    %1301 = vmatprep.subr.mxu0 0.0
    %1302 = vmatpush1.msra.mxu0 %v405
    %1303 = vmatprep.subr.mxu0 0.0
    %1304 = vmatpush1.msra.mxu0 %v400
    %1305 = vmatprep.subr.mxu0 0.0
    %1306 = vmatpush1.msra.mxu0 %v395
    %1307 = vmatprep.subr.mxu0 0.0
    %1308 = vmatpush1.msra.mxu0 %v390
    %1309 = vmatprep.subr.mxu0 0.0
    %1310 = vmatpush1.msra.mxu0 %v385
    %1311 = vmatprep.subr.mxu0 0.0
    %1312 = vmatpush2.msra.mxu0 0.0
    %1313 = vmatprep.subr.mxu0 0.0
    %1314 = vmatpush2.msra.mxu0 0.0
    %1315 = vmatprep.subr.mxu0 0.0
    %1316 = vmatpush2.msra.mxu0 0.0
    %1317 = vmatprep.subr.mxu0 0.0
    %1318 = vmatpush2.msra.mxu0 0.0
    %1319 = vmatprep.subr.mxu0 0.0
    %1320 = vmatpush2.msra.mxu0 0.0
    %1321 = vmatprep.subr.mxu0 0.0
    %1322 = vmatpush2.msra.mxu0 0.0
    %1323 = vmatprep.subr.mxu0 0.0
    %1324 = vmatpush2.msra.mxu0 0.0
    %1325 = vmatprep.subr.mxu0 0.0
    %1326 = vmatpush2.msra.mxu0 0.0
    %1327 = vmatprep.subr.mxu0 0.0
    %1328 = vmatpush2.msra.mxu0 0.0
    %1329 = vmatprep.subr.mxu0 0.0
    %1330 = vmatpush2.msra.mxu0 0.0
    %1331 = vmatprep.subr.mxu0 0.0
    %1332 = vmatpush2.msra.mxu0 0.0
    %1333 = vmatprep.subr.mxu0 0.0
    %1334 = vmatpush2.msra.mxu0 0.0
    %1335 = vmatprep.subr.mxu0 0.0
    %1336 = vmatpush2.msra.mxu0 0.0
    %1337 = vmatprep.subr.mxu0 0.0
    %1338 = vmatpush2.msra.mxu0 0.0
    %1339 = vmatprep.subr.mxu0 0.0
    %1340 = vmatpush2.msra.mxu0 0.0
    %1341 = vmatprep.subr.mxu0 0.0
    %1342 = vmatpush2.msra.mxu0 0.0
    %1343 = vmatprep.mubr.f32.mxu0 0.0
    %1344 = vmatmul.mubr.f32.gmra.mxu0 %v1263
    %v1345 = vpop.f32.mrf.mxu0
    %v1346 = vadd.f32 0.0, %v1345
    %v1347 = vpop.f32.mrf.mxu0
    %1348 = vmatprep.mubr.f32.mxu0 0.0
    %1349 = vmatmul.mubr.f32.gmra.mxu0 %v1264
    %v1350 = vpop.f32.mrf.mxu0
    %v1351 = vadd.f32 0.0, %v1350
    %v1352 = vpop.f32.mrf.mxu0
    %1353 = vmatprep.mubr.f32.mxu0 0.0
    %1354 = vmatmul.mubr.f32.gmra.mxu0 %v1265
    %v1355 = vpop.f32.mrf.mxu0
    %v1356 = vadd.f32 0.0, %v1355
    %v1357 = vpop.f32.mrf.mxu0
    %1358 = vmatprep.mubr.f32.mxu0 0.0
    %1359 = vmatmul.mubr.f32.gmra.mxu0 %v1266
    %v1360 = vpop.f32.mrf.mxu0
    %v1361 = vadd.f32 0.0, %v1360
    %v1362 = vpop.f32.mrf.mxu0
    %1363 = vmatprep.mubr.f32.mxu0 0.0
    %1364 = vmatmul.mubr.f32.gmra.mxu0 %v1267
    %v1365 = vpop.f32.mrf.mxu0
    %v1366 = vadd.f32 0.0, %v1365
    %v1367 = vpop.f32.mrf.mxu0
    %1368 = vmatprep.mubr.f32.mxu0 0.0
    %1369 = vmatmul.mubr.f32.gmra.mxu0 %v1268
    %v1370 = vpop.f32.mrf.mxu0
    %v1371 = vadd.f32 0.0, %v1370
    %v1372 = vpop.f32.mrf.mxu0
    %1373 = vmatprep.mubr.f32.mxu0 0.0
    %1374 = vmatmul.mubr.f32.gmra.mxu0 %v1269
    %v1375 = vpop.f32.mrf.mxu0
    %v1376 = vadd.f32 0.0, %v1375
    %v1377 = vpop.f32.mrf.mxu0
    %1378 = vmatprep.mubr.f32.mxu0 0.0
    %1379 = vmatmul.mubr.f32.gmra.mxu0 %v1270
    %v1380 = vpop.f32.mrf.mxu0
    %v1381 = vadd.f32 0.0, %v1380
    %v1382 = vpop.f32.mrf.mxu0
    %1383 = vmatprep.mubr.f32.mxu0 0.0
    %1384 = vmatmul.mubr.f32.gmra.mxu0 %v1271
    %v1385 = vpop.f32.mrf.mxu0
    %v1386 = vadd.f32 0.0, %v1385
    %v1387 = vpop.f32.mrf.mxu0
    %1388 = vmatprep.mubr.f32.mxu0 0.0
    %1389 = vmatmul.mubr.f32.gmra.mxu0 %v1272
    %v1390 = vpop.f32.mrf.mxu0
    %v1391 = vadd.f32 0.0, %v1390
    %v1392 = vpop.f32.mrf.mxu0
    %1393 = vmatprep.mubr.f32.mxu0 0.0
    %1394 = vmatmul.mubr.f32.gmra.mxu0 %v1273
    %v1395 = vpop.f32.mrf.mxu0
    %v1396 = vadd.f32 0.0, %v1395
    %v1397 = vpop.f32.mrf.mxu0
    %1398 = vmatprep.mubr.f32.mxu0 0.0
    %1399 = vmatmul.mubr.f32.gmra.mxu0 %v1274
    %v1400 = vpop.f32.mrf.mxu0
    %v1401 = vadd.f32 0.0, %v1400
    %v1402 = vpop.f32.mrf.mxu0
    %1403 = vmatprep.mubr.f32.mxu0 0.0
    %1404 = vmatmul.mubr.f32.gmra.mxu0 %v1275
    %v1405 = vpop.f32.mrf.mxu0
    %v1406 = vadd.f32 0.0, %v1405
    %v1407 = vpop.f32.mrf.mxu0
    %1408 = vmatprep.mubr.f32.mxu0 0.0
    %1409 = vmatmul.mubr.f32.gmra.mxu0 %v1276
    %v1410 = vpop.f32.mrf.mxu0
    %v1411 = vadd.f32 0.0, %v1410
    %v1412 = vpop.f32.mrf.mxu0
    %1413 = vmatprep.mubr.f32.mxu0 0.0
    %1414 = vmatmul.mubr.f32.gmra.mxu0 %v1277
    %v1415 = vpop.f32.mrf.mxu0
    %v1416 = vadd.f32 0.0, %v1415
    %v1417 = vpop.f32.mrf.mxu0
    %1418 = vmatprep.mubr.f32.mxu0 0.0
    %1419 = vmatmul.mubr.f32.gmra.mxu0 %v1278
    %v1420 = vpop.f32.mrf.mxu0
    %v1421 = vadd.f32 0.0, %v1420
    %v1422 = vpop.f32.mrf.mxu0
    %1423 = vdwg.mxu0
    %v1424 = vsub.f32 %v539, %v1346
    %v1425 = vsub.f32 %v544, %v1351
    %v1426 = vsub.f32 %v549, %v1356
    %v1427 = vsub.f32 %v554, %v1361
    %v1428 = vsub.f32 %v559, %v1366
    %v1429 = vsub.f32 %v564, %v1371
    %v1430 = vsub.f32 %v569, %v1376
    %v1431 = vsub.f32 %v574, %v1381
    %v1432 = vsub.f32 %v579, %v1386
    %v1433 = vsub.f32 %v584, %v1391
    %v1434 = vsub.f32 %v589, %v1396
    %v1435 = vsub.f32 %v594, %v1401
    %v1436 = vsub.f32 %v599, %v1406
    %v1437 = vsub.f32 %v604, %v1411
    %v1438 = vsub.f32 %v609, %v1416
    %v1439 = vsub.f32 %v614, %v1421
    %v1440 = vmax.f32 %v1424, 0.0
    %v1441 = vmax.f32 %v1425, 0.0
    %v1442 = vmax.f32 %v1426, 0.0
    %v1443 = vmax.f32 %v1427, 0.0
    %v1444 = vmax.f32 %v1428, 0.0
    %v1445 = vmax.f32 %v1429, 0.0
    %v1446 = vmax.f32 %v1430, 0.0
    %v1447 = vmax.f32 %v1431, 0.0
    %v1448 = vmax.f32 %v1432, 0.0
    %v1449 = vmax.f32 %v1433, 0.0
    %v1450 = vmax.f32 %v1434, 0.0
    %v1451 = vmax.f32 %v1435, 0.0
    %v1452 = vmax.f32 %v1436, 0.0
    %v1453 = vmax.f32 %v1437, 0.0
    %v1454 = vmax.f32 %v1438, 0.0
    %v1455 = vmax.f32 %v1439, 0.0
    %1456 = vmin.xlane.f32.xlu0 %v1247
    %v1457 = vpop.xlane.xlu0 %1456
    %1458 = vmin.xlane.f32.xlu0 %v1248
    %v1459 = vpop.xlane.xlu0 %1458
    %1460 = vmin.xlane.f32.xlu0 %v1249
    %v1461 = vpop.xlane.xlu0 %1460
    %1462 = vmin.xlane.f32.xlu0 %v1250
    %v1463 = vpop.xlane.xlu0 %1462
    %1464 = vmin.xlane.f32.xlu0 %v1251
    %v1465 = vpop.xlane.xlu0 %1464
    %1466 = vmin.xlane.f32.xlu0 %v1252
    %v1467 = vpop.xlane.xlu0 %1466
    %1468 = vmin.xlane.f32.xlu0 %v1253
    %v1469 = vpop.xlane.xlu0 %1468
    %1470 = vmin.xlane.f32.xlu0 %v1254
    %v1471 = vpop.xlane.xlu0 %1470
    %1472 = vmin.xlane.f32.xlu0 %v1255
    %v1473 = vpop.xlane.xlu0 %1472
    %1474 = vmin.xlane.f32.xlu0 %v1256
    %v1475 = vpop.xlane.xlu0 %1474
    %1476 = vmin.xlane.f32.xlu0 %v1257
    %v1477 = vpop.xlane.xlu0 %1476
    %1478 = vmin.xlane.f32.xlu0 %v1258
    %v1479 = vpop.xlane.xlu0 %1478
    %1480 = vmin.xlane.f32.xlu0 %v1259
    %v1481 = vpop.xlane.xlu0 %1480
    %1482 = vmin.xlane.f32.xlu0 %v1260
    %v1483 = vpop.xlane.xlu0 %1482
    %1484 = vmin.xlane.f32.xlu0 %v1261
    %v1485 = vpop.xlane.xlu0 %1484
    %1486 = vmin.xlane.f32.xlu0 %v1262
    %v1487 = vpop.xlane.xlu0 %1486
    %vm1488 = vcmp.eq.f32.partialorder %v1247, %v1457
    %vm1489 = vcmp.eq.f32.partialorder %v1248, %v1459
    %vm1490 = vcmp.eq.f32.partialorder %v1249, %v1461
    %vm1491 = vcmp.eq.f32.partialorder %v1250, %v1463
    %vm1492 = vcmp.eq.f32.partialorder %v1251, %v1465
    %vm1493 = vcmp.eq.f32.partialorder %v1252, %v1467
    %vm1494 = vcmp.eq.f32.partialorder %v1253, %v1469
    %vm1495 = vcmp.eq.f32.partialorder %v1254, %v1471
    %vm1496 = vcmp.eq.f32.partialorder %v1255, %v1473
    %vm1497 = vcmp.eq.f32.partialorder %v1256, %v1475
    %vm1498 = vcmp.eq.f32.partialorder %v1257, %v1477
    %vm1499 = vcmp.eq.f32.partialorder %v1258, %v1479
    %vm1500 = vcmp.eq.f32.partialorder %v1259, %v1481
    %vm1501 = vcmp.eq.f32.partialorder %v1260, %v1483
    %vm1502 = vcmp.eq.f32.partialorder %v1261, %v1485
    %vm1503 = vcmp.eq.f32.partialorder %v1262, %v1487
    %v1504 = vsel %vm1488, 1e+30, %v1247
    %v1505 = vsel %vm1489, 1e+30, %v1248
    %v1506 = vsel %vm1490, 1e+30, %v1249
    %v1507 = vsel %vm1491, 1e+30, %v1250
    %v1508 = vsel %vm1492, 1e+30, %v1251
    %v1509 = vsel %vm1493, 1e+30, %v1252
    %v1510 = vsel %vm1494, 1e+30, %v1253
    %v1511 = vsel %vm1495, 1e+30, %v1254
    %v1512 = vsel %vm1496, 1e+30, %v1255
    %v1513 = vsel %vm1497, 1e+30, %v1256
    %v1514 = vsel %vm1498, 1e+30, %v1257
    %v1515 = vsel %vm1499, 1e+30, %v1258
    %v1516 = vsel %vm1500, 1e+30, %v1259
    %v1517 = vsel %vm1501, 1e+30, %v1260
    %v1518 = vsel %vm1502, 1e+30, %v1261
    %v1519 = vsel %vm1503, 1e+30, %v1262
    %v1520 = vsel %vm1488, 1.0, 0.0
    %v1521 = vsel %vm1489, 1.0, 0.0
    %v1522 = vsel %vm1490, 1.0, 0.0
    %v1523 = vsel %vm1491, 1.0, 0.0
    %v1524 = vsel %vm1492, 1.0, 0.0
    %v1525 = vsel %vm1493, 1.0, 0.0
    %v1526 = vsel %vm1494, 1.0, 0.0
    %v1527 = vsel %vm1495, 1.0, 0.0
    %v1528 = vsel %vm1496, 1.0, 0.0
    %v1529 = vsel %vm1497, 1.0, 0.0
    %v1530 = vsel %vm1498, 1.0, 0.0
    %v1531 = vsel %vm1499, 1.0, 0.0
    %v1532 = vsel %vm1500, 1.0, 0.0
    %v1533 = vsel %vm1501, 1.0, 0.0
    %v1534 = vsel %vm1502, 1.0, 0.0
    %v1535 = vsel %vm1503, 1.0, 0.0
    %1536 = vmatprep.subr.mxu0 0.0
    %1537 = vmatpush1.msra.mxu0 %v460
    %1538 = vmatprep.subr.mxu0 0.0
    %1539 = vmatpush1.msra.mxu0 %v455
    %1540 = vmatprep.subr.mxu0 0.0
    %1541 = vmatpush1.msra.mxu0 %v450
    %1542 = vmatprep.subr.mxu0 0.0
    %1543 = vmatpush1.msra.mxu0 %v445
    %1544 = vmatprep.subr.mxu0 0.0
    %1545 = vmatpush1.msra.mxu0 %v440
    %1546 = vmatprep.subr.mxu0 0.0
    %1547 = vmatpush1.msra.mxu0 %v435
    %1548 = vmatprep.subr.mxu0 0.0
    %1549 = vmatpush1.msra.mxu0 %v430
    %1550 = vmatprep.subr.mxu0 0.0
    %1551 = vmatpush1.msra.mxu0 %v425
    %1552 = vmatprep.subr.mxu0 0.0
    %1553 = vmatpush1.msra.mxu0 %v420
    %1554 = vmatprep.subr.mxu0 0.0
    %1555 = vmatpush1.msra.mxu0 %v415
    %1556 = vmatprep.subr.mxu0 0.0
    %1557 = vmatpush1.msra.mxu0 %v410
    %1558 = vmatprep.subr.mxu0 0.0
    %1559 = vmatpush1.msra.mxu0 %v405
    %1560 = vmatprep.subr.mxu0 0.0
    %1561 = vmatpush1.msra.mxu0 %v400
    %1562 = vmatprep.subr.mxu0 0.0
    %1563 = vmatpush1.msra.mxu0 %v395
    %1564 = vmatprep.subr.mxu0 0.0
    %1565 = vmatpush1.msra.mxu0 %v390
    %1566 = vmatprep.subr.mxu0 0.0
    %1567 = vmatpush1.msra.mxu0 %v385
    %1568 = vmatprep.subr.mxu0 0.0
    %1569 = vmatpush2.msra.mxu0 0.0
    %1570 = vmatprep.subr.mxu0 0.0
    %1571 = vmatpush2.msra.mxu0 0.0
    %1572 = vmatprep.subr.mxu0 0.0
    %1573 = vmatpush2.msra.mxu0 0.0
    %1574 = vmatprep.subr.mxu0 0.0
    %1575 = vmatpush2.msra.mxu0 0.0
    %1576 = vmatprep.subr.mxu0 0.0
    %1577 = vmatpush2.msra.mxu0 0.0
    %1578 = vmatprep.subr.mxu0 0.0
    %1579 = vmatpush2.msra.mxu0 0.0
    %1580 = vmatprep.subr.mxu0 0.0
    %1581 = vmatpush2.msra.mxu0 0.0
    %1582 = vmatprep.subr.mxu0 0.0
    %1583 = vmatpush2.msra.mxu0 0.0
    %1584 = vmatprep.subr.mxu0 0.0
    %1585 = vmatpush2.msra.mxu0 0.0
    %1586 = vmatprep.subr.mxu0 0.0
    %1587 = vmatpush2.msra.mxu0 0.0
    %1588 = vmatprep.subr.mxu0 0.0
    %1589 = vmatpush2.msra.mxu0 0.0
    %1590 = vmatprep.subr.mxu0 0.0
    %1591 = vmatpush2.msra.mxu0 0.0
    %1592 = vmatprep.subr.mxu0 0.0
    %1593 = vmatpush2.msra.mxu0 0.0
    %1594 = vmatprep.subr.mxu0 0.0
    %1595 = vmatpush2.msra.mxu0 0.0
    %1596 = vmatprep.subr.mxu0 0.0
    %1597 = vmatpush2.msra.mxu0 0.0
    %1598 = vmatprep.subr.mxu0 0.0
    %1599 = vmatpush2.msra.mxu0 0.0
    %1600 = vmatprep.mubr.f32.mxu0 0.0
    %1601 = vmatmul.mubr.f32.gmra.mxu0 %v1520
    %v1602 = vpop.f32.mrf.mxu0
    %v1603 = vadd.f32 0.0, %v1602
    %v1604 = vpop.f32.mrf.mxu0
    %1605 = vmatprep.mubr.f32.mxu0 0.0
    %1606 = vmatmul.mubr.f32.gmra.mxu0 %v1521
    %v1607 = vpop.f32.mrf.mxu0
    %v1608 = vadd.f32 0.0, %v1607
    %v1609 = vpop.f32.mrf.mxu0
    %1610 = vmatprep.mubr.f32.mxu0 0.0
    %1611 = vmatmul.mubr.f32.gmra.mxu0 %v1522
    %v1612 = vpop.f32.mrf.mxu0
    %v1613 = vadd.f32 0.0, %v1612
    %v1614 = vpop.f32.mrf.mxu0
    %1615 = vmatprep.mubr.f32.mxu0 0.0
    %1616 = vmatmul.mubr.f32.gmra.mxu0 %v1523
    %v1617 = vpop.f32.mrf.mxu0
    %v1618 = vadd.f32 0.0, %v1617
    %v1619 = vpop.f32.mrf.mxu0
    %1620 = vmatprep.mubr.f32.mxu0 0.0
    %1621 = vmatmul.mubr.f32.gmra.mxu0 %v1524
    %v1622 = vpop.f32.mrf.mxu0
    %v1623 = vadd.f32 0.0, %v1622
    %v1624 = vpop.f32.mrf.mxu0
    %1625 = vmatprep.mubr.f32.mxu0 0.0
    %1626 = vmatmul.mubr.f32.gmra.mxu0 %v1525
    %v1627 = vpop.f32.mrf.mxu0
    %v1628 = vadd.f32 0.0, %v1627
    %v1629 = vpop.f32.mrf.mxu0
    %1630 = vmatprep.mubr.f32.mxu0 0.0
    %1631 = vmatmul.mubr.f32.gmra.mxu0 %v1526
    %v1632 = vpop.f32.mrf.mxu0
    %v1633 = vadd.f32 0.0, %v1632
    %v1634 = vpop.f32.mrf.mxu0
    %1635 = vmatprep.mubr.f32.mxu0 0.0
    %1636 = vmatmul.mubr.f32.gmra.mxu0 %v1527
    %v1637 = vpop.f32.mrf.mxu0
    %v1638 = vadd.f32 0.0, %v1637
    %v1639 = vpop.f32.mrf.mxu0
    %1640 = vmatprep.mubr.f32.mxu0 0.0
    %1641 = vmatmul.mubr.f32.gmra.mxu0 %v1528
    %v1642 = vpop.f32.mrf.mxu0
    %v1643 = vadd.f32 0.0, %v1642
    %v1644 = vpop.f32.mrf.mxu0
    %1645 = vmatprep.mubr.f32.mxu0 0.0
    %1646 = vmatmul.mubr.f32.gmra.mxu0 %v1529
    %v1647 = vpop.f32.mrf.mxu0
    %v1648 = vadd.f32 0.0, %v1647
    %v1649 = vpop.f32.mrf.mxu0
    %1650 = vmatprep.mubr.f32.mxu0 0.0
    %1651 = vmatmul.mubr.f32.gmra.mxu0 %v1530
    %v1652 = vpop.f32.mrf.mxu0
    %v1653 = vadd.f32 0.0, %v1652
    %v1654 = vpop.f32.mrf.mxu0
    %1655 = vmatprep.mubr.f32.mxu0 0.0
    %1656 = vmatmul.mubr.f32.gmra.mxu0 %v1531
    %v1657 = vpop.f32.mrf.mxu0
    %v1658 = vadd.f32 0.0, %v1657
    %v1659 = vpop.f32.mrf.mxu0
    %1660 = vmatprep.mubr.f32.mxu0 0.0
    %1661 = vmatmul.mubr.f32.gmra.mxu0 %v1532
    %v1662 = vpop.f32.mrf.mxu0
    %v1663 = vadd.f32 0.0, %v1662
    %v1664 = vpop.f32.mrf.mxu0
    %1665 = vmatprep.mubr.f32.mxu0 0.0
    %1666 = vmatmul.mubr.f32.gmra.mxu0 %v1533
    %v1667 = vpop.f32.mrf.mxu0
    %v1668 = vadd.f32 0.0, %v1667
    %v1669 = vpop.f32.mrf.mxu0
    %1670 = vmatprep.mubr.f32.mxu0 0.0
    %1671 = vmatmul.mubr.f32.gmra.mxu0 %v1534
    %v1672 = vpop.f32.mrf.mxu0
    %v1673 = vadd.f32 0.0, %v1672
    %v1674 = vpop.f32.mrf.mxu0
    %1675 = vmatprep.mubr.f32.mxu0 0.0
    %1676 = vmatmul.mubr.f32.gmra.mxu0 %v1535
    %v1677 = vpop.f32.mrf.mxu0
    %v1678 = vadd.f32 0.0, %v1677
    %v1679 = vpop.f32.mrf.mxu0
    %1680 = vdwg.mxu0
    %v1681 = vsub.f32 %v539, %v1603
    %v1682 = vsub.f32 %v544, %v1608
    %v1683 = vsub.f32 %v549, %v1613
    %v1684 = vsub.f32 %v554, %v1618
    %v1685 = vsub.f32 %v559, %v1623
    %v1686 = vsub.f32 %v564, %v1628
    %v1687 = vsub.f32 %v569, %v1633
    %v1688 = vsub.f32 %v574, %v1638
    %v1689 = vsub.f32 %v579, %v1643
    %v1690 = vsub.f32 %v584, %v1648
    %v1691 = vsub.f32 %v589, %v1653
    %v1692 = vsub.f32 %v594, %v1658
    %v1693 = vsub.f32 %v599, %v1663
    %v1694 = vsub.f32 %v604, %v1668
    %v1695 = vsub.f32 %v609, %v1673
    %v1696 = vsub.f32 %v614, %v1678
    %v1697 = vmax.f32 %v1681, 0.0
    %v1698 = vmax.f32 %v1682, 0.0
    %v1699 = vmax.f32 %v1683, 0.0
    %v1700 = vmax.f32 %v1684, 0.0
    %v1701 = vmax.f32 %v1685, 0.0
    %v1702 = vmax.f32 %v1686, 0.0
    %v1703 = vmax.f32 %v1687, 0.0
    %v1704 = vmax.f32 %v1688, 0.0
    %v1705 = vmax.f32 %v1689, 0.0
    %v1706 = vmax.f32 %v1690, 0.0
    %v1707 = vmax.f32 %v1691, 0.0
    %v1708 = vmax.f32 %v1692, 0.0
    %v1709 = vmax.f32 %v1693, 0.0
    %v1710 = vmax.f32 %v1694, 0.0
    %v1711 = vmax.f32 %v1695, 0.0
    %v1712 = vmax.f32 %v1696, 0.0
    %1713 = vmin.xlane.f32.xlu0 %v1504
    %v1714 = vpop.xlane.xlu0 %1713
    %1715 = vmin.xlane.f32.xlu0 %v1505
    %v1716 = vpop.xlane.xlu0 %1715
    %1717 = vmin.xlane.f32.xlu0 %v1506
    %v1718 = vpop.xlane.xlu0 %1717
    %1719 = vmin.xlane.f32.xlu0 %v1507
    %v1720 = vpop.xlane.xlu0 %1719
    %1721 = vmin.xlane.f32.xlu0 %v1508
    %v1722 = vpop.xlane.xlu0 %1721
    %1723 = vmin.xlane.f32.xlu0 %v1509
    %v1724 = vpop.xlane.xlu0 %1723
    %1725 = vmin.xlane.f32.xlu0 %v1510
    %v1726 = vpop.xlane.xlu0 %1725
    %1727 = vmin.xlane.f32.xlu0 %v1511
    %v1728 = vpop.xlane.xlu0 %1727
    %1729 = vmin.xlane.f32.xlu0 %v1512
    %v1730 = vpop.xlane.xlu0 %1729
    %1731 = vmin.xlane.f32.xlu0 %v1513
    %v1732 = vpop.xlane.xlu0 %1731
    %1733 = vmin.xlane.f32.xlu0 %v1514
    %v1734 = vpop.xlane.xlu0 %1733
    %1735 = vmin.xlane.f32.xlu0 %v1515
    %v1736 = vpop.xlane.xlu0 %1735
    %1737 = vmin.xlane.f32.xlu0 %v1516
    %v1738 = vpop.xlane.xlu0 %1737
    %1739 = vmin.xlane.f32.xlu0 %v1517
    %v1740 = vpop.xlane.xlu0 %1739
    %1741 = vmin.xlane.f32.xlu0 %v1518
    %v1742 = vpop.xlane.xlu0 %1741
    %1743 = vmin.xlane.f32.xlu0 %v1519
    %v1744 = vpop.xlane.xlu0 %1743
    %vm1745 = vcmp.eq.f32.partialorder %v1504, %v1714
    %vm1746 = vcmp.eq.f32.partialorder %v1505, %v1716
    %vm1747 = vcmp.eq.f32.partialorder %v1506, %v1718
    %vm1748 = vcmp.eq.f32.partialorder %v1507, %v1720
    %vm1749 = vcmp.eq.f32.partialorder %v1508, %v1722
    %vm1750 = vcmp.eq.f32.partialorder %v1509, %v1724
    %vm1751 = vcmp.eq.f32.partialorder %v1510, %v1726
    %vm1752 = vcmp.eq.f32.partialorder %v1511, %v1728
    %vm1753 = vcmp.eq.f32.partialorder %v1512, %v1730
    %vm1754 = vcmp.eq.f32.partialorder %v1513, %v1732
    %vm1755 = vcmp.eq.f32.partialorder %v1514, %v1734
    %vm1756 = vcmp.eq.f32.partialorder %v1515, %v1736
    %vm1757 = vcmp.eq.f32.partialorder %v1516, %v1738
    %vm1758 = vcmp.eq.f32.partialorder %v1517, %v1740
    %vm1759 = vcmp.eq.f32.partialorder %v1518, %v1742
    %vm1760 = vcmp.eq.f32.partialorder %v1519, %v1744
    %v1761 = vsel %vm1745, 1e+30, %v1504
    %v1762 = vsel %vm1746, 1e+30, %v1505
    %v1763 = vsel %vm1747, 1e+30, %v1506
    %v1764 = vsel %vm1748, 1e+30, %v1507
    %v1765 = vsel %vm1749, 1e+30, %v1508
    %v1766 = vsel %vm1750, 1e+30, %v1509
    %v1767 = vsel %vm1751, 1e+30, %v1510
    %v1768 = vsel %vm1752, 1e+30, %v1511
    %v1769 = vsel %vm1753, 1e+30, %v1512
    %v1770 = vsel %vm1754, 1e+30, %v1513
    %v1771 = vsel %vm1755, 1e+30, %v1514
    %v1772 = vsel %vm1756, 1e+30, %v1515
    %v1773 = vsel %vm1757, 1e+30, %v1516
    %v1774 = vsel %vm1758, 1e+30, %v1517
    %v1775 = vsel %vm1759, 1e+30, %v1518
    %v1776 = vsel %vm1760, 1e+30, %v1519
    %v1777 = vsel %vm1745, 1.0, 0.0
    %v1778 = vsel %vm1746, 1.0, 0.0
    %v1779 = vsel %vm1747, 1.0, 0.0
    %v1780 = vsel %vm1748, 1.0, 0.0
    %v1781 = vsel %vm1749, 1.0, 0.0
    %v1782 = vsel %vm1750, 1.0, 0.0
    %v1783 = vsel %vm1751, 1.0, 0.0
    %v1784 = vsel %vm1752, 1.0, 0.0
    %v1785 = vsel %vm1753, 1.0, 0.0
    %v1786 = vsel %vm1754, 1.0, 0.0
    %v1787 = vsel %vm1755, 1.0, 0.0
    %v1788 = vsel %vm1756, 1.0, 0.0
    %v1789 = vsel %vm1757, 1.0, 0.0
    %v1790 = vsel %vm1758, 1.0, 0.0
    %v1791 = vsel %vm1759, 1.0, 0.0
    %v1792 = vsel %vm1760, 1.0, 0.0
    %1793 = vmatprep.subr.mxu0 0.0
    %1794 = vmatpush1.msra.mxu0 %v460
    %1795 = vmatprep.subr.mxu0 0.0
    %1796 = vmatpush1.msra.mxu0 %v455
    %1797 = vmatprep.subr.mxu0 0.0
    %1798 = vmatpush1.msra.mxu0 %v450
    %1799 = vmatprep.subr.mxu0 0.0
    %1800 = vmatpush1.msra.mxu0 %v445
    %1801 = vmatprep.subr.mxu0 0.0
    %1802 = vmatpush1.msra.mxu0 %v440
    %1803 = vmatprep.subr.mxu0 0.0
    %1804 = vmatpush1.msra.mxu0 %v435
    %1805 = vmatprep.subr.mxu0 0.0
    %1806 = vmatpush1.msra.mxu0 %v430
    %1807 = vmatprep.subr.mxu0 0.0
    %1808 = vmatpush1.msra.mxu0 %v425
    %1809 = vmatprep.subr.mxu0 0.0
    %1810 = vmatpush1.msra.mxu0 %v420
    %1811 = vmatprep.subr.mxu0 0.0
    %1812 = vmatpush1.msra.mxu0 %v415
    %1813 = vmatprep.subr.mxu0 0.0
    %1814 = vmatpush1.msra.mxu0 %v410
    %1815 = vmatprep.subr.mxu0 0.0
    %1816 = vmatpush1.msra.mxu0 %v405
    %1817 = vmatprep.subr.mxu0 0.0
    %1818 = vmatpush1.msra.mxu0 %v400
    %1819 = vmatprep.subr.mxu0 0.0
    %1820 = vmatpush1.msra.mxu0 %v395
    %1821 = vmatprep.subr.mxu0 0.0
    %1822 = vmatpush1.msra.mxu0 %v390
    %1823 = vmatprep.subr.mxu0 0.0
    %1824 = vmatpush1.msra.mxu0 %v385
    %1825 = vmatprep.subr.mxu0 0.0
    %1826 = vmatpush2.msra.mxu0 0.0
    %1827 = vmatprep.subr.mxu0 0.0
    %1828 = vmatpush2.msra.mxu0 0.0
    %1829 = vmatprep.subr.mxu0 0.0
    %1830 = vmatpush2.msra.mxu0 0.0
    %1831 = vmatprep.subr.mxu0 0.0
    %1832 = vmatpush2.msra.mxu0 0.0
    %1833 = vmatprep.subr.mxu0 0.0
    %1834 = vmatpush2.msra.mxu0 0.0
    %1835 = vmatprep.subr.mxu0 0.0
    %1836 = vmatpush2.msra.mxu0 0.0
    %1837 = vmatprep.subr.mxu0 0.0
    %1838 = vmatpush2.msra.mxu0 0.0
    %1839 = vmatprep.subr.mxu0 0.0
    %1840 = vmatpush2.msra.mxu0 0.0
    %1841 = vmatprep.subr.mxu0 0.0
    %1842 = vmatpush2.msra.mxu0 0.0
    %1843 = vmatprep.subr.mxu0 0.0
    %1844 = vmatpush2.msra.mxu0 0.0
    %1845 = vmatprep.subr.mxu0 0.0
    %1846 = vmatpush2.msra.mxu0 0.0
    %1847 = vmatprep.subr.mxu0 0.0
    %1848 = vmatpush2.msra.mxu0 0.0
    %1849 = vmatprep.subr.mxu0 0.0
    %1850 = vmatpush2.msra.mxu0 0.0
    %1851 = vmatprep.subr.mxu0 0.0
    %1852 = vmatpush2.msra.mxu0 0.0
    %1853 = vmatprep.subr.mxu0 0.0
    %1854 = vmatpush2.msra.mxu0 0.0
    %1855 = vmatprep.subr.mxu0 0.0
    %1856 = vmatpush2.msra.mxu0 0.0
    %1857 = vmatprep.mubr.f32.mxu0 0.0
    %1858 = vmatmul.mubr.f32.gmra.mxu0 %v1777
    %v1859 = vpop.f32.mrf.mxu0
    %v1860 = vadd.f32 0.0, %v1859
    %v1861 = vpop.f32.mrf.mxu0
    %1862 = vmatprep.mubr.f32.mxu0 0.0
    %1863 = vmatmul.mubr.f32.gmra.mxu0 %v1778
    %v1864 = vpop.f32.mrf.mxu0
    %v1865 = vadd.f32 0.0, %v1864
    %v1866 = vpop.f32.mrf.mxu0
    %1867 = vmatprep.mubr.f32.mxu0 0.0
    %1868 = vmatmul.mubr.f32.gmra.mxu0 %v1779
    %v1869 = vpop.f32.mrf.mxu0
    %v1870 = vadd.f32 0.0, %v1869
    %v1871 = vpop.f32.mrf.mxu0
    %1872 = vmatprep.mubr.f32.mxu0 0.0
    %1873 = vmatmul.mubr.f32.gmra.mxu0 %v1780
    %v1874 = vpop.f32.mrf.mxu0
    %v1875 = vadd.f32 0.0, %v1874
    %v1876 = vpop.f32.mrf.mxu0
    %1877 = vmatprep.mubr.f32.mxu0 0.0
    %1878 = vmatmul.mubr.f32.gmra.mxu0 %v1781
    %v1879 = vpop.f32.mrf.mxu0
    %v1880 = vadd.f32 0.0, %v1879
    %v1881 = vpop.f32.mrf.mxu0
    %1882 = vmatprep.mubr.f32.mxu0 0.0
    %1883 = vmatmul.mubr.f32.gmra.mxu0 %v1782
    %v1884 = vpop.f32.mrf.mxu0
    %v1885 = vadd.f32 0.0, %v1884
    %v1886 = vpop.f32.mrf.mxu0
    %1887 = vmatprep.mubr.f32.mxu0 0.0
    %1888 = vmatmul.mubr.f32.gmra.mxu0 %v1783
    %v1889 = vpop.f32.mrf.mxu0
    %v1890 = vadd.f32 0.0, %v1889
    %v1891 = vpop.f32.mrf.mxu0
    %1892 = vmatprep.mubr.f32.mxu0 0.0
    %1893 = vmatmul.mubr.f32.gmra.mxu0 %v1784
    %v1894 = vpop.f32.mrf.mxu0
    %v1895 = vadd.f32 0.0, %v1894
    %v1896 = vpop.f32.mrf.mxu0
    %1897 = vmatprep.mubr.f32.mxu0 0.0
    %1898 = vmatmul.mubr.f32.gmra.mxu0 %v1785
    %v1899 = vpop.f32.mrf.mxu0
    %v1900 = vadd.f32 0.0, %v1899
    %v1901 = vpop.f32.mrf.mxu0
    %1902 = vmatprep.mubr.f32.mxu0 0.0
    %1903 = vmatmul.mubr.f32.gmra.mxu0 %v1786
    %v1904 = vpop.f32.mrf.mxu0
    %v1905 = vadd.f32 0.0, %v1904
    %v1906 = vpop.f32.mrf.mxu0
    %1907 = vmatprep.mubr.f32.mxu0 0.0
    %1908 = vmatmul.mubr.f32.gmra.mxu0 %v1787
    %v1909 = vpop.f32.mrf.mxu0
    %v1910 = vadd.f32 0.0, %v1909
    %v1911 = vpop.f32.mrf.mxu0
    %1912 = vmatprep.mubr.f32.mxu0 0.0
    %1913 = vmatmul.mubr.f32.gmra.mxu0 %v1788
    %v1914 = vpop.f32.mrf.mxu0
    %v1915 = vadd.f32 0.0, %v1914
    %v1916 = vpop.f32.mrf.mxu0
    %1917 = vmatprep.mubr.f32.mxu0 0.0
    %1918 = vmatmul.mubr.f32.gmra.mxu0 %v1789
    %v1919 = vpop.f32.mrf.mxu0
    %v1920 = vadd.f32 0.0, %v1919
    %v1921 = vpop.f32.mrf.mxu0
    %1922 = vmatprep.mubr.f32.mxu0 0.0
    %1923 = vmatmul.mubr.f32.gmra.mxu0 %v1790
    %v1924 = vpop.f32.mrf.mxu0
    %v1925 = vadd.f32 0.0, %v1924
    %v1926 = vpop.f32.mrf.mxu0
    %1927 = vmatprep.mubr.f32.mxu0 0.0
    %1928 = vmatmul.mubr.f32.gmra.mxu0 %v1791
    %v1929 = vpop.f32.mrf.mxu0
    %v1930 = vadd.f32 0.0, %v1929
    %v1931 = vpop.f32.mrf.mxu0
    %1932 = vmatprep.mubr.f32.mxu0 0.0
    %1933 = vmatmul.mubr.f32.gmra.mxu0 %v1792
    %v1934 = vpop.f32.mrf.mxu0
    %v1935 = vadd.f32 0.0, %v1934
    %v1936 = vpop.f32.mrf.mxu0
    %1937 = vdwg.mxu0
    %v1938 = vsub.f32 %v539, %v1860
    %v1939 = vsub.f32 %v544, %v1865
    %v1940 = vsub.f32 %v549, %v1870
    %v1941 = vsub.f32 %v554, %v1875
    %v1942 = vsub.f32 %v559, %v1880
    %v1943 = vsub.f32 %v564, %v1885
    %v1944 = vsub.f32 %v569, %v1890
    %v1945 = vsub.f32 %v574, %v1895
    %v1946 = vsub.f32 %v579, %v1900
    %v1947 = vsub.f32 %v584, %v1905
    %v1948 = vsub.f32 %v589, %v1910
    %v1949 = vsub.f32 %v594, %v1915
    %v1950 = vsub.f32 %v599, %v1920
    %v1951 = vsub.f32 %v604, %v1925
    %v1952 = vsub.f32 %v609, %v1930
    %v1953 = vsub.f32 %v614, %v1935
    %v1954 = vmax.f32 %v1938, 0.0
    %v1955 = vmax.f32 %v1939, 0.0
    %v1956 = vmax.f32 %v1940, 0.0
    %v1957 = vmax.f32 %v1941, 0.0
    %v1958 = vmax.f32 %v1942, 0.0
    %v1959 = vmax.f32 %v1943, 0.0
    %v1960 = vmax.f32 %v1944, 0.0
    %v1961 = vmax.f32 %v1945, 0.0
    %v1962 = vmax.f32 %v1946, 0.0
    %v1963 = vmax.f32 %v1947, 0.0
    %v1964 = vmax.f32 %v1948, 0.0
    %v1965 = vmax.f32 %v1949, 0.0
    %v1966 = vmax.f32 %v1950, 0.0
    %v1967 = vmax.f32 %v1951, 0.0
    %v1968 = vmax.f32 %v1952, 0.0
    %v1969 = vmax.f32 %v1953, 0.0
    %1970 = vmin.xlane.f32.xlu0 %v1761
    %v1971 = vpop.xlane.xlu0 %1970
    %1972 = vmin.xlane.f32.xlu0 %v1762
    %v1973 = vpop.xlane.xlu0 %1972
    %1974 = vmin.xlane.f32.xlu0 %v1763
    %v1975 = vpop.xlane.xlu0 %1974
    %1976 = vmin.xlane.f32.xlu0 %v1764
    %v1977 = vpop.xlane.xlu0 %1976
    %1978 = vmin.xlane.f32.xlu0 %v1765
    %v1979 = vpop.xlane.xlu0 %1978
    %1980 = vmin.xlane.f32.xlu0 %v1766
    %v1981 = vpop.xlane.xlu0 %1980
    %1982 = vmin.xlane.f32.xlu0 %v1767
    %v1983 = vpop.xlane.xlu0 %1982
    %1984 = vmin.xlane.f32.xlu0 %v1768
    %v1985 = vpop.xlane.xlu0 %1984
    %1986 = vmin.xlane.f32.xlu0 %v1769
    %v1987 = vpop.xlane.xlu0 %1986
    %1988 = vmin.xlane.f32.xlu0 %v1770
    %v1989 = vpop.xlane.xlu0 %1988
    %1990 = vmin.xlane.f32.xlu0 %v1771
    %v1991 = vpop.xlane.xlu0 %1990
    %1992 = vmin.xlane.f32.xlu0 %v1772
    %v1993 = vpop.xlane.xlu0 %1992
    %1994 = vmin.xlane.f32.xlu0 %v1773
    %v1995 = vpop.xlane.xlu0 %1994
    %1996 = vmin.xlane.f32.xlu0 %v1774
    %v1997 = vpop.xlane.xlu0 %1996
    %1998 = vmin.xlane.f32.xlu0 %v1775
    %v1999 = vpop.xlane.xlu0 %1998
    %2000 = vmin.xlane.f32.xlu0 %v1776
    %v2001 = vpop.xlane.xlu0 %2000
    %vm2002 = vcmp.eq.f32.partialorder %v1761, %v1971
    %vm2003 = vcmp.eq.f32.partialorder %v1762, %v1973
    %vm2004 = vcmp.eq.f32.partialorder %v1763, %v1975
    %vm2005 = vcmp.eq.f32.partialorder %v1764, %v1977
    %vm2006 = vcmp.eq.f32.partialorder %v1765, %v1979
    %vm2007 = vcmp.eq.f32.partialorder %v1766, %v1981
    %vm2008 = vcmp.eq.f32.partialorder %v1767, %v1983
    %vm2009 = vcmp.eq.f32.partialorder %v1768, %v1985
    %vm2010 = vcmp.eq.f32.partialorder %v1769, %v1987
    %vm2011 = vcmp.eq.f32.partialorder %v1770, %v1989
    %vm2012 = vcmp.eq.f32.partialorder %v1771, %v1991
    %vm2013 = vcmp.eq.f32.partialorder %v1772, %v1993
    %vm2014 = vcmp.eq.f32.partialorder %v1773, %v1995
    %vm2015 = vcmp.eq.f32.partialorder %v1774, %v1997
    %vm2016 = vcmp.eq.f32.partialorder %v1775, %v1999
    %vm2017 = vcmp.eq.f32.partialorder %v1776, %v2001
    %v2018 = vsel %vm2002, 1.0, 0.0
    %v2019 = vsel %vm2003, 1.0, 0.0
    %v2020 = vsel %vm2004, 1.0, 0.0
    %v2021 = vsel %vm2005, 1.0, 0.0
    %v2022 = vsel %vm2006, 1.0, 0.0
    %v2023 = vsel %vm2007, 1.0, 0.0
    %v2024 = vsel %vm2008, 1.0, 0.0
    %v2025 = vsel %vm2009, 1.0, 0.0
    %v2026 = vsel %vm2010, 1.0, 0.0
    %v2027 = vsel %vm2011, 1.0, 0.0
    %v2028 = vsel %vm2012, 1.0, 0.0
    %v2029 = vsel %vm2013, 1.0, 0.0
    %v2030 = vsel %vm2014, 1.0, 0.0
    %v2031 = vsel %vm2015, 1.0, 0.0
    %v2032 = vsel %vm2016, 1.0, 0.0
    %v2033 = vsel %vm2017, 1.0, 0.0
    %2034 = vmatprep.subr.mxu0 0.0
    %2035 = vmatpush1.msra.mxu0 %v460
    %2036 = vmatprep.subr.mxu0 0.0
    %2037 = vmatpush1.msra.mxu0 %v455
    %2038 = vmatprep.subr.mxu0 0.0
    %2039 = vmatpush1.msra.mxu0 %v450
    %2040 = vmatprep.subr.mxu0 0.0
    %2041 = vmatpush1.msra.mxu0 %v445
    %2042 = vmatprep.subr.mxu0 0.0
    %2043 = vmatpush1.msra.mxu0 %v440
    %2044 = vmatprep.subr.mxu0 0.0
    %2045 = vmatpush1.msra.mxu0 %v435
    %2046 = vmatprep.subr.mxu0 0.0
    %2047 = vmatpush1.msra.mxu0 %v430
    %2048 = vmatprep.subr.mxu0 0.0
    %2049 = vmatpush1.msra.mxu0 %v425
    %2050 = vmatprep.subr.mxu0 0.0
    %2051 = vmatpush1.msra.mxu0 %v420
    %2052 = vmatprep.subr.mxu0 0.0
    %2053 = vmatpush1.msra.mxu0 %v415
    %2054 = vmatprep.subr.mxu0 0.0
    %2055 = vmatpush1.msra.mxu0 %v410
    %2056 = vmatprep.subr.mxu0 0.0
    %2057 = vmatpush1.msra.mxu0 %v405
    %2058 = vmatprep.subr.mxu0 0.0
    %2059 = vmatpush1.msra.mxu0 %v400
    %2060 = vmatprep.subr.mxu0 0.0
    %2061 = vmatpush1.msra.mxu0 %v395
    %2062 = vmatprep.subr.mxu0 0.0
    %2063 = vmatpush1.msra.mxu0 %v390
    %2064 = vmatprep.subr.mxu0 0.0
    %2065 = vmatpush1.msra.mxu0 %v385
    %2066 = vmatprep.subr.mxu0 0.0
    %2067 = vmatpush2.msra.mxu0 0.0
    %2068 = vmatprep.subr.mxu0 0.0
    %2069 = vmatpush2.msra.mxu0 0.0
    %2070 = vmatprep.subr.mxu0 0.0
    %2071 = vmatpush2.msra.mxu0 0.0
    %2072 = vmatprep.subr.mxu0 0.0
    %2073 = vmatpush2.msra.mxu0 0.0
    %2074 = vmatprep.subr.mxu0 0.0
    %2075 = vmatpush2.msra.mxu0 0.0
    %2076 = vmatprep.subr.mxu0 0.0
    %2077 = vmatpush2.msra.mxu0 0.0
    %2078 = vmatprep.subr.mxu0 0.0
    %2079 = vmatpush2.msra.mxu0 0.0
    %2080 = vmatprep.subr.mxu0 0.0
    %2081 = vmatpush2.msra.mxu0 0.0
    %2082 = vmatprep.subr.mxu0 0.0
    %2083 = vmatpush2.msra.mxu0 0.0
    %2084 = vmatprep.subr.mxu0 0.0
    %2085 = vmatpush2.msra.mxu0 0.0
    %2086 = vmatprep.subr.mxu0 0.0
    %2087 = vmatpush2.msra.mxu0 0.0
    %2088 = vmatprep.subr.mxu0 0.0
    %2089 = vmatpush2.msra.mxu0 0.0
    %2090 = vmatprep.subr.mxu0 0.0
    %2091 = vmatpush2.msra.mxu0 0.0
    %2092 = vmatprep.subr.mxu0 0.0
    %2093 = vmatpush2.msra.mxu0 0.0
    %2094 = vmatprep.subr.mxu0 0.0
    %2095 = vmatpush2.msra.mxu0 0.0
    %2096 = vmatprep.subr.mxu0 0.0
    %2097 = vmatpush2.msra.mxu0 0.0
    %2098 = vmatprep.mubr.f32.mxu0 0.0
    %2099 = vmatmul.mubr.f32.gmra.mxu0 %v2018
    %v2100 = vpop.f32.mrf.mxu0
    %v2101 = vadd.f32 0.0, %v2100
    %v2102 = vpop.f32.mrf.mxu0
    %2103 = vmatprep.mubr.f32.mxu0 0.0
    %2104 = vmatmul.mubr.f32.gmra.mxu0 %v2019
    %v2105 = vpop.f32.mrf.mxu0
    %v2106 = vadd.f32 0.0, %v2105
    %v2107 = vpop.f32.mrf.mxu0
    %2108 = vmatprep.mubr.f32.mxu0 0.0
    %2109 = vmatmul.mubr.f32.gmra.mxu0 %v2020
    %v2110 = vpop.f32.mrf.mxu0
    %v2111 = vadd.f32 0.0, %v2110
    %v2112 = vpop.f32.mrf.mxu0
    %2113 = vmatprep.mubr.f32.mxu0 0.0
    %2114 = vmatmul.mubr.f32.gmra.mxu0 %v2021
    %v2115 = vpop.f32.mrf.mxu0
    %v2116 = vadd.f32 0.0, %v2115
    %v2117 = vpop.f32.mrf.mxu0
    %2118 = vmatprep.mubr.f32.mxu0 0.0
    %2119 = vmatmul.mubr.f32.gmra.mxu0 %v2022
    %v2120 = vpop.f32.mrf.mxu0
    %v2121 = vadd.f32 0.0, %v2120
    %v2122 = vpop.f32.mrf.mxu0
    %2123 = vmatprep.mubr.f32.mxu0 0.0
    %2124 = vmatmul.mubr.f32.gmra.mxu0 %v2023
    %v2125 = vpop.f32.mrf.mxu0
    %v2126 = vadd.f32 0.0, %v2125
    %v2127 = vpop.f32.mrf.mxu0
    %2128 = vmatprep.mubr.f32.mxu0 0.0
    %2129 = vmatmul.mubr.f32.gmra.mxu0 %v2024
    %v2130 = vpop.f32.mrf.mxu0
    %v2131 = vadd.f32 0.0, %v2130
    %v2132 = vpop.f32.mrf.mxu0
    %2133 = vmatprep.mubr.f32.mxu0 0.0
    %2134 = vmatmul.mubr.f32.gmra.mxu0 %v2025
    %v2135 = vpop.f32.mrf.mxu0
    %v2136 = vadd.f32 0.0, %v2135
    %v2137 = vpop.f32.mrf.mxu0
    %2138 = vmatprep.mubr.f32.mxu0 0.0
    %2139 = vmatmul.mubr.f32.gmra.mxu0 %v2026
    %v2140 = vpop.f32.mrf.mxu0
    %v2141 = vadd.f32 0.0, %v2140
    %v2142 = vpop.f32.mrf.mxu0
    %2143 = vmatprep.mubr.f32.mxu0 0.0
    %2144 = vmatmul.mubr.f32.gmra.mxu0 %v2027
    %v2145 = vpop.f32.mrf.mxu0
    %v2146 = vadd.f32 0.0, %v2145
    %v2147 = vpop.f32.mrf.mxu0
    %2148 = vmatprep.mubr.f32.mxu0 0.0
    %2149 = vmatmul.mubr.f32.gmra.mxu0 %v2028
    %v2150 = vpop.f32.mrf.mxu0
    %v2151 = vadd.f32 0.0, %v2150
    %v2152 = vpop.f32.mrf.mxu0
    %2153 = vmatprep.mubr.f32.mxu0 0.0
    %2154 = vmatmul.mubr.f32.gmra.mxu0 %v2029
    %v2155 = vpop.f32.mrf.mxu0
    %v2156 = vadd.f32 0.0, %v2155
    %v2157 = vpop.f32.mrf.mxu0
    %2158 = vmatprep.mubr.f32.mxu0 0.0
    %2159 = vmatmul.mubr.f32.gmra.mxu0 %v2030
    %v2160 = vpop.f32.mrf.mxu0
    %v2161 = vadd.f32 0.0, %v2160
    %v2162 = vpop.f32.mrf.mxu0
    %2163 = vmatprep.mubr.f32.mxu0 0.0
    %2164 = vmatmul.mubr.f32.gmra.mxu0 %v2031
    %v2165 = vpop.f32.mrf.mxu0
    %v2166 = vadd.f32 0.0, %v2165
    %v2167 = vpop.f32.mrf.mxu0
    %2168 = vmatprep.mubr.f32.mxu0 0.0
    %2169 = vmatmul.mubr.f32.gmra.mxu0 %v2032
    %v2170 = vpop.f32.mrf.mxu0
    %v2171 = vadd.f32 0.0, %v2170
    %v2172 = vpop.f32.mrf.mxu0
    %2173 = vmatprep.mubr.f32.mxu0 0.0
    %2174 = vmatmul.mubr.f32.gmra.mxu0 %v2033
    %v2175 = vpop.f32.mrf.mxu0
    %v2176 = vadd.f32 0.0, %v2175
    %v2177 = vpop.f32.mrf.mxu0
    %2178 = vdwg.mxu0
    %v2179 = vsub.f32 %v539, %v2101
    %v2180 = vsub.f32 %v544, %v2106
    %v2181 = vsub.f32 %v549, %v2111
    %v2182 = vsub.f32 %v554, %v2116
    %v2183 = vsub.f32 %v559, %v2121
    %v2184 = vsub.f32 %v564, %v2126
    %v2185 = vsub.f32 %v569, %v2131
    %v2186 = vsub.f32 %v574, %v2136
    %v2187 = vsub.f32 %v579, %v2141
    %v2188 = vsub.f32 %v584, %v2146
    %v2189 = vsub.f32 %v589, %v2151
    %v2190 = vsub.f32 %v594, %v2156
    %v2191 = vsub.f32 %v599, %v2161
    %v2192 = vsub.f32 %v604, %v2166
    %v2193 = vsub.f32 %v609, %v2171
    %v2194 = vsub.f32 %v614, %v2176
    %v2195 = vmax.f32 %v2179, 0.0
    %v2196 = vmax.f32 %v2180, 0.0
    %v2197 = vmax.f32 %v2181, 0.0
    %v2198 = vmax.f32 %v2182, 0.0
    %v2199 = vmax.f32 %v2183, 0.0
    %v2200 = vmax.f32 %v2184, 0.0
    %v2201 = vmax.f32 %v2185, 0.0
    %v2202 = vmax.f32 %v2186, 0.0
    %v2203 = vmax.f32 %v2187, 0.0
    %v2204 = vmax.f32 %v2188, 0.0
    %v2205 = vmax.f32 %v2189, 0.0
    %v2206 = vmax.f32 %v2190, 0.0
    %v2207 = vmax.f32 %v2191, 0.0
    %v2208 = vmax.f32 %v2192, 0.0
    %v2209 = vmax.f32 %v2193, 0.0
    %v2210 = vmax.f32 %v2194, 0.0
    %v2212 = vlaneseq
    %v2213 = vshrl.u32 %v2212, 7
    %v2214 = vsub.s32 0, %v2213
    %v2215 = vrot.slane %v161, %v2214
    %vm2217 = vcmask 64512
    %v2219 = vsel %vm2217, %v1440, 0
    %v2222 = vsel %vm2217, %v1441, 0
    %v2225 = vsel %vm2217, %v1442, 0
    %v2228 = vsel %vm2217, %v1443, 0
    %v2231 = vsel %vm2217, %v1444, 0
    %v2234 = vsel %vm2217, %v1445, 0
    %v2237 = vsel %vm2217, %v1446, 0
    %v2240 = vsel %vm2217, %v1447, 0
    %v2243 = vsel %vm2217, %v1448, 0
    %v2246 = vsel %vm2217, %v1449, 0
    %v2249 = vsel %vm2217, %v1450, 0
    %v2252 = vsel %vm2217, %v1451, 0
    %v2255 = vsel %vm2217, %v1452, 0
    %v2258 = vsel %vm2217, %v1453, 0
    %v2261 = vsel %vm2217, %v1454, 0
    %v2264 = vsel %vm2217, %v1455, 0
    %v2267 = vsel %vm2217, %v1697, 0
    %v2270 = vsel %vm2217, %v1698, 0
    %v2273 = vsel %vm2217, %v1699, 0
    %v2276 = vsel %vm2217, %v1700, 0
    %v2279 = vsel %vm2217, %v1701, 0
    %v2282 = vsel %vm2217, %v1702, 0
    %v2285 = vsel %vm2217, %v1703, 0
    %v2288 = vsel %vm2217, %v1704, 0
    %v2291 = vsel %vm2217, %v1705, 0
    %v2294 = vsel %vm2217, %v1706, 0
    %v2297 = vsel %vm2217, %v1707, 0
    %v2300 = vsel %vm2217, %v1708, 0
    %v2303 = vsel %vm2217, %v1709, 0
    %v2306 = vsel %vm2217, %v1710, 0
    %v2309 = vsel %vm2217, %v1711, 0
    %v2312 = vsel %vm2217, %v1712, 0
    %v2315 = vsel %vm2217, %v1954, 0
    %v2318 = vsel %vm2217, %v1955, 0
    %v2321 = vsel %vm2217, %v1956, 0
    %v2324 = vsel %vm2217, %v1957, 0
    %v2327 = vsel %vm2217, %v1958, 0
    %v2330 = vsel %vm2217, %v1959, 0
    %v2333 = vsel %vm2217, %v1960, 0
    %v2336 = vsel %vm2217, %v1961, 0
    %v2339 = vsel %vm2217, %v1962, 0
    %v2342 = vsel %vm2217, %v1963, 0
    %v2345 = vsel %vm2217, %v1964, 0
    %v2348 = vsel %vm2217, %v1965, 0
    %v2351 = vsel %vm2217, %v1966, 0
    %v2354 = vsel %vm2217, %v1967, 0
    %v2357 = vsel %vm2217, %v1968, 0
    %v2360 = vsel %vm2217, %v1969, 0
    %v2363 = vsel %vm2217, %v2195, 0
    %v2366 = vsel %vm2217, %v2196, 0
    %v2369 = vsel %vm2217, %v2197, 0
    %v2372 = vsel %vm2217, %v2198, 0
    %v2375 = vsel %vm2217, %v2199, 0
    %v2378 = vsel %vm2217, %v2200, 0
    %v2381 = vsel %vm2217, %v2201, 0
    %v2384 = vsel %vm2217, %v2202, 0
    %v2387 = vsel %vm2217, %v2203, 0
    %v2390 = vsel %vm2217, %v2204, 0
    %v2393 = vsel %vm2217, %v2205, 0
    %v2396 = vsel %vm2217, %v2206, 0
    %v2399 = vsel %vm2217, %v2207, 0
    %v2402 = vsel %vm2217, %v2208, 0
    %v2405 = vsel %vm2217, %v2209, 0
    %v2408 = vsel %vm2217, %v2210, 0
    %2410 = vmatprep.subr.mxu0 0.0
    %2411 = vmatpush1.msra.mxu0 0.0
    %2412 = vmatprep.subr.mxu0 0.0
    %2413 = vmatpush1.msra.mxu0 0.0
    %2414 = vmatprep.subr.mxu0 0.0
    %2415 = vmatpush1.msra.mxu0 0.0
    %2416 = vmatprep.subr.mxu0 0.0
    %2417 = vmatpush1.msra.mxu0 0.0
    %2418 = vmatprep.subr.mxu0 0.0
    %2419 = vmatpush1.msra.mxu0 0.0
    %2420 = vmatprep.subr.mxu0 0.0
    %2421 = vmatpush1.msra.mxu0 0.0
    %2422 = vmatprep.subr.mxu0 0.0
    %2423 = vmatpush1.msra.mxu0 0.0
    %2424 = vmatprep.subr.mxu0 0.0
    %2425 = vmatpush1.msra.mxu0 0.0
    %2426 = vmatprep.subr.mxu0 0.0
    %2427 = vmatpush1.msra.mxu0 0.0
    %2428 = vmatprep.subr.mxu0 0.0
    %2429 = vmatpush1.msra.mxu0 0.0
    %2430 = vmatprep.subr.mxu0 0.0
    %2431 = vmatpush1.msra.mxu0 0.0
    %2432 = vmatprep.subr.mxu0 0.0
    %2433 = vmatpush1.msra.mxu0 0.0
    %2434 = vmatprep.subr.mxu0 0.0
    %2435 = vmatpush1.msra.mxu0 0.0
    %2436 = vmatprep.subr.mxu0 0.0
    %2437 = vmatpush1.msra.mxu0 0.0
    %2438 = vmatprep.subr.mxu0 0.0
    %2439 = vmatpush1.msra.mxu0 0.0
    %2440 = vmatprep.subr.mxu0 0.0
    %2441 = vmatpush1.msra.mxu0 %v160
    %2442 = vmatprep.subr.mxu0 0.0
    %2443 = vmatpush2.msra.mxu0 0.0
    %2444 = vmatprep.subr.mxu0 0.0
    %2445 = vmatpush2.msra.mxu0 0.0
    %2446 = vmatprep.subr.mxu0 0.0
    %2447 = vmatpush2.msra.mxu0 0.0
    %2448 = vmatprep.subr.mxu0 0.0
    %2449 = vmatpush2.msra.mxu0 0.0
    %2450 = vmatprep.subr.mxu0 0.0
    %2451 = vmatpush2.msra.mxu0 0.0
    %2452 = vmatprep.subr.mxu0 0.0
    %2453 = vmatpush2.msra.mxu0 0.0
    %2454 = vmatprep.subr.mxu0 0.0
    %2455 = vmatpush2.msra.mxu0 0.0
    %2456 = vmatprep.subr.mxu0 0.0
    %2457 = vmatpush2.msra.mxu0 0.0
    %2458 = vmatprep.subr.mxu0 0.0
    %2459 = vmatpush2.msra.mxu0 0.0
    %2460 = vmatprep.subr.mxu0 0.0
    %2461 = vmatpush2.msra.mxu0 0.0
    %2462 = vmatprep.subr.mxu0 0.0
    %2463 = vmatpush2.msra.mxu0 0.0
    %2464 = vmatprep.subr.mxu0 0.0
    %2465 = vmatpush2.msra.mxu0 0.0
    %2466 = vmatprep.subr.mxu0 0.0
    %2467 = vmatpush2.msra.mxu0 0.0
    %2468 = vmatprep.subr.mxu0 0.0
    %2469 = vmatpush2.msra.mxu0 0.0
    %2470 = vmatprep.subr.mxu0 0.0
    %2471 = vmatpush2.msra.mxu0 0.0
    %2472 = vmatprep.subr.mxu0 0.0
    %2473 = vmatpush2.msra.mxu0 0.0
    %2474 = vmatprep.mubr.f32.mxu0 0.0
    %2475 = vmatmul.mubr.f32.gmra.mxu0 %v2219
    %v2476 = vpop.f32.mrf.mxu0
    %v2477 = vadd.f32 %v2215, %v2476
    %v2478 = vpop.f32.mrf.mxu0
    %2479 = vmatprep.mubr.f32.mxu0 0.0
    %2480 = vmatmul.mubr.f32.gmra.mxu0 %v2222
    %v2481 = vpop.f32.mrf.mxu0
    %v2482 = vadd.f32 %v2215, %v2481
    %v2483 = vpop.f32.mrf.mxu0
    %2484 = vmatprep.mubr.f32.mxu0 0.0
    %2485 = vmatmul.mubr.f32.gmra.mxu0 %v2225
    %v2486 = vpop.f32.mrf.mxu0
    %v2487 = vadd.f32 %v2215, %v2486
    %v2488 = vpop.f32.mrf.mxu0
    %2489 = vmatprep.mubr.f32.mxu0 0.0
    %2490 = vmatmul.mubr.f32.gmra.mxu0 %v2228
    %v2491 = vpop.f32.mrf.mxu0
    %v2492 = vadd.f32 %v2215, %v2491
    %v2493 = vpop.f32.mrf.mxu0
    %2494 = vmatprep.mubr.f32.mxu0 0.0
    %2495 = vmatmul.mubr.f32.gmra.mxu0 %v2231
    %v2496 = vpop.f32.mrf.mxu0
    %v2497 = vadd.f32 %v2215, %v2496
    %v2498 = vpop.f32.mrf.mxu0
    %2499 = vmatprep.mubr.f32.mxu0 0.0
    %2500 = vmatmul.mubr.f32.gmra.mxu0 %v2234
    %v2501 = vpop.f32.mrf.mxu0
    %v2502 = vadd.f32 %v2215, %v2501
    %v2503 = vpop.f32.mrf.mxu0
    %2504 = vmatprep.mubr.f32.mxu0 0.0
    %2505 = vmatmul.mubr.f32.gmra.mxu0 %v2237
    %v2506 = vpop.f32.mrf.mxu0
    %v2507 = vadd.f32 %v2215, %v2506
    %v2508 = vpop.f32.mrf.mxu0
    %2509 = vmatprep.mubr.f32.mxu0 0.0
    %2510 = vmatmul.mubr.f32.gmra.mxu0 %v2240
    %v2511 = vpop.f32.mrf.mxu0
    %v2512 = vadd.f32 %v2215, %v2511
    %v2513 = vpop.f32.mrf.mxu0
    %2514 = vmatprep.mubr.f32.mxu0 0.0
    %2515 = vmatmul.mubr.f32.gmra.mxu0 %v2243
    %v2516 = vpop.f32.mrf.mxu0
    %v2517 = vadd.f32 %v2215, %v2516
    %v2518 = vpop.f32.mrf.mxu0
    %2519 = vmatprep.mubr.f32.mxu0 0.0
    %2520 = vmatmul.mubr.f32.gmra.mxu0 %v2246
    %v2521 = vpop.f32.mrf.mxu0
    %v2522 = vadd.f32 %v2215, %v2521
    %v2523 = vpop.f32.mrf.mxu0
    %2524 = vmatprep.mubr.f32.mxu0 0.0
    %2525 = vmatmul.mubr.f32.gmra.mxu0 %v2249
    %v2526 = vpop.f32.mrf.mxu0
    %v2527 = vadd.f32 %v2215, %v2526
    %v2528 = vpop.f32.mrf.mxu0
    %2529 = vmatprep.mubr.f32.mxu0 0.0
    %2530 = vmatmul.mubr.f32.gmra.mxu0 %v2252
    %v2531 = vpop.f32.mrf.mxu0
    %v2532 = vadd.f32 %v2215, %v2531
    %v2533 = vpop.f32.mrf.mxu0
    %2534 = vmatprep.mubr.f32.mxu0 0.0
    %2535 = vmatmul.mubr.f32.gmra.mxu0 %v2255
    %v2536 = vpop.f32.mrf.mxu0
    %v2537 = vadd.f32 %v2215, %v2536
    %v2538 = vpop.f32.mrf.mxu0
    %2539 = vmatprep.mubr.f32.mxu0 0.0
    %2540 = vmatmul.mubr.f32.gmra.mxu0 %v2258
    %v2541 = vpop.f32.mrf.mxu0
    %v2542 = vadd.f32 %v2215, %v2541
    %v2543 = vpop.f32.mrf.mxu0
    %2544 = vmatprep.mubr.f32.mxu0 0.0
    %2545 = vmatmul.mubr.f32.gmra.mxu0 %v2261
    %v2546 = vpop.f32.mrf.mxu0
    %v2547 = vadd.f32 %v2215, %v2546
    %v2548 = vpop.f32.mrf.mxu0
    %2549 = vmatprep.mubr.f32.mxu0 0.0
    %2550 = vmatmul.mubr.f32.gmra.mxu0 %v2264
    %v2551 = vpop.f32.mrf.mxu0
    %v2552 = vadd.f32 %v2215, %v2551
    %v2553 = vpop.f32.mrf.mxu0
    %2554 = vmatprep.mubr.f32.mxu0 0.0
    %2555 = vmatmul.mubr.f32.gmra.mxu0 %v2267
    %v2556 = vpop.f32.mrf.mxu0
    %v2557 = vadd.f32 %v2215, %v2556
    %v2558 = vpop.f32.mrf.mxu0
    %2559 = vmatprep.mubr.f32.mxu0 0.0
    %2560 = vmatmul.mubr.f32.gmra.mxu0 %v2270
    %v2561 = vpop.f32.mrf.mxu0
    %v2562 = vadd.f32 %v2215, %v2561
    %v2563 = vpop.f32.mrf.mxu0
    %2564 = vmatprep.mubr.f32.mxu0 0.0
    %2565 = vmatmul.mubr.f32.gmra.mxu0 %v2273
    %v2566 = vpop.f32.mrf.mxu0
    %v2567 = vadd.f32 %v2215, %v2566
    %v2568 = vpop.f32.mrf.mxu0
    %2569 = vmatprep.mubr.f32.mxu0 0.0
    %2570 = vmatmul.mubr.f32.gmra.mxu0 %v2276
    %v2571 = vpop.f32.mrf.mxu0
    %v2572 = vadd.f32 %v2215, %v2571
    %v2573 = vpop.f32.mrf.mxu0
    %2574 = vmatprep.mubr.f32.mxu0 0.0
    %2575 = vmatmul.mubr.f32.gmra.mxu0 %v2279
    %v2576 = vpop.f32.mrf.mxu0
    %v2577 = vadd.f32 %v2215, %v2576
    %v2578 = vpop.f32.mrf.mxu0
    %2579 = vmatprep.mubr.f32.mxu0 0.0
    %2580 = vmatmul.mubr.f32.gmra.mxu0 %v2282
    %v2581 = vpop.f32.mrf.mxu0
    %v2582 = vadd.f32 %v2215, %v2581
    %v2583 = vpop.f32.mrf.mxu0
    %2584 = vmatprep.mubr.f32.mxu0 0.0
    %2585 = vmatmul.mubr.f32.gmra.mxu0 %v2285
    %v2586 = vpop.f32.mrf.mxu0
    %v2587 = vadd.f32 %v2215, %v2586
    %v2588 = vpop.f32.mrf.mxu0
    %2589 = vmatprep.mubr.f32.mxu0 0.0
    %2590 = vmatmul.mubr.f32.gmra.mxu0 %v2288
    %v2591 = vpop.f32.mrf.mxu0
    %v2592 = vadd.f32 %v2215, %v2591
    %v2593 = vpop.f32.mrf.mxu0
    %2594 = vmatprep.mubr.f32.mxu0 0.0
    %2595 = vmatmul.mubr.f32.gmra.mxu0 %v2291
    %v2596 = vpop.f32.mrf.mxu0
    %v2597 = vadd.f32 %v2215, %v2596
    %v2598 = vpop.f32.mrf.mxu0
    %2599 = vmatprep.mubr.f32.mxu0 0.0
    %2600 = vmatmul.mubr.f32.gmra.mxu0 %v2294
    %v2601 = vpop.f32.mrf.mxu0
    %v2602 = vadd.f32 %v2215, %v2601
    %v2603 = vpop.f32.mrf.mxu0
    %2604 = vmatprep.mubr.f32.mxu0 0.0
    %2605 = vmatmul.mubr.f32.gmra.mxu0 %v2297
    %v2606 = vpop.f32.mrf.mxu0
    %v2607 = vadd.f32 %v2215, %v2606
    %v2608 = vpop.f32.mrf.mxu0
    %2609 = vmatprep.mubr.f32.mxu0 0.0
    %2610 = vmatmul.mubr.f32.gmra.mxu0 %v2300
    %v2611 = vpop.f32.mrf.mxu0
    %v2612 = vadd.f32 %v2215, %v2611
    %v2613 = vpop.f32.mrf.mxu0
    %2614 = vmatprep.mubr.f32.mxu0 0.0
    %2615 = vmatmul.mubr.f32.gmra.mxu0 %v2303
    %v2616 = vpop.f32.mrf.mxu0
    %v2617 = vadd.f32 %v2215, %v2616
    %v2618 = vpop.f32.mrf.mxu0
    %2619 = vmatprep.mubr.f32.mxu0 0.0
    %2620 = vmatmul.mubr.f32.gmra.mxu0 %v2306
    %v2621 = vpop.f32.mrf.mxu0
    %v2622 = vadd.f32 %v2215, %v2621
    %v2623 = vpop.f32.mrf.mxu0
    %2624 = vmatprep.mubr.f32.mxu0 0.0
    %2625 = vmatmul.mubr.f32.gmra.mxu0 %v2309
    %v2626 = vpop.f32.mrf.mxu0
    %v2627 = vadd.f32 %v2215, %v2626
    %v2628 = vpop.f32.mrf.mxu0
    %2629 = vmatprep.mubr.f32.mxu0 0.0
    %2630 = vmatmul.mubr.f32.gmra.mxu0 %v2312
    %v2631 = vpop.f32.mrf.mxu0
    %v2632 = vadd.f32 %v2215, %v2631
    %v2633 = vpop.f32.mrf.mxu0
    %2634 = vmatprep.mubr.f32.mxu0 0.0
    %2635 = vmatmul.mubr.f32.gmra.mxu0 %v2315
    %v2636 = vpop.f32.mrf.mxu0
    %v2637 = vadd.f32 %v2215, %v2636
    %v2638 = vpop.f32.mrf.mxu0
    %2639 = vmatprep.mubr.f32.mxu0 0.0
    %2640 = vmatmul.mubr.f32.gmra.mxu0 %v2318
    %v2641 = vpop.f32.mrf.mxu0
    %v2642 = vadd.f32 %v2215, %v2641
    %v2643 = vpop.f32.mrf.mxu0
    %2644 = vmatprep.mubr.f32.mxu0 0.0
    %2645 = vmatmul.mubr.f32.gmra.mxu0 %v2321
    %v2646 = vpop.f32.mrf.mxu0
    %v2647 = vadd.f32 %v2215, %v2646
    %v2648 = vpop.f32.mrf.mxu0
    %2649 = vmatprep.mubr.f32.mxu0 0.0
    %2650 = vmatmul.mubr.f32.gmra.mxu0 %v2324
    %v2651 = vpop.f32.mrf.mxu0
    %v2652 = vadd.f32 %v2215, %v2651
    %v2653 = vpop.f32.mrf.mxu0
    %2654 = vmatprep.mubr.f32.mxu0 0.0
    %2655 = vmatmul.mubr.f32.gmra.mxu0 %v2327
    %v2656 = vpop.f32.mrf.mxu0
    %v2657 = vadd.f32 %v2215, %v2656
    %v2658 = vpop.f32.mrf.mxu0
    %2659 = vmatprep.mubr.f32.mxu0 0.0
    %2660 = vmatmul.mubr.f32.gmra.mxu0 %v2330
    %v2661 = vpop.f32.mrf.mxu0
    %v2662 = vadd.f32 %v2215, %v2661
    %v2663 = vpop.f32.mrf.mxu0
    %2664 = vmatprep.mubr.f32.mxu0 0.0
    %2665 = vmatmul.mubr.f32.gmra.mxu0 %v2333
    %v2666 = vpop.f32.mrf.mxu0
    %v2667 = vadd.f32 %v2215, %v2666
    %v2668 = vpop.f32.mrf.mxu0
    %2669 = vmatprep.mubr.f32.mxu0 0.0
    %2670 = vmatmul.mubr.f32.gmra.mxu0 %v2336
    %v2671 = vpop.f32.mrf.mxu0
    %v2672 = vadd.f32 %v2215, %v2671
    %v2673 = vpop.f32.mrf.mxu0
    %2674 = vmatprep.mubr.f32.mxu0 0.0
    %2675 = vmatmul.mubr.f32.gmra.mxu0 %v2339
    %v2676 = vpop.f32.mrf.mxu0
    %v2677 = vadd.f32 %v2215, %v2676
    %v2678 = vpop.f32.mrf.mxu0
    %2679 = vmatprep.mubr.f32.mxu0 0.0
    %2680 = vmatmul.mubr.f32.gmra.mxu0 %v2342
    %v2681 = vpop.f32.mrf.mxu0
    %v2682 = vadd.f32 %v2215, %v2681
    %v2683 = vpop.f32.mrf.mxu0
    %2684 = vmatprep.mubr.f32.mxu0 0.0
    %2685 = vmatmul.mubr.f32.gmra.mxu0 %v2345
    %v2686 = vpop.f32.mrf.mxu0
    %v2687 = vadd.f32 %v2215, %v2686
    %v2688 = vpop.f32.mrf.mxu0
    %2689 = vmatprep.mubr.f32.mxu0 0.0
    %2690 = vmatmul.mubr.f32.gmra.mxu0 %v2348
    %v2691 = vpop.f32.mrf.mxu0
    %v2692 = vadd.f32 %v2215, %v2691
    %v2693 = vpop.f32.mrf.mxu0
    %2694 = vmatprep.mubr.f32.mxu0 0.0
    %2695 = vmatmul.mubr.f32.gmra.mxu0 %v2351
    %v2696 = vpop.f32.mrf.mxu0
    %v2697 = vadd.f32 %v2215, %v2696
    %v2698 = vpop.f32.mrf.mxu0
    %2699 = vmatprep.mubr.f32.mxu0 0.0
    %2700 = vmatmul.mubr.f32.gmra.mxu0 %v2354
    %v2701 = vpop.f32.mrf.mxu0
    %v2702 = vadd.f32 %v2215, %v2701
    %v2703 = vpop.f32.mrf.mxu0
    %2704 = vmatprep.mubr.f32.mxu0 0.0
    %2705 = vmatmul.mubr.f32.gmra.mxu0 %v2357
    %v2706 = vpop.f32.mrf.mxu0
    %v2707 = vadd.f32 %v2215, %v2706
    %v2708 = vpop.f32.mrf.mxu0
    %2709 = vmatprep.mubr.f32.mxu0 0.0
    %2710 = vmatmul.mubr.f32.gmra.mxu0 %v2360
    %v2711 = vpop.f32.mrf.mxu0
    %v2712 = vadd.f32 %v2215, %v2711
    %v2713 = vpop.f32.mrf.mxu0
    %2714 = vmatprep.mubr.f32.mxu0 0.0
    %2715 = vmatmul.mubr.f32.gmra.mxu0 %v2363
    %v2716 = vpop.f32.mrf.mxu0
    %v2717 = vadd.f32 %v2215, %v2716
    %v2718 = vpop.f32.mrf.mxu0
    %2719 = vmatprep.mubr.f32.mxu0 0.0
    %2720 = vmatmul.mubr.f32.gmra.mxu0 %v2366
    %v2721 = vpop.f32.mrf.mxu0
    %v2722 = vadd.f32 %v2215, %v2721
    %v2723 = vpop.f32.mrf.mxu0
    %2724 = vmatprep.mubr.f32.mxu0 0.0
    %2725 = vmatmul.mubr.f32.gmra.mxu0 %v2369
    %v2726 = vpop.f32.mrf.mxu0
    %v2727 = vadd.f32 %v2215, %v2726
    %v2728 = vpop.f32.mrf.mxu0
    %2729 = vmatprep.mubr.f32.mxu0 0.0
    %2730 = vmatmul.mubr.f32.gmra.mxu0 %v2372
    %v2731 = vpop.f32.mrf.mxu0
    %v2732 = vadd.f32 %v2215, %v2731
    %v2733 = vpop.f32.mrf.mxu0
    %2734 = vmatprep.mubr.f32.mxu0 0.0
    %2735 = vmatmul.mubr.f32.gmra.mxu0 %v2375
    %v2736 = vpop.f32.mrf.mxu0
    %v2737 = vadd.f32 %v2215, %v2736
    %v2738 = vpop.f32.mrf.mxu0
    %2739 = vmatprep.mubr.f32.mxu0 0.0
    %2740 = vmatmul.mubr.f32.gmra.mxu0 %v2378
    %v2741 = vpop.f32.mrf.mxu0
    %v2742 = vadd.f32 %v2215, %v2741
    %v2743 = vpop.f32.mrf.mxu0
    %2744 = vmatprep.mubr.f32.mxu0 0.0
    %2745 = vmatmul.mubr.f32.gmra.mxu0 %v2381
    %v2746 = vpop.f32.mrf.mxu0
    %v2747 = vadd.f32 %v2215, %v2746
    %v2748 = vpop.f32.mrf.mxu0
    %2749 = vmatprep.mubr.f32.mxu0 0.0
    %2750 = vmatmul.mubr.f32.gmra.mxu0 %v2384
    %v2751 = vpop.f32.mrf.mxu0
    %v2752 = vadd.f32 %v2215, %v2751
    %v2753 = vpop.f32.mrf.mxu0
    %2754 = vmatprep.mubr.f32.mxu0 0.0
    %2755 = vmatmul.mubr.f32.gmra.mxu0 %v2387
    %v2756 = vpop.f32.mrf.mxu0
    %v2757 = vadd.f32 %v2215, %v2756
    %v2758 = vpop.f32.mrf.mxu0
    %2759 = vmatprep.mubr.f32.mxu0 0.0
    %2760 = vmatmul.mubr.f32.gmra.mxu0 %v2390
    %v2761 = vpop.f32.mrf.mxu0
    %v2762 = vadd.f32 %v2215, %v2761
    %v2763 = vpop.f32.mrf.mxu0
    %2764 = vmatprep.mubr.f32.mxu0 0.0
    %2765 = vmatmul.mubr.f32.gmra.mxu0 %v2393
    %v2766 = vpop.f32.mrf.mxu0
    %v2767 = vadd.f32 %v2215, %v2766
    %v2768 = vpop.f32.mrf.mxu0
    %2769 = vmatprep.mubr.f32.mxu0 0.0
    %2770 = vmatmul.mubr.f32.gmra.mxu0 %v2396
    %v2771 = vpop.f32.mrf.mxu0
    %v2772 = vadd.f32 %v2215, %v2771
    %v2773 = vpop.f32.mrf.mxu0
    %2774 = vmatprep.mubr.f32.mxu0 0.0
    %2775 = vmatmul.mubr.f32.gmra.mxu0 %v2399
    %v2776 = vpop.f32.mrf.mxu0
    %v2777 = vadd.f32 %v2215, %v2776
    %v2778 = vpop.f32.mrf.mxu0
    %2779 = vmatprep.mubr.f32.mxu0 0.0
    %2780 = vmatmul.mubr.f32.gmra.mxu0 %v2402
    %v2781 = vpop.f32.mrf.mxu0
    %v2782 = vadd.f32 %v2215, %v2781
    %v2783 = vpop.f32.mrf.mxu0
    %2784 = vmatprep.mubr.f32.mxu0 0.0
    %2785 = vmatmul.mubr.f32.gmra.mxu0 %v2405
    %v2786 = vpop.f32.mrf.mxu0
    %v2787 = vadd.f32 %v2215, %v2786
    %v2788 = vpop.f32.mrf.mxu0
    %2789 = vmatprep.mubr.f32.mxu0 0.0
    %2790 = vmatmul.mubr.f32.gmra.mxu0 %v2408
    %v2791 = vpop.f32.mrf.mxu0
    %v2792 = vadd.f32 %v2215, %v2791
    %v2793 = vpop.f32.mrf.mxu0
    %2794 = vdwg.mxu0
    %v2795 = vmax.f32 %v2477, 0.0
    %v2796 = vmax.f32 %v2482, 0.0
    %v2797 = vmax.f32 %v2487, 0.0
    %v2798 = vmax.f32 %v2492, 0.0
    %v2799 = vmax.f32 %v2497, 0.0
    %v2800 = vmax.f32 %v2502, 0.0
    %v2801 = vmax.f32 %v2507, 0.0
    %v2802 = vmax.f32 %v2512, 0.0
    %v2803 = vmax.f32 %v2517, 0.0
    %v2804 = vmax.f32 %v2522, 0.0
    %v2805 = vmax.f32 %v2527, 0.0
    %v2806 = vmax.f32 %v2532, 0.0
    %v2807 = vmax.f32 %v2537, 0.0
    %v2808 = vmax.f32 %v2542, 0.0
    %v2809 = vmax.f32 %v2547, 0.0
    %v2810 = vmax.f32 %v2552, 0.0
    %v2811 = vmax.f32 %v2557, 0.0
    %v2812 = vmax.f32 %v2562, 0.0
    %v2813 = vmax.f32 %v2567, 0.0
    %v2814 = vmax.f32 %v2572, 0.0
    %v2815 = vmax.f32 %v2577, 0.0
    %v2816 = vmax.f32 %v2582, 0.0
    %v2817 = vmax.f32 %v2587, 0.0
    %v2818 = vmax.f32 %v2592, 0.0
    %v2819 = vmax.f32 %v2597, 0.0
    %v2820 = vmax.f32 %v2602, 0.0
    %v2821 = vmax.f32 %v2607, 0.0
    %v2822 = vmax.f32 %v2612, 0.0
    %v2823 = vmax.f32 %v2617, 0.0
    %v2824 = vmax.f32 %v2622, 0.0
    %v2825 = vmax.f32 %v2627, 0.0
    %v2826 = vmax.f32 %v2632, 0.0
    %v2827 = vmax.f32 %v2637, 0.0
    %v2828 = vmax.f32 %v2642, 0.0
    %v2829 = vmax.f32 %v2647, 0.0
    %v2830 = vmax.f32 %v2652, 0.0
    %v2831 = vmax.f32 %v2657, 0.0
    %v2832 = vmax.f32 %v2662, 0.0
    %v2833 = vmax.f32 %v2667, 0.0
    %v2834 = vmax.f32 %v2672, 0.0
    %v2835 = vmax.f32 %v2677, 0.0
    %v2836 = vmax.f32 %v2682, 0.0
    %v2837 = vmax.f32 %v2687, 0.0
    %v2838 = vmax.f32 %v2692, 0.0
    %v2839 = vmax.f32 %v2697, 0.0
    %v2840 = vmax.f32 %v2702, 0.0
    %v2841 = vmax.f32 %v2707, 0.0
    %v2842 = vmax.f32 %v2712, 0.0
    %v2843 = vmax.f32 %v2717, 0.0
    %v2844 = vmax.f32 %v2722, 0.0
    %v2845 = vmax.f32 %v2727, 0.0
    %v2846 = vmax.f32 %v2732, 0.0
    %v2847 = vmax.f32 %v2737, 0.0
    %v2848 = vmax.f32 %v2742, 0.0
    %v2849 = vmax.f32 %v2747, 0.0
    %v2850 = vmax.f32 %v2752, 0.0
    %v2851 = vmax.f32 %v2757, 0.0
    %v2852 = vmax.f32 %v2762, 0.0
    %v2853 = vmax.f32 %v2767, 0.0
    %v2854 = vmax.f32 %v2772, 0.0
    %v2855 = vmax.f32 %v2777, 0.0
    %v2856 = vmax.f32 %v2782, 0.0
    %v2857 = vmax.f32 %v2787, 0.0
    %v2858 = vmax.f32 %v2792, 0.0
    %v2859 = vadd.f32 %v2795, %v2811
    %v2860 = vadd.f32 %v2796, %v2812
    %v2861 = vadd.f32 %v2797, %v2813
    %v2862 = vadd.f32 %v2798, %v2814
    %v2863 = vadd.f32 %v2799, %v2815
    %v2864 = vadd.f32 %v2800, %v2816
    %v2865 = vadd.f32 %v2801, %v2817
    %v2866 = vadd.f32 %v2802, %v2818
    %v2867 = vadd.f32 %v2803, %v2819
    %v2868 = vadd.f32 %v2804, %v2820
    %v2869 = vadd.f32 %v2805, %v2821
    %v2870 = vadd.f32 %v2806, %v2822
    %v2871 = vadd.f32 %v2807, %v2823
    %v2872 = vadd.f32 %v2808, %v2824
    %v2873 = vadd.f32 %v2809, %v2825
    %v2874 = vadd.f32 %v2810, %v2826
    %v2875 = vadd.f32 %v2859, %v2827
    %v2876 = vadd.f32 %v2860, %v2828
    %v2877 = vadd.f32 %v2861, %v2829
    %v2878 = vadd.f32 %v2862, %v2830
    %v2879 = vadd.f32 %v2863, %v2831
    %v2880 = vadd.f32 %v2864, %v2832
    %v2881 = vadd.f32 %v2865, %v2833
    %v2882 = vadd.f32 %v2866, %v2834
    %v2883 = vadd.f32 %v2867, %v2835
    %v2884 = vadd.f32 %v2868, %v2836
    %v2885 = vadd.f32 %v2869, %v2837
    %v2886 = vadd.f32 %v2870, %v2838
    %v2887 = vadd.f32 %v2871, %v2839
    %v2888 = vadd.f32 %v2872, %v2840
    %v2889 = vadd.f32 %v2873, %v2841
    %v2890 = vadd.f32 %v2874, %v2842
    %v2891 = vadd.f32 %v2875, %v2843
    %v2892 = vadd.f32 %v2876, %v2844
    %v2893 = vadd.f32 %v2877, %v2845
    %v2894 = vadd.f32 %v2878, %v2846
    %v2895 = vadd.f32 %v2879, %v2847
    %v2896 = vadd.f32 %v2880, %v2848
    %v2897 = vadd.f32 %v2881, %v2849
    %v2898 = vadd.f32 %v2882, %v2850
    %v2899 = vadd.f32 %v2883, %v2851
    %v2900 = vadd.f32 %v2884, %v2852
    %v2901 = vadd.f32 %v2885, %v2853
    %v2902 = vadd.f32 %v2886, %v2854
    %v2903 = vadd.f32 %v2887, %v2855
    %v2904 = vadd.f32 %v2888, %v2856
    %v2905 = vadd.f32 %v2889, %v2857
    %v2906 = vadd.f32 %v2890, %v2858
    %v2907 = vmul.f32 %v2891, 0.25
    %v2908 = vmul.f32 %v2892, 0.25
    %v2909 = vmul.f32 %v2893, 0.25
    %v2910 = vmul.f32 %v2894, 0.25
    %v2911 = vmul.f32 %v2895, 0.25
    %v2912 = vmul.f32 %v2896, 0.25
    %v2913 = vmul.f32 %v2897, 0.25
    %v2914 = vmul.f32 %v2898, 0.25
    %v2915 = vmul.f32 %v2899, 0.25
    %v2916 = vmul.f32 %v2900, 0.25
    %v2917 = vmul.f32 %v2901, 0.25
    %v2918 = vmul.f32 %v2902, 0.25
    %v2919 = vmul.f32 %v2903, 0.25
    %v2920 = vmul.f32 %v2904, 0.25
    %v2921 = vmul.f32 %v2905, 0.25
    %v2922 = vmul.f32 %v2906, 0.25
    %v2924 = vlaneseq
    %v2925 = vshrl.u32 %v2924, 7
    %v2926 = vsub.s32 0, %v2925
    %v2927 = vrot.slane %v163, %v2926
    %v2930 = vsel %vm314, %v162, 0
    %2932 = vmatprep.subr.mxu0 0.0
    %2933 = vmatpush1.msra.mxu0 0.0
    %2934 = vmatprep.subr.mxu0 0.0
    %2935 = vmatpush1.msra.mxu0 0.0
    %2936 = vmatprep.subr.mxu0 0.0
    %2937 = vmatpush1.msra.mxu0 0.0
    %2938 = vmatprep.subr.mxu0 0.0
    %2939 = vmatpush1.msra.mxu0 0.0
    %2940 = vmatprep.subr.mxu0 0.0
    %2941 = vmatpush1.msra.mxu0 0.0
    %2942 = vmatprep.subr.mxu0 0.0
    %2943 = vmatpush1.msra.mxu0 0.0
    %2944 = vmatprep.subr.mxu0 0.0
    %2945 = vmatpush1.msra.mxu0 0.0
    %2946 = vmatprep.subr.mxu0 0.0
    %2947 = vmatpush1.msra.mxu0 0.0
    %2948 = vmatprep.subr.mxu0 0.0
    %2949 = vmatpush1.msra.mxu0 0.0
    %2950 = vmatprep.subr.mxu0 0.0
    %2951 = vmatpush1.msra.mxu0 0.0
    %2952 = vmatprep.subr.mxu0 0.0
    %2953 = vmatpush1.msra.mxu0 0.0
    %2954 = vmatprep.subr.mxu0 0.0
    %2955 = vmatpush1.msra.mxu0 0.0
    %2956 = vmatprep.subr.mxu0 0.0
    %2957 = vmatpush1.msra.mxu0 0.0
    %2958 = vmatprep.subr.mxu0 0.0
    %2959 = vmatpush1.msra.mxu0 0.0
    %2960 = vmatprep.subr.mxu0 0.0
    %2961 = vmatpush1.msra.mxu0 0.0
    %2962 = vmatprep.subr.mxu0 0.0
    %2963 = vmatpush1.msra.mxu0 %v2930
    %2964 = vmatprep.subr.mxu0 0.0
    %2965 = vmatpush2.msra.mxu0 0.0
    %2966 = vmatprep.subr.mxu0 0.0
    %2967 = vmatpush2.msra.mxu0 0.0
    %2968 = vmatprep.subr.mxu0 0.0
    %2969 = vmatpush2.msra.mxu0 0.0
    %2970 = vmatprep.subr.mxu0 0.0
    %2971 = vmatpush2.msra.mxu0 0.0
    %2972 = vmatprep.subr.mxu0 0.0
    %2973 = vmatpush2.msra.mxu0 0.0
    %2974 = vmatprep.subr.mxu0 0.0
    %2975 = vmatpush2.msra.mxu0 0.0
    %2976 = vmatprep.subr.mxu0 0.0
    %2977 = vmatpush2.msra.mxu0 0.0
    %2978 = vmatprep.subr.mxu0 0.0
    %2979 = vmatpush2.msra.mxu0 0.0
    %2980 = vmatprep.subr.mxu0 0.0
    %2981 = vmatpush2.msra.mxu0 0.0
    %2982 = vmatprep.subr.mxu0 0.0
    %2983 = vmatpush2.msra.mxu0 0.0
    %2984 = vmatprep.subr.mxu0 0.0
    %2985 = vmatpush2.msra.mxu0 0.0
    %2986 = vmatprep.subr.mxu0 0.0
    %2987 = vmatpush2.msra.mxu0 0.0
    %2988 = vmatprep.subr.mxu0 0.0
    %2989 = vmatpush2.msra.mxu0 0.0
    %2990 = vmatprep.subr.mxu0 0.0
    %2991 = vmatpush2.msra.mxu0 0.0
    %2992 = vmatprep.subr.mxu0 0.0
    %2993 = vmatpush2.msra.mxu0 0.0
    %2994 = vmatprep.subr.mxu0 0.0
    %2995 = vmatpush2.msra.mxu0 0.0
    %2996 = vmatprep.mubr.f32.mxu0 0.0
    %2997 = vmatmul.mubr.f32.gmra.mxu0 %v282
    %v2998 = vpop.f32.mrf.mxu0
    %v2999 = vadd.f32 %v2927, %v2998
    %v3000 = vpop.f32.mrf.mxu0
    %3001 = vmatprep.mubr.f32.mxu0 0.0
    %3002 = vmatmul.mubr.f32.gmra.mxu0 %v284
    %v3003 = vpop.f32.mrf.mxu0
    %v3004 = vadd.f32 %v2927, %v3003
    %v3005 = vpop.f32.mrf.mxu0
    %3006 = vmatprep.mubr.f32.mxu0 0.0
    %3007 = vmatmul.mubr.f32.gmra.mxu0 %v286
    %v3008 = vpop.f32.mrf.mxu0
    %v3009 = vadd.f32 %v2927, %v3008
    %v3010 = vpop.f32.mrf.mxu0
    %3011 = vmatprep.mubr.f32.mxu0 0.0
    %3012 = vmatmul.mubr.f32.gmra.mxu0 %v288
    %v3013 = vpop.f32.mrf.mxu0
    %v3014 = vadd.f32 %v2927, %v3013
    %v3015 = vpop.f32.mrf.mxu0
    %3016 = vmatprep.mubr.f32.mxu0 0.0
    %3017 = vmatmul.mubr.f32.gmra.mxu0 %v290
    %v3018 = vpop.f32.mrf.mxu0
    %v3019 = vadd.f32 %v2927, %v3018
    %v3020 = vpop.f32.mrf.mxu0
    %3021 = vmatprep.mubr.f32.mxu0 0.0
    %3022 = vmatmul.mubr.f32.gmra.mxu0 %v292
    %v3023 = vpop.f32.mrf.mxu0
    %v3024 = vadd.f32 %v2927, %v3023
    %v3025 = vpop.f32.mrf.mxu0
    %3026 = vmatprep.mubr.f32.mxu0 0.0
    %3027 = vmatmul.mubr.f32.gmra.mxu0 %v294
    %v3028 = vpop.f32.mrf.mxu0
    %v3029 = vadd.f32 %v2927, %v3028
    %v3030 = vpop.f32.mrf.mxu0
    %3031 = vmatprep.mubr.f32.mxu0 0.0
    %3032 = vmatmul.mubr.f32.gmra.mxu0 %v296
    %v3033 = vpop.f32.mrf.mxu0
    %v3034 = vadd.f32 %v2927, %v3033
    %v3035 = vpop.f32.mrf.mxu0
    %3036 = vmatprep.mubr.f32.mxu0 0.0
    %3037 = vmatmul.mubr.f32.gmra.mxu0 %v298
    %v3038 = vpop.f32.mrf.mxu0
    %v3039 = vadd.f32 %v2927, %v3038
    %v3040 = vpop.f32.mrf.mxu0
    %3041 = vmatprep.mubr.f32.mxu0 0.0
    %3042 = vmatmul.mubr.f32.gmra.mxu0 %v300
    %v3043 = vpop.f32.mrf.mxu0
    %v3044 = vadd.f32 %v2927, %v3043
    %v3045 = vpop.f32.mrf.mxu0
    %3046 = vmatprep.mubr.f32.mxu0 0.0
    %3047 = vmatmul.mubr.f32.gmra.mxu0 %v302
    %v3048 = vpop.f32.mrf.mxu0
    %v3049 = vadd.f32 %v2927, %v3048
    %v3050 = vpop.f32.mrf.mxu0
    %3051 = vmatprep.mubr.f32.mxu0 0.0
    %3052 = vmatmul.mubr.f32.gmra.mxu0 %v304
    %v3053 = vpop.f32.mrf.mxu0
    %v3054 = vadd.f32 %v2927, %v3053
    %v3055 = vpop.f32.mrf.mxu0
    %3056 = vmatprep.mubr.f32.mxu0 0.0
    %3057 = vmatmul.mubr.f32.gmra.mxu0 %v306
    %v3058 = vpop.f32.mrf.mxu0
    %v3059 = vadd.f32 %v2927, %v3058
    %v3060 = vpop.f32.mrf.mxu0
    %3061 = vmatprep.mubr.f32.mxu0 0.0
    %3062 = vmatmul.mubr.f32.gmra.mxu0 %v308
    %v3063 = vpop.f32.mrf.mxu0
    %v3064 = vadd.f32 %v2927, %v3063
    %v3065 = vpop.f32.mrf.mxu0
    %3066 = vmatprep.mubr.f32.mxu0 0.0
    %3067 = vmatmul.mubr.f32.gmra.mxu0 %v310
    %v3068 = vpop.f32.mrf.mxu0
    %v3069 = vadd.f32 %v2927, %v3068
    %v3070 = vpop.f32.mrf.mxu0
    %3071 = vmatprep.mubr.f32.mxu0 0.0
    %3072 = vmatmul.mubr.f32.gmra.mxu0 %v312
    %v3073 = vpop.f32.mrf.mxu0
    %v3074 = vadd.f32 %v2927, %v3073
    %v3075 = vpop.f32.mrf.mxu0
    %3076 = vdwg.mxu0
    %v3077 = vadd.f32 %v2907, %v2999
    %v3078 = vadd.f32 %v2908, %v3004
    %v3079 = vadd.f32 %v2909, %v3009
    %v3080 = vadd.f32 %v2910, %v3014
    %v3081 = vadd.f32 %v2911, %v3019
    %v3082 = vadd.f32 %v2912, %v3024
    %v3083 = vadd.f32 %v2913, %v3029
    %v3084 = vadd.f32 %v2914, %v3034
    %v3085 = vadd.f32 %v2915, %v3039
    %v3086 = vadd.f32 %v2916, %v3044
    %v3087 = vadd.f32 %v2917, %v3049
    %v3088 = vadd.f32 %v2918, %v3054
    %v3089 = vadd.f32 %v2919, %v3059
    %v3090 = vadd.f32 %v2920, %v3064
    %v3091 = vadd.f32 %v2921, %v3069
    %v3092 = vadd.f32 %v2922, %v3074
    %v3093 = vmax.f32 %v3077, 0.0
    %v3094 = vmax.f32 %v3078, 0.0
    %v3095 = vmax.f32 %v3079, 0.0
    %v3096 = vmax.f32 %v3080, 0.0
    %v3097 = vmax.f32 %v3081, 0.0
    %v3098 = vmax.f32 %v3082, 0.0
    %v3099 = vmax.f32 %v3083, 0.0
    %v3100 = vmax.f32 %v3084, 0.0
    %v3101 = vmax.f32 %v3085, 0.0
    %v3102 = vmax.f32 %v3086, 0.0
    %v3103 = vmax.f32 %v3087, 0.0
    %v3104 = vmax.f32 %v3088, 0.0
    %v3105 = vmax.f32 %v3089, 0.0
    %v3106 = vmax.f32 %v3090, 0.0
    %v3107 = vmax.f32 %v3091, 0.0
    %v3108 = vmax.f32 %v3092, 0.0
    %v3110 = vsel %vm2217, %v3093, 0
    %v3113 = vsel %vm2217, %v3094, 0
    %v3116 = vsel %vm2217, %v3095, 0
    %v3119 = vsel %vm2217, %v3096, 0
    %v3122 = vsel %vm2217, %v3097, 0
    %v3125 = vsel %vm2217, %v3098, 0
    %v3128 = vsel %vm2217, %v3099, 0
    %v3131 = vsel %vm2217, %v3100, 0
    %v3134 = vsel %vm2217, %v3101, 0
    %v3137 = vsel %vm2217, %v3102, 0
    %v3140 = vsel %vm2217, %v3103, 0
    %v3143 = vsel %vm2217, %v3104, 0
    %v3146 = vsel %vm2217, %v3105, 0
    %v3149 = vsel %vm2217, %v3106, 0
    %v3152 = vsel %vm2217, %v3107, 0
    %v3155 = vsel %vm2217, %v3108, 0
    %3157 = vmatprep.subr.mxu0 0.0
    %3158 = vmatpush1.msra.mxu0 0.0
    %3159 = vmatprep.subr.mxu0 0.0
    %3160 = vmatpush1.msra.mxu0 0.0
    %3161 = vmatprep.subr.mxu0 0.0
    %3162 = vmatpush1.msra.mxu0 0.0
    %3163 = vmatprep.subr.mxu0 0.0
    %3164 = vmatpush1.msra.mxu0 0.0
    %3165 = vmatprep.subr.mxu0 0.0
    %3166 = vmatpush1.msra.mxu0 0.0
    %3167 = vmatprep.subr.mxu0 0.0
    %3168 = vmatpush1.msra.mxu0 0.0
    %3169 = vmatprep.subr.mxu0 0.0
    %3170 = vmatpush1.msra.mxu0 0.0
    %3171 = vmatprep.subr.mxu0 0.0
    %3172 = vmatpush1.msra.mxu0 0.0
    %3173 = vmatprep.subr.mxu0 0.0
    %3174 = vmatpush1.msra.mxu0 0.0
    %3175 = vmatprep.subr.mxu0 0.0
    %3176 = vmatpush1.msra.mxu0 0.0
    %3177 = vmatprep.subr.mxu0 0.0
    %3178 = vmatpush1.msra.mxu0 0.0
    %3179 = vmatprep.subr.mxu0 0.0
    %3180 = vmatpush1.msra.mxu0 0.0
    %3181 = vmatprep.subr.mxu0 0.0
    %3182 = vmatpush1.msra.mxu0 0.0
    %3183 = vmatprep.subr.mxu0 0.0
    %3184 = vmatpush1.msra.mxu0 0.0
    %3185 = vmatprep.subr.mxu0 0.0
    %3186 = vmatpush1.msra.mxu0 0.0
    %3187 = vmatprep.subr.mxu0 0.0
    %3188 = vmatpush1.msra.mxu0 %v165
    %3189 = vmatprep.subr.mxu0 0.0
    %3190 = vmatpush2.msra.mxu0 0.0
    %3191 = vmatprep.subr.mxu0 0.0
    %3192 = vmatpush2.msra.mxu0 0.0
    %3193 = vmatprep.subr.mxu0 0.0
    %3194 = vmatpush2.msra.mxu0 0.0
    %3195 = vmatprep.subr.mxu0 0.0
    %3196 = vmatpush2.msra.mxu0 0.0
    %3197 = vmatprep.subr.mxu0 0.0
    %3198 = vmatpush2.msra.mxu0 0.0
    %3199 = vmatprep.subr.mxu0 0.0
    %3200 = vmatpush2.msra.mxu0 0.0
    %3201 = vmatprep.subr.mxu0 0.0
    %3202 = vmatpush2.msra.mxu0 0.0
    %3203 = vmatprep.subr.mxu0 0.0
    %3204 = vmatpush2.msra.mxu0 0.0
    %3205 = vmatprep.subr.mxu0 0.0
    %3206 = vmatpush2.msra.mxu0 0.0
    %3207 = vmatprep.subr.mxu0 0.0
    %3208 = vmatpush2.msra.mxu0 0.0
    %3209 = vmatprep.subr.mxu0 0.0
    %3210 = vmatpush2.msra.mxu0 0.0
    %3211 = vmatprep.subr.mxu0 0.0
    %3212 = vmatpush2.msra.mxu0 0.0
    %3213 = vmatprep.subr.mxu0 0.0
    %3214 = vmatpush2.msra.mxu0 0.0
    %3215 = vmatprep.subr.mxu0 0.0
    %3216 = vmatpush2.msra.mxu0 0.0
    %3217 = vmatprep.subr.mxu0 0.0
    %3218 = vmatpush2.msra.mxu0 0.0
    %3219 = vmatprep.subr.mxu0 0.0
    %3220 = vmatpush2.msra.mxu0 0.0
    %3221 = vmatprep.mubr.f32.mxu0 0.0
    %3222 = vmatmul.mubr.f32.gmra.mxu0 %v3110
    %v3223 = vpop.f32.mrf.mxu0
    %v3224 = vadd.f32 0.0, %v3223
    %v3225 = vpop.f32.mrf.mxu0
    %3226 = vmatprep.mubr.f32.mxu0 0.0
    %3227 = vmatmul.mubr.f32.gmra.mxu0 %v3113
    %v3228 = vpop.f32.mrf.mxu0
    %v3229 = vadd.f32 0.0, %v3228
    %v3230 = vpop.f32.mrf.mxu0
    %3231 = vmatprep.mubr.f32.mxu0 0.0
    %3232 = vmatmul.mubr.f32.gmra.mxu0 %v3116
    %v3233 = vpop.f32.mrf.mxu0
    %v3234 = vadd.f32 0.0, %v3233
    %v3235 = vpop.f32.mrf.mxu0
    %3236 = vmatprep.mubr.f32.mxu0 0.0
    %3237 = vmatmul.mubr.f32.gmra.mxu0 %v3119
    %v3238 = vpop.f32.mrf.mxu0
    %v3239 = vadd.f32 0.0, %v3238
    %v3240 = vpop.f32.mrf.mxu0
    %3241 = vmatprep.mubr.f32.mxu0 0.0
    %3242 = vmatmul.mubr.f32.gmra.mxu0 %v3122
    %v3243 = vpop.f32.mrf.mxu0
    %v3244 = vadd.f32 0.0, %v3243
    %v3245 = vpop.f32.mrf.mxu0
    %3246 = vmatprep.mubr.f32.mxu0 0.0
    %3247 = vmatmul.mubr.f32.gmra.mxu0 %v3125
    %v3248 = vpop.f32.mrf.mxu0
    %v3249 = vadd.f32 0.0, %v3248
    %v3250 = vpop.f32.mrf.mxu0
    %3251 = vmatprep.mubr.f32.mxu0 0.0
    %3252 = vmatmul.mubr.f32.gmra.mxu0 %v3128
    %v3253 = vpop.f32.mrf.mxu0
    %v3254 = vadd.f32 0.0, %v3253
    %v3255 = vpop.f32.mrf.mxu0
    %3256 = vmatprep.mubr.f32.mxu0 0.0
    %3257 = vmatmul.mubr.f32.gmra.mxu0 %v3131
    %v3258 = vpop.f32.mrf.mxu0
    %v3259 = vadd.f32 0.0, %v3258
    %v3260 = vpop.f32.mrf.mxu0
    %3261 = vmatprep.mubr.f32.mxu0 0.0
    %3262 = vmatmul.mubr.f32.gmra.mxu0 %v3134
    %v3263 = vpop.f32.mrf.mxu0
    %v3264 = vadd.f32 0.0, %v3263
    %v3265 = vpop.f32.mrf.mxu0
    %3266 = vmatprep.mubr.f32.mxu0 0.0
    %3267 = vmatmul.mubr.f32.gmra.mxu0 %v3137
    %v3268 = vpop.f32.mrf.mxu0
    %v3269 = vadd.f32 0.0, %v3268
    %v3270 = vpop.f32.mrf.mxu0
    %3271 = vmatprep.mubr.f32.mxu0 0.0
    %3272 = vmatmul.mubr.f32.gmra.mxu0 %v3140
    %v3273 = vpop.f32.mrf.mxu0
    %v3274 = vadd.f32 0.0, %v3273
    %v3275 = vpop.f32.mrf.mxu0
    %3276 = vmatprep.mubr.f32.mxu0 0.0
    %3277 = vmatmul.mubr.f32.gmra.mxu0 %v3143
    %v3278 = vpop.f32.mrf.mxu0
    %v3279 = vadd.f32 0.0, %v3278
    %v3280 = vpop.f32.mrf.mxu0
    %3281 = vmatprep.mubr.f32.mxu0 0.0
    %3282 = vmatmul.mubr.f32.gmra.mxu0 %v3146
    %v3283 = vpop.f32.mrf.mxu0
    %v3284 = vadd.f32 0.0, %v3283
    %v3285 = vpop.f32.mrf.mxu0
    %3286 = vmatprep.mubr.f32.mxu0 0.0
    %3287 = vmatmul.mubr.f32.gmra.mxu0 %v3149
    %v3288 = vpop.f32.mrf.mxu0
    %v3289 = vadd.f32 0.0, %v3288
    %v3290 = vpop.f32.mrf.mxu0
    %3291 = vmatprep.mubr.f32.mxu0 0.0
    %3292 = vmatmul.mubr.f32.gmra.mxu0 %v3152
    %v3293 = vpop.f32.mrf.mxu0
    %v3294 = vadd.f32 0.0, %v3293
    %v3295 = vpop.f32.mrf.mxu0
    %3296 = vmatprep.mubr.f32.mxu0 0.0
    %3297 = vmatmul.mubr.f32.gmra.mxu0 %v3155
    %v3298 = vpop.f32.mrf.mxu0
    %v3299 = vadd.f32 0.0, %v3298
    %v3300 = vpop.f32.mrf.mxu0
    %3301 = vdwg.mxu0
    %v3303 = vlaneseq
    %v3304 = vshrl.u32 %v3303, 7
    %v3305 = vsub.s32 0, %v3304
    %v3306 = vrot.slane %v166, %v3305
    %3308 = vmatprep.subr.mxu0 0.0
    %3309 = vmatpush1.msra.mxu0 0.0
    %3310 = vmatprep.subr.mxu0 0.0
    %3311 = vmatpush1.msra.mxu0 0.0
    %3312 = vmatprep.subr.mxu0 0.0
    %3313 = vmatpush1.msra.mxu0 0.0
    %3314 = vmatprep.subr.mxu0 0.0
    %3315 = vmatpush1.msra.mxu0 0.0
    %3316 = vmatprep.subr.mxu0 0.0
    %3317 = vmatpush1.msra.mxu0 0.0
    %3318 = vmatprep.subr.mxu0 0.0
    %3319 = vmatpush1.msra.mxu0 0.0
    %3320 = vmatprep.subr.mxu0 0.0
    %3321 = vmatpush1.msra.mxu0 0.0
    %3322 = vmatprep.subr.mxu0 0.0
    %3323 = vmatpush1.msra.mxu0 0.0
    %3324 = vmatprep.subr.mxu0 0.0
    %3325 = vmatpush1.msra.mxu0 0.0
    %3326 = vmatprep.subr.mxu0 0.0
    %3327 = vmatpush1.msra.mxu0 0.0
    %3328 = vmatprep.subr.mxu0 0.0
    %3329 = vmatpush1.msra.mxu0 0.0
    %3330 = vmatprep.subr.mxu0 0.0
    %3331 = vmatpush1.msra.mxu0 0.0
    %3332 = vmatprep.subr.mxu0 0.0
    %3333 = vmatpush1.msra.mxu0 0.0
    %3334 = vmatprep.subr.mxu0 0.0
    %3335 = vmatpush1.msra.mxu0 0.0
    %3336 = vmatprep.subr.mxu0 0.0
    %3337 = vmatpush1.msra.mxu0 0.0
    %3338 = vmatprep.subr.mxu0 0.0
    %3339 = vmatpush1.msra.mxu0 %v164
    %3340 = vmatprep.subr.mxu0 0.0
    %3341 = vmatpush2.msra.mxu0 0.0
    %3342 = vmatprep.subr.mxu0 0.0
    %3343 = vmatpush2.msra.mxu0 0.0
    %3344 = vmatprep.subr.mxu0 0.0
    %3345 = vmatpush2.msra.mxu0 0.0
    %3346 = vmatprep.subr.mxu0 0.0
    %3347 = vmatpush2.msra.mxu0 0.0
    %3348 = vmatprep.subr.mxu0 0.0
    %3349 = vmatpush2.msra.mxu0 0.0
    %3350 = vmatprep.subr.mxu0 0.0
    %3351 = vmatpush2.msra.mxu0 0.0
    %3352 = vmatprep.subr.mxu0 0.0
    %3353 = vmatpush2.msra.mxu0 0.0
    %3354 = vmatprep.subr.mxu0 0.0
    %3355 = vmatpush2.msra.mxu0 0.0
    %3356 = vmatprep.subr.mxu0 0.0
    %3357 = vmatpush2.msra.mxu0 0.0
    %3358 = vmatprep.subr.mxu0 0.0
    %3359 = vmatpush2.msra.mxu0 0.0
    %3360 = vmatprep.subr.mxu0 0.0
    %3361 = vmatpush2.msra.mxu0 0.0
    %3362 = vmatprep.subr.mxu0 0.0
    %3363 = vmatpush2.msra.mxu0 0.0
    %3364 = vmatprep.subr.mxu0 0.0
    %3365 = vmatpush2.msra.mxu0 0.0
    %3366 = vmatprep.subr.mxu0 0.0
    %3367 = vmatpush2.msra.mxu0 0.0
    %3368 = vmatprep.subr.mxu0 0.0
    %3369 = vmatpush2.msra.mxu0 0.0
    %3370 = vmatprep.subr.mxu0 0.0
    %3371 = vmatpush2.msra.mxu0 0.0
    %3372 = vmatprep.mubr.f32.mxu0 0.0
    %3373 = vmatmul.mubr.f32.gmra.mxu0 %v3110
    %v3374 = vpop.f32.mrf.mxu0
    %v3375 = vadd.f32 %v3306, %v3374
    %v3376 = vpop.f32.mrf.mxu0
    %3377 = vmatprep.mubr.f32.mxu0 0.0
    %3378 = vmatmul.mubr.f32.gmra.mxu0 %v3113
    %v3379 = vpop.f32.mrf.mxu0
    %v3380 = vadd.f32 %v3306, %v3379
    %v3381 = vpop.f32.mrf.mxu0
    %3382 = vmatprep.mubr.f32.mxu0 0.0
    %3383 = vmatmul.mubr.f32.gmra.mxu0 %v3116
    %v3384 = vpop.f32.mrf.mxu0
    %v3385 = vadd.f32 %v3306, %v3384
    %v3386 = vpop.f32.mrf.mxu0
    %3387 = vmatprep.mubr.f32.mxu0 0.0
    %3388 = vmatmul.mubr.f32.gmra.mxu0 %v3119
    %v3389 = vpop.f32.mrf.mxu0
    %v3390 = vadd.f32 %v3306, %v3389
    %v3391 = vpop.f32.mrf.mxu0
    %3392 = vmatprep.mubr.f32.mxu0 0.0
    %3393 = vmatmul.mubr.f32.gmra.mxu0 %v3122
    %v3394 = vpop.f32.mrf.mxu0
    %v3395 = vadd.f32 %v3306, %v3394
    %v3396 = vpop.f32.mrf.mxu0
    %3397 = vmatprep.mubr.f32.mxu0 0.0
    %3398 = vmatmul.mubr.f32.gmra.mxu0 %v3125
    %v3399 = vpop.f32.mrf.mxu0
    %v3400 = vadd.f32 %v3306, %v3399
    %v3401 = vpop.f32.mrf.mxu0
    %3402 = vmatprep.mubr.f32.mxu0 0.0
    %3403 = vmatmul.mubr.f32.gmra.mxu0 %v3128
    %v3404 = vpop.f32.mrf.mxu0
    %v3405 = vadd.f32 %v3306, %v3404
    %v3406 = vpop.f32.mrf.mxu0
    %3407 = vmatprep.mubr.f32.mxu0 0.0
    %3408 = vmatmul.mubr.f32.gmra.mxu0 %v3131
    %v3409 = vpop.f32.mrf.mxu0
    %v3410 = vadd.f32 %v3306, %v3409
    %v3411 = vpop.f32.mrf.mxu0
    %3412 = vmatprep.mubr.f32.mxu0 0.0
    %3413 = vmatmul.mubr.f32.gmra.mxu0 %v3134
    %v3414 = vpop.f32.mrf.mxu0
    %v3415 = vadd.f32 %v3306, %v3414
    %v3416 = vpop.f32.mrf.mxu0
    %3417 = vmatprep.mubr.f32.mxu0 0.0
    %3418 = vmatmul.mubr.f32.gmra.mxu0 %v3137
    %v3419 = vpop.f32.mrf.mxu0
    %v3420 = vadd.f32 %v3306, %v3419
    %v3421 = vpop.f32.mrf.mxu0
    %3422 = vmatprep.mubr.f32.mxu0 0.0
    %3423 = vmatmul.mubr.f32.gmra.mxu0 %v3140
    %v3424 = vpop.f32.mrf.mxu0
    %v3425 = vadd.f32 %v3306, %v3424
    %v3426 = vpop.f32.mrf.mxu0
    %3427 = vmatprep.mubr.f32.mxu0 0.0
    %3428 = vmatmul.mubr.f32.gmra.mxu0 %v3143
    %v3429 = vpop.f32.mrf.mxu0
    %v3430 = vadd.f32 %v3306, %v3429
    %v3431 = vpop.f32.mrf.mxu0
    %3432 = vmatprep.mubr.f32.mxu0 0.0
    %3433 = vmatmul.mubr.f32.gmra.mxu0 %v3146
    %v3434 = vpop.f32.mrf.mxu0
    %v3435 = vadd.f32 %v3306, %v3434
    %v3436 = vpop.f32.mrf.mxu0
    %3437 = vmatprep.mubr.f32.mxu0 0.0
    %3438 = vmatmul.mubr.f32.gmra.mxu0 %v3149
    %v3439 = vpop.f32.mrf.mxu0
    %v3440 = vadd.f32 %v3306, %v3439
    %v3441 = vpop.f32.mrf.mxu0
    %3442 = vmatprep.mubr.f32.mxu0 0.0
    %3443 = vmatmul.mubr.f32.gmra.mxu0 %v3152
    %v3444 = vpop.f32.mrf.mxu0
    %v3445 = vadd.f32 %v3306, %v3444
    %v3446 = vpop.f32.mrf.mxu0
    %3447 = vmatprep.mubr.f32.mxu0 0.0
    %3448 = vmatmul.mubr.f32.gmra.mxu0 %v3155
    %v3449 = vpop.f32.mrf.mxu0
    %v3450 = vadd.f32 %v3306, %v3449
    %v3451 = vpop.f32.mrf.mxu0
    %3452 = vdwg.mxu0
    %v3453 = vmul.f32 %v3093, %v3093
    %v3454 = vmul.f32 %v3094, %v3094
    %v3455 = vmul.f32 %v3095, %v3095
    %v3456 = vmul.f32 %v3096, %v3096
    %v3457 = vmul.f32 %v3097, %v3097
    %v3458 = vmul.f32 %v3098, %v3098
    %v3459 = vmul.f32 %v3099, %v3099
    %v3460 = vmul.f32 %v3100, %v3100
    %v3461 = vmul.f32 %v3101, %v3101
    %v3462 = vmul.f32 %v3102, %v3102
    %v3463 = vmul.f32 %v3103, %v3103
    %v3464 = vmul.f32 %v3104, %v3104
    %v3465 = vmul.f32 %v3105, %v3105
    %v3466 = vmul.f32 %v3106, %v3106
    %v3467 = vmul.f32 %v3107, %v3107
    %v3468 = vmul.f32 %v3108, %v3108
    %3469 = vmatprep.subr.mxu0 0.0
    %3470 = vmatpush1.xpose.msra.mxu0 %v3155
    %3471 = vmatprep.subr.mxu0 0.0
    %3472 = vmatpush1.xpose.msra.mxu0 %v3152
    %3473 = vmatprep.subr.mxu0 0.0
    %3474 = vmatpush1.xpose.msra.mxu0 %v3149
    %3475 = vmatprep.subr.mxu0 0.0
    %3476 = vmatpush1.xpose.msra.mxu0 %v3146
    %3477 = vmatprep.subr.mxu0 0.0
    %3478 = vmatpush1.xpose.msra.mxu0 %v3143
    %3479 = vmatprep.subr.mxu0 0.0
    %3480 = vmatpush1.xpose.msra.mxu0 %v3140
    %3481 = vmatprep.subr.mxu0 0.0
    %3482 = vmatpush1.xpose.msra.mxu0 %v3137
    %3483 = vmatprep.subr.mxu0 0.0
    %3484 = vmatpush1.xpose.msra.mxu0 %v3134
    %3485 = vmatprep.subr.mxu0 0.0
    %3486 = vmatpush1.xpose.msra.mxu0 %v3131
    %3487 = vmatprep.subr.mxu0 0.0
    %3488 = vmatpush1.xpose.msra.mxu0 %v3128
    %3489 = vmatprep.subr.mxu0 0.0
    %3490 = vmatpush1.xpose.msra.mxu0 %v3125
    %3491 = vmatprep.subr.mxu0 0.0
    %3492 = vmatpush1.xpose.msra.mxu0 %v3122
    %3493 = vmatprep.subr.mxu0 0.0
    %3494 = vmatpush1.xpose.msra.mxu0 %v3119
    %3495 = vmatprep.subr.mxu0 0.0
    %3496 = vmatpush1.xpose.msra.mxu0 %v3116
    %3497 = vmatprep.subr.mxu0 0.0
    %3498 = vmatpush1.xpose.msra.mxu0 %v3113
    %3499 = vmatprep.subr.mxu0 0.0
    %3500 = vmatpush1.xpose.msra.mxu0 %v3110
    %3501 = vmatprep.subr.mxu0 0.0
    %3502 = vmatpush2.xpose.msra.mxu0 0.0
    %3503 = vmatprep.subr.mxu0 0.0
    %3504 = vmatpush2.xpose.msra.mxu0 0.0
    %3505 = vmatprep.subr.mxu0 0.0
    %3506 = vmatpush2.xpose.msra.mxu0 0.0
    %3507 = vmatprep.subr.mxu0 0.0
    %3508 = vmatpush2.xpose.msra.mxu0 0.0
    %3509 = vmatprep.subr.mxu0 0.0
    %3510 = vmatpush2.xpose.msra.mxu0 0.0
    %3511 = vmatprep.subr.mxu0 0.0
    %3512 = vmatpush2.xpose.msra.mxu0 0.0
    %3513 = vmatprep.subr.mxu0 0.0
    %3514 = vmatpush2.xpose.msra.mxu0 0.0
    %3515 = vmatprep.subr.mxu0 0.0
    %3516 = vmatpush2.xpose.msra.mxu0 0.0
    %3517 = vmatprep.subr.mxu0 0.0
    %3518 = vmatpush2.xpose.msra.mxu0 0.0
    %3519 = vmatprep.subr.mxu0 0.0
    %3520 = vmatpush2.xpose.msra.mxu0 0.0
    %3521 = vmatprep.subr.mxu0 0.0
    %3522 = vmatpush2.xpose.msra.mxu0 0.0
    %3523 = vmatprep.subr.mxu0 0.0
    %3524 = vmatpush2.xpose.msra.mxu0 0.0
    %3525 = vmatprep.subr.mxu0 0.0
    %3526 = vmatpush2.xpose.msra.mxu0 0.0
    %3527 = vmatprep.subr.mxu0 0.0
    %3528 = vmatpush2.xpose.msra.mxu0 0.0
    %3529 = vmatprep.subr.mxu0 0.0
    %3530 = vmatpush2.xpose.msra.mxu0 0.0
    %3531 = vmatprep.subr.mxu0 0.0
    %3532 = vmatpush2.xpose.msra.mxu0 0.0
    %3533 = vmatprep.mubr.f32.mxu0 0.0
    %3534 = vmatmul.mubr.f32.gmra.mxu0 %v3110
    %v3535 = vpop.f32.mrf.mxu0
    %v3536 = vadd.f32 0.0, %v3535
    %v3537 = vpop.f32.mrf.mxu0
    %3538 = vmatprep.mubr.f32.mxu0 0.0
    %3539 = vmatmul.mubr.f32.gmra.mxu0 %v3113
    %v3540 = vpop.f32.mrf.mxu0
    %v3541 = vadd.f32 0.0, %v3540
    %v3542 = vpop.f32.mrf.mxu0
    %3543 = vmatprep.mubr.f32.mxu0 0.0
    %3544 = vmatmul.mubr.f32.gmra.mxu0 %v3116
    %v3545 = vpop.f32.mrf.mxu0
    %v3546 = vadd.f32 0.0, %v3545
    %v3547 = vpop.f32.mrf.mxu0
    %3548 = vmatprep.mubr.f32.mxu0 0.0
    %3549 = vmatmul.mubr.f32.gmra.mxu0 %v3119
    %v3550 = vpop.f32.mrf.mxu0
    %v3551 = vadd.f32 0.0, %v3550
    %v3552 = vpop.f32.mrf.mxu0
    %3553 = vmatprep.mubr.f32.mxu0 0.0
    %3554 = vmatmul.mubr.f32.gmra.mxu0 %v3122
    %v3555 = vpop.f32.mrf.mxu0
    %v3556 = vadd.f32 0.0, %v3555
    %v3557 = vpop.f32.mrf.mxu0
    %3558 = vmatprep.mubr.f32.mxu0 0.0
    %3559 = vmatmul.mubr.f32.gmra.mxu0 %v3125
    %v3560 = vpop.f32.mrf.mxu0
    %v3561 = vadd.f32 0.0, %v3560
    %v3562 = vpop.f32.mrf.mxu0
    %3563 = vmatprep.mubr.f32.mxu0 0.0
    %3564 = vmatmul.mubr.f32.gmra.mxu0 %v3128
    %v3565 = vpop.f32.mrf.mxu0
    %v3566 = vadd.f32 0.0, %v3565
    %v3567 = vpop.f32.mrf.mxu0
    %3568 = vmatprep.mubr.f32.mxu0 0.0
    %3569 = vmatmul.mubr.f32.gmra.mxu0 %v3131
    %v3570 = vpop.f32.mrf.mxu0
    %v3571 = vadd.f32 0.0, %v3570
    %v3572 = vpop.f32.mrf.mxu0
    %3573 = vmatprep.mubr.f32.mxu0 0.0
    %3574 = vmatmul.mubr.f32.gmra.mxu0 %v3134
    %v3575 = vpop.f32.mrf.mxu0
    %v3576 = vadd.f32 0.0, %v3575
    %v3577 = vpop.f32.mrf.mxu0
    %3578 = vmatprep.mubr.f32.mxu0 0.0
    %3579 = vmatmul.mubr.f32.gmra.mxu0 %v3137
    %v3580 = vpop.f32.mrf.mxu0
    %v3581 = vadd.f32 0.0, %v3580
    %v3582 = vpop.f32.mrf.mxu0
    %3583 = vmatprep.mubr.f32.mxu0 0.0
    %3584 = vmatmul.mubr.f32.gmra.mxu0 %v3140
    %v3585 = vpop.f32.mrf.mxu0
    %v3586 = vadd.f32 0.0, %v3585
    %v3587 = vpop.f32.mrf.mxu0
    %3588 = vmatprep.mubr.f32.mxu0 0.0
    %3589 = vmatmul.mubr.f32.gmra.mxu0 %v3143
    %v3590 = vpop.f32.mrf.mxu0
    %v3591 = vadd.f32 0.0, %v3590
    %v3592 = vpop.f32.mrf.mxu0
    %3593 = vmatprep.mubr.f32.mxu0 0.0
    %3594 = vmatmul.mubr.f32.gmra.mxu0 %v3146
    %v3595 = vpop.f32.mrf.mxu0
    %v3596 = vadd.f32 0.0, %v3595
    %v3597 = vpop.f32.mrf.mxu0
    %3598 = vmatprep.mubr.f32.mxu0 0.0
    %3599 = vmatmul.mubr.f32.gmra.mxu0 %v3149
    %v3600 = vpop.f32.mrf.mxu0
    %v3601 = vadd.f32 0.0, %v3600
    %v3602 = vpop.f32.mrf.mxu0
    %3603 = vmatprep.mubr.f32.mxu0 0.0
    %3604 = vmatmul.mubr.f32.gmra.mxu0 %v3152
    %v3605 = vpop.f32.mrf.mxu0
    %v3606 = vadd.f32 0.0, %v3605
    %v3607 = vpop.f32.mrf.mxu0
    %3608 = vmatprep.mubr.f32.mxu0 0.0
    %3609 = vmatmul.mubr.f32.gmra.mxu0 %v3155
    %v3610 = vpop.f32.mrf.mxu0
    %v3611 = vadd.f32 0.0, %v3610
    %v3612 = vpop.f32.mrf.mxu0
    %3613 = vdwg.mxu0
    %v3614 = vsel %vm2217, 1.0, 0
    %v3617 = vsel %vm2217, %v3453, 0
    %v3620 = vsel %vm2217, %v3454, 0
    %v3623 = vsel %vm2217, %v3455, 0
    %v3626 = vsel %vm2217, %v3456, 0
    %v3629 = vsel %vm2217, %v3457, 0
    %v3632 = vsel %vm2217, %v3458, 0
    %v3635 = vsel %vm2217, %v3459, 0
    %v3638 = vsel %vm2217, %v3460, 0
    %v3641 = vsel %vm2217, %v3461, 0
    %v3644 = vsel %vm2217, %v3462, 0
    %v3647 = vsel %vm2217, %v3463, 0
    %v3650 = vsel %vm2217, %v3464, 0
    %v3653 = vsel %vm2217, %v3465, 0
    %v3656 = vsel %vm2217, %v3466, 0
    %v3659 = vsel %vm2217, %v3467, 0
    %v3662 = vsel %vm2217, %v3468, 0
    %3664 = vmatprep.subr.mxu0 0.0
    %3665 = vmatpush1.xpose.msra.mxu0 %v3662
    %3666 = vmatprep.subr.mxu0 0.0
    %3667 = vmatpush1.xpose.msra.mxu0 %v3659
    %3668 = vmatprep.subr.mxu0 0.0
    %3669 = vmatpush1.xpose.msra.mxu0 %v3656
    %3670 = vmatprep.subr.mxu0 0.0
    %3671 = vmatpush1.xpose.msra.mxu0 %v3653
    %3672 = vmatprep.subr.mxu0 0.0
    %3673 = vmatpush1.xpose.msra.mxu0 %v3650
    %3674 = vmatprep.subr.mxu0 0.0
    %3675 = vmatpush1.xpose.msra.mxu0 %v3647
    %3676 = vmatprep.subr.mxu0 0.0
    %3677 = vmatpush1.xpose.msra.mxu0 %v3644
    %3678 = vmatprep.subr.mxu0 0.0
    %3679 = vmatpush1.xpose.msra.mxu0 %v3641
    %3680 = vmatprep.subr.mxu0 0.0
    %3681 = vmatpush1.xpose.msra.mxu0 %v3638
    %3682 = vmatprep.subr.mxu0 0.0
    %3683 = vmatpush1.xpose.msra.mxu0 %v3635
    %3684 = vmatprep.subr.mxu0 0.0
    %3685 = vmatpush1.xpose.msra.mxu0 %v3632
    %3686 = vmatprep.subr.mxu0 0.0
    %3687 = vmatpush1.xpose.msra.mxu0 %v3629
    %3688 = vmatprep.subr.mxu0 0.0
    %3689 = vmatpush1.xpose.msra.mxu0 %v3626
    %3690 = vmatprep.subr.mxu0 0.0
    %3691 = vmatpush1.xpose.msra.mxu0 %v3623
    %3692 = vmatprep.subr.mxu0 0.0
    %3693 = vmatpush1.xpose.msra.mxu0 %v3620
    %3694 = vmatprep.subr.mxu0 0.0
    %3695 = vmatpush1.xpose.msra.mxu0 %v3617
    %3696 = vmatprep.subr.mxu0 0.0
    %3697 = vmatpush2.xpose.msra.mxu0 0.0
    %3698 = vmatprep.subr.mxu0 0.0
    %3699 = vmatpush2.xpose.msra.mxu0 0.0
    %3700 = vmatprep.subr.mxu0 0.0
    %3701 = vmatpush2.xpose.msra.mxu0 0.0
    %3702 = vmatprep.subr.mxu0 0.0
    %3703 = vmatpush2.xpose.msra.mxu0 0.0
    %3704 = vmatprep.subr.mxu0 0.0
    %3705 = vmatpush2.xpose.msra.mxu0 0.0
    %3706 = vmatprep.subr.mxu0 0.0
    %3707 = vmatpush2.xpose.msra.mxu0 0.0
    %3708 = vmatprep.subr.mxu0 0.0
    %3709 = vmatpush2.xpose.msra.mxu0 0.0
    %3710 = vmatprep.subr.mxu0 0.0
    %3711 = vmatpush2.xpose.msra.mxu0 0.0
    %3712 = vmatprep.subr.mxu0 0.0
    %3713 = vmatpush2.xpose.msra.mxu0 0.0
    %3714 = vmatprep.subr.mxu0 0.0
    %3715 = vmatpush2.xpose.msra.mxu0 0.0
    %3716 = vmatprep.subr.mxu0 0.0
    %3717 = vmatpush2.xpose.msra.mxu0 0.0
    %3718 = vmatprep.subr.mxu0 0.0
    %3719 = vmatpush2.xpose.msra.mxu0 0.0
    %3720 = vmatprep.subr.mxu0 0.0
    %3721 = vmatpush2.xpose.msra.mxu0 0.0
    %3722 = vmatprep.subr.mxu0 0.0
    %3723 = vmatpush2.xpose.msra.mxu0 0.0
    %3724 = vmatprep.subr.mxu0 0.0
    %3725 = vmatpush2.xpose.msra.mxu0 0.0
    %3726 = vmatprep.subr.mxu0 0.0
    %3727 = vmatpush2.xpose.msra.mxu0 0.0
    %3728 = vmatprep.mubr.f32.mxu0 0.0
    %3729 = vmatmul.mubr.f32.gmra.mxu0 %v3614
    %v3730 = vpop.f32.mrf.mxu0
    %v3731 = vadd.f32 0.0, %v3730
    %v3732 = vpop.f32.mrf.mxu0
    %3733 = vmatprep.mubr.f32.mxu0 0.0
    %3734 = vmatmul.mubr.f32.gmra.mxu0 %v3614
    %v3735 = vpop.f32.mrf.mxu0
    %v3736 = vadd.f32 0.0, %v3735
    %v3737 = vpop.f32.mrf.mxu0
    %3738 = vmatprep.mubr.f32.mxu0 0.0
    %3739 = vmatmul.mubr.f32.gmra.mxu0 %v3614
    %v3740 = vpop.f32.mrf.mxu0
    %v3741 = vadd.f32 0.0, %v3740
    %v3742 = vpop.f32.mrf.mxu0
    %3743 = vmatprep.mubr.f32.mxu0 0.0
    %3744 = vmatmul.mubr.f32.gmra.mxu0 %v3614
    %v3745 = vpop.f32.mrf.mxu0
    %v3746 = vadd.f32 0.0, %v3745
    %v3747 = vpop.f32.mrf.mxu0
    %3748 = vmatprep.mubr.f32.mxu0 0.0
    %3749 = vmatmul.mubr.f32.gmra.mxu0 %v3614
    %v3750 = vpop.f32.mrf.mxu0
    %v3751 = vadd.f32 0.0, %v3750
    %v3752 = vpop.f32.mrf.mxu0
    %3753 = vmatprep.mubr.f32.mxu0 0.0
    %3754 = vmatmul.mubr.f32.gmra.mxu0 %v3614
    %v3755 = vpop.f32.mrf.mxu0
    %v3756 = vadd.f32 0.0, %v3755
    %v3757 = vpop.f32.mrf.mxu0
    %3758 = vmatprep.mubr.f32.mxu0 0.0
    %3759 = vmatmul.mubr.f32.gmra.mxu0 %v3614
    %v3760 = vpop.f32.mrf.mxu0
    %v3761 = vadd.f32 0.0, %v3760
    %v3762 = vpop.f32.mrf.mxu0
    %3763 = vmatprep.mubr.f32.mxu0 0.0
    %3764 = vmatmul.mubr.f32.gmra.mxu0 %v3614
    %v3765 = vpop.f32.mrf.mxu0
    %v3766 = vadd.f32 0.0, %v3765
    %v3767 = vpop.f32.mrf.mxu0
    %3768 = vmatprep.mubr.f32.mxu0 0.0
    %3769 = vmatmul.mubr.f32.gmra.mxu0 %v3614
    %v3770 = vpop.f32.mrf.mxu0
    %v3771 = vadd.f32 0.0, %v3770
    %v3772 = vpop.f32.mrf.mxu0
    %3773 = vmatprep.mubr.f32.mxu0 0.0
    %3774 = vmatmul.mubr.f32.gmra.mxu0 %v3614
    %v3775 = vpop.f32.mrf.mxu0
    %v3776 = vadd.f32 0.0, %v3775
    %v3777 = vpop.f32.mrf.mxu0
    %3778 = vmatprep.mubr.f32.mxu0 0.0
    %3779 = vmatmul.mubr.f32.gmra.mxu0 %v3614
    %v3780 = vpop.f32.mrf.mxu0
    %v3781 = vadd.f32 0.0, %v3780
    %v3782 = vpop.f32.mrf.mxu0
    %3783 = vmatprep.mubr.f32.mxu0 0.0
    %3784 = vmatmul.mubr.f32.gmra.mxu0 %v3614
    %v3785 = vpop.f32.mrf.mxu0
    %v3786 = vadd.f32 0.0, %v3785
    %v3787 = vpop.f32.mrf.mxu0
    %3788 = vmatprep.mubr.f32.mxu0 0.0
    %3789 = vmatmul.mubr.f32.gmra.mxu0 %v3614
    %v3790 = vpop.f32.mrf.mxu0
    %v3791 = vadd.f32 0.0, %v3790
    %v3792 = vpop.f32.mrf.mxu0
    %3793 = vmatprep.mubr.f32.mxu0 0.0
    %3794 = vmatmul.mubr.f32.gmra.mxu0 %v3614
    %v3795 = vpop.f32.mrf.mxu0
    %v3796 = vadd.f32 0.0, %v3795
    %v3797 = vpop.f32.mrf.mxu0
    %3798 = vmatprep.mubr.f32.mxu0 0.0
    %3799 = vmatmul.mubr.f32.gmra.mxu0 %v3614
    %v3800 = vpop.f32.mrf.mxu0
    %v3801 = vadd.f32 0.0, %v3800
    %v3802 = vpop.f32.mrf.mxu0
    %3803 = vmatprep.mubr.f32.mxu0 0.0
    %3804 = vmatmul.mubr.f32.gmra.mxu0 %v3614
    %v3805 = vpop.f32.mrf.mxu0
    %v3806 = vadd.f32 0.0, %v3805
    %v3807 = vpop.f32.mrf.mxu0
    %3808 = vdwg.mxu0
    %v3809 = vsel %vm2217, %v3453, 0.0
    %3810 = vadd.xlane.f32.xlu0 %v3809
    %v3811 = vpop.xlane.xlu0 %3810
    %v3812 = vsel %vm2217, %v3454, 0.0
    %3813 = vadd.xlane.f32.xlu0 %v3812
    %v3814 = vpop.xlane.xlu0 %3813
    %v3815 = vsel %vm2217, %v3455, 0.0
    %3816 = vadd.xlane.f32.xlu0 %v3815
    %v3817 = vpop.xlane.xlu0 %3816
    %v3818 = vsel %vm2217, %v3456, 0.0
    %3819 = vadd.xlane.f32.xlu0 %v3818
    %v3820 = vpop.xlane.xlu0 %3819
    %v3821 = vsel %vm2217, %v3457, 0.0
    %3822 = vadd.xlane.f32.xlu0 %v3821
    %v3823 = vpop.xlane.xlu0 %3822
    %v3824 = vsel %vm2217, %v3458, 0.0
    %3825 = vadd.xlane.f32.xlu0 %v3824
    %v3826 = vpop.xlane.xlu0 %3825
    %v3827 = vsel %vm2217, %v3459, 0.0
    %3828 = vadd.xlane.f32.xlu0 %v3827
    %v3829 = vpop.xlane.xlu0 %3828
    %v3830 = vsel %vm2217, %v3460, 0.0
    %3831 = vadd.xlane.f32.xlu0 %v3830
    %v3832 = vpop.xlane.xlu0 %3831
    %v3833 = vsel %vm2217, %v3461, 0.0
    %3834 = vadd.xlane.f32.xlu0 %v3833
    %v3835 = vpop.xlane.xlu0 %3834
    %v3836 = vsel %vm2217, %v3462, 0.0
    %3837 = vadd.xlane.f32.xlu0 %v3836
    %v3838 = vpop.xlane.xlu0 %3837
    %v3839 = vsel %vm2217, %v3463, 0.0
    %3840 = vadd.xlane.f32.xlu0 %v3839
    %v3841 = vpop.xlane.xlu0 %3840
    %v3842 = vsel %vm2217, %v3464, 0.0
    %3843 = vadd.xlane.f32.xlu0 %v3842
    %v3844 = vpop.xlane.xlu0 %3843
    %v3845 = vsel %vm2217, %v3465, 0.0
    %3846 = vadd.xlane.f32.xlu0 %v3845
    %v3847 = vpop.xlane.xlu0 %3846
    %v3848 = vsel %vm2217, %v3466, 0.0
    %3849 = vadd.xlane.f32.xlu0 %v3848
    %v3850 = vpop.xlane.xlu0 %3849
    %v3851 = vsel %vm2217, %v3467, 0.0
    %3852 = vadd.xlane.f32.xlu0 %v3851
    %v3853 = vpop.xlane.xlu0 %3852
    %v3854 = vsel %vm2217, %v3468, 0.0
    %3855 = vadd.xlane.f32.xlu0 %v3854
    %v3856 = vpop.xlane.xlu0 %3855
    %v3857 = vmul.f32 %v3536, 2.0
    %v3858 = vmul.f32 %v3541, 2.0
    %v3859 = vmul.f32 %v3546, 2.0
    %v3860 = vmul.f32 %v3551, 2.0
    %v3861 = vmul.f32 %v3556, 2.0
    %v3862 = vmul.f32 %v3561, 2.0
    %v3863 = vmul.f32 %v3566, 2.0
    %v3864 = vmul.f32 %v3571, 2.0
    %v3865 = vmul.f32 %v3576, 2.0
    %v3866 = vmul.f32 %v3581, 2.0
    %v3867 = vmul.f32 %v3586, 2.0
    %v3868 = vmul.f32 %v3591, 2.0
    %v3869 = vmul.f32 %v3596, 2.0
    %v3870 = vmul.f32 %v3601, 2.0
    %v3871 = vmul.f32 %v3606, 2.0
    %v3872 = vmul.f32 %v3611, 2.0
    %v3873 = vsub.f32 %v3811, %v3857
    %v3874 = vsub.f32 %v3814, %v3858
    %v3875 = vsub.f32 %v3817, %v3859
    %v3876 = vsub.f32 %v3820, %v3860
    %v3877 = vsub.f32 %v3823, %v3861
    %v3878 = vsub.f32 %v3826, %v3862
    %v3879 = vsub.f32 %v3829, %v3863
    %v3880 = vsub.f32 %v3832, %v3864
    %v3881 = vsub.f32 %v3835, %v3865
    %v3882 = vsub.f32 %v3838, %v3866
    %v3883 = vsub.f32 %v3841, %v3867
    %v3884 = vsub.f32 %v3844, %v3868
    %v3885 = vsub.f32 %v3847, %v3869
    %v3886 = vsub.f32 %v3850, %v3870
    %v3887 = vsub.f32 %v3853, %v3871
    %v3888 = vsub.f32 %v3856, %v3872
    %v3889 = vadd.f32 %v3873, %v3731
    %v3890 = vadd.f32 %v3874, %v3736
    %v3891 = vadd.f32 %v3875, %v3741
    %v3892 = vadd.f32 %v3876, %v3746
    %v3893 = vadd.f32 %v3877, %v3751
    %v3894 = vadd.f32 %v3878, %v3756
    %v3895 = vadd.f32 %v3879, %v3761
    %v3896 = vadd.f32 %v3880, %v3766
    %v3897 = vadd.f32 %v3881, %v3771
    %v3898 = vadd.f32 %v3882, %v3776
    %v3899 = vadd.f32 %v3883, %v3781
    %v3900 = vadd.f32 %v3884, %v3786
    %v3901 = vadd.f32 %v3885, %v3791
    %v3902 = vadd.f32 %v3886, %v3796
    %v3903 = vadd.f32 %v3887, %v3801
    %v3904 = vadd.f32 %v3888, %v3806
    %v3905 = vmax.f32 %v3889, 0.0
    %v3906 = vmax.f32 %v3890, 0.0
    %v3907 = vmax.f32 %v3891, 0.0
    %v3908 = vmax.f32 %v3892, 0.0
    %v3909 = vmax.f32 %v3893, 0.0
    %v3910 = vmax.f32 %v3894, 0.0
    %v3911 = vmax.f32 %v3895, 0.0
    %v3912 = vmax.f32 %v3896, 0.0
    %v3913 = vmax.f32 %v3897, 0.0
    %v3914 = vmax.f32 %v3898, 0.0
    %v3915 = vmax.f32 %v3899, 0.0
    %v3916 = vmax.f32 %v3900, 0.0
    %v3917 = vmax.f32 %v3901, 0.0
    %v3918 = vmax.f32 %v3902, 0.0
    %v3919 = vmax.f32 %v3903, 0.0
    %v3920 = vmax.f32 %v3904, 0.0
    %v3937 = vadd.s32 %v3905, 8388608
    %v3938 = vadd.s32 %v3906, 8388608
    %v3939 = vadd.s32 %v3907, 8388608
    %v3940 = vadd.s32 %v3908, 8388608
    %v3941 = vadd.s32 %v3909, 8388608
    %v3942 = vadd.s32 %v3910, 8388608
    %v3943 = vadd.s32 %v3911, 8388608
    %v3944 = vadd.s32 %v3912, 8388608
    %v3945 = vadd.s32 %v3913, 8388608
    %v3946 = vadd.s32 %v3914, 8388608
    %v3947 = vadd.s32 %v3915, 8388608
    %v3948 = vadd.s32 %v3916, 8388608
    %v3949 = vadd.s32 %v3917, 8388608
    %v3950 = vadd.s32 %v3918, 8388608
    %v3951 = vadd.s32 %v3919, 8388608
    %v3952 = vadd.s32 %v3920, 8388608
    %v3953 = vand.u32 %v3937, %v185
    %v3954 = vand.u32 %v3938, %v186
    %v3955 = vand.u32 %v3939, %v187
    %v3956 = vand.u32 %v3940, %v188
    %v3957 = vand.u32 %v3941, %v189
    %v3958 = vand.u32 %v3942, %v190
    %v3959 = vand.u32 %v3943, %v191
    %v3960 = vand.u32 %v3944, %v192
    %v3961 = vand.u32 %v3945, %v193
    %v3962 = vand.u32 %v3946, %v194
    %v3963 = vand.u32 %v3947, %v195
    %v3964 = vand.u32 %v3948, %v196
    %v3965 = vand.u32 %v3949, %v197
    %v3966 = vand.u32 %v3950, %v198
    %v3967 = vand.u32 %v3951, %v199
    %v3968 = vand.u32 %v3952, %v200
    %v3969 = vor.u32 %v3953, %v201
    %v3970 = vor.u32 %v3954, %v202
    %v3971 = vor.u32 %v3955, %v203
    %v3972 = vor.u32 %v3956, %v204
    %v3973 = vor.u32 %v3957, %v205
    %v3974 = vor.u32 %v3958, %v206
    %v3975 = vor.u32 %v3959, %v207
    %v3976 = vor.u32 %v3960, %v208
    %v3977 = vor.u32 %v3961, %v209
    %v3978 = vor.u32 %v3962, %v210
    %v3979 = vor.u32 %v3963, %v211
    %v3980 = vor.u32 %v3964, %v212
    %v3981 = vor.u32 %v3965, %v213
    %v3982 = vor.u32 %v3966, %v214
    %v3983 = vor.u32 %v3967, %v215
    %v3984 = vor.u32 %v3968, %v216
    %4001 = vmin.xlane.f32.xlu0 %v3969
    %v4002 = vpop.xlane.xlu0 %4001
    %4003 = vmin.xlane.f32.xlu0 %v3970
    %v4004 = vpop.xlane.xlu0 %4003
    %4005 = vmin.xlane.f32.xlu0 %v3971
    %v4006 = vpop.xlane.xlu0 %4005
    %4007 = vmin.xlane.f32.xlu0 %v3972
    %v4008 = vpop.xlane.xlu0 %4007
    %4009 = vmin.xlane.f32.xlu0 %v3973
    %v4010 = vpop.xlane.xlu0 %4009
    %4011 = vmin.xlane.f32.xlu0 %v3974
    %v4012 = vpop.xlane.xlu0 %4011
    %4013 = vmin.xlane.f32.xlu0 %v3975
    %v4014 = vpop.xlane.xlu0 %4013
    %4015 = vmin.xlane.f32.xlu0 %v3976
    %v4016 = vpop.xlane.xlu0 %4015
    %4017 = vmin.xlane.f32.xlu0 %v3977
    %v4018 = vpop.xlane.xlu0 %4017
    %4019 = vmin.xlane.f32.xlu0 %v3978
    %v4020 = vpop.xlane.xlu0 %4019
    %4021 = vmin.xlane.f32.xlu0 %v3979
    %v4022 = vpop.xlane.xlu0 %4021
    %4023 = vmin.xlane.f32.xlu0 %v3980
    %v4024 = vpop.xlane.xlu0 %4023
    %4025 = vmin.xlane.f32.xlu0 %v3981
    %v4026 = vpop.xlane.xlu0 %4025
    %4027 = vmin.xlane.f32.xlu0 %v3982
    %v4028 = vpop.xlane.xlu0 %4027
    %4029 = vmin.xlane.f32.xlu0 %v3983
    %v4030 = vpop.xlane.xlu0 %4029
    %4031 = vmin.xlane.f32.xlu0 %v3984
    %v4032 = vpop.xlane.xlu0 %4031
    %vm4033 = vcmp.eq.f32.partialorder %v3969, %v4002
    %vm4034 = vcmp.eq.f32.partialorder %v3970, %v4004
    %vm4035 = vcmp.eq.f32.partialorder %v3971, %v4006
    %vm4036 = vcmp.eq.f32.partialorder %v3972, %v4008
    %vm4037 = vcmp.eq.f32.partialorder %v3973, %v4010
    %vm4038 = vcmp.eq.f32.partialorder %v3974, %v4012
    %vm4039 = vcmp.eq.f32.partialorder %v3975, %v4014
    %vm4040 = vcmp.eq.f32.partialorder %v3976, %v4016
    %vm4041 = vcmp.eq.f32.partialorder %v3977, %v4018
    %vm4042 = vcmp.eq.f32.partialorder %v3978, %v4020
    %vm4043 = vcmp.eq.f32.partialorder %v3979, %v4022
    %vm4044 = vcmp.eq.f32.partialorder %v3980, %v4024
    %vm4045 = vcmp.eq.f32.partialorder %v3981, %v4026
    %vm4046 = vcmp.eq.f32.partialorder %v3982, %v4028
    %vm4047 = vcmp.eq.f32.partialorder %v3983, %v4030
    %vm4048 = vcmp.eq.f32.partialorder %v3984, %v4032
    %v4049 = vsel %vm4033, 1e+30, %v3969
    %v4050 = vsel %vm4034, 1e+30, %v3970
    %v4051 = vsel %vm4035, 1e+30, %v3971
    %v4052 = vsel %vm4036, 1e+30, %v3972
    %v4053 = vsel %vm4037, 1e+30, %v3973
    %v4054 = vsel %vm4038, 1e+30, %v3974
    %v4055 = vsel %vm4039, 1e+30, %v3975
    %v4056 = vsel %vm4040, 1e+30, %v3976
    %v4057 = vsel %vm4041, 1e+30, %v3977
    %v4058 = vsel %vm4042, 1e+30, %v3978
    %v4059 = vsel %vm4043, 1e+30, %v3979
    %v4060 = vsel %vm4044, 1e+30, %v3980
    %v4061 = vsel %vm4045, 1e+30, %v3981
    %v4062 = vsel %vm4046, 1e+30, %v3982
    %v4063 = vsel %vm4047, 1e+30, %v3983
    %v4064 = vsel %vm4048, 1e+30, %v3984
    %v4065 = vsel %vm4033, 1.0, 0.0
    %v4066 = vsel %vm4034, 1.0, 0.0
    %v4067 = vsel %vm4035, 1.0, 0.0
    %v4068 = vsel %vm4036, 1.0, 0.0
    %v4069 = vsel %vm4037, 1.0, 0.0
    %v4070 = vsel %vm4038, 1.0, 0.0
    %v4071 = vsel %vm4039, 1.0, 0.0
    %v4072 = vsel %vm4040, 1.0, 0.0
    %v4073 = vsel %vm4041, 1.0, 0.0
    %v4074 = vsel %vm4042, 1.0, 0.0
    %v4075 = vsel %vm4043, 1.0, 0.0
    %v4076 = vsel %vm4044, 1.0, 0.0
    %v4077 = vsel %vm4045, 1.0, 0.0
    %v4078 = vsel %vm4046, 1.0, 0.0
    %v4079 = vsel %vm4047, 1.0, 0.0
    %v4080 = vsel %vm4048, 1.0, 0.0
    %4081 = vmatprep.subr.mxu0 0.0
    %4082 = vmatpush1.msra.mxu0 %v3299
    %4083 = vmatprep.subr.mxu0 0.0
    %4084 = vmatpush1.msra.mxu0 %v3294
    %4085 = vmatprep.subr.mxu0 0.0
    %4086 = vmatpush1.msra.mxu0 %v3289
    %4087 = vmatprep.subr.mxu0 0.0
    %4088 = vmatpush1.msra.mxu0 %v3284
    %4089 = vmatprep.subr.mxu0 0.0
    %4090 = vmatpush1.msra.mxu0 %v3279
    %4091 = vmatprep.subr.mxu0 0.0
    %4092 = vmatpush1.msra.mxu0 %v3274
    %4093 = vmatprep.subr.mxu0 0.0
    %4094 = vmatpush1.msra.mxu0 %v3269
    %4095 = vmatprep.subr.mxu0 0.0
    %4096 = vmatpush1.msra.mxu0 %v3264
    %4097 = vmatprep.subr.mxu0 0.0
    %4098 = vmatpush1.msra.mxu0 %v3259
    %4099 = vmatprep.subr.mxu0 0.0
    %4100 = vmatpush1.msra.mxu0 %v3254
    %4101 = vmatprep.subr.mxu0 0.0
    %4102 = vmatpush1.msra.mxu0 %v3249
    %4103 = vmatprep.subr.mxu0 0.0
    %4104 = vmatpush1.msra.mxu0 %v3244
    %4105 = vmatprep.subr.mxu0 0.0
    %4106 = vmatpush1.msra.mxu0 %v3239
    %4107 = vmatprep.subr.mxu0 0.0
    %4108 = vmatpush1.msra.mxu0 %v3234
    %4109 = vmatprep.subr.mxu0 0.0
    %4110 = vmatpush1.msra.mxu0 %v3229
    %4111 = vmatprep.subr.mxu0 0.0
    %4112 = vmatpush1.msra.mxu0 %v3224
    %4113 = vmatprep.subr.mxu0 0.0
    %4114 = vmatpush2.msra.mxu0 0.0
    %4115 = vmatprep.subr.mxu0 0.0
    %4116 = vmatpush2.msra.mxu0 0.0
    %4117 = vmatprep.subr.mxu0 0.0
    %4118 = vmatpush2.msra.mxu0 0.0
    %4119 = vmatprep.subr.mxu0 0.0
    %4120 = vmatpush2.msra.mxu0 0.0
    %4121 = vmatprep.subr.mxu0 0.0
    %4122 = vmatpush2.msra.mxu0 0.0
    %4123 = vmatprep.subr.mxu0 0.0
    %4124 = vmatpush2.msra.mxu0 0.0
    %4125 = vmatprep.subr.mxu0 0.0
    %4126 = vmatpush2.msra.mxu0 0.0
    %4127 = vmatprep.subr.mxu0 0.0
    %4128 = vmatpush2.msra.mxu0 0.0
    %4129 = vmatprep.subr.mxu0 0.0
    %4130 = vmatpush2.msra.mxu0 0.0
    %4131 = vmatprep.subr.mxu0 0.0
    %4132 = vmatpush2.msra.mxu0 0.0
    %4133 = vmatprep.subr.mxu0 0.0
    %4134 = vmatpush2.msra.mxu0 0.0
    %4135 = vmatprep.subr.mxu0 0.0
    %4136 = vmatpush2.msra.mxu0 0.0
    %4137 = vmatprep.subr.mxu0 0.0
    %4138 = vmatpush2.msra.mxu0 0.0
    %4139 = vmatprep.subr.mxu0 0.0
    %4140 = vmatpush2.msra.mxu0 0.0
    %4141 = vmatprep.subr.mxu0 0.0
    %4142 = vmatpush2.msra.mxu0 0.0
    %4143 = vmatprep.subr.mxu0 0.0
    %4144 = vmatpush2.msra.mxu0 0.0
    %4145 = vmatprep.mubr.f32.mxu0 0.0
    %4146 = vmatmul.mubr.f32.gmra.mxu0 %v4065
    %v4147 = vpop.f32.mrf.mxu0
    %v4148 = vadd.f32 0.0, %v4147
    %v4149 = vpop.f32.mrf.mxu0
    %4150 = vmatprep.mubr.f32.mxu0 0.0
    %4151 = vmatmul.mubr.f32.gmra.mxu0 %v4066
    %v4152 = vpop.f32.mrf.mxu0
    %v4153 = vadd.f32 0.0, %v4152
    %v4154 = vpop.f32.mrf.mxu0
    %4155 = vmatprep.mubr.f32.mxu0 0.0
    %4156 = vmatmul.mubr.f32.gmra.mxu0 %v4067
    %v4157 = vpop.f32.mrf.mxu0
    %v4158 = vadd.f32 0.0, %v4157
    %v4159 = vpop.f32.mrf.mxu0
    %4160 = vmatprep.mubr.f32.mxu0 0.0
    %4161 = vmatmul.mubr.f32.gmra.mxu0 %v4068
    %v4162 = vpop.f32.mrf.mxu0
    %v4163 = vadd.f32 0.0, %v4162
    %v4164 = vpop.f32.mrf.mxu0
    %4165 = vmatprep.mubr.f32.mxu0 0.0
    %4166 = vmatmul.mubr.f32.gmra.mxu0 %v4069
    %v4167 = vpop.f32.mrf.mxu0
    %v4168 = vadd.f32 0.0, %v4167
    %v4169 = vpop.f32.mrf.mxu0
    %4170 = vmatprep.mubr.f32.mxu0 0.0
    %4171 = vmatmul.mubr.f32.gmra.mxu0 %v4070
    %v4172 = vpop.f32.mrf.mxu0
    %v4173 = vadd.f32 0.0, %v4172
    %v4174 = vpop.f32.mrf.mxu0
    %4175 = vmatprep.mubr.f32.mxu0 0.0
    %4176 = vmatmul.mubr.f32.gmra.mxu0 %v4071
    %v4177 = vpop.f32.mrf.mxu0
    %v4178 = vadd.f32 0.0, %v4177
    %v4179 = vpop.f32.mrf.mxu0
    %4180 = vmatprep.mubr.f32.mxu0 0.0
    %4181 = vmatmul.mubr.f32.gmra.mxu0 %v4072
    %v4182 = vpop.f32.mrf.mxu0
    %v4183 = vadd.f32 0.0, %v4182
    %v4184 = vpop.f32.mrf.mxu0
    %4185 = vmatprep.mubr.f32.mxu0 0.0
    %4186 = vmatmul.mubr.f32.gmra.mxu0 %v4073
    %v4187 = vpop.f32.mrf.mxu0
    %v4188 = vadd.f32 0.0, %v4187
    %v4189 = vpop.f32.mrf.mxu0
    %4190 = vmatprep.mubr.f32.mxu0 0.0
    %4191 = vmatmul.mubr.f32.gmra.mxu0 %v4074
    %v4192 = vpop.f32.mrf.mxu0
    %v4193 = vadd.f32 0.0, %v4192
    %v4194 = vpop.f32.mrf.mxu0
    %4195 = vmatprep.mubr.f32.mxu0 0.0
    %4196 = vmatmul.mubr.f32.gmra.mxu0 %v4075
    %v4197 = vpop.f32.mrf.mxu0
    %v4198 = vadd.f32 0.0, %v4197
    %v4199 = vpop.f32.mrf.mxu0
    %4200 = vmatprep.mubr.f32.mxu0 0.0
    %4201 = vmatmul.mubr.f32.gmra.mxu0 %v4076
    %v4202 = vpop.f32.mrf.mxu0
    %v4203 = vadd.f32 0.0, %v4202
    %v4204 = vpop.f32.mrf.mxu0
    %4205 = vmatprep.mubr.f32.mxu0 0.0
    %4206 = vmatmul.mubr.f32.gmra.mxu0 %v4077
    %v4207 = vpop.f32.mrf.mxu0
    %v4208 = vadd.f32 0.0, %v4207
    %v4209 = vpop.f32.mrf.mxu0
    %4210 = vmatprep.mubr.f32.mxu0 0.0
    %4211 = vmatmul.mubr.f32.gmra.mxu0 %v4078
    %v4212 = vpop.f32.mrf.mxu0
    %v4213 = vadd.f32 0.0, %v4212
    %v4214 = vpop.f32.mrf.mxu0
    %4215 = vmatprep.mubr.f32.mxu0 0.0
    %4216 = vmatmul.mubr.f32.gmra.mxu0 %v4079
    %v4217 = vpop.f32.mrf.mxu0
    %v4218 = vadd.f32 0.0, %v4217
    %v4219 = vpop.f32.mrf.mxu0
    %4220 = vmatprep.mubr.f32.mxu0 0.0
    %4221 = vmatmul.mubr.f32.gmra.mxu0 %v4080
    %v4222 = vpop.f32.mrf.mxu0
    %v4223 = vadd.f32 0.0, %v4222
    %v4224 = vpop.f32.mrf.mxu0
    %4225 = vdwg.mxu0
    %v4226 = vsub.f32 %v3375, %v4148
    %v4227 = vsub.f32 %v3380, %v4153
    %v4228 = vsub.f32 %v3385, %v4158
    %v4229 = vsub.f32 %v3390, %v4163
    %v4230 = vsub.f32 %v3395, %v4168
    %v4231 = vsub.f32 %v3400, %v4173
    %v4232 = vsub.f32 %v3405, %v4178
    %v4233 = vsub.f32 %v3410, %v4183
    %v4234 = vsub.f32 %v3415, %v4188
    %v4235 = vsub.f32 %v3420, %v4193
    %v4236 = vsub.f32 %v3425, %v4198
    %v4237 = vsub.f32 %v3430, %v4203
    %v4238 = vsub.f32 %v3435, %v4208
    %v4239 = vsub.f32 %v3440, %v4213
    %v4240 = vsub.f32 %v3445, %v4218
    %v4241 = vsub.f32 %v3450, %v4223
    %v4242 = vmax.f32 %v4226, 0.0
    %v4243 = vmax.f32 %v4227, 0.0
    %v4244 = vmax.f32 %v4228, 0.0
    %v4245 = vmax.f32 %v4229, 0.0
    %v4246 = vmax.f32 %v4230, 0.0
    %v4247 = vmax.f32 %v4231, 0.0
    %v4248 = vmax.f32 %v4232, 0.0
    %v4249 = vmax.f32 %v4233, 0.0
    %v4250 = vmax.f32 %v4234, 0.0
    %v4251 = vmax.f32 %v4235, 0.0
    %v4252 = vmax.f32 %v4236, 0.0
    %v4253 = vmax.f32 %v4237, 0.0
    %v4254 = vmax.f32 %v4238, 0.0
    %v4255 = vmax.f32 %v4239, 0.0
    %v4256 = vmax.f32 %v4240, 0.0
    %v4257 = vmax.f32 %v4241, 0.0
    %4258 = vmin.xlane.f32.xlu0 %v4049
    %v4259 = vpop.xlane.xlu0 %4258
    %4260 = vmin.xlane.f32.xlu0 %v4050
    %v4261 = vpop.xlane.xlu0 %4260
    %4262 = vmin.xlane.f32.xlu0 %v4051
    %v4263 = vpop.xlane.xlu0 %4262
    %4264 = vmin.xlane.f32.xlu0 %v4052
    %v4265 = vpop.xlane.xlu0 %4264
    %4266 = vmin.xlane.f32.xlu0 %v4053
    %v4267 = vpop.xlane.xlu0 %4266
    %4268 = vmin.xlane.f32.xlu0 %v4054
    %v4269 = vpop.xlane.xlu0 %4268
    %4270 = vmin.xlane.f32.xlu0 %v4055
    %v4271 = vpop.xlane.xlu0 %4270
    %4272 = vmin.xlane.f32.xlu0 %v4056
    %v4273 = vpop.xlane.xlu0 %4272
    %4274 = vmin.xlane.f32.xlu0 %v4057
    %v4275 = vpop.xlane.xlu0 %4274
    %4276 = vmin.xlane.f32.xlu0 %v4058
    %v4277 = vpop.xlane.xlu0 %4276
    %4278 = vmin.xlane.f32.xlu0 %v4059
    %v4279 = vpop.xlane.xlu0 %4278
    %4280 = vmin.xlane.f32.xlu0 %v4060
    %v4281 = vpop.xlane.xlu0 %4280
    %4282 = vmin.xlane.f32.xlu0 %v4061
    %v4283 = vpop.xlane.xlu0 %4282
    %4284 = vmin.xlane.f32.xlu0 %v4062
    %v4285 = vpop.xlane.xlu0 %4284
    %4286 = vmin.xlane.f32.xlu0 %v4063
    %v4287 = vpop.xlane.xlu0 %4286
    %4288 = vmin.xlane.f32.xlu0 %v4064
    %v4289 = vpop.xlane.xlu0 %4288
    %vm4290 = vcmp.eq.f32.partialorder %v4049, %v4259
    %vm4291 = vcmp.eq.f32.partialorder %v4050, %v4261
    %vm4292 = vcmp.eq.f32.partialorder %v4051, %v4263
    %vm4293 = vcmp.eq.f32.partialorder %v4052, %v4265
    %vm4294 = vcmp.eq.f32.partialorder %v4053, %v4267
    %vm4295 = vcmp.eq.f32.partialorder %v4054, %v4269
    %vm4296 = vcmp.eq.f32.partialorder %v4055, %v4271
    %vm4297 = vcmp.eq.f32.partialorder %v4056, %v4273
    %vm4298 = vcmp.eq.f32.partialorder %v4057, %v4275
    %vm4299 = vcmp.eq.f32.partialorder %v4058, %v4277
    %vm4300 = vcmp.eq.f32.partialorder %v4059, %v4279
    %vm4301 = vcmp.eq.f32.partialorder %v4060, %v4281
    %vm4302 = vcmp.eq.f32.partialorder %v4061, %v4283
    %vm4303 = vcmp.eq.f32.partialorder %v4062, %v4285
    %vm4304 = vcmp.eq.f32.partialorder %v4063, %v4287
    %vm4305 = vcmp.eq.f32.partialorder %v4064, %v4289
    %v4306 = vsel %vm4290, 1e+30, %v4049
    %v4307 = vsel %vm4291, 1e+30, %v4050
    %v4308 = vsel %vm4292, 1e+30, %v4051
    %v4309 = vsel %vm4293, 1e+30, %v4052
    %v4310 = vsel %vm4294, 1e+30, %v4053
    %v4311 = vsel %vm4295, 1e+30, %v4054
    %v4312 = vsel %vm4296, 1e+30, %v4055
    %v4313 = vsel %vm4297, 1e+30, %v4056
    %v4314 = vsel %vm4298, 1e+30, %v4057
    %v4315 = vsel %vm4299, 1e+30, %v4058
    %v4316 = vsel %vm4300, 1e+30, %v4059
    %v4317 = vsel %vm4301, 1e+30, %v4060
    %v4318 = vsel %vm4302, 1e+30, %v4061
    %v4319 = vsel %vm4303, 1e+30, %v4062
    %v4320 = vsel %vm4304, 1e+30, %v4063
    %v4321 = vsel %vm4305, 1e+30, %v4064
    %v4322 = vsel %vm4290, 1.0, 0.0
    %v4323 = vsel %vm4291, 1.0, 0.0
    %v4324 = vsel %vm4292, 1.0, 0.0
    %v4325 = vsel %vm4293, 1.0, 0.0
    %v4326 = vsel %vm4294, 1.0, 0.0
    %v4327 = vsel %vm4295, 1.0, 0.0
    %v4328 = vsel %vm4296, 1.0, 0.0
    %v4329 = vsel %vm4297, 1.0, 0.0
    %v4330 = vsel %vm4298, 1.0, 0.0
    %v4331 = vsel %vm4299, 1.0, 0.0
    %v4332 = vsel %vm4300, 1.0, 0.0
    %v4333 = vsel %vm4301, 1.0, 0.0
    %v4334 = vsel %vm4302, 1.0, 0.0
    %v4335 = vsel %vm4303, 1.0, 0.0
    %v4336 = vsel %vm4304, 1.0, 0.0
    %v4337 = vsel %vm4305, 1.0, 0.0
    %4338 = vmatprep.subr.mxu0 0.0
    %4339 = vmatpush1.msra.mxu0 %v3299
    %4340 = vmatprep.subr.mxu0 0.0
    %4341 = vmatpush1.msra.mxu0 %v3294
    %4342 = vmatprep.subr.mxu0 0.0
    %4343 = vmatpush1.msra.mxu0 %v3289
    %4344 = vmatprep.subr.mxu0 0.0
    %4345 = vmatpush1.msra.mxu0 %v3284
    %4346 = vmatprep.subr.mxu0 0.0
    %4347 = vmatpush1.msra.mxu0 %v3279
    %4348 = vmatprep.subr.mxu0 0.0
    %4349 = vmatpush1.msra.mxu0 %v3274
    %4350 = vmatprep.subr.mxu0 0.0
    %4351 = vmatpush1.msra.mxu0 %v3269
    %4352 = vmatprep.subr.mxu0 0.0
    %4353 = vmatpush1.msra.mxu0 %v3264
    %4354 = vmatprep.subr.mxu0 0.0
    %4355 = vmatpush1.msra.mxu0 %v3259
    %4356 = vmatprep.subr.mxu0 0.0
    %4357 = vmatpush1.msra.mxu0 %v3254
    %4358 = vmatprep.subr.mxu0 0.0
    %4359 = vmatpush1.msra.mxu0 %v3249
    %4360 = vmatprep.subr.mxu0 0.0
    %4361 = vmatpush1.msra.mxu0 %v3244
    %4362 = vmatprep.subr.mxu0 0.0
    %4363 = vmatpush1.msra.mxu0 %v3239
    %4364 = vmatprep.subr.mxu0 0.0
    %4365 = vmatpush1.msra.mxu0 %v3234
    %4366 = vmatprep.subr.mxu0 0.0
    %4367 = vmatpush1.msra.mxu0 %v3229
    %4368 = vmatprep.subr.mxu0 0.0
    %4369 = vmatpush1.msra.mxu0 %v3224
    %4370 = vmatprep.subr.mxu0 0.0
    %4371 = vmatpush2.msra.mxu0 0.0
    %4372 = vmatprep.subr.mxu0 0.0
    %4373 = vmatpush2.msra.mxu0 0.0
    %4374 = vmatprep.subr.mxu0 0.0
    %4375 = vmatpush2.msra.mxu0 0.0
    %4376 = vmatprep.subr.mxu0 0.0
    %4377 = vmatpush2.msra.mxu0 0.0
    %4378 = vmatprep.subr.mxu0 0.0
    %4379 = vmatpush2.msra.mxu0 0.0
    %4380 = vmatprep.subr.mxu0 0.0
    %4381 = vmatpush2.msra.mxu0 0.0
    %4382 = vmatprep.subr.mxu0 0.0
    %4383 = vmatpush2.msra.mxu0 0.0
    %4384 = vmatprep.subr.mxu0 0.0
    %4385 = vmatpush2.msra.mxu0 0.0
    %4386 = vmatprep.subr.mxu0 0.0
    %4387 = vmatpush2.msra.mxu0 0.0
    %4388 = vmatprep.subr.mxu0 0.0
    %4389 = vmatpush2.msra.mxu0 0.0
    %4390 = vmatprep.subr.mxu0 0.0
    %4391 = vmatpush2.msra.mxu0 0.0
    %4392 = vmatprep.subr.mxu0 0.0
    %4393 = vmatpush2.msra.mxu0 0.0
    %4394 = vmatprep.subr.mxu0 0.0
    %4395 = vmatpush2.msra.mxu0 0.0
    %4396 = vmatprep.subr.mxu0 0.0
    %4397 = vmatpush2.msra.mxu0 0.0
    %4398 = vmatprep.subr.mxu0 0.0
    %4399 = vmatpush2.msra.mxu0 0.0
    %4400 = vmatprep.subr.mxu0 0.0
    %4401 = vmatpush2.msra.mxu0 0.0
    %4402 = vmatprep.mubr.f32.mxu0 0.0
    %4403 = vmatmul.mubr.f32.gmra.mxu0 %v4322
    %v4404 = vpop.f32.mrf.mxu0
    %v4405 = vadd.f32 0.0, %v4404
    %v4406 = vpop.f32.mrf.mxu0
    %4407 = vmatprep.mubr.f32.mxu0 0.0
    %4408 = vmatmul.mubr.f32.gmra.mxu0 %v4323
    %v4409 = vpop.f32.mrf.mxu0
    %v4410 = vadd.f32 0.0, %v4409
    %v4411 = vpop.f32.mrf.mxu0
    %4412 = vmatprep.mubr.f32.mxu0 0.0
    %4413 = vmatmul.mubr.f32.gmra.mxu0 %v4324
    %v4414 = vpop.f32.mrf.mxu0
    %v4415 = vadd.f32 0.0, %v4414
    %v4416 = vpop.f32.mrf.mxu0
    %4417 = vmatprep.mubr.f32.mxu0 0.0
    %4418 = vmatmul.mubr.f32.gmra.mxu0 %v4325
    %v4419 = vpop.f32.mrf.mxu0
    %v4420 = vadd.f32 0.0, %v4419
    %v4421 = vpop.f32.mrf.mxu0
    %4422 = vmatprep.mubr.f32.mxu0 0.0
    %4423 = vmatmul.mubr.f32.gmra.mxu0 %v4326
    %v4424 = vpop.f32.mrf.mxu0
    %v4425 = vadd.f32 0.0, %v4424
    %v4426 = vpop.f32.mrf.mxu0
    %4427 = vmatprep.mubr.f32.mxu0 0.0
    %4428 = vmatmul.mubr.f32.gmra.mxu0 %v4327
    %v4429 = vpop.f32.mrf.mxu0
    %v4430 = vadd.f32 0.0, %v4429
    %v4431 = vpop.f32.mrf.mxu0
    %4432 = vmatprep.mubr.f32.mxu0 0.0
    %4433 = vmatmul.mubr.f32.gmra.mxu0 %v4328
    %v4434 = vpop.f32.mrf.mxu0
    %v4435 = vadd.f32 0.0, %v4434
    %v4436 = vpop.f32.mrf.mxu0
    %4437 = vmatprep.mubr.f32.mxu0 0.0
    %4438 = vmatmul.mubr.f32.gmra.mxu0 %v4329
    %v4439 = vpop.f32.mrf.mxu0
    %v4440 = vadd.f32 0.0, %v4439
    %v4441 = vpop.f32.mrf.mxu0
    %4442 = vmatprep.mubr.f32.mxu0 0.0
    %4443 = vmatmul.mubr.f32.gmra.mxu0 %v4330
    %v4444 = vpop.f32.mrf.mxu0
    %v4445 = vadd.f32 0.0, %v4444
    %v4446 = vpop.f32.mrf.mxu0
    %4447 = vmatprep.mubr.f32.mxu0 0.0
    %4448 = vmatmul.mubr.f32.gmra.mxu0 %v4331
    %v4449 = vpop.f32.mrf.mxu0
    %v4450 = vadd.f32 0.0, %v4449
    %v4451 = vpop.f32.mrf.mxu0
    %4452 = vmatprep.mubr.f32.mxu0 0.0
    %4453 = vmatmul.mubr.f32.gmra.mxu0 %v4332
    %v4454 = vpop.f32.mrf.mxu0
    %v4455 = vadd.f32 0.0, %v4454
    %v4456 = vpop.f32.mrf.mxu0
    %4457 = vmatprep.mubr.f32.mxu0 0.0
    %4458 = vmatmul.mubr.f32.gmra.mxu0 %v4333
    %v4459 = vpop.f32.mrf.mxu0
    %v4460 = vadd.f32 0.0, %v4459
    %v4461 = vpop.f32.mrf.mxu0
    %4462 = vmatprep.mubr.f32.mxu0 0.0
    %4463 = vmatmul.mubr.f32.gmra.mxu0 %v4334
    %v4464 = vpop.f32.mrf.mxu0
    %v4465 = vadd.f32 0.0, %v4464
    %v4466 = vpop.f32.mrf.mxu0
    %4467 = vmatprep.mubr.f32.mxu0 0.0
    %4468 = vmatmul.mubr.f32.gmra.mxu0 %v4335
    %v4469 = vpop.f32.mrf.mxu0
    %v4470 = vadd.f32 0.0, %v4469
    %v4471 = vpop.f32.mrf.mxu0
    %4472 = vmatprep.mubr.f32.mxu0 0.0
    %4473 = vmatmul.mubr.f32.gmra.mxu0 %v4336
    %v4474 = vpop.f32.mrf.mxu0
    %v4475 = vadd.f32 0.0, %v4474
    %v4476 = vpop.f32.mrf.mxu0
    %4477 = vmatprep.mubr.f32.mxu0 0.0
    %4478 = vmatmul.mubr.f32.gmra.mxu0 %v4337
    %v4479 = vpop.f32.mrf.mxu0
    %v4480 = vadd.f32 0.0, %v4479
    %v4481 = vpop.f32.mrf.mxu0
    %4482 = vdwg.mxu0
    %v4483 = vsub.f32 %v3375, %v4405
    %v4484 = vsub.f32 %v3380, %v4410
    %v4485 = vsub.f32 %v3385, %v4415
    %v4486 = vsub.f32 %v3390, %v4420
    %v4487 = vsub.f32 %v3395, %v4425
    %v4488 = vsub.f32 %v3400, %v4430
    %v4489 = vsub.f32 %v3405, %v4435
    %v4490 = vsub.f32 %v3410, %v4440
    %v4491 = vsub.f32 %v3415, %v4445
    %v4492 = vsub.f32 %v3420, %v4450
    %v4493 = vsub.f32 %v3425, %v4455
    %v4494 = vsub.f32 %v3430, %v4460
    %v4495 = vsub.f32 %v3435, %v4465
    %v4496 = vsub.f32 %v3440, %v4470
    %v4497 = vsub.f32 %v3445, %v4475
    %v4498 = vsub.f32 %v3450, %v4480
    %v4499 = vmax.f32 %v4483, 0.0
    %v4500 = vmax.f32 %v4484, 0.0
    %v4501 = vmax.f32 %v4485, 0.0
    %v4502 = vmax.f32 %v4486, 0.0
    %v4503 = vmax.f32 %v4487, 0.0
    %v4504 = vmax.f32 %v4488, 0.0
    %v4505 = vmax.f32 %v4489, 0.0
    %v4506 = vmax.f32 %v4490, 0.0
    %v4507 = vmax.f32 %v4491, 0.0
    %v4508 = vmax.f32 %v4492, 0.0
    %v4509 = vmax.f32 %v4493, 0.0
    %v4510 = vmax.f32 %v4494, 0.0
    %v4511 = vmax.f32 %v4495, 0.0
    %v4512 = vmax.f32 %v4496, 0.0
    %v4513 = vmax.f32 %v4497, 0.0
    %v4514 = vmax.f32 %v4498, 0.0
    %4515 = vmin.xlane.f32.xlu0 %v4306
    %v4516 = vpop.xlane.xlu0 %4515
    %4517 = vmin.xlane.f32.xlu0 %v4307
    %v4518 = vpop.xlane.xlu0 %4517
    %4519 = vmin.xlane.f32.xlu0 %v4308
    %v4520 = vpop.xlane.xlu0 %4519
    %4521 = vmin.xlane.f32.xlu0 %v4309
    %v4522 = vpop.xlane.xlu0 %4521
    %4523 = vmin.xlane.f32.xlu0 %v4310
    %v4524 = vpop.xlane.xlu0 %4523
    %4525 = vmin.xlane.f32.xlu0 %v4311
    %v4526 = vpop.xlane.xlu0 %4525
    %4527 = vmin.xlane.f32.xlu0 %v4312
    %v4528 = vpop.xlane.xlu0 %4527
    %4529 = vmin.xlane.f32.xlu0 %v4313
    %v4530 = vpop.xlane.xlu0 %4529
    %4531 = vmin.xlane.f32.xlu0 %v4314
    %v4532 = vpop.xlane.xlu0 %4531
    %4533 = vmin.xlane.f32.xlu0 %v4315
    %v4534 = vpop.xlane.xlu0 %4533
    %4535 = vmin.xlane.f32.xlu0 %v4316
    %v4536 = vpop.xlane.xlu0 %4535
    %4537 = vmin.xlane.f32.xlu0 %v4317
    %v4538 = vpop.xlane.xlu0 %4537
    %4539 = vmin.xlane.f32.xlu0 %v4318
    %v4540 = vpop.xlane.xlu0 %4539
    %4541 = vmin.xlane.f32.xlu0 %v4319
    %v4542 = vpop.xlane.xlu0 %4541
    %4543 = vmin.xlane.f32.xlu0 %v4320
    %v4544 = vpop.xlane.xlu0 %4543
    %4545 = vmin.xlane.f32.xlu0 %v4321
    %v4546 = vpop.xlane.xlu0 %4545
    %vm4547 = vcmp.eq.f32.partialorder %v4306, %v4516
    %vm4548 = vcmp.eq.f32.partialorder %v4307, %v4518
    %vm4549 = vcmp.eq.f32.partialorder %v4308, %v4520
    %vm4550 = vcmp.eq.f32.partialorder %v4309, %v4522
    %vm4551 = vcmp.eq.f32.partialorder %v4310, %v4524
    %vm4552 = vcmp.eq.f32.partialorder %v4311, %v4526
    %vm4553 = vcmp.eq.f32.partialorder %v4312, %v4528
    %vm4554 = vcmp.eq.f32.partialorder %v4313, %v4530
    %vm4555 = vcmp.eq.f32.partialorder %v4314, %v4532
    %vm4556 = vcmp.eq.f32.partialorder %v4315, %v4534
    %vm4557 = vcmp.eq.f32.partialorder %v4316, %v4536
    %vm4558 = vcmp.eq.f32.partialorder %v4317, %v4538
    %vm4559 = vcmp.eq.f32.partialorder %v4318, %v4540
    %vm4560 = vcmp.eq.f32.partialorder %v4319, %v4542
    %vm4561 = vcmp.eq.f32.partialorder %v4320, %v4544
    %vm4562 = vcmp.eq.f32.partialorder %v4321, %v4546
    %v4563 = vsel %vm4547, 1e+30, %v4306
    %v4564 = vsel %vm4548, 1e+30, %v4307
    %v4565 = vsel %vm4549, 1e+30, %v4308
    %v4566 = vsel %vm4550, 1e+30, %v4309
    %v4567 = vsel %vm4551, 1e+30, %v4310
    %v4568 = vsel %vm4552, 1e+30, %v4311
    %v4569 = vsel %vm4553, 1e+30, %v4312
    %v4570 = vsel %vm4554, 1e+30, %v4313
    %v4571 = vsel %vm4555, 1e+30, %v4314
    %v4572 = vsel %vm4556, 1e+30, %v4315
    %v4573 = vsel %vm4557, 1e+30, %v4316
    %v4574 = vsel %vm4558, 1e+30, %v4317
    %v4575 = vsel %vm4559, 1e+30, %v4318
    %v4576 = vsel %vm4560, 1e+30, %v4319
    %v4577 = vsel %vm4561, 1e+30, %v4320
    %v4578 = vsel %vm4562, 1e+30, %v4321
    %v4579 = vsel %vm4547, 1.0, 0.0
    %v4580 = vsel %vm4548, 1.0, 0.0
    %v4581 = vsel %vm4549, 1.0, 0.0
    %v4582 = vsel %vm4550, 1.0, 0.0
    %v4583 = vsel %vm4551, 1.0, 0.0
    %v4584 = vsel %vm4552, 1.0, 0.0
    %v4585 = vsel %vm4553, 1.0, 0.0
    %v4586 = vsel %vm4554, 1.0, 0.0
    %v4587 = vsel %vm4555, 1.0, 0.0
    %v4588 = vsel %vm4556, 1.0, 0.0
    %v4589 = vsel %vm4557, 1.0, 0.0
    %v4590 = vsel %vm4558, 1.0, 0.0
    %v4591 = vsel %vm4559, 1.0, 0.0
    %v4592 = vsel %vm4560, 1.0, 0.0
    %v4593 = vsel %vm4561, 1.0, 0.0
    %v4594 = vsel %vm4562, 1.0, 0.0
    %4595 = vmatprep.subr.mxu0 0.0
    %4596 = vmatpush1.msra.mxu0 %v3299
    %4597 = vmatprep.subr.mxu0 0.0
    %4598 = vmatpush1.msra.mxu0 %v3294
    %4599 = vmatprep.subr.mxu0 0.0
    %4600 = vmatpush1.msra.mxu0 %v3289
    %4601 = vmatprep.subr.mxu0 0.0
    %4602 = vmatpush1.msra.mxu0 %v3284
    %4603 = vmatprep.subr.mxu0 0.0
    %4604 = vmatpush1.msra.mxu0 %v3279
    %4605 = vmatprep.subr.mxu0 0.0
    %4606 = vmatpush1.msra.mxu0 %v3274
    %4607 = vmatprep.subr.mxu0 0.0
    %4608 = vmatpush1.msra.mxu0 %v3269
    %4609 = vmatprep.subr.mxu0 0.0
    %4610 = vmatpush1.msra.mxu0 %v3264
    %4611 = vmatprep.subr.mxu0 0.0
    %4612 = vmatpush1.msra.mxu0 %v3259
    %4613 = vmatprep.subr.mxu0 0.0
    %4614 = vmatpush1.msra.mxu0 %v3254
    %4615 = vmatprep.subr.mxu0 0.0
    %4616 = vmatpush1.msra.mxu0 %v3249
    %4617 = vmatprep.subr.mxu0 0.0
    %4618 = vmatpush1.msra.mxu0 %v3244
    %4619 = vmatprep.subr.mxu0 0.0
    %4620 = vmatpush1.msra.mxu0 %v3239
    %4621 = vmatprep.subr.mxu0 0.0
    %4622 = vmatpush1.msra.mxu0 %v3234
    %4623 = vmatprep.subr.mxu0 0.0
    %4624 = vmatpush1.msra.mxu0 %v3229
    %4625 = vmatprep.subr.mxu0 0.0
    %4626 = vmatpush1.msra.mxu0 %v3224
    %4627 = vmatprep.subr.mxu0 0.0
    %4628 = vmatpush2.msra.mxu0 0.0
    %4629 = vmatprep.subr.mxu0 0.0
    %4630 = vmatpush2.msra.mxu0 0.0
    %4631 = vmatprep.subr.mxu0 0.0
    %4632 = vmatpush2.msra.mxu0 0.0
    %4633 = vmatprep.subr.mxu0 0.0
    %4634 = vmatpush2.msra.mxu0 0.0
    %4635 = vmatprep.subr.mxu0 0.0
    %4636 = vmatpush2.msra.mxu0 0.0
    %4637 = vmatprep.subr.mxu0 0.0
    %4638 = vmatpush2.msra.mxu0 0.0
    %4639 = vmatprep.subr.mxu0 0.0
    %4640 = vmatpush2.msra.mxu0 0.0
    %4641 = vmatprep.subr.mxu0 0.0
    %4642 = vmatpush2.msra.mxu0 0.0
    %4643 = vmatprep.subr.mxu0 0.0
    %4644 = vmatpush2.msra.mxu0 0.0
    %4645 = vmatprep.subr.mxu0 0.0
    %4646 = vmatpush2.msra.mxu0 0.0
    %4647 = vmatprep.subr.mxu0 0.0
    %4648 = vmatpush2.msra.mxu0 0.0
    %4649 = vmatprep.subr.mxu0 0.0
    %4650 = vmatpush2.msra.mxu0 0.0
    %4651 = vmatprep.subr.mxu0 0.0
    %4652 = vmatpush2.msra.mxu0 0.0
    %4653 = vmatprep.subr.mxu0 0.0
    %4654 = vmatpush2.msra.mxu0 0.0
    %4655 = vmatprep.subr.mxu0 0.0
    %4656 = vmatpush2.msra.mxu0 0.0
    %4657 = vmatprep.subr.mxu0 0.0
    %4658 = vmatpush2.msra.mxu0 0.0
    %4659 = vmatprep.mubr.f32.mxu0 0.0
    %4660 = vmatmul.mubr.f32.gmra.mxu0 %v4579
    %v4661 = vpop.f32.mrf.mxu0
    %v4662 = vadd.f32 0.0, %v4661
    %v4663 = vpop.f32.mrf.mxu0
    %4664 = vmatprep.mubr.f32.mxu0 0.0
    %4665 = vmatmul.mubr.f32.gmra.mxu0 %v4580
    %v4666 = vpop.f32.mrf.mxu0
    %v4667 = vadd.f32 0.0, %v4666
    %v4668 = vpop.f32.mrf.mxu0
    %4669 = vmatprep.mubr.f32.mxu0 0.0
    %4670 = vmatmul.mubr.f32.gmra.mxu0 %v4581
    %v4671 = vpop.f32.mrf.mxu0
    %v4672 = vadd.f32 0.0, %v4671
    %v4673 = vpop.f32.mrf.mxu0
    %4674 = vmatprep.mubr.f32.mxu0 0.0
    %4675 = vmatmul.mubr.f32.gmra.mxu0 %v4582
    %v4676 = vpop.f32.mrf.mxu0
    %v4677 = vadd.f32 0.0, %v4676
    %v4678 = vpop.f32.mrf.mxu0
    %4679 = vmatprep.mubr.f32.mxu0 0.0
    %4680 = vmatmul.mubr.f32.gmra.mxu0 %v4583
    %v4681 = vpop.f32.mrf.mxu0
    %v4682 = vadd.f32 0.0, %v4681
    %v4683 = vpop.f32.mrf.mxu0
    %4684 = vmatprep.mubr.f32.mxu0 0.0
    %4685 = vmatmul.mubr.f32.gmra.mxu0 %v4584
    %v4686 = vpop.f32.mrf.mxu0
    %v4687 = vadd.f32 0.0, %v4686
    %v4688 = vpop.f32.mrf.mxu0
    %4689 = vmatprep.mubr.f32.mxu0 0.0
    %4690 = vmatmul.mubr.f32.gmra.mxu0 %v4585
    %v4691 = vpop.f32.mrf.mxu0
    %v4692 = vadd.f32 0.0, %v4691
    %v4693 = vpop.f32.mrf.mxu0
    %4694 = vmatprep.mubr.f32.mxu0 0.0
    %4695 = vmatmul.mubr.f32.gmra.mxu0 %v4586
    %v4696 = vpop.f32.mrf.mxu0
    %v4697 = vadd.f32 0.0, %v4696
    %v4698 = vpop.f32.mrf.mxu0
    %4699 = vmatprep.mubr.f32.mxu0 0.0
    %4700 = vmatmul.mubr.f32.gmra.mxu0 %v4587
    %v4701 = vpop.f32.mrf.mxu0
    %v4702 = vadd.f32 0.0, %v4701
    %v4703 = vpop.f32.mrf.mxu0
    %4704 = vmatprep.mubr.f32.mxu0 0.0
    %4705 = vmatmul.mubr.f32.gmra.mxu0 %v4588
    %v4706 = vpop.f32.mrf.mxu0
    %v4707 = vadd.f32 0.0, %v4706
    %v4708 = vpop.f32.mrf.mxu0
    %4709 = vmatprep.mubr.f32.mxu0 0.0
    %4710 = vmatmul.mubr.f32.gmra.mxu0 %v4589
    %v4711 = vpop.f32.mrf.mxu0
    %v4712 = vadd.f32 0.0, %v4711
    %v4713 = vpop.f32.mrf.mxu0
    %4714 = vmatprep.mubr.f32.mxu0 0.0
    %4715 = vmatmul.mubr.f32.gmra.mxu0 %v4590
    %v4716 = vpop.f32.mrf.mxu0
    %v4717 = vadd.f32 0.0, %v4716
    %v4718 = vpop.f32.mrf.mxu0
    %4719 = vmatprep.mubr.f32.mxu0 0.0
    %4720 = vmatmul.mubr.f32.gmra.mxu0 %v4591
    %v4721 = vpop.f32.mrf.mxu0
    %v4722 = vadd.f32 0.0, %v4721
    %v4723 = vpop.f32.mrf.mxu0
    %4724 = vmatprep.mubr.f32.mxu0 0.0
    %4725 = vmatmul.mubr.f32.gmra.mxu0 %v4592
    %v4726 = vpop.f32.mrf.mxu0
    %v4727 = vadd.f32 0.0, %v4726
    %v4728 = vpop.f32.mrf.mxu0
    %4729 = vmatprep.mubr.f32.mxu0 0.0
    %4730 = vmatmul.mubr.f32.gmra.mxu0 %v4593
    %v4731 = vpop.f32.mrf.mxu0
    %v4732 = vadd.f32 0.0, %v4731
    %v4733 = vpop.f32.mrf.mxu0
    %4734 = vmatprep.mubr.f32.mxu0 0.0
    %4735 = vmatmul.mubr.f32.gmra.mxu0 %v4594
    %v4736 = vpop.f32.mrf.mxu0
    %v4737 = vadd.f32 0.0, %v4736
    %v4738 = vpop.f32.mrf.mxu0
    %4739 = vdwg.mxu0
    %v4740 = vsub.f32 %v3375, %v4662
    %v4741 = vsub.f32 %v3380, %v4667
    %v4742 = vsub.f32 %v3385, %v4672
    %v4743 = vsub.f32 %v3390, %v4677
    %v4744 = vsub.f32 %v3395, %v4682
    %v4745 = vsub.f32 %v3400, %v4687
    %v4746 = vsub.f32 %v3405, %v4692
    %v4747 = vsub.f32 %v3410, %v4697
    %v4748 = vsub.f32 %v3415, %v4702
    %v4749 = vsub.f32 %v3420, %v4707
    %v4750 = vsub.f32 %v3425, %v4712
    %v4751 = vsub.f32 %v3430, %v4717
    %v4752 = vsub.f32 %v3435, %v4722
    %v4753 = vsub.f32 %v3440, %v4727
    %v4754 = vsub.f32 %v3445, %v4732
    %v4755 = vsub.f32 %v3450, %v4737
    %v4756 = vmax.f32 %v4740, 0.0
    %v4757 = vmax.f32 %v4741, 0.0
    %v4758 = vmax.f32 %v4742, 0.0
    %v4759 = vmax.f32 %v4743, 0.0
    %v4760 = vmax.f32 %v4744, 0.0
    %v4761 = vmax.f32 %v4745, 0.0
    %v4762 = vmax.f32 %v4746, 0.0
    %v4763 = vmax.f32 %v4747, 0.0
    %v4764 = vmax.f32 %v4748, 0.0
    %v4765 = vmax.f32 %v4749, 0.0
    %v4766 = vmax.f32 %v4750, 0.0
    %v4767 = vmax.f32 %v4751, 0.0
    %v4768 = vmax.f32 %v4752, 0.0
    %v4769 = vmax.f32 %v4753, 0.0
    %v4770 = vmax.f32 %v4754, 0.0
    %v4771 = vmax.f32 %v4755, 0.0
    %4772 = vmin.xlane.f32.xlu0 %v4563
    %v4773 = vpop.xlane.xlu0 %4772
    %4774 = vmin.xlane.f32.xlu0 %v4564
    %v4775 = vpop.xlane.xlu0 %4774
    %4776 = vmin.xlane.f32.xlu0 %v4565
    %v4777 = vpop.xlane.xlu0 %4776
    %4778 = vmin.xlane.f32.xlu0 %v4566
    %v4779 = vpop.xlane.xlu0 %4778
    %4780 = vmin.xlane.f32.xlu0 %v4567
    %v4781 = vpop.xlane.xlu0 %4780
    %4782 = vmin.xlane.f32.xlu0 %v4568
    %v4783 = vpop.xlane.xlu0 %4782
    %4784 = vmin.xlane.f32.xlu0 %v4569
    %v4785 = vpop.xlane.xlu0 %4784
    %4786 = vmin.xlane.f32.xlu0 %v4570
    %v4787 = vpop.xlane.xlu0 %4786
    %4788 = vmin.xlane.f32.xlu0 %v4571
    %v4789 = vpop.xlane.xlu0 %4788
    %4790 = vmin.xlane.f32.xlu0 %v4572
    %v4791 = vpop.xlane.xlu0 %4790
    %4792 = vmin.xlane.f32.xlu0 %v4573
    %v4793 = vpop.xlane.xlu0 %4792
    %4794 = vmin.xlane.f32.xlu0 %v4574
    %v4795 = vpop.xlane.xlu0 %4794
    %4796 = vmin.xlane.f32.xlu0 %v4575
    %v4797 = vpop.xlane.xlu0 %4796
    %4798 = vmin.xlane.f32.xlu0 %v4576
    %v4799 = vpop.xlane.xlu0 %4798
    %4800 = vmin.xlane.f32.xlu0 %v4577
    %v4801 = vpop.xlane.xlu0 %4800
    %4802 = vmin.xlane.f32.xlu0 %v4578
    %v4803 = vpop.xlane.xlu0 %4802
    %vm4804 = vcmp.eq.f32.partialorder %v4563, %v4773
    %vm4805 = vcmp.eq.f32.partialorder %v4564, %v4775
    %vm4806 = vcmp.eq.f32.partialorder %v4565, %v4777
    %vm4807 = vcmp.eq.f32.partialorder %v4566, %v4779
    %vm4808 = vcmp.eq.f32.partialorder %v4567, %v4781
    %vm4809 = vcmp.eq.f32.partialorder %v4568, %v4783
    %vm4810 = vcmp.eq.f32.partialorder %v4569, %v4785
    %vm4811 = vcmp.eq.f32.partialorder %v4570, %v4787
    %vm4812 = vcmp.eq.f32.partialorder %v4571, %v4789
    %vm4813 = vcmp.eq.f32.partialorder %v4572, %v4791
    %vm4814 = vcmp.eq.f32.partialorder %v4573, %v4793
    %vm4815 = vcmp.eq.f32.partialorder %v4574, %v4795
    %vm4816 = vcmp.eq.f32.partialorder %v4575, %v4797
    %vm4817 = vcmp.eq.f32.partialorder %v4576, %v4799
    %vm4818 = vcmp.eq.f32.partialorder %v4577, %v4801
    %vm4819 = vcmp.eq.f32.partialorder %v4578, %v4803
    %v4820 = vsel %vm4804, 1.0, 0.0
    %v4821 = vsel %vm4805, 1.0, 0.0
    %v4822 = vsel %vm4806, 1.0, 0.0
    %v4823 = vsel %vm4807, 1.0, 0.0
    %v4824 = vsel %vm4808, 1.0, 0.0
    %v4825 = vsel %vm4809, 1.0, 0.0
    %v4826 = vsel %vm4810, 1.0, 0.0
    %v4827 = vsel %vm4811, 1.0, 0.0
    %v4828 = vsel %vm4812, 1.0, 0.0
    %v4829 = vsel %vm4813, 1.0, 0.0
    %v4830 = vsel %vm4814, 1.0, 0.0
    %v4831 = vsel %vm4815, 1.0, 0.0
    %v4832 = vsel %vm4816, 1.0, 0.0
    %v4833 = vsel %vm4817, 1.0, 0.0
    %v4834 = vsel %vm4818, 1.0, 0.0
    %v4835 = vsel %vm4819, 1.0, 0.0
    %4836 = vmatprep.subr.mxu0 0.0
    %4837 = vmatpush1.msra.mxu0 %v3299
    %4838 = vmatprep.subr.mxu0 0.0
    %4839 = vmatpush1.msra.mxu0 %v3294
    %4840 = vmatprep.subr.mxu0 0.0
    %4841 = vmatpush1.msra.mxu0 %v3289
    %4842 = vmatprep.subr.mxu0 0.0
    %4843 = vmatpush1.msra.mxu0 %v3284
    %4844 = vmatprep.subr.mxu0 0.0
    %4845 = vmatpush1.msra.mxu0 %v3279
    %4846 = vmatprep.subr.mxu0 0.0
    %4847 = vmatpush1.msra.mxu0 %v3274
    %4848 = vmatprep.subr.mxu0 0.0
    %4849 = vmatpush1.msra.mxu0 %v3269
    %4850 = vmatprep.subr.mxu0 0.0
    %4851 = vmatpush1.msra.mxu0 %v3264
    %4852 = vmatprep.subr.mxu0 0.0
    %4853 = vmatpush1.msra.mxu0 %v3259
    %4854 = vmatprep.subr.mxu0 0.0
    %4855 = vmatpush1.msra.mxu0 %v3254
    %4856 = vmatprep.subr.mxu0 0.0
    %4857 = vmatpush1.msra.mxu0 %v3249
    %4858 = vmatprep.subr.mxu0 0.0
    %4859 = vmatpush1.msra.mxu0 %v3244
    %4860 = vmatprep.subr.mxu0 0.0
    %4861 = vmatpush1.msra.mxu0 %v3239
    %4862 = vmatprep.subr.mxu0 0.0
    %4863 = vmatpush1.msra.mxu0 %v3234
    %4864 = vmatprep.subr.mxu0 0.0
    %4865 = vmatpush1.msra.mxu0 %v3229
    %4866 = vmatprep.subr.mxu0 0.0
    %4867 = vmatpush1.msra.mxu0 %v3224
    %4868 = vmatprep.subr.mxu0 0.0
    %4869 = vmatpush2.msra.mxu0 0.0
    %4870 = vmatprep.subr.mxu0 0.0
    %4871 = vmatpush2.msra.mxu0 0.0
    %4872 = vmatprep.subr.mxu0 0.0
    %4873 = vmatpush2.msra.mxu0 0.0
    %4874 = vmatprep.subr.mxu0 0.0
    %4875 = vmatpush2.msra.mxu0 0.0
    %4876 = vmatprep.subr.mxu0 0.0
    %4877 = vmatpush2.msra.mxu0 0.0
    %4878 = vmatprep.subr.mxu0 0.0
    %4879 = vmatpush2.msra.mxu0 0.0
    %4880 = vmatprep.subr.mxu0 0.0
    %4881 = vmatpush2.msra.mxu0 0.0
    %4882 = vmatprep.subr.mxu0 0.0
    %4883 = vmatpush2.msra.mxu0 0.0
    %4884 = vmatprep.subr.mxu0 0.0
    %4885 = vmatpush2.msra.mxu0 0.0
    %4886 = vmatprep.subr.mxu0 0.0
    %4887 = vmatpush2.msra.mxu0 0.0
    %4888 = vmatprep.subr.mxu0 0.0
    %4889 = vmatpush2.msra.mxu0 0.0
    %4890 = vmatprep.subr.mxu0 0.0
    %4891 = vmatpush2.msra.mxu0 0.0
    %4892 = vmatprep.subr.mxu0 0.0
    %4893 = vmatpush2.msra.mxu0 0.0
    %4894 = vmatprep.subr.mxu0 0.0
    %4895 = vmatpush2.msra.mxu0 0.0
    %4896 = vmatprep.subr.mxu0 0.0
    %4897 = vmatpush2.msra.mxu0 0.0
    %4898 = vmatprep.subr.mxu0 0.0
    %4899 = vmatpush2.msra.mxu0 0.0
    %4900 = vmatprep.mubr.f32.mxu0 0.0
    %4901 = vmatmul.mubr.f32.gmra.mxu0 %v4820
    %v4902 = vpop.f32.mrf.mxu0
    %v4903 = vadd.f32 0.0, %v4902
    %v4904 = vpop.f32.mrf.mxu0
    %4905 = vmatprep.mubr.f32.mxu0 0.0
    %4906 = vmatmul.mubr.f32.gmra.mxu0 %v4821
    %v4907 = vpop.f32.mrf.mxu0
    %v4908 = vadd.f32 0.0, %v4907
    %v4909 = vpop.f32.mrf.mxu0
    %4910 = vmatprep.mubr.f32.mxu0 0.0
    %4911 = vmatmul.mubr.f32.gmra.mxu0 %v4822
    %v4912 = vpop.f32.mrf.mxu0
    %v4913 = vadd.f32 0.0, %v4912
    %v4914 = vpop.f32.mrf.mxu0
    %4915 = vmatprep.mubr.f32.mxu0 0.0
    %4916 = vmatmul.mubr.f32.gmra.mxu0 %v4823
    %v4917 = vpop.f32.mrf.mxu0
    %v4918 = vadd.f32 0.0, %v4917
    %v4919 = vpop.f32.mrf.mxu0
    %4920 = vmatprep.mubr.f32.mxu0 0.0
    %4921 = vmatmul.mubr.f32.gmra.mxu0 %v4824
    %v4922 = vpop.f32.mrf.mxu0
    %v4923 = vadd.f32 0.0, %v4922
    %v4924 = vpop.f32.mrf.mxu0
    %4925 = vmatprep.mubr.f32.mxu0 0.0
    %4926 = vmatmul.mubr.f32.gmra.mxu0 %v4825
    %v4927 = vpop.f32.mrf.mxu0
    %v4928 = vadd.f32 0.0, %v4927
    %v4929 = vpop.f32.mrf.mxu0
    %4930 = vmatprep.mubr.f32.mxu0 0.0
    %4931 = vmatmul.mubr.f32.gmra.mxu0 %v4826
    %v4932 = vpop.f32.mrf.mxu0
    %v4933 = vadd.f32 0.0, %v4932
    %v4934 = vpop.f32.mrf.mxu0
    %4935 = vmatprep.mubr.f32.mxu0 0.0
    %4936 = vmatmul.mubr.f32.gmra.mxu0 %v4827
    %v4937 = vpop.f32.mrf.mxu0
    %v4938 = vadd.f32 0.0, %v4937
    %v4939 = vpop.f32.mrf.mxu0
    %4940 = vmatprep.mubr.f32.mxu0 0.0
    %4941 = vmatmul.mubr.f32.gmra.mxu0 %v4828
    %v4942 = vpop.f32.mrf.mxu0
    %v4943 = vadd.f32 0.0, %v4942
    %v4944 = vpop.f32.mrf.mxu0
    %4945 = vmatprep.mubr.f32.mxu0 0.0
    %4946 = vmatmul.mubr.f32.gmra.mxu0 %v4829
    %v4947 = vpop.f32.mrf.mxu0
    %v4948 = vadd.f32 0.0, %v4947
    %v4949 = vpop.f32.mrf.mxu0
    %4950 = vmatprep.mubr.f32.mxu0 0.0
    %4951 = vmatmul.mubr.f32.gmra.mxu0 %v4830
    %v4952 = vpop.f32.mrf.mxu0
    %v4953 = vadd.f32 0.0, %v4952
    %v4954 = vpop.f32.mrf.mxu0
    %4955 = vmatprep.mubr.f32.mxu0 0.0
    %4956 = vmatmul.mubr.f32.gmra.mxu0 %v4831
    %v4957 = vpop.f32.mrf.mxu0
    %v4958 = vadd.f32 0.0, %v4957
    %v4959 = vpop.f32.mrf.mxu0
    %4960 = vmatprep.mubr.f32.mxu0 0.0
    %4961 = vmatmul.mubr.f32.gmra.mxu0 %v4832
    %v4962 = vpop.f32.mrf.mxu0
    %v4963 = vadd.f32 0.0, %v4962
    %v4964 = vpop.f32.mrf.mxu0
    %4965 = vmatprep.mubr.f32.mxu0 0.0
    %4966 = vmatmul.mubr.f32.gmra.mxu0 %v4833
    %v4967 = vpop.f32.mrf.mxu0
    %v4968 = vadd.f32 0.0, %v4967
    %v4969 = vpop.f32.mrf.mxu0
    %4970 = vmatprep.mubr.f32.mxu0 0.0
    %4971 = vmatmul.mubr.f32.gmra.mxu0 %v4834
    %v4972 = vpop.f32.mrf.mxu0
    %v4973 = vadd.f32 0.0, %v4972
    %v4974 = vpop.f32.mrf.mxu0
    %4975 = vmatprep.mubr.f32.mxu0 0.0
    %4976 = vmatmul.mubr.f32.gmra.mxu0 %v4835
    %v4977 = vpop.f32.mrf.mxu0
    %v4978 = vadd.f32 0.0, %v4977
    %v4979 = vpop.f32.mrf.mxu0
    %4980 = vdwg.mxu0
    %v4981 = vsub.f32 %v3375, %v4903
    %v4982 = vsub.f32 %v3380, %v4908
    %v4983 = vsub.f32 %v3385, %v4913
    %v4984 = vsub.f32 %v3390, %v4918
    %v4985 = vsub.f32 %v3395, %v4923
    %v4986 = vsub.f32 %v3400, %v4928
    %v4987 = vsub.f32 %v3405, %v4933
    %v4988 = vsub.f32 %v3410, %v4938
    %v4989 = vsub.f32 %v3415, %v4943
    %v4990 = vsub.f32 %v3420, %v4948
    %v4991 = vsub.f32 %v3425, %v4953
    %v4992 = vsub.f32 %v3430, %v4958
    %v4993 = vsub.f32 %v3435, %v4963
    %v4994 = vsub.f32 %v3440, %v4968
    %v4995 = vsub.f32 %v3445, %v4973
    %v4996 = vsub.f32 %v3450, %v4978
    %v4997 = vmax.f32 %v4981, 0.0
    %v4998 = vmax.f32 %v4982, 0.0
    %v4999 = vmax.f32 %v4983, 0.0
    %v5000 = vmax.f32 %v4984, 0.0
    %v5001 = vmax.f32 %v4985, 0.0
    %v5002 = vmax.f32 %v4986, 0.0
    %v5003 = vmax.f32 %v4987, 0.0
    %v5004 = vmax.f32 %v4988, 0.0
    %v5005 = vmax.f32 %v4989, 0.0
    %v5006 = vmax.f32 %v4990, 0.0
    %v5007 = vmax.f32 %v4991, 0.0
    %v5008 = vmax.f32 %v4992, 0.0
    %v5009 = vmax.f32 %v4993, 0.0
    %v5010 = vmax.f32 %v4994, 0.0
    %v5011 = vmax.f32 %v4995, 0.0
    %v5012 = vmax.f32 %v4996, 0.0
    %v5014 = vlaneseq
    %v5015 = vshrl.u32 %v5014, 7
    %v5016 = vsub.s32 0, %v5015
    %v5017 = vrot.slane %v169, %v5016
    %vm5019 = vcmask 130048
    %v5021 = vsel %vm5019, %v4242, 0
    %v5024 = vsel %vm5019, %v4243, 0
    %v5027 = vsel %vm5019, %v4244, 0
    %v5030 = vsel %vm5019, %v4245, 0
    %v5033 = vsel %vm5019, %v4246, 0
    %v5036 = vsel %vm5019, %v4247, 0
    %v5039 = vsel %vm5019, %v4248, 0
    %v5042 = vsel %vm5019, %v4249, 0
    %v5045 = vsel %vm5019, %v4250, 0
    %v5048 = vsel %vm5019, %v4251, 0
    %v5051 = vsel %vm5019, %v4252, 0
    %v5054 = vsel %vm5019, %v4253, 0
    %v5057 = vsel %vm5019, %v4254, 0
    %v5060 = vsel %vm5019, %v4255, 0
    %v5063 = vsel %vm5019, %v4256, 0
    %v5066 = vsel %vm5019, %v4257, 0
    %v5069 = vsel %vm5019, %v4499, 0
    %v5072 = vsel %vm5019, %v4500, 0
    %v5075 = vsel %vm5019, %v4501, 0
    %v5078 = vsel %vm5019, %v4502, 0
    %v5081 = vsel %vm5019, %v4503, 0
    %v5084 = vsel %vm5019, %v4504, 0
    %v5087 = vsel %vm5019, %v4505, 0
    %v5090 = vsel %vm5019, %v4506, 0
    %v5093 = vsel %vm5019, %v4507, 0
    %v5096 = vsel %vm5019, %v4508, 0
    %v5099 = vsel %vm5019, %v4509, 0
    %v5102 = vsel %vm5019, %v4510, 0
    %v5105 = vsel %vm5019, %v4511, 0
    %v5108 = vsel %vm5019, %v4512, 0
    %v5111 = vsel %vm5019, %v4513, 0
    %v5114 = vsel %vm5019, %v4514, 0
    %v5117 = vsel %vm5019, %v4756, 0
    %v5120 = vsel %vm5019, %v4757, 0
    %v5123 = vsel %vm5019, %v4758, 0
    %v5126 = vsel %vm5019, %v4759, 0
    %v5129 = vsel %vm5019, %v4760, 0
    %v5132 = vsel %vm5019, %v4761, 0
    %v5135 = vsel %vm5019, %v4762, 0
    %v5138 = vsel %vm5019, %v4763, 0
    %v5141 = vsel %vm5019, %v4764, 0
    %v5144 = vsel %vm5019, %v4765, 0
    %v5147 = vsel %vm5019, %v4766, 0
    %v5150 = vsel %vm5019, %v4767, 0
    %v5153 = vsel %vm5019, %v4768, 0
    %v5156 = vsel %vm5019, %v4769, 0
    %v5159 = vsel %vm5019, %v4770, 0
    %v5162 = vsel %vm5019, %v4771, 0
    %v5165 = vsel %vm5019, %v4997, 0
    %v5168 = vsel %vm5019, %v4998, 0
    %v5171 = vsel %vm5019, %v4999, 0
    %v5174 = vsel %vm5019, %v5000, 0
    %v5177 = vsel %vm5019, %v5001, 0
    %v5180 = vsel %vm5019, %v5002, 0
    %v5183 = vsel %vm5019, %v5003, 0
    %v5186 = vsel %vm5019, %v5004, 0
    %v5189 = vsel %vm5019, %v5005, 0
    %v5192 = vsel %vm5019, %v5006, 0
    %v5195 = vsel %vm5019, %v5007, 0
    %v5198 = vsel %vm5019, %v5008, 0
    %v5201 = vsel %vm5019, %v5009, 0
    %v5204 = vsel %vm5019, %v5010, 0
    %v5207 = vsel %vm5019, %v5011, 0
    %v5210 = vsel %vm5019, %v5012, 0
    %5212 = vmatprep.subr.mxu0 0.0
    %5213 = vmatpush1.msra.mxu0 0.0
    %5214 = vmatprep.subr.mxu0 0.0
    %5215 = vmatpush1.msra.mxu0 0.0
    %5216 = vmatprep.subr.mxu0 0.0
    %5217 = vmatpush1.msra.mxu0 0.0
    %5218 = vmatprep.subr.mxu0 0.0
    %5219 = vmatpush1.msra.mxu0 0.0
    %5220 = vmatprep.subr.mxu0 0.0
    %5221 = vmatpush1.msra.mxu0 0.0
    %5222 = vmatprep.subr.mxu0 0.0
    %5223 = vmatpush1.msra.mxu0 0.0
    %5224 = vmatprep.subr.mxu0 0.0
    %5225 = vmatpush1.msra.mxu0 0.0
    %5226 = vmatprep.subr.mxu0 0.0
    %5227 = vmatpush1.msra.mxu0 0.0
    %5228 = vmatprep.subr.mxu0 0.0
    %5229 = vmatpush1.msra.mxu0 0.0
    %5230 = vmatprep.subr.mxu0 0.0
    %5231 = vmatpush1.msra.mxu0 0.0
    %5232 = vmatprep.subr.mxu0 0.0
    %5233 = vmatpush1.msra.mxu0 0.0
    %5234 = vmatprep.subr.mxu0 0.0
    %5235 = vmatpush1.msra.mxu0 0.0
    %5236 = vmatprep.subr.mxu0 0.0
    %5237 = vmatpush1.msra.mxu0 0.0
    %5238 = vmatprep.subr.mxu0 0.0
    %5239 = vmatpush1.msra.mxu0 0.0
    %5240 = vmatprep.subr.mxu0 0.0
    %5241 = vmatpush1.msra.mxu0 %v168
    %5242 = vmatprep.subr.mxu0 0.0
    %5243 = vmatpush1.msra.mxu0 %v167
    %5244 = vmatprep.subr.mxu0 0.0
    %5245 = vmatpush2.msra.mxu0 0.0
    %5246 = vmatprep.subr.mxu0 0.0
    %5247 = vmatpush2.msra.mxu0 0.0
    %5248 = vmatprep.subr.mxu0 0.0
    %5249 = vmatpush2.msra.mxu0 0.0
    %5250 = vmatprep.subr.mxu0 0.0
    %5251 = vmatpush2.msra.mxu0 0.0
    %5252 = vmatprep.subr.mxu0 0.0
    %5253 = vmatpush2.msra.mxu0 0.0
    %5254 = vmatprep.subr.mxu0 0.0
    %5255 = vmatpush2.msra.mxu0 0.0
    %5256 = vmatprep.subr.mxu0 0.0
    %5257 = vmatpush2.msra.mxu0 0.0
    %5258 = vmatprep.subr.mxu0 0.0
    %5259 = vmatpush2.msra.mxu0 0.0
    %5260 = vmatprep.subr.mxu0 0.0
    %5261 = vmatpush2.msra.mxu0 0.0
    %5262 = vmatprep.subr.mxu0 0.0
    %5263 = vmatpush2.msra.mxu0 0.0
    %5264 = vmatprep.subr.mxu0 0.0
    %5265 = vmatpush2.msra.mxu0 0.0
    %5266 = vmatprep.subr.mxu0 0.0
    %5267 = vmatpush2.msra.mxu0 0.0
    %5268 = vmatprep.subr.mxu0 0.0
    %5269 = vmatpush2.msra.mxu0 0.0
    %5270 = vmatprep.subr.mxu0 0.0
    %5271 = vmatpush2.msra.mxu0 0.0
    %5272 = vmatprep.subr.mxu0 0.0
    %5273 = vmatpush2.msra.mxu0 0.0
    %5274 = vmatprep.subr.mxu0 0.0
    %5275 = vmatpush2.msra.mxu0 0.0
    %5276 = vmatprep.mubr.f32.mxu0 0.0
    %5277 = vmatmul.mubr.f32.gmra.mxu0 %v5021
    %v5278 = vpop.f32.mrf.mxu0
    %v5279 = vadd.f32 %v5017, %v5278
    %v5280 = vpop.f32.mrf.mxu0
    %5281 = vmatprep.mubr.f32.mxu0 0.0
    %5282 = vmatmul.mubr.f32.gmra.mxu0 %v5024
    %v5283 = vpop.f32.mrf.mxu0
    %v5284 = vadd.f32 %v5017, %v5283
    %v5285 = vpop.f32.mrf.mxu0
    %5286 = vmatprep.mubr.f32.mxu0 0.0
    %5287 = vmatmul.mubr.f32.gmra.mxu0 %v5027
    %v5288 = vpop.f32.mrf.mxu0
    %v5289 = vadd.f32 %v5017, %v5288
    %v5290 = vpop.f32.mrf.mxu0
    %5291 = vmatprep.mubr.f32.mxu0 0.0
    %5292 = vmatmul.mubr.f32.gmra.mxu0 %v5030
    %v5293 = vpop.f32.mrf.mxu0
    %v5294 = vadd.f32 %v5017, %v5293
    %v5295 = vpop.f32.mrf.mxu0
    %5296 = vmatprep.mubr.f32.mxu0 0.0
    %5297 = vmatmul.mubr.f32.gmra.mxu0 %v5033
    %v5298 = vpop.f32.mrf.mxu0
    %v5299 = vadd.f32 %v5017, %v5298
    %v5300 = vpop.f32.mrf.mxu0
    %5301 = vmatprep.mubr.f32.mxu0 0.0
    %5302 = vmatmul.mubr.f32.gmra.mxu0 %v5036
    %v5303 = vpop.f32.mrf.mxu0
    %v5304 = vadd.f32 %v5017, %v5303
    %v5305 = vpop.f32.mrf.mxu0
    %5306 = vmatprep.mubr.f32.mxu0 0.0
    %5307 = vmatmul.mubr.f32.gmra.mxu0 %v5039
    %v5308 = vpop.f32.mrf.mxu0
    %v5309 = vadd.f32 %v5017, %v5308
    %v5310 = vpop.f32.mrf.mxu0
    %5311 = vmatprep.mubr.f32.mxu0 0.0
    %5312 = vmatmul.mubr.f32.gmra.mxu0 %v5042
    %v5313 = vpop.f32.mrf.mxu0
    %v5314 = vadd.f32 %v5017, %v5313
    %v5315 = vpop.f32.mrf.mxu0
    %5316 = vmatprep.mubr.f32.mxu0 0.0
    %5317 = vmatmul.mubr.f32.gmra.mxu0 %v5045
    %v5318 = vpop.f32.mrf.mxu0
    %v5319 = vadd.f32 %v5017, %v5318
    %v5320 = vpop.f32.mrf.mxu0
    %5321 = vmatprep.mubr.f32.mxu0 0.0
    %5322 = vmatmul.mubr.f32.gmra.mxu0 %v5048
    %v5323 = vpop.f32.mrf.mxu0
    %v5324 = vadd.f32 %v5017, %v5323
    %v5325 = vpop.f32.mrf.mxu0
    %5326 = vmatprep.mubr.f32.mxu0 0.0
    %5327 = vmatmul.mubr.f32.gmra.mxu0 %v5051
    %v5328 = vpop.f32.mrf.mxu0
    %v5329 = vadd.f32 %v5017, %v5328
    %v5330 = vpop.f32.mrf.mxu0
    %5331 = vmatprep.mubr.f32.mxu0 0.0
    %5332 = vmatmul.mubr.f32.gmra.mxu0 %v5054
    %v5333 = vpop.f32.mrf.mxu0
    %v5334 = vadd.f32 %v5017, %v5333
    %v5335 = vpop.f32.mrf.mxu0
    %5336 = vmatprep.mubr.f32.mxu0 0.0
    %5337 = vmatmul.mubr.f32.gmra.mxu0 %v5057
    %v5338 = vpop.f32.mrf.mxu0
    %v5339 = vadd.f32 %v5017, %v5338
    %v5340 = vpop.f32.mrf.mxu0
    %5341 = vmatprep.mubr.f32.mxu0 0.0
    %5342 = vmatmul.mubr.f32.gmra.mxu0 %v5060
    %v5343 = vpop.f32.mrf.mxu0
    %v5344 = vadd.f32 %v5017, %v5343
    %v5345 = vpop.f32.mrf.mxu0
    %5346 = vmatprep.mubr.f32.mxu0 0.0
    %5347 = vmatmul.mubr.f32.gmra.mxu0 %v5063
    %v5348 = vpop.f32.mrf.mxu0
    %v5349 = vadd.f32 %v5017, %v5348
    %v5350 = vpop.f32.mrf.mxu0
    %5351 = vmatprep.mubr.f32.mxu0 0.0
    %5352 = vmatmul.mubr.f32.gmra.mxu0 %v5066
    %v5353 = vpop.f32.mrf.mxu0
    %v5354 = vadd.f32 %v5017, %v5353
    %v5355 = vpop.f32.mrf.mxu0
    %5356 = vmatprep.mubr.f32.mxu0 0.0
    %5357 = vmatmul.mubr.f32.gmra.mxu0 %v5069
    %v5358 = vpop.f32.mrf.mxu0
    %v5359 = vadd.f32 %v5017, %v5358
    %v5360 = vpop.f32.mrf.mxu0
    %5361 = vmatprep.mubr.f32.mxu0 0.0
    %5362 = vmatmul.mubr.f32.gmra.mxu0 %v5072
    %v5363 = vpop.f32.mrf.mxu0
    %v5364 = vadd.f32 %v5017, %v5363
    %v5365 = vpop.f32.mrf.mxu0
    %5366 = vmatprep.mubr.f32.mxu0 0.0
    %5367 = vmatmul.mubr.f32.gmra.mxu0 %v5075
    %v5368 = vpop.f32.mrf.mxu0
    %v5369 = vadd.f32 %v5017, %v5368
    %v5370 = vpop.f32.mrf.mxu0
    %5371 = vmatprep.mubr.f32.mxu0 0.0
    %5372 = vmatmul.mubr.f32.gmra.mxu0 %v5078
    %v5373 = vpop.f32.mrf.mxu0
    %v5374 = vadd.f32 %v5017, %v5373
    %v5375 = vpop.f32.mrf.mxu0
    %5376 = vmatprep.mubr.f32.mxu0 0.0
    %5377 = vmatmul.mubr.f32.gmra.mxu0 %v5081
    %v5378 = vpop.f32.mrf.mxu0
    %v5379 = vadd.f32 %v5017, %v5378
    %v5380 = vpop.f32.mrf.mxu0
    %5381 = vmatprep.mubr.f32.mxu0 0.0
    %5382 = vmatmul.mubr.f32.gmra.mxu0 %v5084
    %v5383 = vpop.f32.mrf.mxu0
    %v5384 = vadd.f32 %v5017, %v5383
    %v5385 = vpop.f32.mrf.mxu0
    %5386 = vmatprep.mubr.f32.mxu0 0.0
    %5387 = vmatmul.mubr.f32.gmra.mxu0 %v5087
    %v5388 = vpop.f32.mrf.mxu0
    %v5389 = vadd.f32 %v5017, %v5388
    %v5390 = vpop.f32.mrf.mxu0
    %5391 = vmatprep.mubr.f32.mxu0 0.0
    %5392 = vmatmul.mubr.f32.gmra.mxu0 %v5090
    %v5393 = vpop.f32.mrf.mxu0
    %v5394 = vadd.f32 %v5017, %v5393
    %v5395 = vpop.f32.mrf.mxu0
    %5396 = vmatprep.mubr.f32.mxu0 0.0
    %5397 = vmatmul.mubr.f32.gmra.mxu0 %v5093
    %v5398 = vpop.f32.mrf.mxu0
    %v5399 = vadd.f32 %v5017, %v5398
    %v5400 = vpop.f32.mrf.mxu0
    %5401 = vmatprep.mubr.f32.mxu0 0.0
    %5402 = vmatmul.mubr.f32.gmra.mxu0 %v5096
    %v5403 = vpop.f32.mrf.mxu0
    %v5404 = vadd.f32 %v5017, %v5403
    %v5405 = vpop.f32.mrf.mxu0
    %5406 = vmatprep.mubr.f32.mxu0 0.0
    %5407 = vmatmul.mubr.f32.gmra.mxu0 %v5099
    %v5408 = vpop.f32.mrf.mxu0
    %v5409 = vadd.f32 %v5017, %v5408
    %v5410 = vpop.f32.mrf.mxu0
    %5411 = vmatprep.mubr.f32.mxu0 0.0
    %5412 = vmatmul.mubr.f32.gmra.mxu0 %v5102
    %v5413 = vpop.f32.mrf.mxu0
    %v5414 = vadd.f32 %v5017, %v5413
    %v5415 = vpop.f32.mrf.mxu0
    %5416 = vmatprep.mubr.f32.mxu0 0.0
    %5417 = vmatmul.mubr.f32.gmra.mxu0 %v5105
    %v5418 = vpop.f32.mrf.mxu0
    %v5419 = vadd.f32 %v5017, %v5418
    %v5420 = vpop.f32.mrf.mxu0
    %5421 = vmatprep.mubr.f32.mxu0 0.0
    %5422 = vmatmul.mubr.f32.gmra.mxu0 %v5108
    %v5423 = vpop.f32.mrf.mxu0
    %v5424 = vadd.f32 %v5017, %v5423
    %v5425 = vpop.f32.mrf.mxu0
    %5426 = vmatprep.mubr.f32.mxu0 0.0
    %5427 = vmatmul.mubr.f32.gmra.mxu0 %v5111
    %v5428 = vpop.f32.mrf.mxu0
    %v5429 = vadd.f32 %v5017, %v5428
    %v5430 = vpop.f32.mrf.mxu0
    %5431 = vmatprep.mubr.f32.mxu0 0.0
    %5432 = vmatmul.mubr.f32.gmra.mxu0 %v5114
    %v5433 = vpop.f32.mrf.mxu0
    %v5434 = vadd.f32 %v5017, %v5433
    %v5435 = vpop.f32.mrf.mxu0
    %5436 = vmatprep.mubr.f32.mxu0 0.0
    %5437 = vmatmul.mubr.f32.gmra.mxu0 %v5117
    %v5438 = vpop.f32.mrf.mxu0
    %v5439 = vadd.f32 %v5017, %v5438
    %v5440 = vpop.f32.mrf.mxu0
    %5441 = vmatprep.mubr.f32.mxu0 0.0
    %5442 = vmatmul.mubr.f32.gmra.mxu0 %v5120
    %v5443 = vpop.f32.mrf.mxu0
    %v5444 = vadd.f32 %v5017, %v5443
    %v5445 = vpop.f32.mrf.mxu0
    %5446 = vmatprep.mubr.f32.mxu0 0.0
    %5447 = vmatmul.mubr.f32.gmra.mxu0 %v5123
    %v5448 = vpop.f32.mrf.mxu0
    %v5449 = vadd.f32 %v5017, %v5448
    %v5450 = vpop.f32.mrf.mxu0
    %5451 = vmatprep.mubr.f32.mxu0 0.0
    %5452 = vmatmul.mubr.f32.gmra.mxu0 %v5126
    %v5453 = vpop.f32.mrf.mxu0
    %v5454 = vadd.f32 %v5017, %v5453
    %v5455 = vpop.f32.mrf.mxu0
    %5456 = vmatprep.mubr.f32.mxu0 0.0
    %5457 = vmatmul.mubr.f32.gmra.mxu0 %v5129
    %v5458 = vpop.f32.mrf.mxu0
    %v5459 = vadd.f32 %v5017, %v5458
    %v5460 = vpop.f32.mrf.mxu0
    %5461 = vmatprep.mubr.f32.mxu0 0.0
    %5462 = vmatmul.mubr.f32.gmra.mxu0 %v5132
    %v5463 = vpop.f32.mrf.mxu0
    %v5464 = vadd.f32 %v5017, %v5463
    %v5465 = vpop.f32.mrf.mxu0
    %5466 = vmatprep.mubr.f32.mxu0 0.0
    %5467 = vmatmul.mubr.f32.gmra.mxu0 %v5135
    %v5468 = vpop.f32.mrf.mxu0
    %v5469 = vadd.f32 %v5017, %v5468
    %v5470 = vpop.f32.mrf.mxu0
    %5471 = vmatprep.mubr.f32.mxu0 0.0
    %5472 = vmatmul.mubr.f32.gmra.mxu0 %v5138
    %v5473 = vpop.f32.mrf.mxu0
    %v5474 = vadd.f32 %v5017, %v5473
    %v5475 = vpop.f32.mrf.mxu0
    %5476 = vmatprep.mubr.f32.mxu0 0.0
    %5477 = vmatmul.mubr.f32.gmra.mxu0 %v5141
    %v5478 = vpop.f32.mrf.mxu0
    %v5479 = vadd.f32 %v5017, %v5478
    %v5480 = vpop.f32.mrf.mxu0
    %5481 = vmatprep.mubr.f32.mxu0 0.0
    %5482 = vmatmul.mubr.f32.gmra.mxu0 %v5144
    %v5483 = vpop.f32.mrf.mxu0
    %v5484 = vadd.f32 %v5017, %v5483
    %v5485 = vpop.f32.mrf.mxu0
    %5486 = vmatprep.mubr.f32.mxu0 0.0
    %5487 = vmatmul.mubr.f32.gmra.mxu0 %v5147
    %v5488 = vpop.f32.mrf.mxu0
    %v5489 = vadd.f32 %v5017, %v5488
    %v5490 = vpop.f32.mrf.mxu0
    %5491 = vmatprep.mubr.f32.mxu0 0.0
    %5492 = vmatmul.mubr.f32.gmra.mxu0 %v5150
    %v5493 = vpop.f32.mrf.mxu0
    %v5494 = vadd.f32 %v5017, %v5493
    %v5495 = vpop.f32.mrf.mxu0
    %5496 = vmatprep.mubr.f32.mxu0 0.0
    %5497 = vmatmul.mubr.f32.gmra.mxu0 %v5153
    %v5498 = vpop.f32.mrf.mxu0
    %v5499 = vadd.f32 %v5017, %v5498
    %v5500 = vpop.f32.mrf.mxu0
    %5501 = vmatprep.mubr.f32.mxu0 0.0
    %5502 = vmatmul.mubr.f32.gmra.mxu0 %v5156
    %v5503 = vpop.f32.mrf.mxu0
    %v5504 = vadd.f32 %v5017, %v5503
    %v5505 = vpop.f32.mrf.mxu0
    %5506 = vmatprep.mubr.f32.mxu0 0.0
    %5507 = vmatmul.mubr.f32.gmra.mxu0 %v5159
    %v5508 = vpop.f32.mrf.mxu0
    %v5509 = vadd.f32 %v5017, %v5508
    %v5510 = vpop.f32.mrf.mxu0
    %5511 = vmatprep.mubr.f32.mxu0 0.0
    %5512 = vmatmul.mubr.f32.gmra.mxu0 %v5162
    %v5513 = vpop.f32.mrf.mxu0
    %v5514 = vadd.f32 %v5017, %v5513
    %v5515 = vpop.f32.mrf.mxu0
    %5516 = vmatprep.mubr.f32.mxu0 0.0
    %5517 = vmatmul.mubr.f32.gmra.mxu0 %v5165
    %v5518 = vpop.f32.mrf.mxu0
    %v5519 = vadd.f32 %v5017, %v5518
    %v5520 = vpop.f32.mrf.mxu0
    %5521 = vmatprep.mubr.f32.mxu0 0.0
    %5522 = vmatmul.mubr.f32.gmra.mxu0 %v5168
    %v5523 = vpop.f32.mrf.mxu0
    %v5524 = vadd.f32 %v5017, %v5523
    %v5525 = vpop.f32.mrf.mxu0
    %5526 = vmatprep.mubr.f32.mxu0 0.0
    %5527 = vmatmul.mubr.f32.gmra.mxu0 %v5171
    %v5528 = vpop.f32.mrf.mxu0
    %v5529 = vadd.f32 %v5017, %v5528
    %v5530 = vpop.f32.mrf.mxu0
    %5531 = vmatprep.mubr.f32.mxu0 0.0
    %5532 = vmatmul.mubr.f32.gmra.mxu0 %v5174
    %v5533 = vpop.f32.mrf.mxu0
    %v5534 = vadd.f32 %v5017, %v5533
    %v5535 = vpop.f32.mrf.mxu0
    %5536 = vmatprep.mubr.f32.mxu0 0.0
    %5537 = vmatmul.mubr.f32.gmra.mxu0 %v5177
    %v5538 = vpop.f32.mrf.mxu0
    %v5539 = vadd.f32 %v5017, %v5538
    %v5540 = vpop.f32.mrf.mxu0
    %5541 = vmatprep.mubr.f32.mxu0 0.0
    %5542 = vmatmul.mubr.f32.gmra.mxu0 %v5180
    %v5543 = vpop.f32.mrf.mxu0
    %v5544 = vadd.f32 %v5017, %v5543
    %v5545 = vpop.f32.mrf.mxu0
    %5546 = vmatprep.mubr.f32.mxu0 0.0
    %5547 = vmatmul.mubr.f32.gmra.mxu0 %v5183
    %v5548 = vpop.f32.mrf.mxu0
    %v5549 = vadd.f32 %v5017, %v5548
    %v5550 = vpop.f32.mrf.mxu0
    %5551 = vmatprep.mubr.f32.mxu0 0.0
    %5552 = vmatmul.mubr.f32.gmra.mxu0 %v5186
    %v5553 = vpop.f32.mrf.mxu0
    %v5554 = vadd.f32 %v5017, %v5553
    %v5555 = vpop.f32.mrf.mxu0
    %5556 = vmatprep.mubr.f32.mxu0 0.0
    %5557 = vmatmul.mubr.f32.gmra.mxu0 %v5189
    %v5558 = vpop.f32.mrf.mxu0
    %v5559 = vadd.f32 %v5017, %v5558
    %v5560 = vpop.f32.mrf.mxu0
    %5561 = vmatprep.mubr.f32.mxu0 0.0
    %5562 = vmatmul.mubr.f32.gmra.mxu0 %v5192
    %v5563 = vpop.f32.mrf.mxu0
    %v5564 = vadd.f32 %v5017, %v5563
    %v5565 = vpop.f32.mrf.mxu0
    %5566 = vmatprep.mubr.f32.mxu0 0.0
    %5567 = vmatmul.mubr.f32.gmra.mxu0 %v5195
    %v5568 = vpop.f32.mrf.mxu0
    %v5569 = vadd.f32 %v5017, %v5568
    %v5570 = vpop.f32.mrf.mxu0
    %5571 = vmatprep.mubr.f32.mxu0 0.0
    %5572 = vmatmul.mubr.f32.gmra.mxu0 %v5198
    %v5573 = vpop.f32.mrf.mxu0
    %v5574 = vadd.f32 %v5017, %v5573
    %v5575 = vpop.f32.mrf.mxu0
    %5576 = vmatprep.mubr.f32.mxu0 0.0
    %5577 = vmatmul.mubr.f32.gmra.mxu0 %v5201
    %v5578 = vpop.f32.mrf.mxu0
    %v5579 = vadd.f32 %v5017, %v5578
    %v5580 = vpop.f32.mrf.mxu0
    %5581 = vmatprep.mubr.f32.mxu0 0.0
    %5582 = vmatmul.mubr.f32.gmra.mxu0 %v5204
    %v5583 = vpop.f32.mrf.mxu0
    %v5584 = vadd.f32 %v5017, %v5583
    %v5585 = vpop.f32.mrf.mxu0
    %5586 = vmatprep.mubr.f32.mxu0 0.0
    %5587 = vmatmul.mubr.f32.gmra.mxu0 %v5207
    %v5588 = vpop.f32.mrf.mxu0
    %v5589 = vadd.f32 %v5017, %v5588
    %v5590 = vpop.f32.mrf.mxu0
    %5591 = vmatprep.mubr.f32.mxu0 0.0
    %5592 = vmatmul.mubr.f32.gmra.mxu0 %v5210
    %v5593 = vpop.f32.mrf.mxu0
    %v5594 = vadd.f32 %v5017, %v5593
    %v5595 = vpop.f32.mrf.mxu0
    %5596 = vdwg.mxu0
    %v5597 = vmax.f32 %v5279, 0.0
    %v5598 = vmax.f32 %v5284, 0.0
    %v5599 = vmax.f32 %v5289, 0.0
    %v5600 = vmax.f32 %v5294, 0.0
    %v5601 = vmax.f32 %v5299, 0.0
    %v5602 = vmax.f32 %v5304, 0.0
    %v5603 = vmax.f32 %v5309, 0.0
    %v5604 = vmax.f32 %v5314, 0.0
    %v5605 = vmax.f32 %v5319, 0.0
    %v5606 = vmax.f32 %v5324, 0.0
    %v5607 = vmax.f32 %v5329, 0.0
    %v5608 = vmax.f32 %v5334, 0.0
    %v5609 = vmax.f32 %v5339, 0.0
    %v5610 = vmax.f32 %v5344, 0.0
    %v5611 = vmax.f32 %v5349, 0.0
    %v5612 = vmax.f32 %v5354, 0.0
    %v5613 = vmax.f32 %v5359, 0.0
    %v5614 = vmax.f32 %v5364, 0.0
    %v5615 = vmax.f32 %v5369, 0.0
    %v5616 = vmax.f32 %v5374, 0.0
    %v5617 = vmax.f32 %v5379, 0.0
    %v5618 = vmax.f32 %v5384, 0.0
    %v5619 = vmax.f32 %v5389, 0.0
    %v5620 = vmax.f32 %v5394, 0.0
    %v5621 = vmax.f32 %v5399, 0.0
    %v5622 = vmax.f32 %v5404, 0.0
    %v5623 = vmax.f32 %v5409, 0.0
    %v5624 = vmax.f32 %v5414, 0.0
    %v5625 = vmax.f32 %v5419, 0.0
    %v5626 = vmax.f32 %v5424, 0.0
    %v5627 = vmax.f32 %v5429, 0.0
    %v5628 = vmax.f32 %v5434, 0.0
    %v5629 = vmax.f32 %v5439, 0.0
    %v5630 = vmax.f32 %v5444, 0.0
    %v5631 = vmax.f32 %v5449, 0.0
    %v5632 = vmax.f32 %v5454, 0.0
    %v5633 = vmax.f32 %v5459, 0.0
    %v5634 = vmax.f32 %v5464, 0.0
    %v5635 = vmax.f32 %v5469, 0.0
    %v5636 = vmax.f32 %v5474, 0.0
    %v5637 = vmax.f32 %v5479, 0.0
    %v5638 = vmax.f32 %v5484, 0.0
    %v5639 = vmax.f32 %v5489, 0.0
    %v5640 = vmax.f32 %v5494, 0.0
    %v5641 = vmax.f32 %v5499, 0.0
    %v5642 = vmax.f32 %v5504, 0.0
    %v5643 = vmax.f32 %v5509, 0.0
    %v5644 = vmax.f32 %v5514, 0.0
    %v5645 = vmax.f32 %v5519, 0.0
    %v5646 = vmax.f32 %v5524, 0.0
    %v5647 = vmax.f32 %v5529, 0.0
    %v5648 = vmax.f32 %v5534, 0.0
    %v5649 = vmax.f32 %v5539, 0.0
    %v5650 = vmax.f32 %v5544, 0.0
    %v5651 = vmax.f32 %v5549, 0.0
    %v5652 = vmax.f32 %v5554, 0.0
    %v5653 = vmax.f32 %v5559, 0.0
    %v5654 = vmax.f32 %v5564, 0.0
    %v5655 = vmax.f32 %v5569, 0.0
    %v5656 = vmax.f32 %v5574, 0.0
    %v5657 = vmax.f32 %v5579, 0.0
    %v5658 = vmax.f32 %v5584, 0.0
    %v5659 = vmax.f32 %v5589, 0.0
    %v5660 = vmax.f32 %v5594, 0.0
    %v5661 = vadd.f32 %v5597, %v5613
    %v5662 = vadd.f32 %v5598, %v5614
    %v5663 = vadd.f32 %v5599, %v5615
    %v5664 = vadd.f32 %v5600, %v5616
    %v5665 = vadd.f32 %v5601, %v5617
    %v5666 = vadd.f32 %v5602, %v5618
    %v5667 = vadd.f32 %v5603, %v5619
    %v5668 = vadd.f32 %v5604, %v5620
    %v5669 = vadd.f32 %v5605, %v5621
    %v5670 = vadd.f32 %v5606, %v5622
    %v5671 = vadd.f32 %v5607, %v5623
    %v5672 = vadd.f32 %v5608, %v5624
    %v5673 = vadd.f32 %v5609, %v5625
    %v5674 = vadd.f32 %v5610, %v5626
    %v5675 = vadd.f32 %v5611, %v5627
    %v5676 = vadd.f32 %v5612, %v5628
    %v5677 = vadd.f32 %v5661, %v5629
    %v5678 = vadd.f32 %v5662, %v5630
    %v5679 = vadd.f32 %v5663, %v5631
    %v5680 = vadd.f32 %v5664, %v5632
    %v5681 = vadd.f32 %v5665, %v5633
    %v5682 = vadd.f32 %v5666, %v5634
    %v5683 = vadd.f32 %v5667, %v5635
    %v5684 = vadd.f32 %v5668, %v5636
    %v5685 = vadd.f32 %v5669, %v5637
    %v5686 = vadd.f32 %v5670, %v5638
    %v5687 = vadd.f32 %v5671, %v5639
    %v5688 = vadd.f32 %v5672, %v5640
    %v5689 = vadd.f32 %v5673, %v5641
    %v5690 = vadd.f32 %v5674, %v5642
    %v5691 = vadd.f32 %v5675, %v5643
    %v5692 = vadd.f32 %v5676, %v5644
    %v5693 = vadd.f32 %v5677, %v5645
    %v5694 = vadd.f32 %v5678, %v5646
    %v5695 = vadd.f32 %v5679, %v5647
    %v5696 = vadd.f32 %v5680, %v5648
    %v5697 = vadd.f32 %v5681, %v5649
    %v5698 = vadd.f32 %v5682, %v5650
    %v5699 = vadd.f32 %v5683, %v5651
    %v5700 = vadd.f32 %v5684, %v5652
    %v5701 = vadd.f32 %v5685, %v5653
    %v5702 = vadd.f32 %v5686, %v5654
    %v5703 = vadd.f32 %v5687, %v5655
    %v5704 = vadd.f32 %v5688, %v5656
    %v5705 = vadd.f32 %v5689, %v5657
    %v5706 = vadd.f32 %v5690, %v5658
    %v5707 = vadd.f32 %v5691, %v5659
    %v5708 = vadd.f32 %v5692, %v5660
    %v5709 = vmul.f32 %v5693, 0.25
    %v5710 = vmul.f32 %v5694, 0.25
    %v5711 = vmul.f32 %v5695, 0.25
    %v5712 = vmul.f32 %v5696, 0.25
    %v5713 = vmul.f32 %v5697, 0.25
    %v5714 = vmul.f32 %v5698, 0.25
    %v5715 = vmul.f32 %v5699, 0.25
    %v5716 = vmul.f32 %v5700, 0.25
    %v5717 = vmul.f32 %v5701, 0.25
    %v5718 = vmul.f32 %v5702, 0.25
    %v5719 = vmul.f32 %v5703, 0.25
    %v5720 = vmul.f32 %v5704, 0.25
    %v5721 = vmul.f32 %v5705, 0.25
    %v5722 = vmul.f32 %v5706, 0.25
    %v5723 = vmul.f32 %v5707, 0.25
    %v5724 = vmul.f32 %v5708, 0.25
    %v5726 = vlaneseq
    %v5727 = vshrl.u32 %v5726, 7
    %v5728 = vsub.s32 0, %v5727
    %v5729 = vrot.slane %v171, %v5728
    %5731 = vmatprep.subr.mxu0 0.0
    %5732 = vmatpush1.msra.mxu0 0.0
    %5733 = vmatprep.subr.mxu0 0.0
    %5734 = vmatpush1.msra.mxu0 0.0
    %5735 = vmatprep.subr.mxu0 0.0
    %5736 = vmatpush1.msra.mxu0 0.0
    %5737 = vmatprep.subr.mxu0 0.0
    %5738 = vmatpush1.msra.mxu0 0.0
    %5739 = vmatprep.subr.mxu0 0.0
    %5740 = vmatpush1.msra.mxu0 0.0
    %5741 = vmatprep.subr.mxu0 0.0
    %5742 = vmatpush1.msra.mxu0 0.0
    %5743 = vmatprep.subr.mxu0 0.0
    %5744 = vmatpush1.msra.mxu0 0.0
    %5745 = vmatprep.subr.mxu0 0.0
    %5746 = vmatpush1.msra.mxu0 0.0
    %5747 = vmatprep.subr.mxu0 0.0
    %5748 = vmatpush1.msra.mxu0 0.0
    %5749 = vmatprep.subr.mxu0 0.0
    %5750 = vmatpush1.msra.mxu0 0.0
    %5751 = vmatprep.subr.mxu0 0.0
    %5752 = vmatpush1.msra.mxu0 0.0
    %5753 = vmatprep.subr.mxu0 0.0
    %5754 = vmatpush1.msra.mxu0 0.0
    %5755 = vmatprep.subr.mxu0 0.0
    %5756 = vmatpush1.msra.mxu0 0.0
    %5757 = vmatprep.subr.mxu0 0.0
    %5758 = vmatpush1.msra.mxu0 0.0
    %5759 = vmatprep.subr.mxu0 0.0
    %5760 = vmatpush1.msra.mxu0 0.0
    %5761 = vmatprep.subr.mxu0 0.0
    %5762 = vmatpush1.msra.mxu0 %v170
    %5763 = vmatprep.subr.mxu0 0.0
    %5764 = vmatpush2.msra.mxu0 0.0
    %5765 = vmatprep.subr.mxu0 0.0
    %5766 = vmatpush2.msra.mxu0 0.0
    %5767 = vmatprep.subr.mxu0 0.0
    %5768 = vmatpush2.msra.mxu0 0.0
    %5769 = vmatprep.subr.mxu0 0.0
    %5770 = vmatpush2.msra.mxu0 0.0
    %5771 = vmatprep.subr.mxu0 0.0
    %5772 = vmatpush2.msra.mxu0 0.0
    %5773 = vmatprep.subr.mxu0 0.0
    %5774 = vmatpush2.msra.mxu0 0.0
    %5775 = vmatprep.subr.mxu0 0.0
    %5776 = vmatpush2.msra.mxu0 0.0
    %5777 = vmatprep.subr.mxu0 0.0
    %5778 = vmatpush2.msra.mxu0 0.0
    %5779 = vmatprep.subr.mxu0 0.0
    %5780 = vmatpush2.msra.mxu0 0.0
    %5781 = vmatprep.subr.mxu0 0.0
    %5782 = vmatpush2.msra.mxu0 0.0
    %5783 = vmatprep.subr.mxu0 0.0
    %5784 = vmatpush2.msra.mxu0 0.0
    %5785 = vmatprep.subr.mxu0 0.0
    %5786 = vmatpush2.msra.mxu0 0.0
    %5787 = vmatprep.subr.mxu0 0.0
    %5788 = vmatpush2.msra.mxu0 0.0
    %5789 = vmatprep.subr.mxu0 0.0
    %5790 = vmatpush2.msra.mxu0 0.0
    %5791 = vmatprep.subr.mxu0 0.0
    %5792 = vmatpush2.msra.mxu0 0.0
    %5793 = vmatprep.subr.mxu0 0.0
    %5794 = vmatpush2.msra.mxu0 0.0
    %5795 = vmatprep.mubr.f32.mxu0 0.0
    %5796 = vmatmul.mubr.f32.gmra.mxu0 %v3110
    %v5797 = vpop.f32.mrf.mxu0
    %v5798 = vadd.f32 %v5729, %v5797
    %v5799 = vpop.f32.mrf.mxu0
    %5800 = vmatprep.mubr.f32.mxu0 0.0
    %5801 = vmatmul.mubr.f32.gmra.mxu0 %v3113
    %v5802 = vpop.f32.mrf.mxu0
    %v5803 = vadd.f32 %v5729, %v5802
    %v5804 = vpop.f32.mrf.mxu0
    %5805 = vmatprep.mubr.f32.mxu0 0.0
    %5806 = vmatmul.mubr.f32.gmra.mxu0 %v3116
    %v5807 = vpop.f32.mrf.mxu0
    %v5808 = vadd.f32 %v5729, %v5807
    %v5809 = vpop.f32.mrf.mxu0
    %5810 = vmatprep.mubr.f32.mxu0 0.0
    %5811 = vmatmul.mubr.f32.gmra.mxu0 %v3119
    %v5812 = vpop.f32.mrf.mxu0
    %v5813 = vadd.f32 %v5729, %v5812
    %v5814 = vpop.f32.mrf.mxu0
    %5815 = vmatprep.mubr.f32.mxu0 0.0
    %5816 = vmatmul.mubr.f32.gmra.mxu0 %v3122
    %v5817 = vpop.f32.mrf.mxu0
    %v5818 = vadd.f32 %v5729, %v5817
    %v5819 = vpop.f32.mrf.mxu0
    %5820 = vmatprep.mubr.f32.mxu0 0.0
    %5821 = vmatmul.mubr.f32.gmra.mxu0 %v3125
    %v5822 = vpop.f32.mrf.mxu0
    %v5823 = vadd.f32 %v5729, %v5822
    %v5824 = vpop.f32.mrf.mxu0
    %5825 = vmatprep.mubr.f32.mxu0 0.0
    %5826 = vmatmul.mubr.f32.gmra.mxu0 %v3128
    %v5827 = vpop.f32.mrf.mxu0
    %v5828 = vadd.f32 %v5729, %v5827
    %v5829 = vpop.f32.mrf.mxu0
    %5830 = vmatprep.mubr.f32.mxu0 0.0
    %5831 = vmatmul.mubr.f32.gmra.mxu0 %v3131
    %v5832 = vpop.f32.mrf.mxu0
    %v5833 = vadd.f32 %v5729, %v5832
    %v5834 = vpop.f32.mrf.mxu0
    %5835 = vmatprep.mubr.f32.mxu0 0.0
    %5836 = vmatmul.mubr.f32.gmra.mxu0 %v3134
    %v5837 = vpop.f32.mrf.mxu0
    %v5838 = vadd.f32 %v5729, %v5837
    %v5839 = vpop.f32.mrf.mxu0
    %5840 = vmatprep.mubr.f32.mxu0 0.0
    %5841 = vmatmul.mubr.f32.gmra.mxu0 %v3137
    %v5842 = vpop.f32.mrf.mxu0
    %v5843 = vadd.f32 %v5729, %v5842
    %v5844 = vpop.f32.mrf.mxu0
    %5845 = vmatprep.mubr.f32.mxu0 0.0
    %5846 = vmatmul.mubr.f32.gmra.mxu0 %v3140
    %v5847 = vpop.f32.mrf.mxu0
    %v5848 = vadd.f32 %v5729, %v5847
    %v5849 = vpop.f32.mrf.mxu0
    %5850 = vmatprep.mubr.f32.mxu0 0.0
    %5851 = vmatmul.mubr.f32.gmra.mxu0 %v3143
    %v5852 = vpop.f32.mrf.mxu0
    %v5853 = vadd.f32 %v5729, %v5852
    %v5854 = vpop.f32.mrf.mxu0
    %5855 = vmatprep.mubr.f32.mxu0 0.0
    %5856 = vmatmul.mubr.f32.gmra.mxu0 %v3146
    %v5857 = vpop.f32.mrf.mxu0
    %v5858 = vadd.f32 %v5729, %v5857
    %v5859 = vpop.f32.mrf.mxu0
    %5860 = vmatprep.mubr.f32.mxu0 0.0
    %5861 = vmatmul.mubr.f32.gmra.mxu0 %v3149
    %v5862 = vpop.f32.mrf.mxu0
    %v5863 = vadd.f32 %v5729, %v5862
    %v5864 = vpop.f32.mrf.mxu0
    %5865 = vmatprep.mubr.f32.mxu0 0.0
    %5866 = vmatmul.mubr.f32.gmra.mxu0 %v3152
    %v5867 = vpop.f32.mrf.mxu0
    %v5868 = vadd.f32 %v5729, %v5867
    %v5869 = vpop.f32.mrf.mxu0
    %5870 = vmatprep.mubr.f32.mxu0 0.0
    %5871 = vmatmul.mubr.f32.gmra.mxu0 %v3155
    %v5872 = vpop.f32.mrf.mxu0
    %v5873 = vadd.f32 %v5729, %v5872
    %v5874 = vpop.f32.mrf.mxu0
    %5875 = vdwg.mxu0
    %v5876 = vadd.f32 %v5709, %v5798
    %v5877 = vadd.f32 %v5710, %v5803
    %v5878 = vadd.f32 %v5711, %v5808
    %v5879 = vadd.f32 %v5712, %v5813
    %v5880 = vadd.f32 %v5713, %v5818
    %v5881 = vadd.f32 %v5714, %v5823
    %v5882 = vadd.f32 %v5715, %v5828
    %v5883 = vadd.f32 %v5716, %v5833
    %v5884 = vadd.f32 %v5717, %v5838
    %v5885 = vadd.f32 %v5718, %v5843
    %v5886 = vadd.f32 %v5719, %v5848
    %v5887 = vadd.f32 %v5720, %v5853
    %v5888 = vadd.f32 %v5721, %v5858
    %v5889 = vadd.f32 %v5722, %v5863
    %v5890 = vadd.f32 %v5723, %v5868
    %v5891 = vadd.f32 %v5724, %v5873
    %v5892 = vmax.f32 %v5876, 0.0
    %v5893 = vmax.f32 %v5877, 0.0
    %v5894 = vmax.f32 %v5878, 0.0
    %v5895 = vmax.f32 %v5879, 0.0
    %v5896 = vmax.f32 %v5880, 0.0
    %v5897 = vmax.f32 %v5881, 0.0
    %v5898 = vmax.f32 %v5882, 0.0
    %v5899 = vmax.f32 %v5883, 0.0
    %v5900 = vmax.f32 %v5884, 0.0
    %v5901 = vmax.f32 %v5885, 0.0
    %v5902 = vmax.f32 %v5886, 0.0
    %v5903 = vmax.f32 %v5887, 0.0
    %v5904 = vmax.f32 %v5888, 0.0
    %v5905 = vmax.f32 %v5889, 0.0
    %v5906 = vmax.f32 %v5890, 0.0
    %v5907 = vmax.f32 %v5891, 0.0
    %v5908 = vsel %vm5019, %v5892, 0.0
    %v5909 = vsel %vm5019, %v5893, 0.0
    %v5910 = vadd.f32 %v5908, %v5909
    %v5911 = vrot.slane %v5910, 4
    %v5912 = vadd.f32 %v5910, %v5911
    %v5913 = vrot.slane %v5912, 2
    %v5914 = vadd.f32 %v5912, %v5913
    %v5915 = vrot.slane %v5914, 1
    %v5916 = vadd.f32 %v5914, %v5915
    %v5917 = vsel %vm5019, %v5894, 0.0
    %v5918 = vsel %vm5019, %v5895, 0.0
    %v5919 = vadd.f32 %v5917, %v5918
    %v5920 = vrot.slane %v5919, 4
    %v5921 = vadd.f32 %v5919, %v5920
    %v5922 = vrot.slane %v5921, 2
    %v5923 = vadd.f32 %v5921, %v5922
    %v5924 = vrot.slane %v5923, 1
    %v5925 = vadd.f32 %v5923, %v5924
    %v5926 = vsel %vm5019, %v5896, 0.0
    %v5927 = vsel %vm5019, %v5897, 0.0
    %v5928 = vadd.f32 %v5926, %v5927
    %v5929 = vrot.slane %v5928, 4
    %v5930 = vadd.f32 %v5928, %v5929
    %v5931 = vrot.slane %v5930, 2
    %v5932 = vadd.f32 %v5930, %v5931
    %v5933 = vrot.slane %v5932, 1
    %v5934 = vadd.f32 %v5932, %v5933
    %v5935 = vsel %vm5019, %v5898, 0.0
    %v5936 = vsel %vm5019, %v5899, 0.0
    %v5937 = vadd.f32 %v5935, %v5936
    %v5938 = vrot.slane %v5937, 4
    %v5939 = vadd.f32 %v5937, %v5938
    %v5940 = vrot.slane %v5939, 2
    %v5941 = vadd.f32 %v5939, %v5940
    %v5942 = vrot.slane %v5941, 1
    %v5943 = vadd.f32 %v5941, %v5942
    %v5944 = vsel %vm5019, %v5900, 0.0
    %v5945 = vsel %vm5019, %v5901, 0.0
    %v5946 = vadd.f32 %v5944, %v5945
    %v5947 = vrot.slane %v5946, 4
    %v5948 = vadd.f32 %v5946, %v5947
    %v5949 = vrot.slane %v5948, 2
    %v5950 = vadd.f32 %v5948, %v5949
    %v5951 = vrot.slane %v5950, 1
    %v5952 = vadd.f32 %v5950, %v5951
    %v5953 = vsel %vm5019, %v5902, 0.0
    %v5954 = vsel %vm5019, %v5903, 0.0
    %v5955 = vadd.f32 %v5953, %v5954
    %v5956 = vrot.slane %v5955, 4
    %v5957 = vadd.f32 %v5955, %v5956
    %v5958 = vrot.slane %v5957, 2
    %v5959 = vadd.f32 %v5957, %v5958
    %v5960 = vrot.slane %v5959, 1
    %v5961 = vadd.f32 %v5959, %v5960
    %v5962 = vsel %vm5019, %v5904, 0.0
    %v5963 = vsel %vm5019, %v5905, 0.0
    %v5964 = vadd.f32 %v5962, %v5963
    %v5965 = vrot.slane %v5964, 4
    %v5966 = vadd.f32 %v5964, %v5965
    %v5967 = vrot.slane %v5966, 2
    %v5968 = vadd.f32 %v5966, %v5967
    %v5969 = vrot.slane %v5968, 1
    %v5970 = vadd.f32 %v5968, %v5969
    %v5971 = vsel %vm5019, %v5906, 0.0
    %v5972 = vsel %vm5019, %v5907, 0.0
    %v5973 = vadd.f32 %v5971, %v5972
    %v5974 = vrot.slane %v5973, 4
    %v5975 = vadd.f32 %v5973, %v5974
    %v5976 = vrot.slane %v5975, 2
    %v5977 = vadd.f32 %v5975, %v5976
    %v5978 = vrot.slane %v5977, 1
    %v5979 = vadd.f32 %v5977, %v5978
    %v5980 = vmul.f32 %v5916, 0.0625
    %v5981 = vmul.f32 %v5925, 0.0625
    %v5982 = vmul.f32 %v5934, 0.0625
    %v5983 = vmul.f32 %v5943, 0.0625
    %v5984 = vmul.f32 %v5952, 0.0625
    %v5985 = vmul.f32 %v5961, 0.0625
    %v5986 = vmul.f32 %v5970, 0.0625
    %v5987 = vmul.f32 %v5979, 0.0625
    %v5989 = vlaneseq
    %v5990 = vshrl.u32 %v5989, 7
    %v5991 = vsub.s32 0, %v5990
    %v5992 = vrot.slane %v174, %v5991
    %vm6002 = vcmask 1041409
    %v6003 = vsel %vm6002, %v5981, %v5980
    %vm6004 = vcmask 1042434
    %v6005 = vsel %vm6004, %v5982, %v6003
    %vm6006 = vcmask 1043459
    %v6007 = vsel %vm6006, %v5983, %v6005
    %vm6008 = vcmask 1044484
    %v6009 = vsel %vm6008, %v5984, %v6007
    %vm6010 = vcmask 1045509
    %v6011 = vsel %vm6010, %v5985, %v6009
    %vm6012 = vcmask 1046534
    %v6013 = vsel %vm6012, %v5986, %v6011
    %vm6014 = vcmask 1047559
    %v6015 = vsel %vm6014, %v5987, %v6013
    %v6016 = vsel %vm5019, %v6015, 0
    %6018 = vmatprep.subr.mxu0 0.0
    %6019 = vmatpush1.msra.mxu0 0.0
    %6020 = vmatprep.subr.mxu0 0.0
    %6021 = vmatpush1.msra.mxu0 0.0
    %6022 = vmatprep.subr.mxu0 0.0
    %6023 = vmatpush1.msra.mxu0 0.0
    %6024 = vmatprep.subr.mxu0 0.0
    %6025 = vmatpush1.msra.mxu0 0.0
    %6026 = vmatprep.subr.mxu0 0.0
    %6027 = vmatpush1.msra.mxu0 0.0
    %6028 = vmatprep.subr.mxu0 0.0
    %6029 = vmatpush1.msra.mxu0 0.0
    %6030 = vmatprep.subr.mxu0 0.0
    %6031 = vmatpush1.msra.mxu0 0.0
    %6032 = vmatprep.subr.mxu0 0.0
    %6033 = vmatpush1.msra.mxu0 0.0
    %6034 = vmatprep.subr.mxu0 0.0
    %6035 = vmatpush1.msra.mxu0 0.0
    %6036 = vmatprep.subr.mxu0 0.0
    %6037 = vmatpush1.msra.mxu0 0.0
    %6038 = vmatprep.subr.mxu0 0.0
    %6039 = vmatpush1.msra.mxu0 0.0
    %6040 = vmatprep.subr.mxu0 0.0
    %6041 = vmatpush1.msra.mxu0 0.0
    %6042 = vmatprep.subr.mxu0 0.0
    %6043 = vmatpush1.msra.mxu0 0.0
    %6044 = vmatprep.subr.mxu0 0.0
    %6045 = vmatpush1.msra.mxu0 0.0
    %6046 = vmatprep.subr.mxu0 0.0
    %6047 = vmatpush1.msra.mxu0 %v173
    %6048 = vmatprep.subr.mxu0 0.0
    %6049 = vmatpush1.msra.mxu0 %v172
    %6050 = vmatprep.subr.mxu0 0.0
    %6051 = vmatpush2.msra.mxu0 0.0
    %6052 = vmatprep.subr.mxu0 0.0
    %6053 = vmatpush2.msra.mxu0 0.0
    %6054 = vmatprep.subr.mxu0 0.0
    %6055 = vmatpush2.msra.mxu0 0.0
    %6056 = vmatprep.subr.mxu0 0.0
    %6057 = vmatpush2.msra.mxu0 0.0
    %6058 = vmatprep.subr.mxu0 0.0
    %6059 = vmatpush2.msra.mxu0 0.0
    %6060 = vmatprep.subr.mxu0 0.0
    %6061 = vmatpush2.msra.mxu0 0.0
    %6062 = vmatprep.subr.mxu0 0.0
    %6063 = vmatpush2.msra.mxu0 0.0
    %6064 = vmatprep.subr.mxu0 0.0
    %6065 = vmatpush2.msra.mxu0 0.0
    %6066 = vmatprep.subr.mxu0 0.0
    %6067 = vmatpush2.msra.mxu0 0.0
    %6068 = vmatprep.subr.mxu0 0.0
    %6069 = vmatpush2.msra.mxu0 0.0
    %6070 = vmatprep.subr.mxu0 0.0
    %6071 = vmatpush2.msra.mxu0 0.0
    %6072 = vmatprep.subr.mxu0 0.0
    %6073 = vmatpush2.msra.mxu0 0.0
    %6074 = vmatprep.subr.mxu0 0.0
    %6075 = vmatpush2.msra.mxu0 0.0
    %6076 = vmatprep.subr.mxu0 0.0
    %6077 = vmatpush2.msra.mxu0 0.0
    %6078 = vmatprep.subr.mxu0 0.0
    %6079 = vmatpush2.msra.mxu0 0.0
    %6080 = vmatprep.subr.mxu0 0.0
    %6081 = vmatpush2.msra.mxu0 0.0
    %6082 = vmatprep.mubr.f32.mxu0 0.0
    %6083 = vmatmul.mubr.f32.gmra.mxu0 %v6016
    %v6084 = vpop.f32.mrf.mxu0
    %v6085 = vadd.f32 %v5992, %v6084
    %v6086 = vpop.f32.mrf.mxu0
    %6087 = vdwg.mxu0
    %v6088 = vmax.f32 %v6085, 0.0
    %v6090 = vlaneseq
    %v6091 = vshrl.u32 %v6090, 7
    %v6092 = vsub.s32 0, %v6091
    %v6093 = vrot.slane %v179, %v6092
    %vm6095 = vcmask 261120
    %v6097 = vsel %vm6095, %v6088, 0
    %6099 = vmatprep.subr.mxu0 0.0
    %6100 = vmatpush1.msra.mxu0 0.0
    %6101 = vmatprep.subr.mxu0 0.0
    %6102 = vmatpush1.msra.mxu0 0.0
    %6103 = vmatprep.subr.mxu0 0.0
    %6104 = vmatpush1.msra.mxu0 0.0
    %6105 = vmatprep.subr.mxu0 0.0
    %6106 = vmatpush1.msra.mxu0 0.0
    %6107 = vmatprep.subr.mxu0 0.0
    %6108 = vmatpush1.msra.mxu0 0.0
    %6109 = vmatprep.subr.mxu0 0.0
    %6110 = vmatpush1.msra.mxu0 0.0
    %6111 = vmatprep.subr.mxu0 0.0
    %6112 = vmatpush1.msra.mxu0 0.0
    %6113 = vmatprep.subr.mxu0 0.0
    %6114 = vmatpush1.msra.mxu0 0.0
    %6115 = vmatprep.subr.mxu0 0.0
    %6116 = vmatpush1.msra.mxu0 0.0
    %6117 = vmatprep.subr.mxu0 0.0
    %6118 = vmatpush1.msra.mxu0 0.0
    %6119 = vmatprep.subr.mxu0 0.0
    %6120 = vmatpush1.msra.mxu0 0.0
    %6121 = vmatprep.subr.mxu0 0.0
    %6122 = vmatpush1.msra.mxu0 0.0
    %6123 = vmatprep.subr.mxu0 0.0
    %6124 = vmatpush1.msra.mxu0 %v178
    %6125 = vmatprep.subr.mxu0 0.0
    %6126 = vmatpush1.msra.mxu0 %v177
    %6127 = vmatprep.subr.mxu0 0.0
    %6128 = vmatpush1.msra.mxu0 %v176
    %6129 = vmatprep.subr.mxu0 0.0
    %6130 = vmatpush1.msra.mxu0 %v175
    %6131 = vmatprep.subr.mxu0 0.0
    %6132 = vmatpush2.msra.mxu0 0.0
    %6133 = vmatprep.subr.mxu0 0.0
    %6134 = vmatpush2.msra.mxu0 0.0
    %6135 = vmatprep.subr.mxu0 0.0
    %6136 = vmatpush2.msra.mxu0 0.0
    %6137 = vmatprep.subr.mxu0 0.0
    %6138 = vmatpush2.msra.mxu0 0.0
    %6139 = vmatprep.subr.mxu0 0.0
    %6140 = vmatpush2.msra.mxu0 0.0
    %6141 = vmatprep.subr.mxu0 0.0
    %6142 = vmatpush2.msra.mxu0 0.0
    %6143 = vmatprep.subr.mxu0 0.0
    %6144 = vmatpush2.msra.mxu0 0.0
    %6145 = vmatprep.subr.mxu0 0.0
    %6146 = vmatpush2.msra.mxu0 0.0
    %6147 = vmatprep.subr.mxu0 0.0
    %6148 = vmatpush2.msra.mxu0 0.0
    %6149 = vmatprep.subr.mxu0 0.0
    %6150 = vmatpush2.msra.mxu0 0.0
    %6151 = vmatprep.subr.mxu0 0.0
    %6152 = vmatpush2.msra.mxu0 0.0
    %6153 = vmatprep.subr.mxu0 0.0
    %6154 = vmatpush2.msra.mxu0 0.0
    %6155 = vmatprep.subr.mxu0 0.0
    %6156 = vmatpush2.msra.mxu0 0.0
    %6157 = vmatprep.subr.mxu0 0.0
    %6158 = vmatpush2.msra.mxu0 0.0
    %6159 = vmatprep.subr.mxu0 0.0
    %6160 = vmatpush2.msra.mxu0 0.0
    %6161 = vmatprep.subr.mxu0 0.0
    %6162 = vmatpush2.msra.mxu0 0.0
    %6163 = vmatprep.mubr.f32.mxu0 0.0
    %6164 = vmatmul.mubr.f32.gmra.mxu0 %v6097
    %v6165 = vpop.f32.mrf.mxu0
    %v6166 = vadd.f32 %v6093, %v6165
    %v6167 = vpop.f32.mrf.mxu0
    %6168 = vdwg.mxu0
    %v6169 = vmax.f32 %v6166, 0.0
    %v6171 = vlaneseq
    %v6172 = vshrl.u32 %v6171, 7
    %v6173 = vsub.s32 0, %v6172
    %v6174 = vrot.slane %v184, %v6173
    %v6177 = vsel %vm6095, %v6169, 0
    %6179 = vmatprep.subr.mxu0 0.0
    %6180 = vmatpush1.msra.mxu0 0.0
    %6181 = vmatprep.subr.mxu0 0.0
    %6182 = vmatpush1.msra.mxu0 0.0
    %6183 = vmatprep.subr.mxu0 0.0
    %6184 = vmatpush1.msra.mxu0 0.0
    %6185 = vmatprep.subr.mxu0 0.0
    %6186 = vmatpush1.msra.mxu0 0.0
    %6187 = vmatprep.subr.mxu0 0.0
    %6188 = vmatpush1.msra.mxu0 0.0
    %6189 = vmatprep.subr.mxu0 0.0
    %6190 = vmatpush1.msra.mxu0 0.0
    %6191 = vmatprep.subr.mxu0 0.0
    %6192 = vmatpush1.msra.mxu0 0.0
    %6193 = vmatprep.subr.mxu0 0.0
    %6194 = vmatpush1.msra.mxu0 0.0
    %6195 = vmatprep.subr.mxu0 0.0
    %6196 = vmatpush1.msra.mxu0 0.0
    %6197 = vmatprep.subr.mxu0 0.0
    %6198 = vmatpush1.msra.mxu0 0.0
    %6199 = vmatprep.subr.mxu0 0.0
    %6200 = vmatpush1.msra.mxu0 0.0
    %6201 = vmatprep.subr.mxu0 0.0
    %6202 = vmatpush1.msra.mxu0 0.0
    %6203 = vmatprep.subr.mxu0 0.0
    %6204 = vmatpush1.msra.mxu0 %v183
    %6205 = vmatprep.subr.mxu0 0.0
    %6206 = vmatpush1.msra.mxu0 %v182
    %6207 = vmatprep.subr.mxu0 0.0
    %6208 = vmatpush1.msra.mxu0 %v181
    %6209 = vmatprep.subr.mxu0 0.0
    %6210 = vmatpush1.msra.mxu0 %v180
    %6211 = vmatprep.subr.mxu0 0.0
    %6212 = vmatpush2.msra.mxu0 0.0
    %6213 = vmatprep.subr.mxu0 0.0
    %6214 = vmatpush2.msra.mxu0 0.0
    %6215 = vmatprep.subr.mxu0 0.0
    %6216 = vmatpush2.msra.mxu0 0.0
    %6217 = vmatprep.subr.mxu0 0.0
    %6218 = vmatpush2.msra.mxu0 0.0
    %6219 = vmatprep.subr.mxu0 0.0
    %6220 = vmatpush2.msra.mxu0 0.0
    %6221 = vmatprep.subr.mxu0 0.0
    %6222 = vmatpush2.msra.mxu0 0.0
    %6223 = vmatprep.subr.mxu0 0.0
    %6224 = vmatpush2.msra.mxu0 0.0
    %6225 = vmatprep.subr.mxu0 0.0
    %6226 = vmatpush2.msra.mxu0 0.0
    %6227 = vmatprep.subr.mxu0 0.0
    %6228 = vmatpush2.msra.mxu0 0.0
    %6229 = vmatprep.subr.mxu0 0.0
    %6230 = vmatpush2.msra.mxu0 0.0
    %6231 = vmatprep.subr.mxu0 0.0
    %6232 = vmatpush2.msra.mxu0 0.0
    %6233 = vmatprep.subr.mxu0 0.0
    %6234 = vmatpush2.msra.mxu0 0.0
    %6235 = vmatprep.subr.mxu0 0.0
    %6236 = vmatpush2.msra.mxu0 0.0
    %6237 = vmatprep.subr.mxu0 0.0
    %6238 = vmatpush2.msra.mxu0 0.0
    %6239 = vmatprep.subr.mxu0 0.0
    %6240 = vmatpush2.msra.mxu0 0.0
    %6241 = vmatprep.subr.mxu0 0.0
    %6242 = vmatpush2.msra.mxu0 0.0
    %6243 = vmatprep.mubr.f32.mxu0 0.0
    %6244 = vmatmul.mubr.f32.gmra.mxu0 %v6177
    %v6245 = vpop.f32.mrf.mxu0
    %v6246 = vadd.f32 %v6174, %v6245
    %v6247 = vpop.f32.mrf.mxu0
    %6248 = vdwg.mxu0
    %6249 = vst.msk [vmem:[%s23] sm:$0xff] %vm633, %v6246
    // Predicated region
    $region122: #{tpu_custom_call.1} parent=1 // pred_check
      _
    $region123: #{tpu_custom_call.1} parent=1 // pred_check_branch
      %6251 = sbr.rel (0) target = $region125
    $region124: #{tpu_custom_call.1} parent=1 // pred_region
      _
    $region125: #{tpu_custom_call.1} parent=1 // pred_fallthru
      _
    // Predicated region
    $region126: #{tpu_custom_call.1} parent=1 // pred_check
      _
    $region127: #{tpu_custom_call.1} parent=1 // pred_check_branch
      %6253 = sbr.rel (0) target = $region129
    $region128: #{tpu_custom_call.1} parent=1 // pred_region
      _
    $region129: #{tpu_custom_call.1} parent=1 // pred_fallthru
      _
    %6254 = vsyncpa [#allocation3], 1
    %6255 = vsyncpa [#allocation5], 1
    %6256 = vsyncpa [#allocation8], 1
    %6257 = vsyncpa [#allocation11], 1

</llo_original>
